<compile_context>
chip_gen: v7x
topology: tpu7x:2x2x1
jax: 0.10.0
libtpu: 0.0.40
codegen_flags: <defaults>
</compile_context>

<pallas_src>
import numpy as np

import jax
import jax.numpy as jnp
from jax.experimental import pallas as pl
from jax.experimental.pallas import tpu as pltpu

VMEM_SPEC = pl.BlockSpec(memory_space=pltpu.MemorySpace.VMEM)
BN_EPS = 1e-5  # PyTorch BatchNorm2d default


def _round_up(x, m):
    return (x + m - 1) // m * m


# ------------------------------ fused kernel ------------------------------- #

def _build_fused_kernel(nl_layers, mid_layers, guard, win, wp):
    """Builds the fused forward kernel for a fixed layer configuration."""
    # 3x3 tap offsets in the flattened padded lattice (row-major (n, hp, wp)).
    offsets = [(dy - 1) * wp + (dx - 1) for dy in range(3) for dx in range(3)]

    def kernel(*refs):
        it = iter(refs)
        x_ref = next(it)                                   # (Cin, win)
        mask_ref = next(it)                                # (1, win)
        nl = [(next(it), next(it)) for _ in range(nl_layers)]
        first_w = next(it)
        mid = [(next(it), next(it), next(it)) for _ in range(mid_layers)]
        last_w = next(it)
        o_ref = next(it)                                   # (Cout, win) output
        buf_a = next(it)                                   # (Cmax, L) scratch
        buf_b = next(it)                                   # (Cmax, L) scratch
        z_ref = next(it)                                   # (9*Cmax, win)

        mask = mask_ref[...]                   # 1 at real pixels, 0 elsewhere

        # Guard columns and the pad ring must read as exact zeros for every
        # 3x3 tap, so zero both activation buffers once up front.
        buf_a[...] = jnp.zeros_like(buf_a)
        buf_b[...] = jnp.zeros_like(buf_b)
        in_ch = x_ref.shape[0]
        buf_a[0:in_ch, guard:guard + win] = x_ref[...]

        def conv1x1(src, cin, w_r, b_r):
            x = src[0:cin, guard:guard + win]              # (cin, win)
            y = jnp.dot(w_r[...], x, preferred_element_type=jnp.float32)
            return jnp.maximum(y + b_r[...], 0.0) * mask

        def conv3x3(src, cin, w_r, scale_r=None, shift_r=None, relu=True):
            # In-kernel im2col: 9 shifted windows -> (9*cin, win) slab, then a
            # single MXU matmul with K = 9*cin.
            for t, off in enumerate(offsets):
                z_ref[t * cin:(t + 1) * cin, :] = (
                    src[0:cin, guard + off:guard + off + win])
            y = jnp.dot(w_r[...], z_ref[0:9 * cin, :],
                        preferred_element_type=jnp.float32)
            if scale_r is not None:            # folded eval-mode BatchNorm
                y = y * scale_r[...] + shift_r[...]
            if relu:
                y = jnp.maximum(y, 0.0)
            return y * mask

        bufs = (buf_a, buf_b)
        cur, cin = 0, in_ch
        # [1x1 conv + bias + ReLU] x nlconv_layers
        for w_r, b_r in nl:
            y = conv1x1(bufs[cur], cin, w_r, b_r)
            cout = w_r.shape[0]
            bufs[1 - cur][0:cout, guard:guard + win] = y
            cur, cin = 1 - cur, cout
        # 3x3 conv (no bias) + ReLU
        y = conv3x3(bufs[cur], cin, first_w, relu=True)
        cout = first_w.shape[0]
        bufs[1 - cur][0:cout, guard:guard + win] = y
        cur, cin = 1 - cur, cout
        # [3x3 conv + BN + ReLU] x (dnnconv_layers - 2)
        for w_r, sc_r, sh_r in mid:
            y = conv3x3(bufs[cur], cin, w_r, scale_r=sc_r, shift_r=sh_r,
                        relu=True)
            cout = w_r.shape[0]
            bufs[1 - cur][0:cout, guard:guard + win] = y
            cur, cin = 1 - cur, cout
        # final 3x3 conv, no ReLU
        o_ref[...] = conv3x3(bufs[cur], cin, last_w, relu=False)

    return kernel


# ------------------------------ full forward ------------------------------- #

def modified_dncnn_forward(x_nchw, prep):
    n, in_ch, h, w = x_nchw.shape
    hp, wp = h + 2, w + 2
    p_len = n * hp * wp
    win = _round_up(p_len, 128)                 # lane-dense compute window
    guard = max(128, _round_up(wp + 2, 128))    # zero guard >= one padded row
    l_total = guard + win + guard

    nl = prep["nl"]
    first_w = prep["first3"]
    mid = prep["mid"]
    last_w = prep["last3"]

    nl_feat = nl[-1][0].shape[0]
    dnn_feat = first_w.shape[0]
    out_ch = last_w.shape[0]
    c_max = _round_up(max(in_ch, nl_feat, dnn_feat, out_ch), 8)

    # NCHW -> zero-padded flat lattice (Cin, N*Hp*Wp), tail-padded to `win`.
    xp = jnp.pad(x_nchw, ((0, 0), (0, 0), (1, 1), (1, 1)))
    xflat = jnp.transpose(xp, (1, 0, 2, 3)).reshape(in_ch, p_len)
    xflat = jnp.pad(xflat, ((0, 0), (0, win - p_len)))

    # Interior mask (static per shape): 1 at real pixels, 0 on pad ring / tail.
    m_np = np.zeros((n, hp, wp), np.float32)
    m_np[:, 1:h + 1, 1:w + 1] = 1.0
    mask_np = np.zeros((1, win), np.float32)
    mask_np[0, :p_len] = m_np.reshape(-1)
    mask = jnp.asarray(mask_np)

    kernel = _build_fused_kernel(nl_layers=len(nl), mid_layers=len(mid),
                                 guard=guard, win=win, wp=wp)

    inputs = [xflat, mask]
    for w_r, b_r in nl:
        inputs += [w_r, b_r]
    inputs.append(first_w)
    for w9, sc, sh in mid:
        inputs += [w9, sc, sh]
    inputs.append(last_w)

    out_win = pl.pallas_call(
        kernel,
        out_shape=jax.ShapeDtypeStruct((out_ch, win), jnp.float32),
        in_specs=[VMEM_SPEC] * len(inputs),
        out_specs=VMEM_SPEC,
        scratch_shapes=[
            pltpu.VMEM((c_max, l_total), jnp.float32),   # ping activation
            pltpu.VMEM((c_max, l_total), jnp.float32),   # pong activation
            pltpu.VMEM((9 * c_max, win), jnp.float32),   # im2col slab
        ],
    )(*inputs)

    y = out_win[:, :p_len].reshape(out_ch, n, hp, wp)[:, :, 1:h + 1, 1:w + 1]
    return jnp.transpose(y, (1, 0, 2, 3))                 # -> NCHW


# ------------------- hoisted (once-per-model) param prep ------------------- #

def prepare_params(params):
    """Weight reshapes to the (Cout, K) matmul layout + eval-mode BN folding."""
    def as_mm_1x1(w, b):                       # (Cout, Cin, 1, 1), (Cout,)
        co, ci = w.shape[0], w.shape[1]
        return (w.reshape(co, ci).astype(jnp.float32),
                b.reshape(co, 1).astype(jnp.float32))

    def as_mm_3x3(w):                          # OIHW -> (Cout, 9*Cin) tap-major
        co, ci = w.shape[0], w.shape[1]
        return (jnp.transpose(w, (0, 2, 3, 1))
                .reshape(co, 9 * ci).astype(jnp.float32))

    prep = {"nl": [as_mm_1x1(w, b) for w, b in params["nl"]],
            "first3": as_mm_3x3(params["first3"]),
            "mid": [],
            "last3": as_mm_3x3(params["last3"])}
    for w, gamma, beta, mean, var in params["mid"]:
        sc = gamma / jnp.sqrt(var + BN_EPS)
        sh = beta - mean * sc
        prep["mid"].append((as_mm_3x3(w),
                            sc.reshape(-1, 1).astype(jnp.float32),
                            sh.reshape(-1, 1).astype(jnp.float32)))
    return prep


# ------------------------- pure-JAX reference check ------------------------ #

def _ref_conv(x, w, padding):
    return jax.lax.conv_general_dilated(
        x, w, window_strides=(1, 1), padding=padding,
        dimension_numbers=("NCHW", "OIHW", "NCHW"))


def ref_forward(x, params):
    for w, b in params["nl"]:
        x = jax.nn.relu(_ref_conv(x, w, "VALID") + b.reshape(1, -1, 1, 1))
    x = jax.nn.relu(_ref_conv(x, params["first3"], "SAME"))
    for w, gamma, beta, mean, var in params["mid"]:
        sc = (gamma / jnp.sqrt(var + BN_EPS)).reshape(1, -1, 1, 1)
        sh = (beta - mean * gamma / jnp.sqrt(var + BN_EPS)).reshape(1, -1, 1, 1)
        x = jax.nn.relu(_ref_conv(x, w, "SAME") * sc + sh)
    return _ref_conv(x, params["last3"], "SAME")


# ---------------------------- parameter creation ---------------------------- #

def init_params(key, in_ch, out_ch, nl_feat, nl_layers, dnn_feat, dnn_layers):
    keys = iter(jax.random.split(key, 64))
    p = {"nl": [], "mid": []}
    c = in_ch
    for _ in range(nl_layers):
        w = 0.1 * jax.random.normal(next(keys), (nl_feat, c, 1, 1), jnp.float32)
        b = 0.1 * jax.random.normal(next(keys), (nl_feat,), jnp.float32)
        p["nl"].append((w, b))
        c = nl_feat
    p["first3"] = 0.1 * jax.random.normal(next(keys), (dnn_feat, nl_feat, 3, 3),
                                          jnp.float32)
    for _ in range(dnn_layers - 2):
        w = 0.1 * jax.random.normal(next(keys), (dnn_feat, dnn_feat, 3, 3),
                                    jnp.float32)
        gamma = 1.0 + 0.1 * jax.random.normal(next(keys), (dnn_feat,), jnp.float32)
        beta = 0.1 * jax.random.normal(next(keys), (dnn_feat,), jnp.float32)
        mean = 0.1 * jax.random.normal(next(keys), (dnn_feat,), jnp.float32)
        var = 1.0 + 0.1 * jnp.abs(jax.random.normal(next(keys), (dnn_feat,),
                                                    jnp.float32))
        p["mid"].append((w, gamma, beta, mean, var))
    p["last3"] = 0.1 * jax.random.normal(next(keys), (out_ch, dnn_feat, 3, 3),
                                         jnp.float32)
    return p


# ----------------------------------- main ----------------------------------- #

if __name__ == "__main__":
    # ModifiedDnCNN(input_channels=4, output_channels=4, nlconv_features=16,
    #               nlconv_layers=2, dnnconv_features=32, dnnconv_layers=4)
    key = jax.random.PRNGKey(0)
    kx, kp = jax.random.split(key)
    x = jax.random.normal(kx, (2, 4, 16, 16), jnp.float32)   # NCHW like PyTorch
    params = init_params(kp, in_ch=4, out_ch=4, nl_feat=16, nl_layers=2,
                         dnn_feat=32, dnn_layers=4)
    prep = prepare_params(params)                            # hoisted, once

    fwd = jax.jit(modified_dncnn_forward)
    out = jax.block_until_ready(fwd(x, prep))
    ref = jax.block_until_ready(ref_forward(x, params))

    assert out.shape == (2, 4, 16, 16) and out.dtype == jnp.float32
    max_err = float(jnp.max(jnp.abs(out - ref)))
    if not bool(jnp.allclose(out, ref, rtol=1e-3, atol=1e-3)):
        raise SystemExit(f"mismatch vs reference, max abs err = {max_err}")
    print("KERNEL_OK")
</pallas_src>

<mosaic_0001>
module attributes {stable_mosaic.version = 11 : i64} {
  func.func @kernel(%arg0: memref<4x768xf32, #tpu.memory_space<vmem>>, %arg1: memref<1x768xf32, #tpu.memory_space<vmem>>, %arg2: memref<16x4xf32, #tpu.memory_space<vmem>>, %arg3: memref<16x1xf32, #tpu.memory_space<vmem>>, %arg4: memref<16x16xf32, #tpu.memory_space<vmem>>, %arg5: memref<16x1xf32, #tpu.memory_space<vmem>>, %arg6: memref<32x144xf32, #tpu.memory_space<vmem>>, %arg7: memref<32x288xf32, #tpu.memory_space<vmem>>, %arg8: memref<32x1xf32, #tpu.memory_space<vmem>>, %arg9: memref<32x1xf32, #tpu.memory_space<vmem>>, %arg10: memref<32x288xf32, #tpu.memory_space<vmem>>, %arg11: memref<32x1xf32, #tpu.memory_space<vmem>>, %arg12: memref<32x1xf32, #tpu.memory_space<vmem>>, %arg13: memref<4x288xf32, #tpu.memory_space<vmem>>, %arg14: memref<4x768xf32, #tpu.memory_space<vmem>>, %arg15: memref<32x1024xf32, #tpu.memory_space<vmem>>, %arg16: memref<32x1024xf32, #tpu.memory_space<vmem>>, %arg17: memref<288x768xf32, #tpu.memory_space<vmem>>) attributes {dimension_semantics = [], scalar_prefetch = 0 : i64, scratch_operands = 3 : i64, tpu.core_type = #tpu.core_type<tc>} {
    %c0 = arith.constant 0 : index
    %c0_0 = arith.constant 0 : index
    %0 = vector.load %arg1[%c0, %c0_0] : memref<1x768xf32, #tpu.memory_space<vmem>>, vector<1x768xf32>
    %cst = arith.constant 0.000000e+00 : f32
    %1 = vector.broadcast %cst : f32 to vector<32x1024xf32>
    %c0_1 = arith.constant 0 : index
    %c0_2 = arith.constant 0 : index
    %2 = vector.load %arg15[%c0_1, %c0_2] : memref<32x1024xf32, #tpu.memory_space<vmem>>, vector<32x1024xf32>
    tpu.vector_store %arg15[%c0_1, %c0_2], %1 {strides = array<i32>} : memref<32x1024xf32, #tpu.memory_space<vmem>>, vector<32x1024xf32>,
    %cst_3 = arith.constant 0.000000e+00 : f32
    %3 = vector.broadcast %cst_3 : f32 to vector<32x1024xf32>
    %c0_4 = arith.constant 0 : index
    %c0_5 = arith.constant 0 : index
    %4 = vector.load %arg16[%c0_4, %c0_5] : memref<32x1024xf32, #tpu.memory_space<vmem>>, vector<32x1024xf32>
    tpu.vector_store %arg16[%c0_4, %c0_5], %3 {strides = array<i32>} : memref<32x1024xf32, #tpu.memory_space<vmem>>, vector<32x1024xf32>,
    %c0_6 = arith.constant 0 : index
    %c0_7 = arith.constant 0 : index
    %5 = vector.load %arg0[%c0_6, %c0_7] : memref<4x768xf32, #tpu.memory_space<vmem>>, vector<4x768xf32>
    %c0_8 = arith.constant 0 : index
    %c128 = arith.constant 128 : index
    %6 = vector.load %arg15[%c0_8, %c128] : memref<32x1024xf32, #tpu.memory_space<vmem>>, vector<4x768xf32>
    tpu.vector_store %arg15[%c0_8, %c128], %5 {strides = array<i32>} : memref<32x1024xf32, #tpu.memory_space<vmem>>, vector<4x768xf32>,
    %c0_9 = arith.constant 0 : index
    %c128_10 = arith.constant 128 : index
    %7 = vector.load %arg15[%c0_9, %c128_10] : memref<32x1024xf32, #tpu.memory_space<vmem>>, vector<4x768xf32>
    %c0_11 = arith.constant 0 : index
    %c0_12 = arith.constant 0 : index
    %8 = vector.load %arg2[%c0_11, %c0_12] : memref<16x4xf32, #tpu.memory_space<vmem>>, vector<16x4xf32>
    %cst_13 = arith.constant dense<0.000000e+00> : vector<16x768xf32>
    %9 = tpu.matmul %8, %7, %cst_13 {dimension_numbers = #tpu.dot_dimension_numbers<[1], [0], [0], [1], [0, 0, 1, 1], [], []>} : vector<16x4xf32>, vector<4x768xf32>, vector<16x768xf32> -> vector<16x768xf32>
    %c0_14 = arith.constant 0 : index
    %c0_15 = arith.constant 0 : index
    %10 = vector.load %arg3[%c0_14, %c0_15] : memref<16x1xf32, #tpu.memory_space<vmem>>, vector<16x1xf32>
    %11 = vector.broadcast %10 : vector<16x1xf32> to vector<16x768xf32>
    %12 = arith.addf %9, %11 : vector<16x768xf32>
    %cst_16 = arith.constant 0.000000e+00 : f32
    %13 = vector.broadcast %cst_16 : f32 to vector<16x768xf32>
    %14 = arith.maximumf %12, %13 : vector<16x768xf32>
    %15 = vector.broadcast %0 : vector<1x768xf32> to vector<16x768xf32>
    %16 = arith.mulf %14, %15 : vector<16x768xf32>
    %c0_17 = arith.constant 0 : index
    %c128_18 = arith.constant 128 : index
    %17 = vector.load %arg16[%c0_17, %c128_18] : memref<32x1024xf32, #tpu.memory_space<vmem>>, vector<16x768xf32>
    tpu.vector_store %arg16[%c0_17, %c128_18], %16 {strides = array<i32>} : memref<32x1024xf32, #tpu.memory_space<vmem>>, vector<16x768xf32>,
    %c0_19 = arith.constant 0 : index
    %c128_20 = arith.constant 128 : index
    %18 = vector.load %arg16[%c0_19, %c128_20] : memref<32x1024xf32, #tpu.memory_space<vmem>>, vector<16x768xf32>
    %c0_21 = arith.constant 0 : index
    %c0_22 = arith.constant 0 : index
    %19 = vector.load %arg4[%c0_21, %c0_22] : memref<16x16xf32, #tpu.memory_space<vmem>>, vector<16x16xf32>
    %cst_23 = arith.constant dense<0.000000e+00> : vector<16x768xf32>
    %20 = tpu.matmul %19, %18, %cst_23 {dimension_numbers = #tpu.dot_dimension_numbers<[1], [0], [0], [1], [0, 0, 1, 1], [], []>} : vector<16x16xf32>, vector<16x768xf32>, vector<16x768xf32> -> vector<16x768xf32>
    %c0_24 = arith.constant 0 : index
    %c0_25 = arith.constant 0 : index
    %21 = vector.load %arg5[%c0_24, %c0_25] : memref<16x1xf32, #tpu.memory_space<vmem>>, vector<16x1xf32>
    %22 = vector.broadcast %21 : vector<16x1xf32> to vector<16x768xf32>
    %23 = arith.addf %20, %22 : vector<16x768xf32>
    %cst_26 = arith.constant 0.000000e+00 : f32
    %24 = vector.broadcast %cst_26 : f32 to vector<16x768xf32>
    %25 = arith.maximumf %23, %24 : vector<16x768xf32>
    %26 = vector.broadcast %0 : vector<1x768xf32> to vector<16x768xf32>
    %27 = arith.mulf %25, %26 : vector<16x768xf32>
    %c0_27 = arith.constant 0 : index
    %c128_28 = arith.constant 128 : index
    %28 = vector.load %arg15[%c0_27, %c128_28] : memref<32x1024xf32, #tpu.memory_space<vmem>>, vector<16x768xf32>
    tpu.vector_store %arg15[%c0_27, %c128_28], %27 {strides = array<i32>} : memref<32x1024xf32, #tpu.memory_space<vmem>>, vector<16x768xf32>,
    %c0_29 = arith.constant 0 : index
    %c109 = arith.constant 109 : index
    %29 = vector.load %arg15[%c0_29, %c109] : memref<32x1024xf32, #tpu.memory_space<vmem>>, vector<16x768xf32>
    %c0_30 = arith.constant 0 : index
    %c0_31 = arith.constant 0 : index
    %30 = vector.load %arg17[%c0_30, %c0_31] : memref<288x768xf32, #tpu.memory_space<vmem>>, vector<16x768xf32>
    tpu.vector_store %arg17[%c0_30, %c0_31], %29 {strides = array<i32>} : memref<288x768xf32, #tpu.memory_space<vmem>>, vector<16x768xf32>,
    %c0_32 = arith.constant 0 : index
    %c110 = arith.constant 110 : index
    %31 = vector.load %arg15[%c0_32, %c110] : memref<32x1024xf32, #tpu.memory_space<vmem>>, vector<16x768xf32>
    %c16 = arith.constant 16 : index
    %c0_33 = arith.constant 0 : index
    %32 = vector.load %arg17[%c16, %c0_33] : memref<288x768xf32, #tpu.memory_space<vmem>>, vector<16x768xf32>
    tpu.vector_store %arg17[%c16, %c0_33], %31 {strides = array<i32>} : memref<288x768xf32, #tpu.memory_space<vmem>>, vector<16x768xf32>,
    %c0_34 = arith.constant 0 : index
    %c111 = arith.constant 111 : index
    %33 = vector.load %arg15[%c0_34, %c111] : memref<32x1024xf32, #tpu.memory_space<vmem>>, vector<16x768xf32>
    %c32 = arith.constant 32 : index
    %c0_35 = arith.constant 0 : index
    %34 = vector.load %arg17[%c32, %c0_35] : memref<288x768xf32, #tpu.memory_space<vmem>>, vector<16x768xf32>
    tpu.vector_store %arg17[%c32, %c0_35], %33 {strides = array<i32>} : memref<288x768xf32, #tpu.memory_space<vmem>>, vector<16x768xf32>,
    %c0_36 = arith.constant 0 : index
    %c127 = arith.constant 127 : index
    %35 = vector.load %arg15[%c0_36, %c127] : memref<32x1024xf32, #tpu.memory_space<vmem>>, vector<16x768xf32>
    %c48 = arith.constant 48 : index
    %c0_37 = arith.constant 0 : index
    %36 = vector.load %arg17[%c48, %c0_37] : memref<288x768xf32, #tpu.memory_space<vmem>>, vector<16x768xf32>
    tpu.vector_store %arg17[%c48, %c0_37], %35 {strides = array<i32>} : memref<288x768xf32, #tpu.memory_space<vmem>>, vector<16x768xf32>,
    %c0_38 = arith.constant 0 : index
    %c128_39 = arith.constant 128 : index
    %37 = vector.load %arg15[%c0_38, %c128_39] : memref<32x1024xf32, #tpu.memory_space<vmem>>, vector<16x768xf32>
    %c64 = arith.constant 64 : index
    %c0_40 = arith.constant 0 : index
    %38 = vector.load %arg17[%c64, %c0_40] : memref<288x768xf32, #tpu.memory_space<vmem>>, vector<16x768xf32>
    tpu.vector_store %arg17[%c64, %c0_40], %37 {strides = array<i32>} : memref<288x768xf32, #tpu.memory_space<vmem>>, vector<16x768xf32>,
    %c0_41 = arith.constant 0 : index
    %c129 = arith.constant 129 : index
    %39 = vector.load %arg15[%c0_41, %c129] : memref<32x1024xf32, #tpu.memory_space<vmem>>, vector<16x768xf32>
    %c80 = arith.constant 80 : index
    %c0_42 = arith.constant 0 : index
    %40 = vector.load %arg17[%c80, %c0_42] : memref<288x768xf32, #tpu.memory_space<vmem>>, vector<16x768xf32>
    tpu.vector_store %arg17[%c80, %c0_42], %39 {strides = array<i32>} : memref<288x768xf32, #tpu.memory_space<vmem>>, vector<16x768xf32>,
    %c0_43 = arith.constant 0 : index
    %c145 = arith.constant 145 : index
    %41 = vector.load %arg15[%c0_43, %c145] : memref<32x1024xf32, #tpu.memory_space<vmem>>, vector<16x768xf32>
    %c96 = arith.constant 96 : index
    %c0_44 = arith.constant 0 : index
    %42 = vector.load %arg17[%c96, %c0_44] : memref<288x768xf32, #tpu.memory_space<vmem>>, vector<16x768xf32>
    tpu.vector_store %arg17[%c96, %c0_44], %41 {strides = array<i32>} : memref<288x768xf32, #tpu.memory_space<vmem>>, vector<16x768xf32>,
    %c0_45 = arith.constant 0 : index
    %c146 = arith.constant 146 : index
    %43 = vector.load %arg15[%c0_45, %c146] : memref<32x1024xf32, #tpu.memory_space<vmem>>, vector<16x768xf32>
    %c112 = arith.constant 112 : index
    %c0_46 = arith.constant 0 : index
    %44 = vector.load %arg17[%c112, %c0_46] : memref<288x768xf32, #tpu.memory_space<vmem>>, vector<16x768xf32>
    tpu.vector_store %arg17[%c112, %c0_46], %43 {strides = array<i32>} : memref<288x768xf32, #tpu.memory_space<vmem>>, vector<16x768xf32>,
    %c0_47 = arith.constant 0 : index
    %c147 = arith.constant 147 : index
    %45 = vector.load %arg15[%c0_47, %c147] : memref<32x1024xf32, #tpu.memory_space<vmem>>, vector<16x768xf32>
    %c128_48 = arith.constant 128 : index
    %c0_49 = arith.constant 0 : index
    %46 = vector.load %arg17[%c128_48, %c0_49] : memref<288x768xf32, #tpu.memory_space<vmem>>, vector<16x768xf32>
    tpu.vector_store %arg17[%c128_48, %c0_49], %45 {strides = array<i32>} : memref<288x768xf32, #tpu.memory_space<vmem>>, vector<16x768xf32>,
    %c0_50 = arith.constant 0 : index
    %c0_51 = arith.constant 0 : index
    %47 = vector.load %arg6[%c0_50, %c0_51] : memref<32x144xf32, #tpu.memory_space<vmem>>, vector<32x144xf32>
    %c0_52 = arith.constant 0 : index
    %c0_53 = arith.constant 0 : index
    %48 = vector.load %arg17[%c0_52, %c0_53] : memref<288x768xf32, #tpu.memory_space<vmem>>, vector<144x768xf32>
    %cst_54 = arith.constant dense<0.000000e+00> : vector<32x768xf32>
    %49 = tpu.matmul %47, %48, %cst_54 {dimension_numbers = #tpu.dot_dimension_numbers<[1], [0], [0], [1], [0, 0, 1, 1], [], []>} : vector<32x144xf32>, vector<144x768xf32>, vector<32x768xf32> -> vector<32x768xf32>
    %cst_55 = arith.constant 0.000000e+00 : f32
    %50 = vector.broadcast %cst_55 : f32 to vector<32x768xf32>
    %51 = arith.maximumf %49, %50 : vector<32x768xf32>
    %52 = vector.broadcast %0 : vector<1x768xf32> to vector<32x768xf32>
    %53 = arith.mulf %51, %52 : vector<32x768xf32>
    %c0_56 = arith.constant 0 : index
    %c128_57 = arith.constant 128 : index
    %54 = vector.load %arg16[%c0_56, %c128_57] : memref<32x1024xf32, #tpu.memory_space<vmem>>, vector<32x768xf32>
    tpu.vector_store %arg16[%c0_56, %c128_57], %53 {strides = array<i32>} : memref<32x1024xf32, #tpu.memory_space<vmem>>, vector<32x768xf32>,
    %c0_58 = arith.constant 0 : index
    %c109_59 = arith.constant 109 : index
    %55 = vector.load %arg16[%c0_58, %c109_59] : memref<32x1024xf32, #tpu.memory_space<vmem>>, vector<32x768xf32>
    %c0_60 = arith.constant 0 : index
    %c0_61 = arith.constant 0 : index
    %56 = vector.load %arg17[%c0_60, %c0_61] : memref<288x768xf32, #tpu.memory_space<vmem>>, vector<32x768xf32>
    tpu.vector_store %arg17[%c0_60, %c0_61], %55 {strides = array<i32>} : memref<288x768xf32, #tpu.memory_space<vmem>>, vector<32x768xf32>,
    %c0_62 = arith.constant 0 : index
    %c110_63 = arith.constant 110 : index
    %57 = vector.load %arg16[%c0_62, %c110_63] : memref<32x1024xf32, #tpu.memory_space<vmem>>, vector<32x768xf32>
    %c32_64 = arith.constant 32 : index
    %c0_65 = arith.constant 0 : index
    %58 = vector.load %arg17[%c32_64, %c0_65] : memref<288x768xf32, #tpu.memory_space<vmem>>, vector<32x768xf32>
    tpu.vector_store %arg17[%c32_64, %c0_65], %57 {strides = array<i32>} : memref<288x768xf32, #tpu.memory_space<vmem>>, vector<32x768xf32>,
    %c0_66 = arith.constant 0 : index
    %c111_67 = arith.constant 111 : index
    %59 = vector.load %arg16[%c0_66, %c111_67] : memref<32x1024xf32, #tpu.memory_space<vmem>>, vector<32x768xf32>
    %c64_68 = arith.constant 64 : index
    %c0_69 = arith.constant 0 : index
    %60 = vector.load %arg17[%c64_68, %c0_69] : memref<288x768xf32, #tpu.memory_space<vmem>>, vector<32x768xf32>
    tpu.vector_store %arg17[%c64_68, %c0_69], %59 {strides = array<i32>} : memref<288x768xf32, #tpu.memory_space<vmem>>, vector<32x768xf32>,
    %c0_70 = arith.constant 0 : index
    %c127_71 = arith.constant 127 : index
    %61 = vector.load %arg16[%c0_70, %c127_71] : memref<32x1024xf32, #tpu.memory_space<vmem>>, vector<32x768xf32>
    %c96_72 = arith.constant 96 : index
    %c0_73 = arith.constant 0 : index
    %62 = vector.load %arg17[%c96_72, %c0_73] : memref<288x768xf32, #tpu.memory_space<vmem>>, vector<32x768xf32>
    tpu.vector_store %arg17[%c96_72, %c0_73], %61 {strides = array<i32>} : memref<288x768xf32, #tpu.memory_space<vmem>>, vector<32x768xf32>,
    %c0_74 = arith.constant 0 : index
    %c128_75 = arith.constant 128 : index
    %63 = vector.load %arg16[%c0_74, %c128_75] : memref<32x1024xf32, #tpu.memory_space<vmem>>, vector<32x768xf32>
    %c128_76 = arith.constant 128 : index
    %c0_77 = arith.constant 0 : index
    %64 = vector.load %arg17[%c128_76, %c0_77] : memref<288x768xf32, #tpu.memory_space<vmem>>, vector<32x768xf32>
    tpu.vector_store %arg17[%c128_76, %c0_77], %63 {strides = array<i32>} : memref<288x768xf32, #tpu.memory_space<vmem>>, vector<32x768xf32>,
    %c0_78 = arith.constant 0 : index
    %c129_79 = arith.constant 129 : index
    %65 = vector.load %arg16[%c0_78, %c129_79] : memref<32x1024xf32, #tpu.memory_space<vmem>>, vector<32x768xf32>
    %c160 = arith.constant 160 : index
    %c0_80 = arith.constant 0 : index
    %66 = vector.load %arg17[%c160, %c0_80] : memref<288x768xf32, #tpu.memory_space<vmem>>, vector<32x768xf32>
    tpu.vector_store %arg17[%c160, %c0_80], %65 {strides = array<i32>} : memref<288x768xf32, #tpu.memory_space<vmem>>, vector<32x768xf32>,
    %c0_81 = arith.constant 0 : index
    %c145_82 = arith.constant 145 : index
    %67 = vector.load %arg16[%c0_81, %c145_82] : memref<32x1024xf32, #tpu.memory_space<vmem>>, vector<32x768xf32>
    %c192 = arith.constant 192 : index
    %c0_83 = arith.constant 0 : index
    %68 = vector.load %arg17[%c192, %c0_83] : memref<288x768xf32, #tpu.memory_space<vmem>>, vector<32x768xf32>
    tpu.vector_store %arg17[%c192, %c0_83], %67 {strides = array<i32>} : memref<288x768xf32, #tpu.memory_space<vmem>>, vector<32x768xf32>,
    %c0_84 = arith.constant 0 : index
    %c146_85 = arith.constant 146 : index
    %69 = vector.load %arg16[%c0_84, %c146_85] : memref<32x1024xf32, #tpu.memory_space<vmem>>, vector<32x768xf32>
    %c224 = arith.constant 224 : index
    %c0_86 = arith.constant 0 : index
    %70 = vector.load %arg17[%c224, %c0_86] : memref<288x768xf32, #tpu.memory_space<vmem>>, vector<32x768xf32>
    tpu.vector_store %arg17[%c224, %c0_86], %69 {strides = array<i32>} : memref<288x768xf32, #tpu.memory_space<vmem>>, vector<32x768xf32>,
    %c0_87 = arith.constant 0 : index
    %c147_88 = arith.constant 147 : index
    %71 = vector.load %arg16[%c0_87, %c147_88] : memref<32x1024xf32, #tpu.memory_space<vmem>>, vector<32x768xf32>
    %c256 = arith.constant 256 : index
    %c0_89 = arith.constant 0 : index
    %72 = vector.load %arg17[%c256, %c0_89] : memref<288x768xf32, #tpu.memory_space<vmem>>, vector<32x768xf32>
    tpu.vector_store %arg17[%c256, %c0_89], %71 {strides = array<i32>} : memref<288x768xf32, #tpu.memory_space<vmem>>, vector<32x768xf32>,
    %c0_90 = arith.constant 0 : index
    %c0_91 = arith.constant 0 : index
    %73 = vector.load %arg7[%c0_90, %c0_91] : memref<32x288xf32, #tpu.memory_space<vmem>>, vector<32x288xf32>
    %c0_92 = arith.constant 0 : index
    %c0_93 = arith.constant 0 : index
    %74 = vector.load %arg17[%c0_92, %c0_93] : memref<288x768xf32, #tpu.memory_space<vmem>>, vector<288x768xf32>
    %cst_94 = arith.constant dense<0.000000e+00> : vector<32x768xf32>
    %75 = tpu.matmul %73, %74, %cst_94 {dimension_numbers = #tpu.dot_dimension_numbers<[1], [0], [0], [1], [0, 0, 1, 1], [], []>} : vector<32x288xf32>, vector<288x768xf32>, vector<32x768xf32> -> vector<32x768xf32>
    %c0_95 = arith.constant 0 : index
    %c0_96 = arith.constant 0 : index
    %76 = vector.load %arg8[%c0_95, %c0_96] : memref<32x1xf32, #tpu.memory_space<vmem>>, vector<32x1xf32>
    %77 = vector.broadcast %76 : vector<32x1xf32> to vector<32x768xf32>
    %78 = arith.mulf %75, %77 : vector<32x768xf32>
    %c0_97 = arith.constant 0 : index
    %c0_98 = arith.constant 0 : index
    %79 = vector.load %arg9[%c0_97, %c0_98] : memref<32x1xf32, #tpu.memory_space<vmem>>, vector<32x1xf32>
    %80 = vector.broadcast %79 : vector<32x1xf32> to vector<32x768xf32>
    %81 = arith.addf %78, %80 : vector<32x768xf32>
    %cst_99 = arith.constant 0.000000e+00 : f32
    %82 = vector.broadcast %cst_99 : f32 to vector<32x768xf32>
    %83 = arith.maximumf %81, %82 : vector<32x768xf32>
    %84 = vector.broadcast %0 : vector<1x768xf32> to vector<32x768xf32>
    %85 = arith.mulf %83, %84 : vector<32x768xf32>
    %c0_100 = arith.constant 0 : index
    %c128_101 = arith.constant 128 : index
    %86 = vector.load %arg15[%c0_100, %c128_101] : memref<32x1024xf32, #tpu.memory_space<vmem>>, vector<32x768xf32>
    tpu.vector_store %arg15[%c0_100, %c128_101], %85 {strides = array<i32>} : memref<32x1024xf32, #tpu.memory_space<vmem>>, vector<32x768xf32>,
    %c0_102 = arith.constant 0 : index
    %c109_103 = arith.constant 109 : index
    %87 = vector.load %arg15[%c0_102, %c109_103] : memref<32x1024xf32, #tpu.memory_space<vmem>>, vector<32x768xf32>
    %c0_104 = arith.constant 0 : index
    %c0_105 = arith.constant 0 : index
    %88 = vector.load %arg17[%c0_104, %c0_105] : memref<288x768xf32, #tpu.memory_space<vmem>>, vector<32x768xf32>
    tpu.vector_store %arg17[%c0_104, %c0_105], %87 {strides = array<i32>} : memref<288x768xf32, #tpu.memory_space<vmem>>, vector<32x768xf32>,
    %c0_106 = arith.constant 0 : index
    %c110_107 = arith.constant 110 : index
    %89 = vector.load %arg15[%c0_106, %c110_107] : memref<32x1024xf32, #tpu.memory_space<vmem>>, vector<32x768xf32>
    %c32_108 = arith.constant 32 : index
    %c0_109 = arith.constant 0 : index
    %90 = vector.load %arg17[%c32_108, %c0_109] : memref<288x768xf32, #tpu.memory_space<vmem>>, vector<32x768xf32>
    tpu.vector_store %arg17[%c32_108, %c0_109], %89 {strides = array<i32>} : memref<288x768xf32, #tpu.memory_space<vmem>>, vector<32x768xf32>,
    %c0_110 = arith.constant 0 : index
    %c111_111 = arith.constant 111 : index
    %91 = vector.load %arg15[%c0_110, %c111_111] : memref<32x1024xf32, #tpu.memory_space<vmem>>, vector<32x768xf32>
    %c64_112 = arith.constant 64 : index
    %c0_113 = arith.constant 0 : index
    %92 = vector.load %arg17[%c64_112, %c0_113] : memref<288x768xf32, #tpu.memory_space<vmem>>, vector<32x768xf32>
    tpu.vector_store %arg17[%c64_112, %c0_113], %91 {strides = array<i32>} : memref<288x768xf32, #tpu.memory_space<vmem>>, vector<32x768xf32>,
    %c0_114 = arith.constant 0 : index
    %c127_115 = arith.constant 127 : index
    %93 = vector.load %arg15[%c0_114, %c127_115] : memref<32x1024xf32, #tpu.memory_space<vmem>>, vector<32x768xf32>
    %c96_116 = arith.constant 96 : index
    %c0_117 = arith.constant 0 : index
    %94 = vector.load %arg17[%c96_116, %c0_117] : memref<288x768xf32, #tpu.memory_space<vmem>>, vector<32x768xf32>
    tpu.vector_store %arg17[%c96_116, %c0_117], %93 {strides = array<i32>} : memref<288x768xf32, #tpu.memory_space<vmem>>, vector<32x768xf32>,
    %c0_118 = arith.constant 0 : index
    %c128_119 = arith.constant 128 : index
    %95 = vector.load %arg15[%c0_118, %c128_119] : memref<32x1024xf32, #tpu.memory_space<vmem>>, vector<32x768xf32>
    %c128_120 = arith.constant 128 : index
    %c0_121 = arith.constant 0 : index
    %96 = vector.load %arg17[%c128_120, %c0_121] : memref<288x768xf32, #tpu.memory_space<vmem>>, vector<32x768xf32>
    tpu.vector_store %arg17[%c128_120, %c0_121], %95 {strides = array<i32>} : memref<288x768xf32, #tpu.memory_space<vmem>>, vector<32x768xf32>,
    %c0_122 = arith.constant 0 : index
    %c129_123 = arith.constant 129 : index
    %97 = vector.load %arg15[%c0_122, %c129_123] : memref<32x1024xf32, #tpu.memory_space<vmem>>, vector<32x768xf32>
    %c160_124 = arith.constant 160 : index
    %c0_125 = arith.constant 0 : index
    %98 = vector.load %arg17[%c160_124, %c0_125] : memref<288x768xf32, #tpu.memory_space<vmem>>, vector<32x768xf32>
    tpu.vector_store %arg17[%c160_124, %c0_125], %97 {strides = array<i32>} : memref<288x768xf32, #tpu.memory_space<vmem>>, vector<32x768xf32>,
    %c0_126 = arith.constant 0 : index
    %c145_127 = arith.constant 145 : index
    %99 = vector.load %arg15[%c0_126, %c145_127] : memref<32x1024xf32, #tpu.memory_space<vmem>>, vector<32x768xf32>
    %c192_128 = arith.constant 192 : index
    %c0_129 = arith.constant 0 : index
    %100 = vector.load %arg17[%c192_128, %c0_129] : memref<288x768xf32, #tpu.memory_space<vmem>>, vector<32x768xf32>
    tpu.vector_store %arg17[%c192_128, %c0_129], %99 {strides = array<i32>} : memref<288x768xf32, #tpu.memory_space<vmem>>, vector<32x768xf32>,
    %c0_130 = arith.constant 0 : index
    %c146_131 = arith.constant 146 : index
    %101 = vector.load %arg15[%c0_130, %c146_131] : memref<32x1024xf32, #tpu.memory_space<vmem>>, vector<32x768xf32>
    %c224_132 = arith.constant 224 : index
    %c0_133 = arith.constant 0 : index
    %102 = vector.load %arg17[%c224_132, %c0_133] : memref<288x768xf32, #tpu.memory_space<vmem>>, vector<32x768xf32>
    tpu.vector_store %arg17[%c224_132, %c0_133], %101 {strides = array<i32>} : memref<288x768xf32, #tpu.memory_space<vmem>>, vector<32x768xf32>,
    %c0_134 = arith.constant 0 : index
    %c147_135 = arith.constant 147 : index
    %103 = vector.load %arg15[%c0_134, %c147_135] : memref<32x1024xf32, #tpu.memory_space<vmem>>, vector<32x768xf32>
    %c256_136 = arith.constant 256 : index
    %c0_137 = arith.constant 0 : index
    %104 = vector.load %arg17[%c256_136, %c0_137] : memref<288x768xf32, #tpu.memory_space<vmem>>, vector<32x768xf32>
    tpu.vector_store %arg17[%c256_136, %c0_137], %103 {strides = array<i32>} : memref<288x768xf32, #tpu.memory_space<vmem>>, vector<32x768xf32>,
    %c0_138 = arith.constant 0 : index
    %c0_139 = arith.constant 0 : index
    %105 = vector.load %arg10[%c0_138, %c0_139] : memref<32x288xf32, #tpu.memory_space<vmem>>, vector<32x288xf32>
    %c0_140 = arith.constant 0 : index
    %c0_141 = arith.constant 0 : index
    %106 = vector.load %arg17[%c0_140, %c0_141] : memref<288x768xf32, #tpu.memory_space<vmem>>, vector<288x768xf32>
    %cst_142 = arith.constant dense<0.000000e+00> : vector<32x768xf32>
    %107 = tpu.matmul %105, %106, %cst_142 {dimension_numbers = #tpu.dot_dimension_numbers<[1], [0], [0], [1], [0, 0, 1, 1], [], []>} : vector<32x288xf32>, vector<288x768xf32>, vector<32x768xf32> -> vector<32x768xf32>
    %c0_143 = arith.constant 0 : index
    %c0_144 = arith.constant 0 : index
    %108 = vector.load %arg11[%c0_143, %c0_144] : memref<32x1xf32, #tpu.memory_space<vmem>>, vector<32x1xf32>
    %109 = vector.broadcast %108 : vector<32x1xf32> to vector<32x768xf32>
    %110 = arith.mulf %107, %109 : vector<32x768xf32>
    %c0_145 = arith.constant 0 : index
    %c0_146 = arith.constant 0 : index
    %111 = vector.load %arg12[%c0_145, %c0_146] : memref<32x1xf32, #tpu.memory_space<vmem>>, vector<32x1xf32>
    %112 = vector.broadcast %111 : vector<32x1xf32> to vector<32x768xf32>
    %113 = arith.addf %110, %112 : vector<32x768xf32>
    %cst_147 = arith.constant 0.000000e+00 : f32
    %114 = vector.broadcast %cst_147 : f32 to vector<32x768xf32>
    %115 = arith.maximumf %113, %114 : vector<32x768xf32>
    %116 = vector.broadcast %0 : vector<1x768xf32> to vector<32x768xf32>
    %117 = arith.mulf %115, %116 : vector<32x768xf32>
    %c0_148 = arith.constant 0 : index
    %c128_149 = arith.constant 128 : index
    %118 = vector.load %arg16[%c0_148, %c128_149] : memref<32x1024xf32, #tpu.memory_space<vmem>>, vector<32x768xf32>
    tpu.vector_store %arg16[%c0_148, %c128_149], %117 {strides = array<i32>} : memref<32x1024xf32, #tpu.memory_space<vmem>>, vector<32x768xf32>,
    %c0_150 = arith.constant 0 : index
    %c109_151 = arith.constant 109 : index
    %119 = vector.load %arg16[%c0_150, %c109_151] : memref<32x1024xf32, #tpu.memory_space<vmem>>, vector<32x768xf32>
    %c0_152 = arith.constant 0 : index
    %c0_153 = arith.constant 0 : index
    %120 = vector.load %arg17[%c0_152, %c0_153] : memref<288x768xf32, #tpu.memory_space<vmem>>, vector<32x768xf32>
    tpu.vector_store %arg17[%c0_152, %c0_153], %119 {strides = array<i32>} : memref<288x768xf32, #tpu.memory_space<vmem>>, vector<32x768xf32>,
    %c0_154 = arith.constant 0 : index
    %c110_155 = arith.constant 110 : index
    %121 = vector.load %arg16[%c0_154, %c110_155] : memref<32x1024xf32, #tpu.memory_space<vmem>>, vector<32x768xf32>
    %c32_156 = arith.constant 32 : index
    %c0_157 = arith.constant 0 : index
    %122 = vector.load %arg17[%c32_156, %c0_157] : memref<288x768xf32, #tpu.memory_space<vmem>>, vector<32x768xf32>
    tpu.vector_store %arg17[%c32_156, %c0_157], %121 {strides = array<i32>} : memref<288x768xf32, #tpu.memory_space<vmem>>, vector<32x768xf32>,
    %c0_158 = arith.constant 0 : index
    %c111_159 = arith.constant 111 : index
    %123 = vector.load %arg16[%c0_158, %c111_159] : memref<32x1024xf32, #tpu.memory_space<vmem>>, vector<32x768xf32>
    %c64_160 = arith.constant 64 : index
    %c0_161 = arith.constant 0 : index
    %124 = vector.load %arg17[%c64_160, %c0_161] : memref<288x768xf32, #tpu.memory_space<vmem>>, vector<32x768xf32>
    tpu.vector_store %arg17[%c64_160, %c0_161], %123 {strides = array<i32>} : memref<288x768xf32, #tpu.memory_space<vmem>>, vector<32x768xf32>,
    %c0_162 = arith.constant 0 : index
    %c127_163 = arith.constant 127 : index
    %125 = vector.load %arg16[%c0_162, %c127_163] : memref<32x1024xf32, #tpu.memory_space<vmem>>, vector<32x768xf32>
    %c96_164 = arith.constant 96 : index
    %c0_165 = arith.constant 0 : index
    %126 = vector.load %arg17[%c96_164, %c0_165] : memref<288x768xf32, #tpu.memory_space<vmem>>, vector<32x768xf32>
    tpu.vector_store %arg17[%c96_164, %c0_165], %125 {strides = array<i32>} : memref<288x768xf32, #tpu.memory_space<vmem>>, vector<32x768xf32>,
    %c0_166 = arith.constant 0 : index
    %c128_167 = arith.constant 128 : index
    %127 = vector.load %arg16[%c0_166, %c128_167] : memref<32x1024xf32, #tpu.memory_space<vmem>>, vector<32x768xf32>
    %c128_168 = arith.constant 128 : index
    %c0_169 = arith.constant 0 : index
    %128 = vector.load %arg17[%c128_168, %c0_169] : memref<288x768xf32, #tpu.memory_space<vmem>>, vector<32x768xf32>
    tpu.vector_store %arg17[%c128_168, %c0_169], %127 {strides = array<i32>} : memref<288x768xf32, #tpu.memory_space<vmem>>, vector<32x768xf32>,
    %c0_170 = arith.constant 0 : index
    %c129_171 = arith.constant 129 : index
    %129 = vector.load %arg16[%c0_170, %c129_171] : memref<32x1024xf32, #tpu.memory_space<vmem>>, vector<32x768xf32>
    %c160_172 = arith.constant 160 : index
    %c0_173 = arith.constant 0 : index
    %130 = vector.load %arg17[%c160_172, %c0_173] : memref<288x768xf32, #tpu.memory_space<vmem>>, vector<32x768xf32>
    tpu.vector_store %arg17[%c160_172, %c0_173], %129 {strides = array<i32>} : memref<288x768xf32, #tpu.memory_space<vmem>>, vector<32x768xf32>,
    %c0_174 = arith.constant 0 : index
    %c145_175 = arith.constant 145 : index
    %131 = vector.load %arg16[%c0_174, %c145_175] : memref<32x1024xf32, #tpu.memory_space<vmem>>, vector<32x768xf32>
    %c192_176 = arith.constant 192 : index
    %c0_177 = arith.constant 0 : index
    %132 = vector.load %arg17[%c192_176, %c0_177] : memref<288x768xf32, #tpu.memory_space<vmem>>, vector<32x768xf32>
    tpu.vector_store %arg17[%c192_176, %c0_177], %131 {strides = array<i32>} : memref<288x768xf32, #tpu.memory_space<vmem>>, vector<32x768xf32>,
    %c0_178 = arith.constant 0 : index
    %c146_179 = arith.constant 146 : index
    %133 = vector.load %arg16[%c0_178, %c146_179] : memref<32x1024xf32, #tpu.memory_space<vmem>>, vector<32x768xf32>
    %c224_180 = arith.constant 224 : index
    %c0_181 = arith.constant 0 : index
    %134 = vector.load %arg17[%c224_180, %c0_181] : memref<288x768xf32, #tpu.memory_space<vmem>>, vector<32x768xf32>
    tpu.vector_store %arg17[%c224_180, %c0_181], %133 {strides = array<i32>} : memref<288x768xf32, #tpu.memory_space<vmem>>, vector<32x768xf32>,
    %c0_182 = arith.constant 0 : index
    %c147_183 = arith.constant 147 : index
    %135 = vector.load %arg16[%c0_182, %c147_183] : memref<32x1024xf32, #tpu.memory_space<vmem>>, vector<32x768xf32>
    %c256_184 = arith.constant 256 : index
    %c0_185 = arith.constant 0 : index
    %136 = vector.load %arg17[%c256_184, %c0_185] : memref<288x768xf32, #tpu.memory_space<vmem>>, vector<32x768xf32>
    tpu.vector_store %arg17[%c256_184, %c0_185], %135 {strides = array<i32>} : memref<288x768xf32, #tpu.memory_space<vmem>>, vector<32x768xf32>,
    %c0_186 = arith.constant 0 : index
    %c0_187 = arith.constant 0 : index
    %137 = vector.load %arg13[%c0_186, %c0_187] : memref<4x288xf32, #tpu.memory_space<vmem>>, vector<4x288xf32>
    %c0_188 = arith.constant 0 : index
    %c0_189 = arith.constant 0 : index
    %138 = vector.load %arg17[%c0_188, %c0_189] : memref<288x768xf32, #tpu.memory_space<vmem>>, vector<288x768xf32>
    %cst_190 = arith.constant dense<0.000000e+00> : vector<4x768xf32>
    %139 = tpu.matmul %137, %138, %cst_190 {dimension_numbers = #tpu.dot_dimension_numbers<[1], [0], [0], [1], [0, 0, 1, 1], [], []>} : vector<4x288xf32>, vector<288x768xf32>, vector<4x768xf32> -> vector<4x768xf32>
    %140 = vector.broadcast %0 : vector<1x768xf32> to vector<4x768xf32>
    %141 = arith.mulf %139, %140 : vector<4x768xf32>
    %c0_191 = arith.constant 0 : index
    %c0_192 = arith.constant 0 : index
    %142 = vector.load %arg14[%c0_191, %c0_192] : memref<4x768xf32, #tpu.memory_space<vmem>>, vector<4x768xf32>
    tpu.vector_store %arg14[%c0_191, %c0_192], %141 {strides = array<i32>} : memref<4x768xf32, #tpu.memory_space<vmem>>, vector<4x768xf32>,
    return
  }
}

</mosaic_0001>

<llo_original>
// kernel: modified_dncnn_forward.1
$region0: #{modified_dncnn_forward.1}
  #allocation0 [shape = 'u32[]', space=smem, size = 0x4, offset = 0x4, fixed_abs, tag = 'smem constant byte address 0x4 - core index']
  #allocation1 [shape = 'u32[144,128]{1,0:T(1,128)}', space=vmem, size = 0x12000, scoped, tag = 'internal scratch']
  #allocation2 [shape = 'f32[32,1024]{1,0:T(8,128)}', space=vmem, size = 0x20000, scoped, tag = 'scratch operand']
  #allocation3 [shape = 'f32[32,1024]{1,0:T(8,128)}', space=vmem, size = 0x20000, scoped, tag = 'scratch operand']
  #allocation4 [shape = 'f32[288,768]{1,0:T(8,128)}', space=vmem, size = 0xd8000, scoped, tag = 'scratch operand']
  %s0 = inlined_call_operand.vmem [shape: f32[4,768], index: 0, kind: input, shape index: {}]
  %s1 = inlined_call_operand.vmem [shape: f32[1,768], index: 1, kind: input, shape index: {}]
  %s2 = inlined_call_operand.vmem [shape: f32[16,4], index: 2, kind: input, shape index: {}]
  %s3 = inlined_call_operand.vmem [shape: f32[16,1], index: 3, kind: input, shape index: {}]
  %s4 = inlined_call_operand.vmem [shape: f32[16,16], index: 4, kind: input, shape index: {}]
  %s5 = inlined_call_operand.vmem [shape: f32[16,1], index: 5, kind: input, shape index: {}]
  %s6 = inlined_call_operand.vmem [shape: f32[32,144], index: 6, kind: input, shape index: {}]
  %s7 = inlined_call_operand.vmem [shape: f32[32,288], index: 7, kind: input, shape index: {}]
  %s8 = inlined_call_operand.vmem [shape: f32[32,1], index: 8, kind: input, shape index: {}]
  %s9 = inlined_call_operand.vmem [shape: f32[32,1], index: 9, kind: input, shape index: {}]
  %s10 = inlined_call_operand.vmem [shape: f32[32,288], index: 10, kind: input, shape index: {}]
  %s11 = inlined_call_operand.vmem [shape: f32[32,1], index: 11, kind: input, shape index: {}]
  %s12 = inlined_call_operand.vmem [shape: f32[32,1], index: 12, kind: input, shape index: {}]
  %s13 = inlined_call_operand.vmem [shape: f32[4,288], index: 13, kind: input, shape index: {}]
  %s14 = inlined_call_operand.vmem [shape: f32[4,768], index: 14, kind: output, shape index: {}]
  %s15 = sld [smem:[#allocation0]]
  $region66: #{modified_dncnn_forward.1} parent=0
    _
  %s17 = ssub.s32 1, %s15
  %s18 = scalar_select 0, %s17, %s15
  // Predicated region
  $region2: #{modified_dncnn_forward.1} parent=0 // pred_check
    _
  $region3: #{modified_dncnn_forward.1} parent=0 // pred_check_branch
    %20 = sbr.rel (0) target = $region5
  $region4: #{modified_dncnn_forward.1} parent=0 // pred_region
    _
  $region5: #{modified_dncnn_forward.1} parent=0 // pred_fallthru
    _
  // Predicated region
  $region6: #{modified_dncnn_forward.1} parent=0 // pred_check
    _
  $region7: #{modified_dncnn_forward.1} parent=0 // pred_check_branch
    %22 = sbr.rel (0) target = $region9
  $region8: #{modified_dncnn_forward.1} parent=0 // pred_region
    _
  $region9: #{modified_dncnn_forward.1} parent=0 // pred_fallthru
    _
  // Predicated region
  $region10: #{modified_dncnn_forward.1} parent=0 // pred_check
    _
  $region11: #{modified_dncnn_forward.1} parent=0 // pred_check_branch
    %24 = sbr.rel (0) target = $region13
  $region12: #{modified_dncnn_forward.1} parent=0 // pred_region
    _
  $region13: #{modified_dncnn_forward.1} parent=0 // pred_fallthru
    _
  // Predicated region
  $region14: #{modified_dncnn_forward.1} parent=0 // pred_check
    _
  $region15: #{modified_dncnn_forward.1} parent=0 // pred_check_branch
    %26 = sbr.rel (0) target = $region17
  $region16: #{modified_dncnn_forward.1} parent=0 // pred_region
    _
  $region17: #{modified_dncnn_forward.1} parent=0 // pred_fallthru
    _
  // Predicated region
  $region18: #{modified_dncnn_forward.1} parent=0 // pred_check
    _
  $region19: #{modified_dncnn_forward.1} parent=0 // pred_check_branch
    %28 = sbr.rel (0) target = $region21
  $region20: #{modified_dncnn_forward.1} parent=0 // pred_region
    _
  $region21: #{modified_dncnn_forward.1} parent=0 // pred_fallthru
    _
  // Predicated region
  $region22: #{modified_dncnn_forward.1} parent=0 // pred_check
    _
  $region23: #{modified_dncnn_forward.1} parent=0 // pred_check_branch
    %30 = sbr.rel (0) target = $region25
  $region24: #{modified_dncnn_forward.1} parent=0 // pred_region
    _
  $region25: #{modified_dncnn_forward.1} parent=0 // pred_fallthru
    _
  // Predicated region
  $region26: #{modified_dncnn_forward.1} parent=0 // pred_check
    _
  $region27: #{modified_dncnn_forward.1} parent=0 // pred_check_branch
    %32 = sbr.rel (0) target = $region29
  $region28: #{modified_dncnn_forward.1} parent=0 // pred_region
    _
  $region29: #{modified_dncnn_forward.1} parent=0 // pred_fallthru
    _
  // Predicated region
  $region30: #{modified_dncnn_forward.1} parent=0 // pred_check
    _
  $region31: #{modified_dncnn_forward.1} parent=0 // pred_check_branch
    %34 = sbr.rel (0) target = $region33
  $region32: #{modified_dncnn_forward.1} parent=0 // pred_region
    _
  $region33: #{modified_dncnn_forward.1} parent=0 // pred_fallthru
    _
  // Predicated region
  $region34: #{modified_dncnn_forward.1} parent=0 // pred_check
    _
  $region35: #{modified_dncnn_forward.1} parent=0 // pred_check_branch
    %36 = sbr.rel (0) target = $region37
  $region36: #{modified_dncnn_forward.1} parent=0 // pred_region
    _
  $region37: #{modified_dncnn_forward.1} parent=0 // pred_fallthru
    _
  // Predicated region
  $region38: #{modified_dncnn_forward.1} parent=0 // pred_check
    _
  $region39: #{modified_dncnn_forward.1} parent=0 // pred_check_branch
    %38 = sbr.rel (0) target = $region41
  $region40: #{modified_dncnn_forward.1} parent=0 // pred_region
    _
  $region41: #{modified_dncnn_forward.1} parent=0 // pred_fallthru
    _
  // Predicated region
  $region42: #{modified_dncnn_forward.1} parent=0 // pred_check
    _
  $region43: #{modified_dncnn_forward.1} parent=0 // pred_check_branch
    %40 = sbr.rel (0) target = $region45
  $region44: #{modified_dncnn_forward.1} parent=0 // pred_region
    _
  $region45: #{modified_dncnn_forward.1} parent=0 // pred_fallthru
    _
  // Predicated region
  $region46: #{modified_dncnn_forward.1} parent=0 // pred_check
    _
  $region47: #{modified_dncnn_forward.1} parent=0 // pred_check_branch
    %42 = sbr.rel (0) target = $region49
  $region48: #{modified_dncnn_forward.1} parent=0 // pred_region
    _
  $region49: #{modified_dncnn_forward.1} parent=0 // pred_fallthru
    _
  // Predicated region
  $region50: #{modified_dncnn_forward.1} parent=0 // pred_check
    _
  $region51: #{modified_dncnn_forward.1} parent=0 // pred_check_branch
    %44 = sbr.rel (0) target = $region53
  $region52: #{modified_dncnn_forward.1} parent=0 // pred_region
    _
  $region53: #{modified_dncnn_forward.1} parent=0 // pred_fallthru
    _
  // Predicated region
  $region54: #{modified_dncnn_forward.1} parent=0 // pred_check
    _
  $region55: #{modified_dncnn_forward.1} parent=0 // pred_check_branch
    %46 = sbr.rel (0) target = $region57
  $region56: #{modified_dncnn_forward.1} parent=0 // pred_region
    _
  $region57: #{modified_dncnn_forward.1} parent=0 // pred_fallthru
    _
  %v47 = vld [vmem:[%s1] sm:$0x3f]
  %48 = vst [vmem:[#allocation2] sm:$0xff] 0.0
  %49 = vst [vmem:[#allocation2 + $0x8] sm:$0xff] 0.0
  %50 = vst [vmem:[#allocation2 + $0x10] sm:$0xff] 0.0
  %51 = vst [vmem:[#allocation2 + $0x18] sm:$0xff] 0.0
  %52 = vst [vmem:[#allocation2 + $0x20] sm:$0xff] 0.0
  %53 = vst [vmem:[#allocation2 + $0x28] sm:$0xff] 0.0
  %54 = vst [vmem:[#allocation2 + $0x30] sm:$0xff] 0.0
  %55 = vst [vmem:[#allocation2 + $0x38] sm:$0xff] 0.0
  %56 = vst [vmem:[#allocation2 + $0x40] sm:$0xff] 0.0
  %57 = vst [vmem:[#allocation2 + $0x48] sm:$0xff] 0.0
  %58 = vst [vmem:[#allocation2 + $0x50] sm:$0xff] 0.0
  %59 = vst [vmem:[#allocation2 + $0x58] sm:$0xff] 0.0
  %60 = vst [vmem:[#allocation2 + $0x60] sm:$0xff] 0.0
  %61 = vst [vmem:[#allocation2 + $0x68] sm:$0xff] 0.0
  %62 = vst [vmem:[#allocation2 + $0x70] sm:$0xff] 0.0
  %63 = vst [vmem:[#allocation2 + $0x78] sm:$0xff] 0.0
  %64 = vst [vmem:[#allocation2 + $0x80] sm:$0xff] 0.0
  %65 = vst [vmem:[#allocation2 + $0x88] sm:$0xff] 0.0
  %66 = vst [vmem:[#allocation2 + $0x90] sm:$0xff] 0.0
  %67 = vst [vmem:[#allocation2 + $0x98] sm:$0xff] 0.0
  %68 = vst [vmem:[#allocation2 + $0xa0] sm:$0xff] 0.0
  %69 = vst [vmem:[#allocation2 + $0xa8] sm:$0xff] 0.0
  %70 = vst [vmem:[#allocation2 + $0xb0] sm:$0xff] 0.0
  %71 = vst [vmem:[#allocation2 + $0xb8] sm:$0xff] 0.0
  %72 = vst [vmem:[#allocation2 + $0xc0] sm:$0xff] 0.0
  %73 = vst [vmem:[#allocation2 + $0xc8] sm:$0xff] 0.0
  %74 = vst [vmem:[#allocation2 + $0xd0] sm:$0xff] 0.0
  %75 = vst [vmem:[#allocation2 + $0xd8] sm:$0xff] 0.0
  %76 = vst [vmem:[#allocation2 + $0xe0] sm:$0xff] 0.0
  %77 = vst [vmem:[#allocation2 + $0xe8] sm:$0xff] 0.0
  %78 = vst [vmem:[#allocation2 + $0xf0] sm:$0xff] 0.0
  %79 = vst [vmem:[#allocation2 + $0xf8] sm:$0xff] 0.0
  %80 = vst [vmem:[#allocation3] sm:$0xff] 0.0
  %81 = vst [vmem:[#allocation3 + $0x8] sm:$0xff] 0.0
  %82 = vst [vmem:[#allocation3 + $0x10] sm:$0xff] 0.0
  %83 = vst [vmem:[#allocation3 + $0x18] sm:$0xff] 0.0
  %84 = vst [vmem:[#allocation3 + $0x20] sm:$0xff] 0.0
  %85 = vst [vmem:[#allocation3 + $0x28] sm:$0xff] 0.0
  %86 = vst [vmem:[#allocation3 + $0x30] sm:$0xff] 0.0
  %87 = vst [vmem:[#allocation3 + $0x38] sm:$0xff] 0.0
  %88 = vst [vmem:[#allocation3 + $0x40] sm:$0xff] 0.0
  %89 = vst [vmem:[#allocation3 + $0x48] sm:$0xff] 0.0
  %90 = vst [vmem:[#allocation3 + $0x50] sm:$0xff] 0.0
  %91 = vst [vmem:[#allocation3 + $0x58] sm:$0xff] 0.0
  %92 = vst [vmem:[#allocation3 + $0x60] sm:$0xff] 0.0
  %93 = vst [vmem:[#allocation3 + $0x68] sm:$0xff] 0.0
  %94 = vst [vmem:[#allocation3 + $0x70] sm:$0xff] 0.0
  %95 = vst [vmem:[#allocation3 + $0x78] sm:$0xff] 0.0
  %96 = vst [vmem:[#allocation3 + $0x80] sm:$0xff] 0.0
  %97 = vst [vmem:[#allocation3 + $0x88] sm:$0xff] 0.0
  %98 = vst [vmem:[#allocation3 + $0x90] sm:$0xff] 0.0
  %99 = vst [vmem:[#allocation3 + $0x98] sm:$0xff] 0.0
  %100 = vst [vmem:[#allocation3 + $0xa0] sm:$0xff] 0.0
  %101 = vst [vmem:[#allocation3 + $0xa8] sm:$0xff] 0.0
  %102 = vst [vmem:[#allocation3 + $0xb0] sm:$0xff] 0.0
  %103 = vst [vmem:[#allocation3 + $0xb8] sm:$0xff] 0.0
  %104 = vst [vmem:[#allocation3 + $0xc0] sm:$0xff] 0.0
  %105 = vst [vmem:[#allocation3 + $0xc8] sm:$0xff] 0.0
  %106 = vst [vmem:[#allocation3 + $0xd0] sm:$0xff] 0.0
  %107 = vst [vmem:[#allocation3 + $0xd8] sm:$0xff] 0.0
  %108 = vst [vmem:[#allocation3 + $0xe0] sm:$0xff] 0.0
  %109 = vst [vmem:[#allocation3 + $0xe8] sm:$0xff] 0.0
  %110 = vst [vmem:[#allocation3 + $0xf0] sm:$0xff] 0.0
  %111 = vst [vmem:[#allocation3 + $0xf8] sm:$0xff] 0.0
  %v112 = vld [vmem:[%s0] sm:$0xff]
  %v113 = vld [vmem:[%s0 + $0x8] sm:$0xff]
  %v114 = vld [vmem:[%s0 + $0x10] sm:$0xff]
  %v118 = vcombine.high %v112, %v112
  %v119 = vcombine.high %v113, %v113
  %v120 = vcombine.high %v114, %v114
  %124 = vst [vmem:[#allocation2 + $0x8] sm:$0xf] %v112
  %125 = vst [vmem:[#allocation2 + $0x10] sm:$0xf] %v118
  %126 = vst [vmem:[#allocation2 + $0x18] sm:$0xf] %v113
  %127 = vst [vmem:[#allocation2 + $0x20] sm:$0xf] %v119
  %128 = vst [vmem:[#allocation2 + $0x28] sm:$0xf] %v114
  %129 = vst [vmem:[#allocation2 + $0x30] sm:$0xf] %v120
  %v130 = vld [vmem:[#allocation2 + $0x8] sm:$0xf]
  %v131 = vld [vmem:[#allocation2 + $0x10] sm:$0xf]
  %v132 = vld [vmem:[#allocation2 + $0x18] sm:$0xf]
  %v133 = vld [vmem:[#allocation2 + $0x20] sm:$0xf]
  %v134 = vld [vmem:[#allocation2 + $0x28] sm:$0xf]
  %v135 = vld [vmem:[#allocation2 + $0x30] sm:$0xf]
  %v136 = vld [vmem:[%s2] sm:$0xff]
  %v137 = vld [vmem:[%s2 + $0x8] sm:$0xff]
  %v138 = vld [vmem:[%s3] sm:$0xff]
  %v139 = vld [vmem:[%s3 + $0x8] sm:$0xff]
  %141 = vset.pattern.permute.xlu0 0
  %142 = vperm.xlu0 %141, %v138
  %v143 = vpop.permute.xlu0 %142
  %146 = vset.pattern.permute.xlu0 0
  %147 = vperm.xlu0 %146, %v139
  %v148 = vpop.permute.xlu0 %147
  %vm150 = vcmask 31744
  %v152 = vsel %vm150, %v136, 0
  %v155 = vsel %vm150, %v137, 0
  %vm157 = vcmask 1043456
  %v159 = vsel %vm157, %v130, 0
  %v162 = vsel %vm157, %v131, 0
  %v165 = vsel %vm157, %v132, 0
  %v168 = vsel %vm157, %v133, 0
  %v171 = vsel %vm157, %v134, 0
  %v174 = vsel %vm157, %v135, 0
  %176 = vmatprep.subr.mxu0 %v162
  %177 = vmatpush1.msra.mxu0 %v159
  %178 = vmatprep.subr.mxu0 0.0
  %179 = vmatpush1.msra.mxu0 0.0
  %180 = vmatprep.subr.mxu0 0.0
  %181 = vmatpush1.msra.mxu0 0.0
  %182 = vmatprep.subr.mxu0 0.0
  %183 = vmatpush1.msra.mxu0 0.0
  %184 = vmatprep.subr.mxu0 0.0
  %185 = vmatpush1.msra.mxu0 0.0
  %186 = vmatprep.subr.mxu0 0.0
  %187 = vmatpush1.msra.mxu0 0.0
  %188 = vmatprep.subr.mxu0 0.0
  %189 = vmatpush1.msra.mxu0 0.0
  %190 = vmatprep.subr.mxu0 0.0
  %191 = vmatpush1.msra.mxu0 0.0
  %192 = vmatprep.subr.mxu0 0.0
  %193 = vmatpush1.msra.mxu0 0.0
  %194 = vmatprep.subr.mxu0 0.0
  %195 = vmatpush1.msra.mxu0 0.0
  %196 = vmatprep.subr.mxu0 0.0
  %197 = vmatpush1.msra.mxu0 0.0
  %198 = vmatprep.subr.mxu0 0.0
  %199 = vmatpush1.msra.mxu0 0.0
  %200 = vmatprep.subr.mxu0 0.0
  %201 = vmatpush1.msra.mxu0 0.0
  %202 = vmatprep.subr.mxu0 0.0
  %203 = vmatpush1.msra.mxu0 0.0
  %204 = vmatprep.subr.mxu0 0.0
  %205 = vmatpush1.msra.mxu0 0.0
  %206 = vmatprep.subr.mxu0 0.0
  %207 = vmatpush1.msra.mxu0 0.0
  %208 = vmatprep.subr.mxu0 0.0
  %209 = vmatpush1.msra.mxu0 0.0
  %210 = vmatprep.subr.mxu0 0.0
  %211 = vmatpush1.msra.mxu0 0.0
  %212 = vmatprep.subr.mxu0 0.0
  %213 = vmatpush1.msra.mxu0 0.0
  %214 = vmatprep.subr.mxu0 0.0
  %215 = vmatpush1.msra.mxu0 0.0
  %216 = vmatprep.subr.mxu0 0.0
  %217 = vmatpush1.msra.mxu0 0.0
  %218 = vmatprep.subr.mxu0 0.0
  %219 = vmatpush1.msra.mxu0 0.0
  %220 = vmatprep.subr.mxu0 0.0
  %221 = vmatpush1.msra.mxu0 0.0
  %222 = vmatprep.subr.mxu0 0.0
  %223 = vmatpush1.msra.mxu0 0.0
  %224 = vmatprep.subr.mxu0 0.0
  %225 = vmatpush1.msra.mxu0 0.0
  %226 = vmatprep.subr.mxu0 0.0
  %227 = vmatpush1.msra.mxu0 0.0
  %228 = vmatprep.subr.mxu0 0.0
  %229 = vmatpush1.msra.mxu0 0.0
  %230 = vmatprep.subr.mxu0 0.0
  %231 = vmatpush1.msra.mxu0 0.0
  %232 = vmatprep.subr.mxu0 0.0
  %233 = vmatpush1.msra.mxu0 0.0
  %234 = vmatprep.subr.mxu0 0.0
  %235 = vmatpush1.msra.mxu0 0.0
  %236 = vmatprep.subr.mxu0 0.0
  %237 = vmatpush1.msra.mxu0 0.0
  %238 = vmatprep.subr.mxu0 0.0
  %239 = vmatpush1.msra.mxu0 0.0
  %240 = vmatprep.mubr.f32.mxu0 0.0
  %241 = vmatmul.mubr.f32.gmra.mrb[0].mxu0 %v152
  %v242 = vpop.f32.mrb[0].mxu0
  %v243 = vadd.f32 %v143, %v242
  %v244 = vpop.f32.mrb[0].mxu0
  %v245 = vadd.f32 %v143, %v244
  %246 = vmatprep.mubr.f32.mxu0 0.0
  %247 = vmatmul.mubr.f32.gmra.mrb[0].mxu0 %v155
  %v248 = vpop.f32.mrb[0].mxu0
  %v249 = vadd.f32 %v148, %v248
  %v250 = vpop.f32.mrb[0].mxu0
  %v251 = vadd.f32 %v148, %v250
  %252 = vdwg.mxu0
  %253 = vmatprep.subr.mxu0 %v168
  %254 = vmatpush1.msra.mxu0 %v165
  %255 = vmatprep.subr.mxu0 0.0
  %256 = vmatpush1.msra.mxu0 0.0
  %257 = vmatprep.subr.mxu0 0.0
  %258 = vmatpush1.msra.mxu0 0.0
  %259 = vmatprep.subr.mxu0 0.0
  %260 = vmatpush1.msra.mxu0 0.0
  %261 = vmatprep.subr.mxu0 0.0
  %262 = vmatpush1.msra.mxu0 0.0
  %263 = vmatprep.subr.mxu0 0.0
  %264 = vmatpush1.msra.mxu0 0.0
  %265 = vmatprep.subr.mxu0 0.0
  %266 = vmatpush1.msra.mxu0 0.0
  %267 = vmatprep.subr.mxu0 0.0
  %268 = vmatpush1.msra.mxu0 0.0
  %269 = vmatprep.subr.mxu0 0.0
  %270 = vmatpush1.msra.mxu0 0.0
  %271 = vmatprep.subr.mxu0 0.0
  %272 = vmatpush1.msra.mxu0 0.0
  %273 = vmatprep.subr.mxu0 0.0
  %274 = vmatpush1.msra.mxu0 0.0
  %275 = vmatprep.subr.mxu0 0.0
  %276 = vmatpush1.msra.mxu0 0.0
  %277 = vmatprep.subr.mxu0 0.0
  %278 = vmatpush1.msra.mxu0 0.0
  %279 = vmatprep.subr.mxu0 0.0
  %280 = vmatpush1.msra.mxu0 0.0
  %281 = vmatprep.subr.mxu0 0.0
  %282 = vmatpush1.msra.mxu0 0.0
  %283 = vmatprep.subr.mxu0 0.0
  %284 = vmatpush1.msra.mxu0 0.0
  %285 = vmatprep.subr.mxu0 0.0
  %286 = vmatpush1.msra.mxu0 0.0
  %287 = vmatprep.subr.mxu0 0.0
  %288 = vmatpush1.msra.mxu0 0.0
  %289 = vmatprep.subr.mxu0 0.0
  %290 = vmatpush1.msra.mxu0 0.0
  %291 = vmatprep.subr.mxu0 0.0
  %292 = vmatpush1.msra.mxu0 0.0
  %293 = vmatprep.subr.mxu0 0.0
  %294 = vmatpush1.msra.mxu0 0.0
  %295 = vmatprep.subr.mxu0 0.0
  %296 = vmatpush1.msra.mxu0 0.0
  %297 = vmatprep.subr.mxu0 0.0
  %298 = vmatpush1.msra.mxu0 0.0
  %299 = vmatprep.subr.mxu0 0.0
  %300 = vmatpush1.msra.mxu0 0.0
  %301 = vmatprep.subr.mxu0 0.0
  %302 = vmatpush1.msra.mxu0 0.0
  %303 = vmatprep.subr.mxu0 0.0
  %304 = vmatpush1.msra.mxu0 0.0
  %305 = vmatprep.subr.mxu0 0.0
  %306 = vmatpush1.msra.mxu0 0.0
  %307 = vmatprep.subr.mxu0 0.0
  %308 = vmatpush1.msra.mxu0 0.0
  %309 = vmatprep.subr.mxu0 0.0
  %310 = vmatpush1.msra.mxu0 0.0
  %311 = vmatprep.subr.mxu0 0.0
  %312 = vmatpush1.msra.mxu0 0.0
  %313 = vmatprep.subr.mxu0 0.0
  %314 = vmatpush1.msra.mxu0 0.0
  %315 = vmatprep.subr.mxu0 0.0
  %316 = vmatpush1.msra.mxu0 0.0
  %317 = vmatprep.mubr.f32.mxu0 0.0
  %318 = vmatmul.mubr.f32.gmra.mrb[0].mxu0 %v152
  %v319 = vpop.f32.mrb[0].mxu0
  %v320 = vadd.f32 %v143, %v319
  %v321 = vpop.f32.mrb[0].mxu0
  %v322 = vadd.f32 %v143, %v321
  %323 = vmatprep.mubr.f32.mxu0 0.0
  %324 = vmatmul.mubr.f32.gmra.mrb[0].mxu0 %v155
  %v325 = vpop.f32.mrb[0].mxu0
  %v326 = vadd.f32 %v148, %v325
  %v327 = vpop.f32.mrb[0].mxu0
  %v328 = vadd.f32 %v148, %v327
  %329 = vdwg.mxu0
  %330 = vmatprep.subr.mxu0 %v174
  %331 = vmatpush1.msra.mxu0 %v171
  %332 = vmatprep.subr.mxu0 0.0
  %333 = vmatpush1.msra.mxu0 0.0
  %334 = vmatprep.subr.mxu0 0.0
  %335 = vmatpush1.msra.mxu0 0.0
  %336 = vmatprep.subr.mxu0 0.0
  %337 = vmatpush1.msra.mxu0 0.0
  %338 = vmatprep.subr.mxu0 0.0
  %339 = vmatpush1.msra.mxu0 0.0
  %340 = vmatprep.subr.mxu0 0.0
  %341 = vmatpush1.msra.mxu0 0.0
  %342 = vmatprep.subr.mxu0 0.0
  %343 = vmatpush1.msra.mxu0 0.0
  %344 = vmatprep.subr.mxu0 0.0
  %345 = vmatpush1.msra.mxu0 0.0
  %346 = vmatprep.subr.mxu0 0.0
  %347 = vmatpush1.msra.mxu0 0.0
  %348 = vmatprep.subr.mxu0 0.0
  %349 = vmatpush1.msra.mxu0 0.0
  %350 = vmatprep.subr.mxu0 0.0
  %351 = vmatpush1.msra.mxu0 0.0
  %352 = vmatprep.subr.mxu0 0.0
  %353 = vmatpush1.msra.mxu0 0.0
  %354 = vmatprep.subr.mxu0 0.0
  %355 = vmatpush1.msra.mxu0 0.0
  %356 = vmatprep.subr.mxu0 0.0
  %357 = vmatpush1.msra.mxu0 0.0
  %358 = vmatprep.subr.mxu0 0.0
  %359 = vmatpush1.msra.mxu0 0.0
  %360 = vmatprep.subr.mxu0 0.0
  %361 = vmatpush1.msra.mxu0 0.0
  %362 = vmatprep.subr.mxu0 0.0
  %363 = vmatpush1.msra.mxu0 0.0
  %364 = vmatprep.subr.mxu0 0.0
  %365 = vmatpush1.msra.mxu0 0.0
  %366 = vmatprep.subr.mxu0 0.0
  %367 = vmatpush1.msra.mxu0 0.0
  %368 = vmatprep.subr.mxu0 0.0
  %369 = vmatpush1.msra.mxu0 0.0
  %370 = vmatprep.subr.mxu0 0.0
  %371 = vmatpush1.msra.mxu0 0.0
  %372 = vmatprep.subr.mxu0 0.0
  %373 = vmatpush1.msra.mxu0 0.0
  %374 = vmatprep.subr.mxu0 0.0
  %375 = vmatpush1.msra.mxu0 0.0
  %376 = vmatprep.subr.mxu0 0.0
  %377 = vmatpush1.msra.mxu0 0.0
  %378 = vmatprep.subr.mxu0 0.0
  %379 = vmatpush1.msra.mxu0 0.0
  %380 = vmatprep.subr.mxu0 0.0
  %381 = vmatpush1.msra.mxu0 0.0
  %382 = vmatprep.subr.mxu0 0.0
  %383 = vmatpush1.msra.mxu0 0.0
  %384 = vmatprep.subr.mxu0 0.0
  %385 = vmatpush1.msra.mxu0 0.0
  %386 = vmatprep.subr.mxu0 0.0
  %387 = vmatpush1.msra.mxu0 0.0
  %388 = vmatprep.subr.mxu0 0.0
  %389 = vmatpush1.msra.mxu0 0.0
  %390 = vmatprep.subr.mxu0 0.0
  %391 = vmatpush1.msra.mxu0 0.0
  %392 = vmatprep.subr.mxu0 0.0
  %393 = vmatpush1.msra.mxu0 0.0
  %394 = vmatprep.mubr.f32.mxu0 0.0
  %395 = vmatmul.mubr.f32.gmra.mrb[0].mxu0 %v152
  %v396 = vpop.f32.mrb[0].mxu0
  %v397 = vadd.f32 %v143, %v396
  %v398 = vpop.f32.mrb[0].mxu0
  %v399 = vadd.f32 %v143, %v398
  %400 = vmatprep.mubr.f32.mxu0 0.0
  %401 = vmatmul.mubr.f32.gmra.mrb[0].mxu0 %v155
  %v402 = vpop.f32.mrb[0].mxu0
  %v403 = vadd.f32 %v148, %v402
  %v404 = vpop.f32.mrb[0].mxu0
  %v405 = vadd.f32 %v148, %v404
  %406 = vdwg.mxu0
  %v407 = vmax.f32 %v243, 0.0
  %v408 = vmax.f32 %v245, 0.0
  %v409 = vmax.f32 %v320, 0.0
  %v410 = vmax.f32 %v322, 0.0
  %v411 = vmax.f32 %v397, 0.0
  %v412 = vmax.f32 %v399, 0.0
  %v413 = vmax.f32 %v249, 0.0
  %v414 = vmax.f32 %v251, 0.0
  %v415 = vmax.f32 %v326, 0.0
  %v416 = vmax.f32 %v328, 0.0
  %v417 = vmax.f32 %v403, 0.0
  %v418 = vmax.f32 %v405, 0.0
  %v420 = vlaneseq
  %v421 = vshrl.u32 %v420, 7
  %v422 = vsub.s32 0, %v421
  %v423 = vrot.slane %v47, %v422
  %v424 = vlaneseq
  %v425 = vshrl.u32 %v424, 7
  %v426 = vsub.s32 1, %v425
  %v427 = vrot.slane %v47, %v426
  %v428 = vlaneseq
  %v429 = vshrl.u32 %v428, 7
  %v430 = vsub.s32 2, %v429
  %v431 = vrot.slane %v47, %v430
  %v432 = vlaneseq
  %v433 = vshrl.u32 %v432, 7
  %v434 = vsub.s32 3, %v433
  %v435 = vrot.slane %v47, %v434
  %v436 = vlaneseq
  %v437 = vshrl.u32 %v436, 7
  %v438 = vsub.s32 4, %v437
  %v439 = vrot.slane %v47, %v438
  %v440 = vlaneseq
  %v441 = vshrl.u32 %v440, 7
  %v442 = vsub.s32 5, %v441
  %v443 = vrot.slane %v47, %v442
  %v450 = vmul.f32 %v407, %v423
  %v451 = vmul.f32 %v408, %v427
  %v452 = vmul.f32 %v409, %v431
  %v453 = vmul.f32 %v410, %v435
  %v454 = vmul.f32 %v411, %v439
  %v455 = vmul.f32 %v412, %v443
  %v456 = vmul.f32 %v413, %v423
  %v457 = vmul.f32 %v414, %v427
  %v458 = vmul.f32 %v415, %v431
  %v459 = vmul.f32 %v416, %v435
  %v460 = vmul.f32 %v417, %v439
  %v461 = vmul.f32 %v418, %v443
  %462 = vst [vmem:[#allocation3 + $0x8] sm:$0xff] %v450
  %463 = vst [vmem:[#allocation3 + $0x10] sm:$0xff] %v451
  %464 = vst [vmem:[#allocation3 + $0x18] sm:$0xff] %v452
  %465 = vst [vmem:[#allocation3 + $0x20] sm:$0xff] %v453
  %466 = vst [vmem:[#allocation3 + $0x28] sm:$0xff] %v454
  %467 = vst [vmem:[#allocation3 + $0x30] sm:$0xff] %v455
  %468 = vst [vmem:[#allocation3 + $0x48] sm:$0xff] %v456
  %469 = vst [vmem:[#allocation3 + $0x50] sm:$0xff] %v457
  %470 = vst [vmem:[#allocation3 + $0x58] sm:$0xff] %v458
  %471 = vst [vmem:[#allocation3 + $0x60] sm:$0xff] %v459
  %472 = vst [vmem:[#allocation3 + $0x68] sm:$0xff] %v460
  %473 = vst [vmem:[#allocation3 + $0x70] sm:$0xff] %v461
  %v474 = vld [vmem:[#allocation3 + $0x8] sm:$0xff]
  %v475 = vld [vmem:[#allocation3 + $0x10] sm:$0xff]
  %v476 = vld [vmem:[#allocation3 + $0x18] sm:$0xff]
  %v477 = vld [vmem:[#allocation3 + $0x20] sm:$0xff]
  %v478 = vld [vmem:[#allocation3 + $0x28] sm:$0xff]
  %v479 = vld [vmem:[#allocation3 + $0x30] sm:$0xff]
  %v480 = vld [vmem:[#allocation3 + $0x48] sm:$0xff]
  %v481 = vld [vmem:[#allocation3 + $0x50] sm:$0xff]
  %v482 = vld [vmem:[#allocation3 + $0x58] sm:$0xff]
  %v483 = vld [vmem:[#allocation3 + $0x60] sm:$0xff]
  %v484 = vld [vmem:[#allocation3 + $0x68] sm:$0xff]
  %v485 = vld [vmem:[#allocation3 + $0x70] sm:$0xff]
  %v486 = vld [vmem:[%s4] sm:$0xff]
  %v487 = vld [vmem:[%s4 + $0x8] sm:$0xff]
  %v488 = vld [vmem:[%s5] sm:$0xff]
  %v489 = vld [vmem:[%s5 + $0x8] sm:$0xff]
  %491 = vset.pattern.permute.xlu0 0
  %492 = vperm.xlu0 %491, %v488
  %v493 = vpop.permute.xlu0 %492
  %496 = vset.pattern.permute.xlu0 0
  %497 = vperm.xlu0 %496, %v489
  %v498 = vpop.permute.xlu0 %497
  %vm500 = vcmask 130048
  %v502 = vsel %vm500, %v486, 0
  %v505 = vsel %vm500, %v487, 0
  %507 = vmatprep.subr.mxu0 %v475
  %508 = vmatpush1.msra.mxu0 %v474
  %509 = vmatprep.subr.mxu0 %v481
  %510 = vmatpush1.msra.mxu0 %v480
  %511 = vmatprep.subr.mxu0 0.0
  %512 = vmatpush1.msra.mxu0 0.0
  %513 = vmatprep.subr.mxu0 0.0
  %514 = vmatpush1.msra.mxu0 0.0
  %515 = vmatprep.subr.mxu0 0.0
  %516 = vmatpush1.msra.mxu0 0.0
  %517 = vmatprep.subr.mxu0 0.0
  %518 = vmatpush1.msra.mxu0 0.0
  %519 = vmatprep.subr.mxu0 0.0
  %520 = vmatpush1.msra.mxu0 0.0
  %521 = vmatprep.subr.mxu0 0.0
  %522 = vmatpush1.msra.mxu0 0.0
  %523 = vmatprep.subr.mxu0 0.0
  %524 = vmatpush1.msra.mxu0 0.0
  %525 = vmatprep.subr.mxu0 0.0
  %526 = vmatpush1.msra.mxu0 0.0
  %527 = vmatprep.subr.mxu0 0.0
  %528 = vmatpush1.msra.mxu0 0.0
  %529 = vmatprep.subr.mxu0 0.0
  %530 = vmatpush1.msra.mxu0 0.0
  %531 = vmatprep.subr.mxu0 0.0
  %532 = vmatpush1.msra.mxu0 0.0
  %533 = vmatprep.subr.mxu0 0.0
  %534 = vmatpush1.msra.mxu0 0.0
  %535 = vmatprep.subr.mxu0 0.0
  %536 = vmatpush1.msra.mxu0 0.0
  %537 = vmatprep.subr.mxu0 0.0
  %538 = vmatpush1.msra.mxu0 0.0
  %539 = vmatprep.subr.mxu0 0.0
  %540 = vmatpush1.msra.mxu0 0.0
  %541 = vmatprep.subr.mxu0 0.0
  %542 = vmatpush1.msra.mxu0 0.0
  %543 = vmatprep.subr.mxu0 0.0
  %544 = vmatpush1.msra.mxu0 0.0
  %545 = vmatprep.subr.mxu0 0.0
  %546 = vmatpush1.msra.mxu0 0.0
  %547 = vmatprep.subr.mxu0 0.0
  %548 = vmatpush1.msra.mxu0 0.0
  %549 = vmatprep.subr.mxu0 0.0
  %550 = vmatpush1.msra.mxu0 0.0
  %551 = vmatprep.subr.mxu0 0.0
  %552 = vmatpush1.msra.mxu0 0.0
  %553 = vmatprep.subr.mxu0 0.0
  %554 = vmatpush1.msra.mxu0 0.0
  %555 = vmatprep.subr.mxu0 0.0
  %556 = vmatpush1.msra.mxu0 0.0
  %557 = vmatprep.subr.mxu0 0.0
  %558 = vmatpush1.msra.mxu0 0.0
  %559 = vmatprep.subr.mxu0 0.0
  %560 = vmatpush1.msra.mxu0 0.0
  %561 = vmatprep.subr.mxu0 0.0
  %562 = vmatpush1.msra.mxu0 0.0
  %563 = vmatprep.subr.mxu0 0.0
  %564 = vmatpush1.msra.mxu0 0.0
  %565 = vmatprep.subr.mxu0 0.0
  %566 = vmatpush1.msra.mxu0 0.0
  %567 = vmatprep.subr.mxu0 0.0
  %568 = vmatpush1.msra.mxu0 0.0
  %569 = vmatprep.subr.mxu0 0.0
  %570 = vmatpush1.msra.mxu0 0.0
  %571 = vmatprep.mubr.f32.mxu0 0.0
  %572 = vmatmul.mubr.f32.gmra.mrb[0].mxu0 %v502
  %v573 = vpop.f32.mrb[0].mxu0
  %v574 = vadd.f32 %v493, %v573
  %v575 = vpop.f32.mrb[0].mxu0
  %v576 = vadd.f32 %v493, %v575
  %577 = vmatprep.mubr.f32.mxu0 0.0
  %578 = vmatmul.mubr.f32.gmra.mrb[0].mxu0 %v505
  %v579 = vpop.f32.mrb[0].mxu0
  %v580 = vadd.f32 %v498, %v579
  %v581 = vpop.f32.mrb[0].mxu0
  %v582 = vadd.f32 %v498, %v581
  %583 = vdwg.mxu0
  %584 = vmatprep.subr.mxu0 %v477
  %585 = vmatpush1.msra.mxu0 %v476
  %586 = vmatprep.subr.mxu0 %v483
  %587 = vmatpush1.msra.mxu0 %v482
  %588 = vmatprep.subr.mxu0 0.0
  %589 = vmatpush1.msra.mxu0 0.0
  %590 = vmatprep.subr.mxu0 0.0
  %591 = vmatpush1.msra.mxu0 0.0
  %592 = vmatprep.subr.mxu0 0.0
  %593 = vmatpush1.msra.mxu0 0.0
  %594 = vmatprep.subr.mxu0 0.0
  %595 = vmatpush1.msra.mxu0 0.0
  %596 = vmatprep.subr.mxu0 0.0
  %597 = vmatpush1.msra.mxu0 0.0
  %598 = vmatprep.subr.mxu0 0.0
  %599 = vmatpush1.msra.mxu0 0.0
  %600 = vmatprep.subr.mxu0 0.0
  %601 = vmatpush1.msra.mxu0 0.0
  %602 = vmatprep.subr.mxu0 0.0
  %603 = vmatpush1.msra.mxu0 0.0
  %604 = vmatprep.subr.mxu0 0.0
  %605 = vmatpush1.msra.mxu0 0.0
  %606 = vmatprep.subr.mxu0 0.0
  %607 = vmatpush1.msra.mxu0 0.0
  %608 = vmatprep.subr.mxu0 0.0
  %609 = vmatpush1.msra.mxu0 0.0
  %610 = vmatprep.subr.mxu0 0.0
  %611 = vmatpush1.msra.mxu0 0.0
  %612 = vmatprep.subr.mxu0 0.0
  %613 = vmatpush1.msra.mxu0 0.0
  %614 = vmatprep.subr.mxu0 0.0
  %615 = vmatpush1.msra.mxu0 0.0
  %616 = vmatprep.subr.mxu0 0.0
  %617 = vmatpush1.msra.mxu0 0.0
  %618 = vmatprep.subr.mxu0 0.0
  %619 = vmatpush1.msra.mxu0 0.0
  %620 = vmatprep.subr.mxu0 0.0
  %621 = vmatpush1.msra.mxu0 0.0
  %622 = vmatprep.subr.mxu0 0.0
  %623 = vmatpush1.msra.mxu0 0.0
  %624 = vmatprep.subr.mxu0 0.0
  %625 = vmatpush1.msra.mxu0 0.0
  %626 = vmatprep.subr.mxu0 0.0
  %627 = vmatpush1.msra.mxu0 0.0
  %628 = vmatprep.subr.mxu0 0.0
  %629 = vmatpush1.msra.mxu0 0.0
  %630 = vmatprep.subr.mxu0 0.0
  %631 = vmatpush1.msra.mxu0 0.0
  %632 = vmatprep.subr.mxu0 0.0
  %633 = vmatpush1.msra.mxu0 0.0
  %634 = vmatprep.subr.mxu0 0.0
  %635 = vmatpush1.msra.mxu0 0.0
  %636 = vmatprep.subr.mxu0 0.0
  %637 = vmatpush1.msra.mxu0 0.0
  %638 = vmatprep.subr.mxu0 0.0
  %639 = vmatpush1.msra.mxu0 0.0
  %640 = vmatprep.subr.mxu0 0.0
  %641 = vmatpush1.msra.mxu0 0.0
  %642 = vmatprep.subr.mxu0 0.0
  %643 = vmatpush1.msra.mxu0 0.0
  %644 = vmatprep.subr.mxu0 0.0
  %645 = vmatpush1.msra.mxu0 0.0
  %646 = vmatprep.subr.mxu0 0.0
  %647 = vmatpush1.msra.mxu0 0.0
  %648 = vmatprep.mubr.f32.mxu0 0.0
  %649 = vmatmul.mubr.f32.gmra.mrb[0].mxu0 %v502
  %v650 = vpop.f32.mrb[0].mxu0
  %v651 = vadd.f32 %v493, %v650
  %v652 = vpop.f32.mrb[0].mxu0
  %v653 = vadd.f32 %v493, %v652
  %654 = vmatprep.mubr.f32.mxu0 0.0
  %655 = vmatmul.mubr.f32.gmra.mrb[0].mxu0 %v505
  %v656 = vpop.f32.mrb[0].mxu0
  %v657 = vadd.f32 %v498, %v656
  %v658 = vpop.f32.mrb[0].mxu0
  %v659 = vadd.f32 %v498, %v658
  %660 = vdwg.mxu0
  %661 = vmatprep.subr.mxu0 %v479
  %662 = vmatpush1.msra.mxu0 %v478
  %663 = vmatprep.subr.mxu0 %v485
  %664 = vmatpush1.msra.mxu0 %v484
  %665 = vmatprep.subr.mxu0 0.0
  %666 = vmatpush1.msra.mxu0 0.0
  %667 = vmatprep.subr.mxu0 0.0
  %668 = vmatpush1.msra.mxu0 0.0
  %669 = vmatprep.subr.mxu0 0.0
  %670 = vmatpush1.msra.mxu0 0.0
  %671 = vmatprep.subr.mxu0 0.0
  %672 = vmatpush1.msra.mxu0 0.0
  %673 = vmatprep.subr.mxu0 0.0
  %674 = vmatpush1.msra.mxu0 0.0
  %675 = vmatprep.subr.mxu0 0.0
  %676 = vmatpush1.msra.mxu0 0.0
  %677 = vmatprep.subr.mxu0 0.0
  %678 = vmatpush1.msra.mxu0 0.0
  %679 = vmatprep.subr.mxu0 0.0
  %680 = vmatpush1.msra.mxu0 0.0
  %681 = vmatprep.subr.mxu0 0.0
  %682 = vmatpush1.msra.mxu0 0.0
  %683 = vmatprep.subr.mxu0 0.0
  %684 = vmatpush1.msra.mxu0 0.0
  %685 = vmatprep.subr.mxu0 0.0
  %686 = vmatpush1.msra.mxu0 0.0
  %687 = vmatprep.subr.mxu0 0.0
  %688 = vmatpush1.msra.mxu0 0.0
  %689 = vmatprep.subr.mxu0 0.0
  %690 = vmatpush1.msra.mxu0 0.0
  %691 = vmatprep.subr.mxu0 0.0
  %692 = vmatpush1.msra.mxu0 0.0
  %693 = vmatprep.subr.mxu0 0.0
  %694 = vmatpush1.msra.mxu0 0.0
  %695 = vmatprep.subr.mxu0 0.0
  %696 = vmatpush1.msra.mxu0 0.0
  %697 = vmatprep.subr.mxu0 0.0
  %698 = vmatpush1.msra.mxu0 0.0
  %699 = vmatprep.subr.mxu0 0.0
  %700 = vmatpush1.msra.mxu0 0.0
  %701 = vmatprep.subr.mxu0 0.0
  %702 = vmatpush1.msra.mxu0 0.0
  %703 = vmatprep.subr.mxu0 0.0
  %704 = vmatpush1.msra.mxu0 0.0
  %705 = vmatprep.subr.mxu0 0.0
  %706 = vmatpush1.msra.mxu0 0.0
  %707 = vmatprep.subr.mxu0 0.0
  %708 = vmatpush1.msra.mxu0 0.0
  %709 = vmatprep.subr.mxu0 0.0
  %710 = vmatpush1.msra.mxu0 0.0
  %711 = vmatprep.subr.mxu0 0.0
  %712 = vmatpush1.msra.mxu0 0.0
  %713 = vmatprep.subr.mxu0 0.0
  %714 = vmatpush1.msra.mxu0 0.0
  %715 = vmatprep.subr.mxu0 0.0
  %716 = vmatpush1.msra.mxu0 0.0
  %717 = vmatprep.subr.mxu0 0.0
  %718 = vmatpush1.msra.mxu0 0.0
  %719 = vmatprep.subr.mxu0 0.0
  %720 = vmatpush1.msra.mxu0 0.0
  %721 = vmatprep.subr.mxu0 0.0
  %722 = vmatpush1.msra.mxu0 0.0
  %723 = vmatprep.subr.mxu0 0.0
  %724 = vmatpush1.msra.mxu0 0.0
  %725 = vmatprep.mubr.f32.mxu0 0.0
  %726 = vmatmul.mubr.f32.gmra.mrb[0].mxu0 %v502
  %v727 = vpop.f32.mrb[0].mxu0
  %v728 = vadd.f32 %v493, %v727
  %v729 = vpop.f32.mrb[0].mxu0
  %v730 = vadd.f32 %v493, %v729
  %731 = vmatprep.mubr.f32.mxu0 0.0
  %732 = vmatmul.mubr.f32.gmra.mrb[0].mxu0 %v505
  %v733 = vpop.f32.mrb[0].mxu0
  %v734 = vadd.f32 %v498, %v733
  %v735 = vpop.f32.mrb[0].mxu0
  %v736 = vadd.f32 %v498, %v735
  %737 = vdwg.mxu0
  %v738 = vmax.f32 %v574, 0.0
  %v739 = vmax.f32 %v576, 0.0
  %v740 = vmax.f32 %v651, 0.0
  %v741 = vmax.f32 %v653, 0.0
  %v742 = vmax.f32 %v728, 0.0
  %v743 = vmax.f32 %v730, 0.0
  %v744 = vmax.f32 %v580, 0.0
  %v745 = vmax.f32 %v582, 0.0
  %v746 = vmax.f32 %v657, 0.0
  %v747 = vmax.f32 %v659, 0.0
  %v748 = vmax.f32 %v734, 0.0
  %v749 = vmax.f32 %v736, 0.0
  %v750 = vmul.f32 %v738, %v423
  %v751 = vmul.f32 %v739, %v427
  %v752 = vmul.f32 %v740, %v431
  %v753 = vmul.f32 %v741, %v435
  %v754 = vmul.f32 %v742, %v439
  %v755 = vmul.f32 %v743, %v443
  %v756 = vmul.f32 %v744, %v423
  %v757 = vmul.f32 %v745, %v427
  %v758 = vmul.f32 %v746, %v431
  %v759 = vmul.f32 %v747, %v435
  %v760 = vmul.f32 %v748, %v439
  %v761 = vmul.f32 %v749, %v443
  %762 = vst [vmem:[#allocation2 + $0x8] sm:$0xff] %v750
  %763 = vst [vmem:[#allocation2 + $0x10] sm:$0xff] %v751
  %764 = vst [vmem:[#allocation2 + $0x18] sm:$0xff] %v752
  %765 = vst [vmem:[#allocation2 + $0x20] sm:$0xff] %v753
  %766 = vst [vmem:[#allocation2 + $0x28] sm:$0xff] %v754
  %767 = vst [vmem:[#allocation2 + $0x30] sm:$0xff] %v755
  %768 = vst [vmem:[#allocation2 + $0x48] sm:$0xff] %v756
  %769 = vst [vmem:[#allocation2 + $0x50] sm:$0xff] %v757
  %770 = vst [vmem:[#allocation2 + $0x58] sm:$0xff] %v758
  %771 = vst [vmem:[#allocation2 + $0x60] sm:$0xff] %v759
  %772 = vst [vmem:[#allocation2 + $0x68] sm:$0xff] %v760
  %773 = vst [vmem:[#allocation2 + $0x70] sm:$0xff] %v761
  %v774 = vld [vmem:[#allocation2] sm:$0xff]
  %v775 = vld [vmem:[#allocation2 + $0x8] sm:$0xff]
  %v776 = vld [vmem:[#allocation2 + $0x10] sm:$0xff]
  %v777 = vld [vmem:[#allocation2 + $0x18] sm:$0xff]
  %v778 = vld [vmem:[#allocation2 + $0x20] sm:$0xff]
  %v779 = vld [vmem:[#allocation2 + $0x28] sm:$0xff]
  %v780 = vld [vmem:[#allocation2 + $0x30] sm:$0xff]
  %v781 = vld [vmem:[#allocation2 + $0x40] sm:$0xff]
  %v782 = vld [vmem:[#allocation2 + $0x48] sm:$0xff]
  %v783 = vld [vmem:[#allocation2 + $0x50] sm:$0xff]
  %v784 = vld [vmem:[#allocation2 + $0x58] sm:$0xff]
  %v785 = vld [vmem:[#allocation2 + $0x60] sm:$0xff]
  %v786 = vld [vmem:[#allocation2 + $0x68] sm:$0xff]
  %v787 = vld [vmem:[#allocation2 + $0x70] sm:$0xff]
  %802 = vrot.lane.b32.xlu0 %v774, 19
  %v803 = vpop.permute.xlu0 %802
  %804 = vrot.lane.b32.xlu0 %v775, 19
  %v805 = vpop.permute.xlu0 %804
  %806 = vrot.lane.b32.xlu0 %v776, 19
  %v807 = vpop.permute.xlu0 %806
  %808 = vrot.lane.b32.xlu0 %v777, 19
  %v809 = vpop.permute.xlu0 %808
  %810 = vrot.lane.b32.xlu0 %v778, 19
  %v811 = vpop.permute.xlu0 %810
  %812 = vrot.lane.b32.xlu0 %v779, 19
  %v813 = vpop.permute.xlu0 %812
  %814 = vrot.lane.b32.xlu0 %v780, 19
  %v815 = vpop.permute.xlu0 %814
  %816 = vrot.lane.b32.xlu0 %v781, 19
  %v817 = vpop.permute.xlu0 %816
  %818 = vrot.lane.b32.xlu0 %v782, 19
  %v819 = vpop.permute.xlu0 %818
  %820 = vrot.lane.b32.xlu0 %v783, 19
  %v821 = vpop.permute.xlu0 %820
  %822 = vrot.lane.b32.xlu0 %v784, 19
  %v823 = vpop.permute.xlu0 %822
  %824 = vrot.lane.b32.xlu0 %v785, 19
  %v825 = vpop.permute.xlu0 %824
  %826 = vrot.lane.b32.xlu0 %v786, 19
  %v827 = vpop.permute.xlu0 %826
  %828 = vrot.lane.b32.xlu0 %v787, 19
  %v829 = vpop.permute.xlu0 %828
  %vm830 = vcmask 154624
  %v831 = vsel %vm830, %v803, %v805
  %v832 = vsel %vm830, %v805, %v807
  %v833 = vsel %vm830, %v807, %v809
  %v834 = vsel %vm830, %v809, %v811
  %v835 = vsel %vm830, %v811, %v813
  %v836 = vsel %vm830, %v813, %v815
  %v837 = vsel %vm830, %v817, %v819
  %v838 = vsel %vm830, %v819, %v821
  %v839 = vsel %vm830, %v821, %v823
  %v840 = vsel %vm830, %v823, %v825
  %v841 = vsel %vm830, %v825, %v827
  %v842 = vsel %vm830, %v827, %v829
  %855 = vst [vmem:[#allocation4] sm:$0xff] %v831
  %856 = vst [vmem:[#allocation4 + $0x8] sm:$0xff] %v832
  %857 = vst [vmem:[#allocation4 + $0x10] sm:$0xff] %v833
  %858 = vst [vmem:[#allocation4 + $0x18] sm:$0xff] %v834
  %859 = vst [vmem:[#allocation4 + $0x20] sm:$0xff] %v835
  %860 = vst [vmem:[#allocation4 + $0x28] sm:$0xff] %v836
  %861 = vst [vmem:[#allocation4 + $0x30] sm:$0xff] %v837
  %862 = vst [vmem:[#allocation4 + $0x38] sm:$0xff] %v838
  %863 = vst [vmem:[#allocation4 + $0x40] sm:$0xff] %v839
  %864 = vst [vmem:[#allocation4 + $0x48] sm:$0xff] %v840
  %865 = vst [vmem:[#allocation4 + $0x50] sm:$0xff] %v841
  %866 = vst [vmem:[#allocation4 + $0x58] sm:$0xff] %v842
  %v867 = vld [vmem:[#allocation2] sm:$0xff]
  %v868 = vld [vmem:[#allocation2 + $0x8] sm:$0xff]
  %v869 = vld [vmem:[#allocation2 + $0x10] sm:$0xff]
  %v870 = vld [vmem:[#allocation2 + $0x18] sm:$0xff]
  %v871 = vld [vmem:[#allocation2 + $0x20] sm:$0xff]
  %v872 = vld [vmem:[#allocation2 + $0x28] sm:$0xff]
  %v873 = vld [vmem:[#allocation2 + $0x30] sm:$0xff]
  %v874 = vld [vmem:[#allocation2 + $0x40] sm:$0xff]
  %v875 = vld [vmem:[#allocation2 + $0x48] sm:$0xff]
  %v876 = vld [vmem:[#allocation2 + $0x50] sm:$0xff]
  %v877 = vld [vmem:[#allocation2 + $0x58] sm:$0xff]
  %v878 = vld [vmem:[#allocation2 + $0x60] sm:$0xff]
  %v879 = vld [vmem:[#allocation2 + $0x68] sm:$0xff]
  %v880 = vld [vmem:[#allocation2 + $0x70] sm:$0xff]
  %895 = vrot.lane.b32.xlu0 %v867, 18
  %v896 = vpop.permute.xlu0 %895
  %897 = vrot.lane.b32.xlu0 %v868, 18
  %v898 = vpop.permute.xlu0 %897
  %899 = vrot.lane.b32.xlu0 %v869, 18
  %v900 = vpop.permute.xlu0 %899
  %901 = vrot.lane.b32.xlu0 %v870, 18
  %v902 = vpop.permute.xlu0 %901
  %903 = vrot.lane.b32.xlu0 %v871, 18
  %v904 = vpop.permute.xlu0 %903
  %905 = vrot.lane.b32.xlu0 %v872, 18
  %v906 = vpop.permute.xlu0 %905
  %907 = vrot.lane.b32.xlu0 %v873, 18
  %v908 = vpop.permute.xlu0 %907
  %909 = vrot.lane.b32.xlu0 %v874, 18
  %v910 = vpop.permute.xlu0 %909
  %911 = vrot.lane.b32.xlu0 %v875, 18
  %v912 = vpop.permute.xlu0 %911
  %913 = vrot.lane.b32.xlu0 %v876, 18
  %v914 = vpop.permute.xlu0 %913
  %915 = vrot.lane.b32.xlu0 %v877, 18
  %v916 = vpop.permute.xlu0 %915
  %917 = vrot.lane.b32.xlu0 %v878, 18
  %v918 = vpop.permute.xlu0 %917
  %919 = vrot.lane.b32.xlu0 %v879, 18
  %v920 = vpop.permute.xlu0 %919
  %921 = vrot.lane.b32.xlu0 %v880, 18
  %v922 = vpop.permute.xlu0 %921
  %vm923 = vcmask 146432
  %v924 = vsel %vm923, %v896, %v898
  %v925 = vsel %vm923, %v898, %v900
  %v926 = vsel %vm923, %v900, %v902
  %v927 = vsel %vm923, %v902, %v904
  %v928 = vsel %vm923, %v904, %v906
  %v929 = vsel %vm923, %v906, %v908
  %v930 = vsel %vm923, %v910, %v912
  %v931 = vsel %vm923, %v912, %v914
  %v932 = vsel %vm923, %v914, %v916
  %v933 = vsel %vm923, %v916, %v918
  %v934 = vsel %vm923, %v918, %v920
  %v935 = vsel %vm923, %v920, %v922
  %948 = vst [vmem:[#allocation4 + $0x60] sm:$0xff] %v924
  %949 = vst [vmem:[#allocation4 + $0x68] sm:$0xff] %v925
  %950 = vst [vmem:[#allocation4 + $0x70] sm:$0xff] %v926
  %951 = vst [vmem:[#allocation4 + $0x78] sm:$0xff] %v927
  %952 = vst [vmem:[#allocation4 + $0x80] sm:$0xff] %v928
  %953 = vst [vmem:[#allocation4 + $0x88] sm:$0xff] %v929
  %954 = vst [vmem:[#allocation4 + $0x90] sm:$0xff] %v930
  %955 = vst [vmem:[#allocation4 + $0x98] sm:$0xff] %v931
  %956 = vst [vmem:[#allocation4 + $0xa0] sm:$0xff] %v932
  %957 = vst [vmem:[#allocation4 + $0xa8] sm:$0xff] %v933
  %958 = vst [vmem:[#allocation4 + $0xb0] sm:$0xff] %v934
  %959 = vst [vmem:[#allocation4 + $0xb8] sm:$0xff] %v935
  %v960 = vld [vmem:[#allocation2] sm:$0xff]
  %v961 = vld [vmem:[#allocation2 + $0x8] sm:$0xff]
  %v962 = vld [vmem:[#allocation2 + $0x10] sm:$0xff]
  %v963 = vld [vmem:[#allocation2 + $0x18] sm:$0xff]
  %v964 = vld [vmem:[#allocation2 + $0x20] sm:$0xff]
  %v965 = vld [vmem:[#allocation2 + $0x28] sm:$0xff]
  %v966 = vld [vmem:[#allocation2 + $0x30] sm:$0xff]
  %v967 = vld [vmem:[#allocation2 + $0x40] sm:$0xff]
  %v968 = vld [vmem:[#allocation2 + $0x48] sm:$0xff]
  %v969 = vld [vmem:[#allocation2 + $0x50] sm:$0xff]
  %v970 = vld [vmem:[#allocation2 + $0x58] sm:$0xff]
  %v971 = vld [vmem:[#allocation2 + $0x60] sm:$0xff]
  %v972 = vld [vmem:[#allocation2 + $0x68] sm:$0xff]
  %v973 = vld [vmem:[#allocation2 + $0x70] sm:$0xff]
  %988 = vrot.lane.b32.xlu0 %v960, 17
  %v989 = vpop.permute.xlu0 %988
  %990 = vrot.lane.b32.xlu0 %v961, 17
  %v991 = vpop.permute.xlu0 %990
  %992 = vrot.lane.b32.xlu0 %v962, 17
  %v993 = vpop.permute.xlu0 %992
  %994 = vrot.lane.b32.xlu0 %v963, 17
  %v995 = vpop.permute.xlu0 %994
  %996 = vrot.lane.b32.xlu0 %v964, 17
  %v997 = vpop.permute.xlu0 %996
  %998 = vrot.lane.b32.xlu0 %v965, 17
  %v999 = vpop.permute.xlu0 %998
  %1000 = vrot.lane.b32.xlu0 %v966, 17
  %v1001 = vpop.permute.xlu0 %1000
  %1002 = vrot.lane.b32.xlu0 %v967, 17
  %v1003 = vpop.permute.xlu0 %1002
  %1004 = vrot.lane.b32.xlu0 %v968, 17
  %v1005 = vpop.permute.xlu0 %1004
  %1006 = vrot.lane.b32.xlu0 %v969, 17
  %v1007 = vpop.permute.xlu0 %1006
  %1008 = vrot.lane.b32.xlu0 %v970, 17
  %v1009 = vpop.permute.xlu0 %1008
  %1010 = vrot.lane.b32.xlu0 %v971, 17
  %v1011 = vpop.permute.xlu0 %1010
  %1012 = vrot.lane.b32.xlu0 %v972, 17
  %v1013 = vpop.permute.xlu0 %1012
  %1014 = vrot.lane.b32.xlu0 %v973, 17
  %v1015 = vpop.permute.xlu0 %1014
  %vm1016 = vcmask 138240
  %v1017 = vsel %vm1016, %v989, %v991
  %v1018 = vsel %vm1016, %v991, %v993
  %v1019 = vsel %vm1016, %v993, %v995
  %v1020 = vsel %vm1016, %v995, %v997
  %v1021 = vsel %vm1016, %v997, %v999
  %v1022 = vsel %vm1016, %v999, %v1001
  %v1023 = vsel %vm1016, %v1003, %v1005
  %v1024 = vsel %vm1016, %v1005, %v1007
  %v1025 = vsel %vm1016, %v1007, %v1009
  %v1026 = vsel %vm1016, %v1009, %v1011
  %v1027 = vsel %vm1016, %v1011, %v1013
  %v1028 = vsel %vm1016, %v1013, %v1015
  %1041 = vst [vmem:[#allocation4 + $0xc0] sm:$0xff] %v1017
  %1042 = vst [vmem:[#allocation4 + $0xc8] sm:$0xff] %v1018
  %1043 = vst [vmem:[#allocation4 + $0xd0] sm:$0xff] %v1019
  %1044 = vst [vmem:[#allocation4 + $0xd8] sm:$0xff] %v1020
  %1045 = vst [vmem:[#allocation4 + $0xe0] sm:$0xff] %v1021
  %1046 = vst [vmem:[#allocation4 + $0xe8] sm:$0xff] %v1022
  %1047 = vst [vmem:[#allocation4 + $0xf0] sm:$0xff] %v1023
  %1048 = vst [vmem:[#allocation4 + $0xf8] sm:$0xff] %v1024
  %1049 = vst [vmem:[#allocation4 + $0x100] sm:$0xff] %v1025
  %1050 = vst [vmem:[#allocation4 + $0x108] sm:$0xff] %v1026
  %1051 = vst [vmem:[#allocation4 + $0x110] sm:$0xff] %v1027
  %1052 = vst [vmem:[#allocation4 + $0x118] sm:$0xff] %v1028
  %v1053 = vld [vmem:[#allocation2] sm:$0xff]
  %v1054 = vld [vmem:[#allocation2 + $0x8] sm:$0xff]
  %v1055 = vld [vmem:[#allocation2 + $0x10] sm:$0xff]
  %v1056 = vld [vmem:[#allocation2 + $0x18] sm:$0xff]
  %v1057 = vld [vmem:[#allocation2 + $0x20] sm:$0xff]
  %v1058 = vld [vmem:[#allocation2 + $0x28] sm:$0xff]
  %v1059 = vld [vmem:[#allocation2 + $0x30] sm:$0xff]
  %v1060 = vld [vmem:[#allocation2 + $0x40] sm:$0xff]
  %v1061 = vld [vmem:[#allocation2 + $0x48] sm:$0xff]
  %v1062 = vld [vmem:[#allocation2 + $0x50] sm:$0xff]
  %v1063 = vld [vmem:[#allocation2 + $0x58] sm:$0xff]
  %v1064 = vld [vmem:[#allocation2 + $0x60] sm:$0xff]
  %v1065 = vld [vmem:[#allocation2 + $0x68] sm:$0xff]
  %v1066 = vld [vmem:[#allocation2 + $0x70] sm:$0xff]
  %1081 = vrot.lane.b32.xlu0 %v1053, 1
  %v1082 = vpop.permute.xlu0 %1081
  %1083 = vrot.lane.b32.xlu0 %v1054, 1
  %v1084 = vpop.permute.xlu0 %1083
  %1085 = vrot.lane.b32.xlu0 %v1055, 1
  %v1086 = vpop.permute.xlu0 %1085
  %1087 = vrot.lane.b32.xlu0 %v1056, 1
  %v1088 = vpop.permute.xlu0 %1087
  %1089 = vrot.lane.b32.xlu0 %v1057, 1
  %v1090 = vpop.permute.xlu0 %1089
  %1091 = vrot.lane.b32.xlu0 %v1058, 1
  %v1092 = vpop.permute.xlu0 %1091
  %1093 = vrot.lane.b32.xlu0 %v1059, 1
  %v1094 = vpop.permute.xlu0 %1093
  %1095 = vrot.lane.b32.xlu0 %v1060, 1
  %v1096 = vpop.permute.xlu0 %1095
  %1097 = vrot.lane.b32.xlu0 %v1061, 1
  %v1098 = vpop.permute.xlu0 %1097
  %1099 = vrot.lane.b32.xlu0 %v1062, 1
  %v1100 = vpop.permute.xlu0 %1099
  %1101 = vrot.lane.b32.xlu0 %v1063, 1
  %v1102 = vpop.permute.xlu0 %1101
  %1103 = vrot.lane.b32.xlu0 %v1064, 1
  %v1104 = vpop.permute.xlu0 %1103
  %1105 = vrot.lane.b32.xlu0 %v1065, 1
  %v1106 = vpop.permute.xlu0 %1105
  %1107 = vrot.lane.b32.xlu0 %v1066, 1
  %v1108 = vpop.permute.xlu0 %1107
  %vm1109 = vcmask 7168
  %v1110 = vsel %vm1109, %v1082, %v1084
  %v1111 = vsel %vm1109, %v1084, %v1086
  %v1112 = vsel %vm1109, %v1086, %v1088
  %v1113 = vsel %vm1109, %v1088, %v1090
  %v1114 = vsel %vm1109, %v1090, %v1092
  %v1115 = vsel %vm1109, %v1092, %v1094
  %v1116 = vsel %vm1109, %v1096, %v1098
  %v1117 = vsel %vm1109, %v1098, %v1100
  %v1118 = vsel %vm1109, %v1100, %v1102
  %v1119 = vsel %vm1109, %v1102, %v1104
  %v1120 = vsel %vm1109, %v1104, %v1106
  %v1121 = vsel %vm1109, %v1106, %v1108
  %1134 = vst [vmem:[#allocation4 + $0x120] sm:$0xff] %v1110
  %1135 = vst [vmem:[#allocation4 + $0x128] sm:$0xff] %v1111
  %1136 = vst [vmem:[#allocation4 + $0x130] sm:$0xff] %v1112
  %1137 = vst [vmem:[#allocation4 + $0x138] sm:$0xff] %v1113
  %1138 = vst [vmem:[#allocation4 + $0x140] sm:$0xff] %v1114
  %1139 = vst [vmem:[#allocation4 + $0x148] sm:$0xff] %v1115
  %1140 = vst [vmem:[#allocation4 + $0x150] sm:$0xff] %v1116
  %1141 = vst [vmem:[#allocation4 + $0x158] sm:$0xff] %v1117
  %1142 = vst [vmem:[#allocation4 + $0x160] sm:$0xff] %v1118
  %1143 = vst [vmem:[#allocation4 + $0x168] sm:$0xff] %v1119
  %1144 = vst [vmem:[#allocation4 + $0x170] sm:$0xff] %v1120
  %1145 = vst [vmem:[#allocation4 + $0x178] sm:$0xff] %v1121
  %v1146 = vld [vmem:[#allocation2 + $0x8] sm:$0xff]
  %v1147 = vld [vmem:[#allocation2 + $0x10] sm:$0xff]
  %v1148 = vld [vmem:[#allocation2 + $0x18] sm:$0xff]
  %v1149 = vld [vmem:[#allocation2 + $0x20] sm:$0xff]
  %v1150 = vld [vmem:[#allocation2 + $0x28] sm:$0xff]
  %v1151 = vld [vmem:[#allocation2 + $0x30] sm:$0xff]
  %v1152 = vld [vmem:[#allocation2 + $0x48] sm:$0xff]
  %v1153 = vld [vmem:[#allocation2 + $0x50] sm:$0xff]
  %v1154 = vld [vmem:[#allocation2 + $0x58] sm:$0xff]
  %v1155 = vld [vmem:[#allocation2 + $0x60] sm:$0xff]
  %v1156 = vld [vmem:[#allocation2 + $0x68] sm:$0xff]
  %v1157 = vld [vmem:[#allocation2 + $0x70] sm:$0xff]
  %1158 = vst [vmem:[#allocation4 + $0x180] sm:$0xff] %v1146
  %1159 = vst [vmem:[#allocation4 + $0x188] sm:$0xff] %v1147
  %1160 = vst [vmem:[#allocation4 + $0x190] sm:$0xff] %v1148
  %1161 = vst [vmem:[#allocation4 + $0x198] sm:$0xff] %v1149
  %1162 = vst [vmem:[#allocation4 + $0x1a0] sm:$0xff] %v1150
  %1163 = vst [vmem:[#allocation4 + $0x1a8] sm:$0xff] %v1151
  %1164 = vst [vmem:[#allocation4 + $0x1b0] sm:$0xff] %v1152
  %1165 = vst [vmem:[#allocation4 + $0x1b8] sm:$0xff] %v1153
  %1166 = vst [vmem:[#allocation4 + $0x1c0] sm:$0xff] %v1154
  %1167 = vst [vmem:[#allocation4 + $0x1c8] sm:$0xff] %v1155
  %1168 = vst [vmem:[#allocation4 + $0x1d0] sm:$0xff] %v1156
  %1169 = vst [vmem:[#allocation4 + $0x1d8] sm:$0xff] %v1157
  %v1170 = vld [vmem:[#allocation2 + $0x8] sm:$0xff]
  %v1171 = vld [vmem:[#allocation2 + $0x10] sm:$0xff]
  %v1172 = vld [vmem:[#allocation2 + $0x18] sm:$0xff]
  %v1173 = vld [vmem:[#allocation2 + $0x20] sm:$0xff]
  %v1174 = vld [vmem:[#allocation2 + $0x28] sm:$0xff]
  %v1175 = vld [vmem:[#allocation2 + $0x30] sm:$0xff]
  %v1176 = vld [vmem:[#allocation2 + $0x38] sm:$0xff]
  %v1177 = vld [vmem:[#allocation2 + $0x48] sm:$0xff]
  %v1178 = vld [vmem:[#allocation2 + $0x50] sm:$0xff]
  %v1179 = vld [vmem:[#allocation2 + $0x58] sm:$0xff]
  %v1180 = vld [vmem:[#allocation2 + $0x60] sm:$0xff]
  %v1181 = vld [vmem:[#allocation2 + $0x68] sm:$0xff]
  %v1182 = vld [vmem:[#allocation2 + $0x70] sm:$0xff]
  %v1183 = vld [vmem:[#allocation2 + $0x78] sm:$0xff]
  %1198 = vrot.lane.b32.xlu0 %v1170, 127
  %v1199 = vpop.permute.xlu0 %1198
  %1200 = vrot.lane.b32.xlu0 %v1171, 127
  %v1201 = vpop.permute.xlu0 %1200
  %1202 = vrot.lane.b32.xlu0 %v1172, 127
  %v1203 = vpop.permute.xlu0 %1202
  %1204 = vrot.lane.b32.xlu0 %v1173, 127
  %v1205 = vpop.permute.xlu0 %1204
  %1206 = vrot.lane.b32.xlu0 %v1174, 127
  %v1207 = vpop.permute.xlu0 %1206
  %1208 = vrot.lane.b32.xlu0 %v1175, 127
  %v1209 = vpop.permute.xlu0 %1208
  %1210 = vrot.lane.b32.xlu0 %v1176, 127
  %v1211 = vpop.permute.xlu0 %1210
  %1212 = vrot.lane.b32.xlu0 %v1177, 127
  %v1213 = vpop.permute.xlu0 %1212
  %1214 = vrot.lane.b32.xlu0 %v1178, 127
  %v1215 = vpop.permute.xlu0 %1214
  %1216 = vrot.lane.b32.xlu0 %v1179, 127
  %v1217 = vpop.permute.xlu0 %1216
  %1218 = vrot.lane.b32.xlu0 %v1180, 127
  %v1219 = vpop.permute.xlu0 %1218
  %1220 = vrot.lane.b32.xlu0 %v1181, 127
  %v1221 = vpop.permute.xlu0 %1220
  %1222 = vrot.lane.b32.xlu0 %v1182, 127
  %v1223 = vpop.permute.xlu0 %1222
  %1224 = vrot.lane.b32.xlu0 %v1183, 127
  %v1225 = vpop.permute.xlu0 %1224
  %vm1226 = vcmask 1039360
  %v1227 = vsel %vm1226, %v1199, %v1201
  %v1228 = vsel %vm1226, %v1201, %v1203
  %v1229 = vsel %vm1226, %v1203, %v1205
  %v1230 = vsel %vm1226, %v1205, %v1207
  %v1231 = vsel %vm1226, %v1207, %v1209
  %v1232 = vsel %vm1226, %v1209, %v1211
  %v1233 = vsel %vm1226, %v1213, %v1215
  %v1234 = vsel %vm1226, %v1215, %v1217
  %v1235 = vsel %vm1226, %v1217, %v1219
  %v1236 = vsel %vm1226, %v1219, %v1221
  %v1237 = vsel %vm1226, %v1221, %v1223
  %v1238 = vsel %vm1226, %v1223, %v1225
  %1251 = vst [vmem:[#allocation4 + $0x1e0] sm:$0xff] %v1227
  %1252 = vst [vmem:[#allocation4 + $0x1e8] sm:$0xff] %v1228
  %1253 = vst [vmem:[#allocation4 + $0x1f0] sm:$0xff] %v1229
  %1254 = vst [vmem:[#allocation4 + $0x1f8] sm:$0xff] %v1230
  %1255 = vst [vmem:[#allocation4 + $0x200] sm:$0xff] %v1231
  %1256 = vst [vmem:[#allocation4 + $0x208] sm:$0xff] %v1232
  %1257 = vst [vmem:[#allocation4 + $0x210] sm:$0xff] %v1233
  %1258 = vst [vmem:[#allocation4 + $0x218] sm:$0xff] %v1234
  %1259 = vst [vmem:[#allocation4 + $0x220] sm:$0xff] %v1235
  %1260 = vst [vmem:[#allocation4 + $0x228] sm:$0xff] %v1236
  %1261 = vst [vmem:[#allocation4 + $0x230] sm:$0xff] %v1237
  %1262 = vst [vmem:[#allocation4 + $0x238] sm:$0xff] %v1238
  %v1263 = vld [vmem:[#allocation2 + $0x8] sm:$0xff]
  %v1264 = vld [vmem:[#allocation2 + $0x10] sm:$0xff]
  %v1265 = vld [vmem:[#allocation2 + $0x18] sm:$0xff]
  %v1266 = vld [vmem:[#allocation2 + $0x20] sm:$0xff]
  %v1267 = vld [vmem:[#allocation2 + $0x28] sm:$0xff]
  %v1268 = vld [vmem:[#allocation2 + $0x30] sm:$0xff]
  %v1269 = vld [vmem:[#allocation2 + $0x38] sm:$0xff]
  %v1270 = vld [vmem:[#allocation2 + $0x48] sm:$0xff]
  %v1271 = vld [vmem:[#allocation2 + $0x50] sm:$0xff]
  %v1272 = vld [vmem:[#allocation2 + $0x58] sm:$0xff]
  %v1273 = vld [vmem:[#allocation2 + $0x60] sm:$0xff]
  %v1274 = vld [vmem:[#allocation2 + $0x68] sm:$0xff]
  %v1275 = vld [vmem:[#allocation2 + $0x70] sm:$0xff]
  %v1276 = vld [vmem:[#allocation2 + $0x78] sm:$0xff]
  %1291 = vrot.lane.b32.xlu0 %v1263, 111
  %v1292 = vpop.permute.xlu0 %1291
  %1293 = vrot.lane.b32.xlu0 %v1264, 111
  %v1294 = vpop.permute.xlu0 %1293
  %1295 = vrot.lane.b32.xlu0 %v1265, 111
  %v1296 = vpop.permute.xlu0 %1295
  %1297 = vrot.lane.b32.xlu0 %v1266, 111
  %v1298 = vpop.permute.xlu0 %1297
  %1299 = vrot.lane.b32.xlu0 %v1267, 111
  %v1300 = vpop.permute.xlu0 %1299
  %1301 = vrot.lane.b32.xlu0 %v1268, 111
  %v1302 = vpop.permute.xlu0 %1301
  %1303 = vrot.lane.b32.xlu0 %v1269, 111
  %v1304 = vpop.permute.xlu0 %1303
  %1305 = vrot.lane.b32.xlu0 %v1270, 111
  %v1306 = vpop.permute.xlu0 %1305
  %1307 = vrot.lane.b32.xlu0 %v1271, 111
  %v1308 = vpop.permute.xlu0 %1307
  %1309 = vrot.lane.b32.xlu0 %v1272, 111
  %v1310 = vpop.permute.xlu0 %1309
  %1311 = vrot.lane.b32.xlu0 %v1273, 111
  %v1312 = vpop.permute.xlu0 %1311
  %1313 = vrot.lane.b32.xlu0 %v1274, 111
  %v1314 = vpop.permute.xlu0 %1313
  %1315 = vrot.lane.b32.xlu0 %v1275, 111
  %v1316 = vpop.permute.xlu0 %1315
  %1317 = vrot.lane.b32.xlu0 %v1276, 111
  %v1318 = vpop.permute.xlu0 %1317
  %vm1319 = vcmask 908288
  %v1320 = vsel %vm1319, %v1292, %v1294
  %v1321 = vsel %vm1319, %v1294, %v1296
  %v1322 = vsel %vm1319, %v1296, %v1298
  %v1323 = vsel %vm1319, %v1298, %v1300
  %v1324 = vsel %vm1319, %v1300, %v1302
  %v1325 = vsel %vm1319, %v1302, %v1304
  %v1326 = vsel %vm1319, %v1306, %v1308
  %v1327 = vsel %vm1319, %v1308, %v1310
  %v1328 = vsel %vm1319, %v1310, %v1312
  %v1329 = vsel %vm1319, %v1312, %v1314
  %v1330 = vsel %vm1319, %v1314, %v1316
  %v1331 = vsel %vm1319, %v1316, %v1318
  %1344 = vst [vmem:[#allocation4 + $0x240] sm:$0xff] %v1320
  %1345 = vst [vmem:[#allocation4 + $0x248] sm:$0xff] %v1321
  %1346 = vst [vmem:[#allocation4 + $0x250] sm:$0xff] %v1322
  %1347 = vst [vmem:[#allocation4 + $0x258] sm:$0xff] %v1323
  %1348 = vst [vmem:[#allocation4 + $0x260] sm:$0xff] %v1324
  %1349 = vst [vmem:[#allocation4 + $0x268] sm:$0xff] %v1325
  %1350 = vst [vmem:[#allocation4 + $0x270] sm:$0xff] %v1326
  %1351 = vst [vmem:[#allocation4 + $0x278] sm:$0xff] %v1327
  %1352 = vst [vmem:[#allocation4 + $0x280] sm:$0xff] %v1328
  %1353 = vst [vmem:[#allocation4 + $0x288] sm:$0xff] %v1329
  %1354 = vst [vmem:[#allocation4 + $0x290] sm:$0xff] %v1330
  %1355 = vst [vmem:[#allocation4 + $0x298] sm:$0xff] %v1331
  %v1356 = vld [vmem:[#allocation2 + $0x8] sm:$0xff]
  %v1357 = vld [vmem:[#allocation2 + $0x10] sm:$0xff]
  %v1358 = vld [vmem:[#allocation2 + $0x18] sm:$0xff]
  %v1359 = vld [vmem:[#allocation2 + $0x20] sm:$0xff]
  %v1360 = vld [vmem:[#allocation2 + $0x28] sm:$0xff]
  %v1361 = vld [vmem:[#allocation2 + $0x30] sm:$0xff]
  %v1362 = vld [vmem:[#allocation2 + $0x38] sm:$0xff]
  %v1363 = vld [vmem:[#allocation2 + $0x48] sm:$0xff]
  %v1364 = vld [vmem:[#allocation2 + $0x50] sm:$0xff]
  %v1365 = vld [vmem:[#allocation2 + $0x58] sm:$0xff]
  %v1366 = vld [vmem:[#allocation2 + $0x60] sm:$0xff]
  %v1367 = vld [vmem:[#allocation2 + $0x68] sm:$0xff]
  %v1368 = vld [vmem:[#allocation2 + $0x70] sm:$0xff]
  %v1369 = vld [vmem:[#allocation2 + $0x78] sm:$0xff]
  %1384 = vrot.lane.b32.xlu0 %v1356, 110
  %v1385 = vpop.permute.xlu0 %1384
  %1386 = vrot.lane.b32.xlu0 %v1357, 110
  %v1387 = vpop.permute.xlu0 %1386
  %1388 = vrot.lane.b32.xlu0 %v1358, 110
  %v1389 = vpop.permute.xlu0 %1388
  %1390 = vrot.lane.b32.xlu0 %v1359, 110
  %v1391 = vpop.permute.xlu0 %1390
  %1392 = vrot.lane.b32.xlu0 %v1360, 110
  %v1393 = vpop.permute.xlu0 %1392
  %1394 = vrot.lane.b32.xlu0 %v1361, 110
  %v1395 = vpop.permute.xlu0 %1394
  %1396 = vrot.lane.b32.xlu0 %v1362, 110
  %v1397 = vpop.permute.xlu0 %1396
  %1398 = vrot.lane.b32.xlu0 %v1363, 110
  %v1399 = vpop.permute.xlu0 %1398
  %1400 = vrot.lane.b32.xlu0 %v1364, 110
  %v1401 = vpop.permute.xlu0 %1400
  %1402 = vrot.lane.b32.xlu0 %v1365, 110
  %v1403 = vpop.permute.xlu0 %1402
  %1404 = vrot.lane.b32.xlu0 %v1366, 110
  %v1405 = vpop.permute.xlu0 %1404
  %1406 = vrot.lane.b32.xlu0 %v1367, 110
  %v1407 = vpop.permute.xlu0 %1406
  %1408 = vrot.lane.b32.xlu0 %v1368, 110
  %v1409 = vpop.permute.xlu0 %1408
  %1410 = vrot.lane.b32.xlu0 %v1369, 110
  %v1411 = vpop.permute.xlu0 %1410
  %vm1412 = vcmask 900096
  %v1413 = vsel %vm1412, %v1385, %v1387
  %v1414 = vsel %vm1412, %v1387, %v1389
  %v1415 = vsel %vm1412, %v1389, %v1391
  %v1416 = vsel %vm1412, %v1391, %v1393
  %v1417 = vsel %vm1412, %v1393, %v1395
  %v1418 = vsel %vm1412, %v1395, %v1397
  %v1419 = vsel %vm1412, %v1399, %v1401
  %v1420 = vsel %vm1412, %v1401, %v1403
  %v1421 = vsel %vm1412, %v1403, %v1405
  %v1422 = vsel %vm1412, %v1405, %v1407
  %v1423 = vsel %vm1412, %v1407, %v1409
  %v1424 = vsel %vm1412, %v1409, %v1411
  %1437 = vst [vmem:[#allocation4 + $0x2a0] sm:$0xff] %v1413
  %1438 = vst [vmem:[#allocation4 + $0x2a8] sm:$0xff] %v1414
  %1439 = vst [vmem:[#allocation4 + $0x2b0] sm:$0xff] %v1415
  %1440 = vst [vmem:[#allocation4 + $0x2b8] sm:$0xff] %v1416
  %1441 = vst [vmem:[#allocation4 + $0x2c0] sm:$0xff] %v1417
  %1442 = vst [vmem:[#allocation4 + $0x2c8] sm:$0xff] %v1418
  %1443 = vst [vmem:[#allocation4 + $0x2d0] sm:$0xff] %v1419
  %1444 = vst [vmem:[#allocation4 + $0x2d8] sm:$0xff] %v1420
  %1445 = vst [vmem:[#allocation4 + $0x2e0] sm:$0xff] %v1421
  %1446 = vst [vmem:[#allocation4 + $0x2e8] sm:$0xff] %v1422
  %1447 = vst [vmem:[#allocation4 + $0x2f0] sm:$0xff] %v1423
  %1448 = vst [vmem:[#allocation4 + $0x2f8] sm:$0xff] %v1424
  %v1449 = vld [vmem:[#allocation2 + $0x8] sm:$0xff]
  %v1450 = vld [vmem:[#allocation2 + $0x10] sm:$0xff]
  %v1451 = vld [vmem:[#allocation2 + $0x18] sm:$0xff]
  %v1452 = vld [vmem:[#allocation2 + $0x20] sm:$0xff]
  %v1453 = vld [vmem:[#allocation2 + $0x28] sm:$0xff]
  %v1454 = vld [vmem:[#allocation2 + $0x30] sm:$0xff]
  %v1455 = vld [vmem:[#allocation2 + $0x38] sm:$0xff]
  %v1456 = vld [vmem:[#allocation2 + $0x48] sm:$0xff]
  %v1457 = vld [vmem:[#allocation2 + $0x50] sm:$0xff]
  %v1458 = vld [vmem:[#allocation2 + $0x58] sm:$0xff]
  %v1459 = vld [vmem:[#allocation2 + $0x60] sm:$0xff]
  %v1460 = vld [vmem:[#allocation2 + $0x68] sm:$0xff]
  %v1461 = vld [vmem:[#allocation2 + $0x70] sm:$0xff]
  %v1462 = vld [vmem:[#allocation2 + $0x78] sm:$0xff]
  %1477 = vrot.lane.b32.xlu0 %v1449, 109
  %v1478 = vpop.permute.xlu0 %1477
  %1479 = vrot.lane.b32.xlu0 %v1450, 109
  %v1480 = vpop.permute.xlu0 %1479
  %1481 = vrot.lane.b32.xlu0 %v1451, 109
  %v1482 = vpop.permute.xlu0 %1481
  %1483 = vrot.lane.b32.xlu0 %v1452, 109
  %v1484 = vpop.permute.xlu0 %1483
  %1485 = vrot.lane.b32.xlu0 %v1453, 109
  %v1486 = vpop.permute.xlu0 %1485
  %1487 = vrot.lane.b32.xlu0 %v1454, 109
  %v1488 = vpop.permute.xlu0 %1487
  %1489 = vrot.lane.b32.xlu0 %v1455, 109
  %v1490 = vpop.permute.xlu0 %1489
  %1491 = vrot.lane.b32.xlu0 %v1456, 109
  %v1492 = vpop.permute.xlu0 %1491
  %1493 = vrot.lane.b32.xlu0 %v1457, 109
  %v1494 = vpop.permute.xlu0 %1493
  %1495 = vrot.lane.b32.xlu0 %v1458, 109
  %v1496 = vpop.permute.xlu0 %1495
  %1497 = vrot.lane.b32.xlu0 %v1459, 109
  %v1498 = vpop.permute.xlu0 %1497
  %1499 = vrot.lane.b32.xlu0 %v1460, 109
  %v1500 = vpop.permute.xlu0 %1499
  %1501 = vrot.lane.b32.xlu0 %v1461, 109
  %v1502 = vpop.permute.xlu0 %1501
  %1503 = vrot.lane.b32.xlu0 %v1462, 109
  %v1504 = vpop.permute.xlu0 %1503
  %vm1505 = vcmask 891904
  %v1506 = vsel %vm1505, %v1478, %v1480
  %v1507 = vsel %vm1505, %v1480, %v1482
  %v1508 = vsel %vm1505, %v1482, %v1484
  %v1509 = vsel %vm1505, %v1484, %v1486
  %v1510 = vsel %vm1505, %v1486, %v1488
  %v1511 = vsel %vm1505, %v1488, %v1490
  %v1512 = vsel %vm1505, %v1492, %v1494
  %v1513 = vsel %vm1505, %v1494, %v1496
  %v1514 = vsel %vm1505, %v1496, %v1498
  %v1515 = vsel %vm1505, %v1498, %v1500
  %v1516 = vsel %vm1505, %v1500, %v1502
  %v1517 = vsel %vm1505, %v1502, %v1504
  %1530 = vst [vmem:[#allocation4 + $0x300] sm:$0xff] %v1506
  %1531 = vst [vmem:[#allocation4 + $0x308] sm:$0xff] %v1507
  %1532 = vst [vmem:[#allocation4 + $0x310] sm:$0xff] %v1508
  %1533 = vst [vmem:[#allocation4 + $0x318] sm:$0xff] %v1509
  %1534 = vst [vmem:[#allocation4 + $0x320] sm:$0xff] %v1510
  %1535 = vst [vmem:[#allocation4 + $0x328] sm:$0xff] %v1511
  %1536 = vst [vmem:[#allocation4 + $0x330] sm:$0xff] %v1512
  %1537 = vst [vmem:[#allocation4 + $0x338] sm:$0xff] %v1513
  %1538 = vst [vmem:[#allocation4 + $0x340] sm:$0xff] %v1514
  %1539 = vst [vmem:[#allocation4 + $0x348] sm:$0xff] %v1515
  %1540 = vst [vmem:[#allocation4 + $0x350] sm:$0xff] %v1516
  %1541 = vst [vmem:[#allocation4 + $0x358] sm:$0xff] %v1517
  %v1542 = vld [vmem:[%s6] sm:$0xff]
  %v1543 = vld [vmem:[%s6 + $0x8] sm:$0xff]
  %v1544 = vld [vmem:[%s6 + $0x10] sm:$0xff]
  %v1545 = vld [vmem:[%s6 + $0x18] sm:$0xff]
  %v1546 = vld [vmem:[%s6 + $0x20] sm:$0xff]
  %v1547 = vld [vmem:[%s6 + $0x28] sm:$0xff]
  %v1548 = vld [vmem:[%s6 + $0x30] sm:$0xff]
  %v1549 = vld [vmem:[%s6 + $0x38] sm:$0xff]
  %v1550 = vld [vmem:[#allocation4] sm:$0xff]
  %v1551 = vld [vmem:[#allocation4 + $0x8] sm:$0xff]
  %v1552 = vld [vmem:[#allocation4 + $0x10] sm:$0xff]
  %v1553 = vld [vmem:[#allocation4 + $0x18] sm:$0xff]
  %v1554 = vld [vmem:[#allocation4 + $0x20] sm:$0xff]
  %v1555 = vld [vmem:[#allocation4 + $0x28] sm:$0xff]
  %v1556 = vld [vmem:[#allocation4 + $0x30] sm:$0xff]
  %v1557 = vld [vmem:[#allocation4 + $0x38] sm:$0xff]
  %v1558 = vld [vmem:[#allocation4 + $0x40] sm:$0xff]
  %v1559 = vld [vmem:[#allocation4 + $0x48] sm:$0xff]
  %v1560 = vld [vmem:[#allocation4 + $0x50] sm:$0xff]
  %v1561 = vld [vmem:[#allocation4 + $0x58] sm:$0xff]
  %v1562 = vld [vmem:[#allocation4 + $0x60] sm:$0xff]
  %v1563 = vld [vmem:[#allocation4 + $0x68] sm:$0xff]
  %v1564 = vld [vmem:[#allocation4 + $0x70] sm:$0xff]
  %v1565 = vld [vmem:[#allocation4 + $0x78] sm:$0xff]
  %v1566 = vld [vmem:[#allocation4 + $0x80] sm:$0xff]
  %v1567 = vld [vmem:[#allocation4 + $0x88] sm:$0xff]
  %v1568 = vld [vmem:[#allocation4 + $0x90] sm:$0xff]
  %v1569 = vld [vmem:[#allocation4 + $0x98] sm:$0xff]
  %v1570 = vld [vmem:[#allocation4 + $0xa0] sm:$0xff]
  %v1571 = vld [vmem:[#allocation4 + $0xa8] sm:$0xff]
  %v1572 = vld [vmem:[#allocation4 + $0xb0] sm:$0xff]
  %v1573 = vld [vmem:[#allocation4 + $0xb8] sm:$0xff]
  %v1574 = vld [vmem:[#allocation4 + $0xc0] sm:$0xff]
  %v1575 = vld [vmem:[#allocation4 + $0xc8] sm:$0xff]
  %v1576 = vld [vmem:[#allocation4 + $0xd0] sm:$0xff]
  %v1577 = vld [vmem:[#allocation4 + $0xd8] sm:$0xff]
  %v1578 = vld [vmem:[#allocation4 + $0xe0] sm:$0xff]
  %v1579 = vld [vmem:[#allocation4 + $0xe8] sm:$0xff]
  %v1580 = vld [vmem:[#allocation4 + $0xf0] sm:$0xff]
  %v1581 = vld [vmem:[#allocation4 + $0xf8] sm:$0xff]
  %v1582 = vld [vmem:[#allocation4 + $0x100] sm:$0xff]
  %v1583 = vld [vmem:[#allocation4 + $0x108] sm:$0xff]
  %v1584 = vld [vmem:[#allocation4 + $0x110] sm:$0xff]
  %v1585 = vld [vmem:[#allocation4 + $0x118] sm:$0xff]
  %v1586 = vld [vmem:[#allocation4 + $0x120] sm:$0xff]
  %v1587 = vld [vmem:[#allocation4 + $0x128] sm:$0xff]
  %v1588 = vld [vmem:[#allocation4 + $0x130] sm:$0xff]
  %v1589 = vld [vmem:[#allocation4 + $0x138] sm:$0xff]
  %v1590 = vld [vmem:[#allocation4 + $0x140] sm:$0xff]
  %v1591 = vld [vmem:[#allocation4 + $0x148] sm:$0xff]
  %v1592 = vld [vmem:[#allocation4 + $0x150] sm:$0xff]
  %v1593 = vld [vmem:[#allocation4 + $0x158] sm:$0xff]
  %v1594 = vld [vmem:[#allocation4 + $0x160] sm:$0xff]
  %v1595 = vld [vmem:[#allocation4 + $0x168] sm:$0xff]
  %v1596 = vld [vmem:[#allocation4 + $0x170] sm:$0xff]
  %v1597 = vld [vmem:[#allocation4 + $0x178] sm:$0xff]
  %v1598 = vld [vmem:[#allocation4 + $0x180] sm:$0xff]
  %v1599 = vld [vmem:[#allocation4 + $0x188] sm:$0xff]
  %v1600 = vld [vmem:[#allocation4 + $0x190] sm:$0xff]
  %v1601 = vld [vmem:[#allocation4 + $0x198] sm:$0xff]
  %v1602 = vld [vmem:[#allocation4 + $0x1a0] sm:$0xff]
  %v1603 = vld [vmem:[#allocation4 + $0x1a8] sm:$0xff]
  %v1604 = vld [vmem:[#allocation4 + $0x1b0] sm:$0xff]
  %v1605 = vld [vmem:[#allocation4 + $0x1b8] sm:$0xff]
  %v1606 = vld [vmem:[#allocation4 + $0x1c0] sm:$0xff]
  %v1607 = vld [vmem:[#allocation4 + $0x1c8] sm:$0xff]
  %v1608 = vld [vmem:[#allocation4 + $0x1d0] sm:$0xff]
  %v1609 = vld [vmem:[#allocation4 + $0x1d8] sm:$0xff]
  %v1610 = vld [vmem:[#allocation4 + $0x1e0] sm:$0xff]
  %v1611 = vld [vmem:[#allocation4 + $0x1e8] sm:$0xff]
  %v1612 = vld [vmem:[#allocation4 + $0x1f0] sm:$0xff]
  %v1613 = vld [vmem:[#allocation4 + $0x1f8] sm:$0xff]
  %v1614 = vld [vmem:[#allocation4 + $0x200] sm:$0xff]
  %v1615 = vld [vmem:[#allocation4 + $0x208] sm:$0xff]
  %v1616 = vld [vmem:[#allocation4 + $0x210] sm:$0xff]
  %v1617 = vld [vmem:[#allocation4 + $0x218] sm:$0xff]
  %v1618 = vld [vmem:[#allocation4 + $0x220] sm:$0xff]
  %v1619 = vld [vmem:[#allocation4 + $0x228] sm:$0xff]
  %v1620 = vld [vmem:[#allocation4 + $0x230] sm:$0xff]
  %v1621 = vld [vmem:[#allocation4 + $0x238] sm:$0xff]
  %v1622 = vld [vmem:[#allocation4 + $0x240] sm:$0xff]
  %v1623 = vld [vmem:[#allocation4 + $0x248] sm:$0xff]
  %v1624 = vld [vmem:[#allocation4 + $0x250] sm:$0xff]
  %v1625 = vld [vmem:[#allocation4 + $0x258] sm:$0xff]
  %v1626 = vld [vmem:[#allocation4 + $0x260] sm:$0xff]
  %v1627 = vld [vmem:[#allocation4 + $0x268] sm:$0xff]
  %v1628 = vld [vmem:[#allocation4 + $0x270] sm:$0xff]
  %v1629 = vld [vmem:[#allocation4 + $0x278] sm:$0xff]
  %v1630 = vld [vmem:[#allocation4 + $0x280] sm:$0xff]
  %v1631 = vld [vmem:[#allocation4 + $0x288] sm:$0xff]
  %v1632 = vld [vmem:[#allocation4 + $0x290] sm:$0xff]
  %v1633 = vld [vmem:[#allocation4 + $0x298] sm:$0xff]
  %v1634 = vld [vmem:[#allocation4 + $0x2a0] sm:$0xff]
  %v1635 = vld [vmem:[#allocation4 + $0x2a8] sm:$0xff]
  %v1636 = vld [vmem:[#allocation4 + $0x2b0] sm:$0xff]
  %v1637 = vld [vmem:[#allocation4 + $0x2b8] sm:$0xff]
  %v1638 = vld [vmem:[#allocation4 + $0x2c0] sm:$0xff]
  %v1639 = vld [vmem:[#allocation4 + $0x2c8] sm:$0xff]
  %v1640 = vld [vmem:[#allocation4 + $0x2d0] sm:$0xff]
  %v1641 = vld [vmem:[#allocation4 + $0x2d8] sm:$0xff]
  %v1642 = vld [vmem:[#allocation4 + $0x2e0] sm:$0xff]
  %v1643 = vld [vmem:[#allocation4 + $0x2e8] sm:$0xff]
  %v1644 = vld [vmem:[#allocation4 + $0x2f0] sm:$0xff]
  %v1645 = vld [vmem:[#allocation4 + $0x2f8] sm:$0xff]
  %v1646 = vld [vmem:[#allocation4 + $0x300] sm:$0xff]
  %v1647 = vld [vmem:[#allocation4 + $0x308] sm:$0xff]
  %v1648 = vld [vmem:[#allocation4 + $0x310] sm:$0xff]
  %v1649 = vld [vmem:[#allocation4 + $0x318] sm:$0xff]
  %v1650 = vld [vmem:[#allocation4 + $0x320] sm:$0xff]
  %v1651 = vld [vmem:[#allocation4 + $0x328] sm:$0xff]
  %v1652 = vld [vmem:[#allocation4 + $0x330] sm:$0xff]
  %v1653 = vld [vmem:[#allocation4 + $0x338] sm:$0xff]
  %v1654 = vld [vmem:[#allocation4 + $0x340] sm:$0xff]
  %v1655 = vld [vmem:[#allocation4 + $0x348] sm:$0xff]
  %v1656 = vld [vmem:[#allocation4 + $0x350] sm:$0xff]
  %v1657 = vld [vmem:[#allocation4 + $0x358] sm:$0xff]
  %v1659 = vsel %vm500, %v1543, 0
  %v1662 = vsel %vm500, %v1545, 0
  %v1665 = vsel %vm500, %v1547, 0
  %v1668 = vsel %vm500, %v1549, 0
  %1670 = vmatprep.subr.mxu0 %v1551
  %1671 = vmatpush1.msra.mxu0 %v1550
  %1672 = vmatprep.subr.mxu0 %v1557
  %1673 = vmatpush1.msra.mxu0 %v1556
  %1674 = vmatprep.subr.mxu0 %v1563
  %1675 = vmatpush1.msra.mxu0 %v1562
  %1676 = vmatprep.subr.mxu0 %v1569
  %1677 = vmatpush1.msra.mxu0 %v1568
  %1678 = vmatprep.subr.mxu0 %v1575
  %1679 = vmatpush1.msra.mxu0 %v1574
  %1680 = vmatprep.subr.mxu0 %v1581
  %1681 = vmatpush1.msra.mxu0 %v1580
  %1682 = vmatprep.subr.mxu0 %v1587
  %1683 = vmatpush1.msra.mxu0 %v1586
  %1684 = vmatprep.subr.mxu0 %v1593
  %1685 = vmatpush1.msra.mxu0 %v1592
  %1686 = vmatprep.subr.mxu0 %v1599
  %1687 = vmatpush1.msra.mxu0 %v1598
  %1688 = vmatprep.subr.mxu0 %v1605
  %1689 = vmatpush1.msra.mxu0 %v1604
  %1690 = vmatprep.subr.mxu0 %v1611
  %1691 = vmatpush1.msra.mxu0 %v1610
  %1692 = vmatprep.subr.mxu0 %v1617
  %1693 = vmatpush1.msra.mxu0 %v1616
  %1694 = vmatprep.subr.mxu0 %v1623
  %1695 = vmatpush1.msra.mxu0 %v1622
  %1696 = vmatprep.subr.mxu0 %v1629
  %1697 = vmatpush1.msra.mxu0 %v1628
  %1698 = vmatprep.subr.mxu0 %v1635
  %1699 = vmatpush1.msra.mxu0 %v1634
  %1700 = vmatprep.subr.mxu0 %v1641
  %1701 = vmatpush1.msra.mxu0 %v1640
  %1702 = vmatprep.subr.mxu0 %v1647
  %1703 = vmatpush1.msra.mxu0 %v1646
  %1704 = vmatprep.subr.mxu0 %v1653
  %1705 = vmatpush1.msra.mxu0 %v1652
  %1706 = vmatprep.subr.mxu0 0.0
  %1707 = vmatpush1.msra.mxu0 0.0
  %1708 = vmatprep.subr.mxu0 0.0
  %1709 = vmatpush1.msra.mxu0 0.0
  %1710 = vmatprep.subr.mxu0 0.0
  %1711 = vmatpush1.msra.mxu0 0.0
  %1712 = vmatprep.subr.mxu0 0.0
  %1713 = vmatpush1.msra.mxu0 0.0
  %1714 = vmatprep.subr.mxu0 0.0
  %1715 = vmatpush1.msra.mxu0 0.0
  %1716 = vmatprep.subr.mxu0 0.0
  %1717 = vmatpush1.msra.mxu0 0.0
  %1718 = vmatprep.subr.mxu0 0.0
  %1719 = vmatpush1.msra.mxu0 0.0
  %1720 = vmatprep.subr.mxu0 0.0
  %1721 = vmatpush1.msra.mxu0 0.0
  %1722 = vmatprep.subr.mxu0 0.0
  %1723 = vmatpush1.msra.mxu0 0.0
  %1724 = vmatprep.subr.mxu0 0.0
  %1725 = vmatpush1.msra.mxu0 0.0
  %1726 = vmatprep.subr.mxu0 0.0
  %1727 = vmatpush1.msra.mxu0 0.0
  %1728 = vmatprep.subr.mxu0 0.0
  %1729 = vmatpush1.msra.mxu0 0.0
  %1730 = vmatprep.subr.mxu0 0.0
  %1731 = vmatpush1.msra.mxu0 0.0
  %1732 = vmatprep.subr.mxu0 0.0
  %1733 = vmatpush1.msra.mxu0 0.0
  %1734 = vmatprep.mubr.f32.mxu0 %v1659
  %1735 = vmatmul.mubr.f32.gmra.mrb[0].mxu0 %v1542
  %v1736 = vpop.f32.mrb[0].mxu0
  %v1737 = vadd.f32 0.0, %v1736
  %v1738 = vpop.f32.mrb[0].mxu0
  %v1739 = vadd.f32 0.0, %v1738
  %1740 = vmatprep.mubr.f32.mxu0 %v1662
  %1741 = vmatmul.mubr.f32.gmra.mrb[0].mxu0 %v1544
  %v1742 = vpop.f32.mrb[0].mxu0
  %v1743 = vadd.f32 0.0, %v1742
  %v1744 = vpop.f32.mrb[0].mxu0
  %v1745 = vadd.f32 0.0, %v1744
  %1746 = vmatprep.mubr.f32.mxu0 %v1665
  %1747 = vmatmul.mubr.f32.gmra.mrb[0].mxu0 %v1546
  %v1748 = vpop.f32.mrb[0].mxu0
  %v1749 = vadd.f32 0.0, %v1748
  %v1750 = vpop.f32.mrb[0].mxu0
  %v1751 = vadd.f32 0.0, %v1750
  %1752 = vmatprep.mubr.f32.mxu0 %v1668
  %1753 = vmatmul.mubr.f32.gmra.mrb[0].mxu0 %v1548
  %v1754 = vpop.f32.mrb[0].mxu0
  %v1755 = vadd.f32 0.0, %v1754
  %v1756 = vpop.f32.mrb[0].mxu0
  %v1757 = vadd.f32 0.0, %v1756
  %1758 = vdwg.mxu0
  %1759 = vmatprep.subr.mxu0 %v1553
  %1760 = vmatpush1.msra.mxu0 %v1552
  %1761 = vmatprep.subr.mxu0 %v1559
  %1762 = vmatpush1.msra.mxu0 %v1558
  %1763 = vmatprep.subr.mxu0 %v1565
  %1764 = vmatpush1.msra.mxu0 %v1564
  %1765 = vmatprep.subr.mxu0 %v1571
  %1766 = vmatpush1.msra.mxu0 %v1570
  %1767 = vmatprep.subr.mxu0 %v1577
  %1768 = vmatpush1.msra.mxu0 %v1576
  %1769 = vmatprep.subr.mxu0 %v1583
  %1770 = vmatpush1.msra.mxu0 %v1582
  %1771 = vmatprep.subr.mxu0 %v1589
  %1772 = vmatpush1.msra.mxu0 %v1588
  %1773 = vmatprep.subr.mxu0 %v1595
  %1774 = vmatpush1.msra.mxu0 %v1594
  %1775 = vmatprep.subr.mxu0 %v1601
  %1776 = vmatpush1.msra.mxu0 %v1600
  %1777 = vmatprep.subr.mxu0 %v1607
  %1778 = vmatpush1.msra.mxu0 %v1606
  %1779 = vmatprep.subr.mxu0 %v1613
  %1780 = vmatpush1.msra.mxu0 %v1612
  %1781 = vmatprep.subr.mxu0 %v1619
  %1782 = vmatpush1.msra.mxu0 %v1618
  %1783 = vmatprep.subr.mxu0 %v1625
  %1784 = vmatpush1.msra.mxu0 %v1624
  %1785 = vmatprep.subr.mxu0 %v1631
  %1786 = vmatpush1.msra.mxu0 %v1630
  %1787 = vmatprep.subr.mxu0 %v1637
  %1788 = vmatpush1.msra.mxu0 %v1636
  %1789 = vmatprep.subr.mxu0 %v1643
  %1790 = vmatpush1.msra.mxu0 %v1642
  %1791 = vmatprep.subr.mxu0 %v1649
  %1792 = vmatpush1.msra.mxu0 %v1648
  %1793 = vmatprep.subr.mxu0 %v1655
  %1794 = vmatpush1.msra.mxu0 %v1654
  %1795 = vmatprep.subr.mxu0 0.0
  %1796 = vmatpush1.msra.mxu0 0.0
  %1797 = vmatprep.subr.mxu0 0.0
  %1798 = vmatpush1.msra.mxu0 0.0
  %1799 = vmatprep.subr.mxu0 0.0
  %1800 = vmatpush1.msra.mxu0 0.0
  %1801 = vmatprep.subr.mxu0 0.0
  %1802 = vmatpush1.msra.mxu0 0.0
  %1803 = vmatprep.subr.mxu0 0.0
  %1804 = vmatpush1.msra.mxu0 0.0
  %1805 = vmatprep.subr.mxu0 0.0
  %1806 = vmatpush1.msra.mxu0 0.0
  %1807 = vmatprep.subr.mxu0 0.0
  %1808 = vmatpush1.msra.mxu0 0.0
  %1809 = vmatprep.subr.mxu0 0.0
  %1810 = vmatpush1.msra.mxu0 0.0
  %1811 = vmatprep.subr.mxu0 0.0
  %1812 = vmatpush1.msra.mxu0 0.0
  %1813 = vmatprep.subr.mxu0 0.0
  %1814 = vmatpush1.msra.mxu0 0.0
  %1815 = vmatprep.subr.mxu0 0.0
  %1816 = vmatpush1.msra.mxu0 0.0
  %1817 = vmatprep.subr.mxu0 0.0
  %1818 = vmatpush1.msra.mxu0 0.0
  %1819 = vmatprep.subr.mxu0 0.0
  %1820 = vmatpush1.msra.mxu0 0.0
  %1821 = vmatprep.subr.mxu0 0.0
  %1822 = vmatpush1.msra.mxu0 0.0
  %1823 = vmatprep.mubr.f32.mxu0 %v1659
  %1824 = vmatmul.mubr.f32.gmra.mrb[0].mxu0 %v1542
  %v1825 = vpop.f32.mrb[0].mxu0
  %v1826 = vadd.f32 0.0, %v1825
  %v1827 = vpop.f32.mrb[0].mxu0
  %v1828 = vadd.f32 0.0, %v1827
  %1829 = vmatprep.mubr.f32.mxu0 %v1662
  %1830 = vmatmul.mubr.f32.gmra.mrb[0].mxu0 %v1544
  %v1831 = vpop.f32.mrb[0].mxu0
  %v1832 = vadd.f32 0.0, %v1831
  %v1833 = vpop.f32.mrb[0].mxu0
  %v1834 = vadd.f32 0.0, %v1833
  %1835 = vmatprep.mubr.f32.mxu0 %v1665
  %1836 = vmatmul.mubr.f32.gmra.mrb[0].mxu0 %v1546
  %v1837 = vpop.f32.mrb[0].mxu0
  %v1838 = vadd.f32 0.0, %v1837
  %v1839 = vpop.f32.mrb[0].mxu0
  %v1840 = vadd.f32 0.0, %v1839
  %1841 = vmatprep.mubr.f32.mxu0 %v1668
  %1842 = vmatmul.mubr.f32.gmra.mrb[0].mxu0 %v1548
  %v1843 = vpop.f32.mrb[0].mxu0
  %v1844 = vadd.f32 0.0, %v1843
  %v1845 = vpop.f32.mrb[0].mxu0
  %v1846 = vadd.f32 0.0, %v1845
  %1847 = vdwg.mxu0
  %1848 = vmatprep.subr.mxu0 %v1555
  %1849 = vmatpush1.msra.mxu0 %v1554
  %1850 = vmatprep.subr.mxu0 %v1561
  %1851 = vmatpush1.msra.mxu0 %v1560
  %1852 = vmatprep.subr.mxu0 %v1567
  %1853 = vmatpush1.msra.mxu0 %v1566
  %1854 = vmatprep.subr.mxu0 %v1573
  %1855 = vmatpush1.msra.mxu0 %v1572
  %1856 = vmatprep.subr.mxu0 %v1579
  %1857 = vmatpush1.msra.mxu0 %v1578
  %1858 = vmatprep.subr.mxu0 %v1585
  %1859 = vmatpush1.msra.mxu0 %v1584
  %1860 = vmatprep.subr.mxu0 %v1591
  %1861 = vmatpush1.msra.mxu0 %v1590
  %1862 = vmatprep.subr.mxu0 %v1597
  %1863 = vmatpush1.msra.mxu0 %v1596
  %1864 = vmatprep.subr.mxu0 %v1603
  %1865 = vmatpush1.msra.mxu0 %v1602
  %1866 = vmatprep.subr.mxu0 %v1609
  %1867 = vmatpush1.msra.mxu0 %v1608
  %1868 = vmatprep.subr.mxu0 %v1615
  %1869 = vmatpush1.msra.mxu0 %v1614
  %1870 = vmatprep.subr.mxu0 %v1621
  %1871 = vmatpush1.msra.mxu0 %v1620
  %1872 = vmatprep.subr.mxu0 %v1627
  %1873 = vmatpush1.msra.mxu0 %v1626
  %1874 = vmatprep.subr.mxu0 %v1633
  %1875 = vmatpush1.msra.mxu0 %v1632
  %1876 = vmatprep.subr.mxu0 %v1639
  %1877 = vmatpush1.msra.mxu0 %v1638
  %1878 = vmatprep.subr.mxu0 %v1645
  %1879 = vmatpush1.msra.mxu0 %v1644
  %1880 = vmatprep.subr.mxu0 %v1651
  %1881 = vmatpush1.msra.mxu0 %v1650
  %1882 = vmatprep.subr.mxu0 %v1657
  %1883 = vmatpush1.msra.mxu0 %v1656
  %1884 = vmatprep.subr.mxu0 0.0
  %1885 = vmatpush1.msra.mxu0 0.0
  %1886 = vmatprep.subr.mxu0 0.0
  %1887 = vmatpush1.msra.mxu0 0.0
  %1888 = vmatprep.subr.mxu0 0.0
  %1889 = vmatpush1.msra.mxu0 0.0
  %1890 = vmatprep.subr.mxu0 0.0
  %1891 = vmatpush1.msra.mxu0 0.0
  %1892 = vmatprep.subr.mxu0 0.0
  %1893 = vmatpush1.msra.mxu0 0.0
  %1894 = vmatprep.subr.mxu0 0.0
  %1895 = vmatpush1.msra.mxu0 0.0
  %1896 = vmatprep.subr.mxu0 0.0
  %1897 = vmatpush1.msra.mxu0 0.0
  %1898 = vmatprep.subr.mxu0 0.0
  %1899 = vmatpush1.msra.mxu0 0.0
  %1900 = vmatprep.subr.mxu0 0.0
  %1901 = vmatpush1.msra.mxu0 0.0
  %1902 = vmatprep.subr.mxu0 0.0
  %1903 = vmatpush1.msra.mxu0 0.0
  %1904 = vmatprep.subr.mxu0 0.0
  %1905 = vmatpush1.msra.mxu0 0.0
  %1906 = vmatprep.subr.mxu0 0.0
  %1907 = vmatpush1.msra.mxu0 0.0
  %1908 = vmatprep.subr.mxu0 0.0
  %1909 = vmatpush1.msra.mxu0 0.0
  %1910 = vmatprep.subr.mxu0 0.0
  %1911 = vmatpush1.msra.mxu0 0.0
  %1912 = vmatprep.mubr.f32.mxu0 %v1659
  %1913 = vmatmul.mubr.f32.gmra.mrb[0].mxu0 %v1542
  %v1914 = vpop.f32.mrb[0].mxu0
  %v1915 = vadd.f32 0.0, %v1914
  %v1916 = vpop.f32.mrb[0].mxu0
  %v1917 = vadd.f32 0.0, %v1916
  %1918 = vmatprep.mubr.f32.mxu0 %v1662
  %1919 = vmatmul.mubr.f32.gmra.mrb[0].mxu0 %v1544
  %v1920 = vpop.f32.mrb[0].mxu0
  %v1921 = vadd.f32 0.0, %v1920
  %v1922 = vpop.f32.mrb[0].mxu0
  %v1923 = vadd.f32 0.0, %v1922
  %1924 = vmatprep.mubr.f32.mxu0 %v1665
  %1925 = vmatmul.mubr.f32.gmra.mrb[0].mxu0 %v1546
  %v1926 = vpop.f32.mrb[0].mxu0
  %v1927 = vadd.f32 0.0, %v1926
  %v1928 = vpop.f32.mrb[0].mxu0
  %v1929 = vadd.f32 0.0, %v1928
  %1930 = vmatprep.mubr.f32.mxu0 %v1668
  %1931 = vmatmul.mubr.f32.gmra.mrb[0].mxu0 %v1548
  %v1932 = vpop.f32.mrb[0].mxu0
  %v1933 = vadd.f32 0.0, %v1932
  %v1934 = vpop.f32.mrb[0].mxu0
  %v1935 = vadd.f32 0.0, %v1934
  %1936 = vdwg.mxu0
  %v1937 = vmax.f32 %v1737, 0.0
  %v1938 = vmax.f32 %v1739, 0.0
  %v1939 = vmax.f32 %v1826, 0.0
  %v1940 = vmax.f32 %v1828, 0.0
  %v1941 = vmax.f32 %v1915, 0.0
  %v1942 = vmax.f32 %v1917, 0.0
  %v1943 = vmax.f32 %v1743, 0.0
  %v1944 = vmax.f32 %v1745, 0.0
  %v1945 = vmax.f32 %v1832, 0.0
  %v1946 = vmax.f32 %v1834, 0.0
  %v1947 = vmax.f32 %v1921, 0.0
  %v1948 = vmax.f32 %v1923, 0.0
  %v1949 = vmax.f32 %v1749, 0.0
  %v1950 = vmax.f32 %v1751, 0.0
  %v1951 = vmax.f32 %v1838, 0.0
  %v1952 = vmax.f32 %v1840, 0.0
  %v1953 = vmax.f32 %v1927, 0.0
  %v1954 = vmax.f32 %v1929, 0.0
  %v1955 = vmax.f32 %v1755, 0.0
  %v1956 = vmax.f32 %v1757, 0.0
  %v1957 = vmax.f32 %v1844, 0.0
  %v1958 = vmax.f32 %v1846, 0.0
  %v1959 = vmax.f32 %v1933, 0.0
  %v1960 = vmax.f32 %v1935, 0.0
  %v1961 = vmul.f32 %v1937, %v423
  %v1962 = vmul.f32 %v1938, %v427
  %v1963 = vmul.f32 %v1939, %v431
  %v1964 = vmul.f32 %v1940, %v435
  %v1965 = vmul.f32 %v1941, %v439
  %v1966 = vmul.f32 %v1942, %v443
  %v1967 = vmul.f32 %v1943, %v423
  %v1968 = vmul.f32 %v1944, %v427
  %v1969 = vmul.f32 %v1945, %v431
  %v1970 = vmul.f32 %v1946, %v435
  %v1971 = vmul.f32 %v1947, %v439
  %v1972 = vmul.f32 %v1948, %v443
  %v1973 = vmul.f32 %v1949, %v423
  %v1974 = vmul.f32 %v1950, %v427
  %v1975 = vmul.f32 %v1951, %v431
  %v1976 = vmul.f32 %v1952, %v435
  %v1977 = vmul.f32 %v1953, %v439
  %v1978 = vmul.f32 %v1954, %v443
  %v1979 = vmul.f32 %v1955, %v423
  %v1980 = vmul.f32 %v1956, %v427
  %v1981 = vmul.f32 %v1957, %v431
  %v1982 = vmul.f32 %v1958, %v435
  %v1983 = vmul.f32 %v1959, %v439
  %v1984 = vmul.f32 %v1960, %v443
  %1985 = vst [vmem:[#allocation3 + $0x8] sm:$0xff] %v1961
  %1986 = vst [vmem:[#allocation3 + $0x10] sm:$0xff] %v1962
  %1987 = vst [vmem:[#allocation3 + $0x18] sm:$0xff] %v1963
  %1988 = vst [vmem:[#allocation3 + $0x20] sm:$0xff] %v1964
  %1989 = vst [vmem:[#allocation3 + $0x28] sm:$0xff] %v1965
  %1990 = vst [vmem:[#allocation3 + $0x30] sm:$0xff] %v1966
  %1991 = vst [vmem:[#allocation3 + $0x48] sm:$0xff] %v1967
  %1992 = vst [vmem:[#allocation3 + $0x50] sm:$0xff] %v1968
  %1993 = vst [vmem:[#allocation3 + $0x58] sm:$0xff] %v1969
  %1994 = vst [vmem:[#allocation3 + $0x60] sm:$0xff] %v1970
  %1995 = vst [vmem:[#allocation3 + $0x68] sm:$0xff] %v1971
  %1996 = vst [vmem:[#allocation3 + $0x70] sm:$0xff] %v1972
  %1997 = vst [vmem:[#allocation3 + $0x88] sm:$0xff] %v1973
  %1998 = vst [vmem:[#allocation3 + $0x90] sm:$0xff] %v1974
  %1999 = vst [vmem:[#allocation3 + $0x98] sm:$0xff] %v1975
  %2000 = vst [vmem:[#allocation3 + $0xa0] sm:$0xff] %v1976
  %2001 = vst [vmem:[#allocation3 + $0xa8] sm:$0xff] %v1977
  %2002 = vst [vmem:[#allocation3 + $0xb0] sm:$0xff] %v1978
  %2003 = vst [vmem:[#allocation3 + $0xc8] sm:$0xff] %v1979
  %2004 = vst [vmem:[#allocation3 + $0xd0] sm:$0xff] %v1980
  %2005 = vst [vmem:[#allocation3 + $0xd8] sm:$0xff] %v1981
  %2006 = vst [vmem:[#allocation3 + $0xe0] sm:$0xff] %v1982
  %2007 = vst [vmem:[#allocation3 + $0xe8] sm:$0xff] %v1983
  %2008 = vst [vmem:[#allocation3 + $0xf0] sm:$0xff] %v1984
  %v2009 = vld [vmem:[#allocation3] sm:$0xff]
  %v2010 = vld [vmem:[#allocation3 + $0x8] sm:$0xff]
  %v2011 = vld [vmem:[#allocation3 + $0x10] sm:$0xff]
  %v2012 = vld [vmem:[#allocation3 + $0x18] sm:$0xff]
  %v2013 = vld [vmem:[#allocation3 + $0x20] sm:$0xff]
  %v2014 = vld [vmem:[#allocation3 + $0x28] sm:$0xff]
  %v2015 = vld [vmem:[#allocation3 + $0x30] sm:$0xff]
  %v2016 = vld [vmem:[#allocation3 + $0x40] sm:$0xff]
  %v2017 = vld [vmem:[#allocation3 + $0x48] sm:$0xff]
  %v2018 = vld [vmem:[#allocation3 + $0x50] sm:$0xff]
  %v2019 = vld [vmem:[#allocation3 + $0x58] sm:$0xff]
  %v2020 = vld [vmem:[#allocation3 + $0x60] sm:$0xff]
  %v2021 = vld [vmem:[#allocation3 + $0x68] sm:$0xff]
  %v2022 = vld [vmem:[#allocation3 + $0x70] sm:$0xff]
  %v2023 = vld [vmem:[#allocation3 + $0x80] sm:$0xff]
  %v2024 = vld [vmem:[#allocation3 + $0x88] sm:$0xff]
  %v2025 = vld [vmem:[#allocation3 + $0x90] sm:$0xff]
  %v2026 = vld [vmem:[#allocation3 + $0x98] sm:$0xff]
  %v2027 = vld [vmem:[#allocation3 + $0xa0] sm:$0xff]
  %v2028 = vld [vmem:[#allocation3 + $0xa8] sm:$0xff]
  %v2029 = vld [vmem:[#allocation3 + $0xb0] sm:$0xff]
  %v2030 = vld [vmem:[#allocation3 + $0xc0] sm:$0xff]
  %v2031 = vld [vmem:[#allocation3 + $0xc8] sm:$0xff]
  %v2032 = vld [vmem:[#allocation3 + $0xd0] sm:$0xff]
  %v2033 = vld [vmem:[#allocation3 + $0xd8] sm:$0xff]
  %v2034 = vld [vmem:[#allocation3 + $0xe0] sm:$0xff]
  %v2035 = vld [vmem:[#allocation3 + $0xe8] sm:$0xff]
  %v2036 = vld [vmem:[#allocation3 + $0xf0] sm:$0xff]
  %2065 = vrot.lane.b32.xlu0 %v2009, 19
  %v2066 = vpop.permute.xlu0 %2065
  %2067 = vrot.lane.b32.xlu0 %v2010, 19
  %v2068 = vpop.permute.xlu0 %2067
  %2069 = vrot.lane.b32.xlu0 %v2011, 19
  %v2070 = vpop.permute.xlu0 %2069
  %2071 = vrot.lane.b32.xlu0 %v2012, 19
  %v2072 = vpop.permute.xlu0 %2071
  %2073 = vrot.lane.b32.xlu0 %v2013, 19
  %v2074 = vpop.permute.xlu0 %2073
  %2075 = vrot.lane.b32.xlu0 %v2014, 19
  %v2076 = vpop.permute.xlu0 %2075
  %2077 = vrot.lane.b32.xlu0 %v2015, 19
  %v2078 = vpop.permute.xlu0 %2077
  %2079 = vrot.lane.b32.xlu0 %v2016, 19
  %v2080 = vpop.permute.xlu0 %2079
  %2081 = vrot.lane.b32.xlu0 %v2017, 19
  %v2082 = vpop.permute.xlu0 %2081
  %2083 = vrot.lane.b32.xlu0 %v2018, 19
  %v2084 = vpop.permute.xlu0 %2083
  %2085 = vrot.lane.b32.xlu0 %v2019, 19
  %v2086 = vpop.permute.xlu0 %2085
  %2087 = vrot.lane.b32.xlu0 %v2020, 19
  %v2088 = vpop.permute.xlu0 %2087
  %2089 = vrot.lane.b32.xlu0 %v2021, 19
  %v2090 = vpop.permute.xlu0 %2089
  %2091 = vrot.lane.b32.xlu0 %v2022, 19
  %v2092 = vpop.permute.xlu0 %2091
  %2093 = vrot.lane.b32.xlu0 %v2023, 19
  %v2094 = vpop.permute.xlu0 %2093
  %2095 = vrot.lane.b32.xlu0 %v2024, 19
  %v2096 = vpop.permute.xlu0 %2095
  %2097 = vrot.lane.b32.xlu0 %v2025, 19
  %v2098 = vpop.permute.xlu0 %2097
  %2099 = vrot.lane.b32.xlu0 %v2026, 19
  %v2100 = vpop.permute.xlu0 %2099
  %2101 = vrot.lane.b32.xlu0 %v2027, 19
  %v2102 = vpop.permute.xlu0 %2101
  %2103 = vrot.lane.b32.xlu0 %v2028, 19
  %v2104 = vpop.permute.xlu0 %2103
  %2105 = vrot.lane.b32.xlu0 %v2029, 19
  %v2106 = vpop.permute.xlu0 %2105
  %2107 = vrot.lane.b32.xlu0 %v2030, 19
  %v2108 = vpop.permute.xlu0 %2107
  %2109 = vrot.lane.b32.xlu0 %v2031, 19
  %v2110 = vpop.permute.xlu0 %2109
  %2111 = vrot.lane.b32.xlu0 %v2032, 19
  %v2112 = vpop.permute.xlu0 %2111
  %2113 = vrot.lane.b32.xlu0 %v2033, 19
  %v2114 = vpop.permute.xlu0 %2113
  %2115 = vrot.lane.b32.xlu0 %v2034, 19
  %v2116 = vpop.permute.xlu0 %2115
  %2117 = vrot.lane.b32.xlu0 %v2035, 19
  %v2118 = vpop.permute.xlu0 %2117
  %2119 = vrot.lane.b32.xlu0 %v2036, 19
  %v2120 = vpop.permute.xlu0 %2119
  %v2121 = vsel %vm830, %v2066, %v2068
  %v2122 = vsel %vm830, %v2068, %v2070
  %v2123 = vsel %vm830, %v2070, %v2072
  %v2124 = vsel %vm830, %v2072, %v2074
  %v2125 = vsel %vm830, %v2074, %v2076
  %v2126 = vsel %vm830, %v2076, %v2078
  %v2127 = vsel %vm830, %v2080, %v2082
  %v2128 = vsel %vm830, %v2082, %v2084
  %v2129 = vsel %vm830, %v2084, %v2086
  %v2130 = vsel %vm830, %v2086, %v2088
  %v2131 = vsel %vm830, %v2088, %v2090
  %v2132 = vsel %vm830, %v2090, %v2092
  %v2133 = vsel %vm830, %v2094, %v2096
  %v2134 = vsel %vm830, %v2096, %v2098
  %v2135 = vsel %vm830, %v2098, %v2100
  %v2136 = vsel %vm830, %v2100, %v2102
  %v2137 = vsel %vm830, %v2102, %v2104
  %v2138 = vsel %vm830, %v2104, %v2106
  %v2139 = vsel %vm830, %v2108, %v2110
  %v2140 = vsel %vm830, %v2110, %v2112
  %v2141 = vsel %vm830, %v2112, %v2114
  %v2142 = vsel %vm830, %v2114, %v2116
  %v2143 = vsel %vm830, %v2116, %v2118
  %v2144 = vsel %vm830, %v2118, %v2120
  %2169 = vst [vmem:[#allocation4] sm:$0xff] %v2121
  %2170 = vst [vmem:[#allocation4 + $0x8] sm:$0xff] %v2122
  %2171 = vst [vmem:[#allocation4 + $0x10] sm:$0xff] %v2123
  %2172 = vst [vmem:[#allocation4 + $0x18] sm:$0xff] %v2124
  %2173 = vst [vmem:[#allocation4 + $0x20] sm:$0xff] %v2125
  %2174 = vst [vmem:[#allocation4 + $0x28] sm:$0xff] %v2126
  %2175 = vst [vmem:[#allocation4 + $0x30] sm:$0xff] %v2127
  %2176 = vst [vmem:[#allocation4 + $0x38] sm:$0xff] %v2128
  %2177 = vst [vmem:[#allocation4 + $0x40] sm:$0xff] %v2129
  %2178 = vst [vmem:[#allocation4 + $0x48] sm:$0xff] %v2130
  %2179 = vst [vmem:[#allocation4 + $0x50] sm:$0xff] %v2131
  %2180 = vst [vmem:[#allocation4 + $0x58] sm:$0xff] %v2132
  %2181 = vst [vmem:[#allocation4 + $0x60] sm:$0xff] %v2133
  %2182 = vst [vmem:[#allocation4 + $0x68] sm:$0xff] %v2134
  %2183 = vst [vmem:[#allocation4 + $0x70] sm:$0xff] %v2135
  %2184 = vst [vmem:[#allocation4 + $0x78] sm:$0xff] %v2136
  %2185 = vst [vmem:[#allocation4 + $0x80] sm:$0xff] %v2137
  %2186 = vst [vmem:[#allocation4 + $0x88] sm:$0xff] %v2138
  %2187 = vst [vmem:[#allocation4 + $0x90] sm:$0xff] %v2139
  %2188 = vst [vmem:[#allocation4 + $0x98] sm:$0xff] %v2140
  %2189 = vst [vmem:[#allocation4 + $0xa0] sm:$0xff] %v2141
  %2190 = vst [vmem:[#allocation4 + $0xa8] sm:$0xff] %v2142
  %2191 = vst [vmem:[#allocation4 + $0xb0] sm:$0xff] %v2143
  %2192 = vst [vmem:[#allocation4 + $0xb8] sm:$0xff] %v2144
  %v2193 = vld [vmem:[#allocation3] sm:$0xff]
  %v2194 = vld [vmem:[#allocation3 + $0x8] sm:$0xff]
  %v2195 = vld [vmem:[#allocation3 + $0x10] sm:$0xff]
  %v2196 = vld [vmem:[#allocation3 + $0x18] sm:$0xff]
  %v2197 = vld [vmem:[#allocation3 + $0x20] sm:$0xff]
  %v2198 = vld [vmem:[#allocation3 + $0x28] sm:$0xff]
  %v2199 = vld [vmem:[#allocation3 + $0x30] sm:$0xff]
  %v2200 = vld [vmem:[#allocation3 + $0x40] sm:$0xff]
  %v2201 = vld [vmem:[#allocation3 + $0x48] sm:$0xff]
  %v2202 = vld [vmem:[#allocation3 + $0x50] sm:$0xff]
  %v2203 = vld [vmem:[#allocation3 + $0x58] sm:$0xff]
  %v2204 = vld [vmem:[#allocation3 + $0x60] sm:$0xff]
  %v2205 = vld [vmem:[#allocation3 + $0x68] sm:$0xff]
  %v2206 = vld [vmem:[#allocation3 + $0x70] sm:$0xff]
  %v2207 = vld [vmem:[#allocation3 + $0x80] sm:$0xff]
  %v2208 = vld [vmem:[#allocation3 + $0x88] sm:$0xff]
  %v2209 = vld [vmem:[#allocation3 + $0x90] sm:$0xff]
  %v2210 = vld [vmem:[#allocation3 + $0x98] sm:$0xff]
  %v2211 = vld [vmem:[#allocation3 + $0xa0] sm:$0xff]
  %v2212 = vld [vmem:[#allocation3 + $0xa8] sm:$0xff]
  %v2213 = vld [vmem:[#allocation3 + $0xb0] sm:$0xff]
  %v2214 = vld [vmem:[#allocation3 + $0xc0] sm:$0xff]
  %v2215 = vld [vmem:[#allocation3 + $0xc8] sm:$0xff]
  %v2216 = vld [vmem:[#allocation3 + $0xd0] sm:$0xff]
  %v2217 = vld [vmem:[#allocation3 + $0xd8] sm:$0xff]
  %v2218 = vld [vmem:[#allocation3 + $0xe0] sm:$0xff]
  %v2219 = vld [vmem:[#allocation3 + $0xe8] sm:$0xff]
  %v2220 = vld [vmem:[#allocation3 + $0xf0] sm:$0xff]
  %2249 = vrot.lane.b32.xlu0 %v2193, 18
  %v2250 = vpop.permute.xlu0 %2249
  %2251 = vrot.lane.b32.xlu0 %v2194, 18
  %v2252 = vpop.permute.xlu0 %2251
  %2253 = vrot.lane.b32.xlu0 %v2195, 18
  %v2254 = vpop.permute.xlu0 %2253
  %2255 = vrot.lane.b32.xlu0 %v2196, 18
  %v2256 = vpop.permute.xlu0 %2255
  %2257 = vrot.lane.b32.xlu0 %v2197, 18
  %v2258 = vpop.permute.xlu0 %2257
  %2259 = vrot.lane.b32.xlu0 %v2198, 18
  %v2260 = vpop.permute.xlu0 %2259
  %2261 = vrot.lane.b32.xlu0 %v2199, 18
  %v2262 = vpop.permute.xlu0 %2261
  %2263 = vrot.lane.b32.xlu0 %v2200, 18
  %v2264 = vpop.permute.xlu0 %2263
  %2265 = vrot.lane.b32.xlu0 %v2201, 18
  %v2266 = vpop.permute.xlu0 %2265
  %2267 = vrot.lane.b32.xlu0 %v2202, 18
  %v2268 = vpop.permute.xlu0 %2267
  %2269 = vrot.lane.b32.xlu0 %v2203, 18
  %v2270 = vpop.permute.xlu0 %2269
  %2271 = vrot.lane.b32.xlu0 %v2204, 18
  %v2272 = vpop.permute.xlu0 %2271
  %2273 = vrot.lane.b32.xlu0 %v2205, 18
  %v2274 = vpop.permute.xlu0 %2273
  %2275 = vrot.lane.b32.xlu0 %v2206, 18
  %v2276 = vpop.permute.xlu0 %2275
  %2277 = vrot.lane.b32.xlu0 %v2207, 18
  %v2278 = vpop.permute.xlu0 %2277
  %2279 = vrot.lane.b32.xlu0 %v2208, 18
  %v2280 = vpop.permute.xlu0 %2279
  %2281 = vrot.lane.b32.xlu0 %v2209, 18
  %v2282 = vpop.permute.xlu0 %2281
  %2283 = vrot.lane.b32.xlu0 %v2210, 18
  %v2284 = vpop.permute.xlu0 %2283
  %2285 = vrot.lane.b32.xlu0 %v2211, 18
  %v2286 = vpop.permute.xlu0 %2285
  %2287 = vrot.lane.b32.xlu0 %v2212, 18
  %v2288 = vpop.permute.xlu0 %2287
  %2289 = vrot.lane.b32.xlu0 %v2213, 18
  %v2290 = vpop.permute.xlu0 %2289
  %2291 = vrot.lane.b32.xlu0 %v2214, 18
  %v2292 = vpop.permute.xlu0 %2291
  %2293 = vrot.lane.b32.xlu0 %v2215, 18
  %v2294 = vpop.permute.xlu0 %2293
  %2295 = vrot.lane.b32.xlu0 %v2216, 18
  %v2296 = vpop.permute.xlu0 %2295
  %2297 = vrot.lane.b32.xlu0 %v2217, 18
  %v2298 = vpop.permute.xlu0 %2297
  %2299 = vrot.lane.b32.xlu0 %v2218, 18
  %v2300 = vpop.permute.xlu0 %2299
  %2301 = vrot.lane.b32.xlu0 %v2219, 18
  %v2302 = vpop.permute.xlu0 %2301
  %2303 = vrot.lane.b32.xlu0 %v2220, 18
  %v2304 = vpop.permute.xlu0 %2303
  %v2305 = vsel %vm923, %v2250, %v2252
  %v2306 = vsel %vm923, %v2252, %v2254
  %v2307 = vsel %vm923, %v2254, %v2256
  %v2308 = vsel %vm923, %v2256, %v2258
  %v2309 = vsel %vm923, %v2258, %v2260
  %v2310 = vsel %vm923, %v2260, %v2262
  %v2311 = vsel %vm923, %v2264, %v2266
  %v2312 = vsel %vm923, %v2266, %v2268
  %v2313 = vsel %vm923, %v2268, %v2270
  %v2314 = vsel %vm923, %v2270, %v2272
  %v2315 = vsel %vm923, %v2272, %v2274
  %v2316 = vsel %vm923, %v2274, %v2276
  %v2317 = vsel %vm923, %v2278, %v2280
  %v2318 = vsel %vm923, %v2280, %v2282
  %v2319 = vsel %vm923, %v2282, %v2284
  %v2320 = vsel %vm923, %v2284, %v2286
  %v2321 = vsel %vm923, %v2286, %v2288
  %v2322 = vsel %vm923, %v2288, %v2290
  %v2323 = vsel %vm923, %v2292, %v2294
  %v2324 = vsel %vm923, %v2294, %v2296
  %v2325 = vsel %vm923, %v2296, %v2298
  %v2326 = vsel %vm923, %v2298, %v2300
  %v2327 = vsel %vm923, %v2300, %v2302
  %v2328 = vsel %vm923, %v2302, %v2304
  %2353 = vst [vmem:[#allocation4 + $0xc0] sm:$0xff] %v2305
  %2354 = vst [vmem:[#allocation4 + $0xc8] sm:$0xff] %v2306
  %2355 = vst [vmem:[#allocation4 + $0xd0] sm:$0xff] %v2307
  %2356 = vst [vmem:[#allocation4 + $0xd8] sm:$0xff] %v2308
  %2357 = vst [vmem:[#allocation4 + $0xe0] sm:$0xff] %v2309
  %2358 = vst [vmem:[#allocation4 + $0xe8] sm:$0xff] %v2310
  %2359 = vst [vmem:[#allocation4 + $0xf0] sm:$0xff] %v2311
  %2360 = vst [vmem:[#allocation4 + $0xf8] sm:$0xff] %v2312
  %2361 = vst [vmem:[#allocation4 + $0x100] sm:$0xff] %v2313
  %2362 = vst [vmem:[#allocation4 + $0x108] sm:$0xff] %v2314
  %2363 = vst [vmem:[#allocation4 + $0x110] sm:$0xff] %v2315
  %2364 = vst [vmem:[#allocation4 + $0x118] sm:$0xff] %v2316
  %2365 = vst [vmem:[#allocation4 + $0x120] sm:$0xff] %v2317
  %2366 = vst [vmem:[#allocation4 + $0x128] sm:$0xff] %v2318
  %2367 = vst [vmem:[#allocation4 + $0x130] sm:$0xff] %v2319
  %2368 = vst [vmem:[#allocation4 + $0x138] sm:$0xff] %v2320
  %2369 = vst [vmem:[#allocation4 + $0x140] sm:$0xff] %v2321
  %2370 = vst [vmem:[#allocation4 + $0x148] sm:$0xff] %v2322
  %2371 = vst [vmem:[#allocation4 + $0x150] sm:$0xff] %v2323
  %2372 = vst [vmem:[#allocation4 + $0x158] sm:$0xff] %v2324
  %2373 = vst [vmem:[#allocation4 + $0x160] sm:$0xff] %v2325
  %2374 = vst [vmem:[#allocation4 + $0x168] sm:$0xff] %v2326
  %2375 = vst [vmem:[#allocation4 + $0x170] sm:$0xff] %v2327
  %2376 = vst [vmem:[#allocation4 + $0x178] sm:$0xff] %v2328
  %v2377 = vld [vmem:[#allocation3] sm:$0xff]
  %v2378 = vld [vmem:[#allocation3 + $0x8] sm:$0xff]
  %v2379 = vld [vmem:[#allocation3 + $0x10] sm:$0xff]
  %v2380 = vld [vmem:[#allocation3 + $0x18] sm:$0xff]
  %v2381 = vld [vmem:[#allocation3 + $0x20] sm:$0xff]
  %v2382 = vld [vmem:[#allocation3 + $0x28] sm:$0xff]
  %v2383 = vld [vmem:[#allocation3 + $0x30] sm:$0xff]
  %v2384 = vld [vmem:[#allocation3 + $0x40] sm:$0xff]
  %v2385 = vld [vmem:[#allocation3 + $0x48] sm:$0xff]
  %v2386 = vld [vmem:[#allocation3 + $0x50] sm:$0xff]
  %v2387 = vld [vmem:[#allocation3 + $0x58] sm:$0xff]
  %v2388 = vld [vmem:[#allocation3 + $0x60] sm:$0xff]
  %v2389 = vld [vmem:[#allocation3 + $0x68] sm:$0xff]
  %v2390 = vld [vmem:[#allocation3 + $0x70] sm:$0xff]
  %v2391 = vld [vmem:[#allocation3 + $0x80] sm:$0xff]
  %v2392 = vld [vmem:[#allocation3 + $0x88] sm:$0xff]
  %v2393 = vld [vmem:[#allocation3 + $0x90] sm:$0xff]
  %v2394 = vld [vmem:[#allocation3 + $0x98] sm:$0xff]
  %v2395 = vld [vmem:[#allocation3 + $0xa0] sm:$0xff]
  %v2396 = vld [vmem:[#allocation3 + $0xa8] sm:$0xff]
  %v2397 = vld [vmem:[#allocation3 + $0xb0] sm:$0xff]
  %v2398 = vld [vmem:[#allocation3 + $0xc0] sm:$0xff]
  %v2399 = vld [vmem:[#allocation3 + $0xc8] sm:$0xff]
  %v2400 = vld [vmem:[#allocation3 + $0xd0] sm:$0xff]
  %v2401 = vld [vmem:[#allocation3 + $0xd8] sm:$0xff]
  %v2402 = vld [vmem:[#allocation3 + $0xe0] sm:$0xff]
  %v2403 = vld [vmem:[#allocation3 + $0xe8] sm:$0xff]
  %v2404 = vld [vmem:[#allocation3 + $0xf0] sm:$0xff]
  %2433 = vrot.lane.b32.xlu0 %v2377, 17
  %v2434 = vpop.permute.xlu0 %2433
  %2435 = vrot.lane.b32.xlu0 %v2378, 17
  %v2436 = vpop.permute.xlu0 %2435
  %2437 = vrot.lane.b32.xlu0 %v2379, 17
  %v2438 = vpop.permute.xlu0 %2437
  %2439 = vrot.lane.b32.xlu0 %v2380, 17
  %v2440 = vpop.permute.xlu0 %2439
  %2441 = vrot.lane.b32.xlu0 %v2381, 17
  %v2442 = vpop.permute.xlu0 %2441
  %2443 = vrot.lane.b32.xlu0 %v2382, 17
  %v2444 = vpop.permute.xlu0 %2443
  %2445 = vrot.lane.b32.xlu0 %v2383, 17
  %v2446 = vpop.permute.xlu0 %2445
  %2447 = vrot.lane.b32.xlu0 %v2384, 17
  %v2448 = vpop.permute.xlu0 %2447
  %2449 = vrot.lane.b32.xlu0 %v2385, 17
  %v2450 = vpop.permute.xlu0 %2449
  %2451 = vrot.lane.b32.xlu0 %v2386, 17
  %v2452 = vpop.permute.xlu0 %2451
  %2453 = vrot.lane.b32.xlu0 %v2387, 17
  %v2454 = vpop.permute.xlu0 %2453
  %2455 = vrot.lane.b32.xlu0 %v2388, 17
  %v2456 = vpop.permute.xlu0 %2455
  %2457 = vrot.lane.b32.xlu0 %v2389, 17
  %v2458 = vpop.permute.xlu0 %2457
  %2459 = vrot.lane.b32.xlu0 %v2390, 17
  %v2460 = vpop.permute.xlu0 %2459
  %2461 = vrot.lane.b32.xlu0 %v2391, 17
  %v2462 = vpop.permute.xlu0 %2461
  %2463 = vrot.lane.b32.xlu0 %v2392, 17
  %v2464 = vpop.permute.xlu0 %2463
  %2465 = vrot.lane.b32.xlu0 %v2393, 17
  %v2466 = vpop.permute.xlu0 %2465
  %2467 = vrot.lane.b32.xlu0 %v2394, 17
  %v2468 = vpop.permute.xlu0 %2467
  %2469 = vrot.lane.b32.xlu0 %v2395, 17
  %v2470 = vpop.permute.xlu0 %2469
  %2471 = vrot.lane.b32.xlu0 %v2396, 17
  %v2472 = vpop.permute.xlu0 %2471
  %2473 = vrot.lane.b32.xlu0 %v2397, 17
  %v2474 = vpop.permute.xlu0 %2473
  %2475 = vrot.lane.b32.xlu0 %v2398, 17
  %v2476 = vpop.permute.xlu0 %2475
  %2477 = vrot.lane.b32.xlu0 %v2399, 17
  %v2478 = vpop.permute.xlu0 %2477
  %2479 = vrot.lane.b32.xlu0 %v2400, 17
  %v2480 = vpop.permute.xlu0 %2479
  %2481 = vrot.lane.b32.xlu0 %v2401, 17
  %v2482 = vpop.permute.xlu0 %2481
  %2483 = vrot.lane.b32.xlu0 %v2402, 17
  %v2484 = vpop.permute.xlu0 %2483
  %2485 = vrot.lane.b32.xlu0 %v2403, 17
  %v2486 = vpop.permute.xlu0 %2485
  %2487 = vrot.lane.b32.xlu0 %v2404, 17
  %v2488 = vpop.permute.xlu0 %2487
  %v2489 = vsel %vm1016, %v2434, %v2436
  %v2490 = vsel %vm1016, %v2436, %v2438
  %v2491 = vsel %vm1016, %v2438, %v2440
  %v2492 = vsel %vm1016, %v2440, %v2442
  %v2493 = vsel %vm1016, %v2442, %v2444
  %v2494 = vsel %vm1016, %v2444, %v2446
  %v2495 = vsel %vm1016, %v2448, %v2450
  %v2496 = vsel %vm1016, %v2450, %v2452
  %v2497 = vsel %vm1016, %v2452, %v2454
  %v2498 = vsel %vm1016, %v2454, %v2456
  %v2499 = vsel %vm1016, %v2456, %v2458
  %v2500 = vsel %vm1016, %v2458, %v2460
  %v2501 = vsel %vm1016, %v2462, %v2464
  %v2502 = vsel %vm1016, %v2464, %v2466
  %v2503 = vsel %vm1016, %v2466, %v2468
  %v2504 = vsel %vm1016, %v2468, %v2470
  %v2505 = vsel %vm1016, %v2470, %v2472
  %v2506 = vsel %vm1016, %v2472, %v2474
  %v2507 = vsel %vm1016, %v2476, %v2478
  %v2508 = vsel %vm1016, %v2478, %v2480
  %v2509 = vsel %vm1016, %v2480, %v2482
  %v2510 = vsel %vm1016, %v2482, %v2484
  %v2511 = vsel %vm1016, %v2484, %v2486
  %v2512 = vsel %vm1016, %v2486, %v2488
  %2537 = vst [vmem:[#allocation4 + $0x180] sm:$0xff] %v2489
  %2538 = vst [vmem:[#allocation4 + $0x188] sm:$0xff] %v2490
  %2539 = vst [vmem:[#allocation4 + $0x190] sm:$0xff] %v2491
  %2540 = vst [vmem:[#allocation4 + $0x198] sm:$0xff] %v2492
  %2541 = vst [vmem:[#allocation4 + $0x1a0] sm:$0xff] %v2493
  %2542 = vst [vmem:[#allocation4 + $0x1a8] sm:$0xff] %v2494
  %2543 = vst [vmem:[#allocation4 + $0x1b0] sm:$0xff] %v2495
  %2544 = vst [vmem:[#allocation4 + $0x1b8] sm:$0xff] %v2496
  %2545 = vst [vmem:[#allocation4 + $0x1c0] sm:$0xff] %v2497
  %2546 = vst [vmem:[#allocation4 + $0x1c8] sm:$0xff] %v2498
  %2547 = vst [vmem:[#allocation4 + $0x1d0] sm:$0xff] %v2499
  %2548 = vst [vmem:[#allocation4 + $0x1d8] sm:$0xff] %v2500
  %2549 = vst [vmem:[#allocation4 + $0x1e0] sm:$0xff] %v2501
  %2550 = vst [vmem:[#allocation4 + $0x1e8] sm:$0xff] %v2502
  %2551 = vst [vmem:[#allocation4 + $0x1f0] sm:$0xff] %v2503
  %2552 = vst [vmem:[#allocation4 + $0x1f8] sm:$0xff] %v2504
  %2553 = vst [vmem:[#allocation4 + $0x200] sm:$0xff] %v2505
  %2554 = vst [vmem:[#allocation4 + $0x208] sm:$0xff] %v2506
  %2555 = vst [vmem:[#allocation4 + $0x210] sm:$0xff] %v2507
  %2556 = vst [vmem:[#allocation4 + $0x218] sm:$0xff] %v2508
  %2557 = vst [vmem:[#allocation4 + $0x220] sm:$0xff] %v2509
  %2558 = vst [vmem:[#allocation4 + $0x228] sm:$0xff] %v2510
  %2559 = vst [vmem:[#allocation4 + $0x230] sm:$0xff] %v2511
  %2560 = vst [vmem:[#allocation4 + $0x238] sm:$0xff] %v2512
  %v2561 = vld [vmem:[#allocation3] sm:$0xff]
  %v2562 = vld [vmem:[#allocation3 + $0x8] sm:$0xff]
  %v2563 = vld [vmem:[#allocation3 + $0x10] sm:$0xff]
  %v2564 = vld [vmem:[#allocation3 + $0x18] sm:$0xff]
  %v2565 = vld [vmem:[#allocation3 + $0x20] sm:$0xff]
  %v2566 = vld [vmem:[#allocation3 + $0x28] sm:$0xff]
  %v2567 = vld [vmem:[#allocation3 + $0x30] sm:$0xff]
  %v2568 = vld [vmem:[#allocation3 + $0x40] sm:$0xff]
  %v2569 = vld [vmem:[#allocation3 + $0x48] sm:$0xff]
  %v2570 = vld [vmem:[#allocation3 + $0x50] sm:$0xff]
  %v2571 = vld [vmem:[#allocation3 + $0x58] sm:$0xff]
  %v2572 = vld [vmem:[#allocation3 + $0x60] sm:$0xff]
  %v2573 = vld [vmem:[#allocation3 + $0x68] sm:$0xff]
  %v2574 = vld [vmem:[#allocation3 + $0x70] sm:$0xff]
  %v2575 = vld [vmem:[#allocation3 + $0x80] sm:$0xff]
  %v2576 = vld [vmem:[#allocation3 + $0x88] sm:$0xff]
  %v2577 = vld [vmem:[#allocation3 + $0x90] sm:$0xff]
  %v2578 = vld [vmem:[#allocation3 + $0x98] sm:$0xff]
  %v2579 = vld [vmem:[#allocation3 + $0xa0] sm:$0xff]
  %v2580 = vld [vmem:[#allocation3 + $0xa8] sm:$0xff]
  %v2581 = vld [vmem:[#allocation3 + $0xb0] sm:$0xff]
  %v2582 = vld [vmem:[#allocation3 + $0xc0] sm:$0xff]
  %v2583 = vld [vmem:[#allocation3 + $0xc8] sm:$0xff]
  %v2584 = vld [vmem:[#allocation3 + $0xd0] sm:$0xff]
  %v2585 = vld [vmem:[#allocation3 + $0xd8] sm:$0xff]
  %v2586 = vld [vmem:[#allocation3 + $0xe0] sm:$0xff]
  %v2587 = vld [vmem:[#allocation3 + $0xe8] sm:$0xff]
  %v2588 = vld [vmem:[#allocation3 + $0xf0] sm:$0xff]
  %2617 = vrot.lane.b32.xlu0 %v2561, 1
  %v2618 = vpop.permute.xlu0 %2617
  %2619 = vrot.lane.b32.xlu0 %v2562, 1
  %v2620 = vpop.permute.xlu0 %2619
  %2621 = vrot.lane.b32.xlu0 %v2563, 1
  %v2622 = vpop.permute.xlu0 %2621
  %2623 = vrot.lane.b32.xlu0 %v2564, 1
  %v2624 = vpop.permute.xlu0 %2623
  %2625 = vrot.lane.b32.xlu0 %v2565, 1
  %v2626 = vpop.permute.xlu0 %2625
  %2627 = vrot.lane.b32.xlu0 %v2566, 1
  %v2628 = vpop.permute.xlu0 %2627
  %2629 = vrot.lane.b32.xlu0 %v2567, 1
  %v2630 = vpop.permute.xlu0 %2629
  %2631 = vrot.lane.b32.xlu0 %v2568, 1
  %v2632 = vpop.permute.xlu0 %2631
  %2633 = vrot.lane.b32.xlu0 %v2569, 1
  %v2634 = vpop.permute.xlu0 %2633
  %2635 = vrot.lane.b32.xlu0 %v2570, 1
  %v2636 = vpop.permute.xlu0 %2635
  %2637 = vrot.lane.b32.xlu0 %v2571, 1
  %v2638 = vpop.permute.xlu0 %2637
  %2639 = vrot.lane.b32.xlu0 %v2572, 1
  %v2640 = vpop.permute.xlu0 %2639
  %2641 = vrot.lane.b32.xlu0 %v2573, 1
  %v2642 = vpop.permute.xlu0 %2641
  %2643 = vrot.lane.b32.xlu0 %v2574, 1
  %v2644 = vpop.permute.xlu0 %2643
  %2645 = vrot.lane.b32.xlu0 %v2575, 1
  %v2646 = vpop.permute.xlu0 %2645
  %2647 = vrot.lane.b32.xlu0 %v2576, 1
  %v2648 = vpop.permute.xlu0 %2647
  %2649 = vrot.lane.b32.xlu0 %v2577, 1
  %v2650 = vpop.permute.xlu0 %2649
  %2651 = vrot.lane.b32.xlu0 %v2578, 1
  %v2652 = vpop.permute.xlu0 %2651
  %2653 = vrot.lane.b32.xlu0 %v2579, 1
  %v2654 = vpop.permute.xlu0 %2653
  %2655 = vrot.lane.b32.xlu0 %v2580, 1
  %v2656 = vpop.permute.xlu0 %2655
  %2657 = vrot.lane.b32.xlu0 %v2581, 1
  %v2658 = vpop.permute.xlu0 %2657
  %2659 = vrot.lane.b32.xlu0 %v2582, 1
  %v2660 = vpop.permute.xlu0 %2659
  %2661 = vrot.lane.b32.xlu0 %v2583, 1
  %v2662 = vpop.permute.xlu0 %2661
  %2663 = vrot.lane.b32.xlu0 %v2584, 1
  %v2664 = vpop.permute.xlu0 %2663
  %2665 = vrot.lane.b32.xlu0 %v2585, 1
  %v2666 = vpop.permute.xlu0 %2665
  %2667 = vrot.lane.b32.xlu0 %v2586, 1
  %v2668 = vpop.permute.xlu0 %2667
  %2669 = vrot.lane.b32.xlu0 %v2587, 1
  %v2670 = vpop.permute.xlu0 %2669
  %2671 = vrot.lane.b32.xlu0 %v2588, 1
  %v2672 = vpop.permute.xlu0 %2671
  %v2673 = vsel %vm1109, %v2618, %v2620
  %v2674 = vsel %vm1109, %v2620, %v2622
  %v2675 = vsel %vm1109, %v2622, %v2624
  %v2676 = vsel %vm1109, %v2624, %v2626
  %v2677 = vsel %vm1109, %v2626, %v2628
  %v2678 = vsel %vm1109, %v2628, %v2630
  %v2679 = vsel %vm1109, %v2632, %v2634
  %v2680 = vsel %vm1109, %v2634, %v2636
  %v2681 = vsel %vm1109, %v2636, %v2638
  %v2682 = vsel %vm1109, %v2638, %v2640
  %v2683 = vsel %vm1109, %v2640, %v2642
  %v2684 = vsel %vm1109, %v2642, %v2644
  %v2685 = vsel %vm1109, %v2646, %v2648
  %v2686 = vsel %vm1109, %v2648, %v2650
  %v2687 = vsel %vm1109, %v2650, %v2652
  %v2688 = vsel %vm1109, %v2652, %v2654
  %v2689 = vsel %vm1109, %v2654, %v2656
  %v2690 = vsel %vm1109, %v2656, %v2658
  %v2691 = vsel %vm1109, %v2660, %v2662
  %v2692 = vsel %vm1109, %v2662, %v2664
  %v2693 = vsel %vm1109, %v2664, %v2666
  %v2694 = vsel %vm1109, %v2666, %v2668
  %v2695 = vsel %vm1109, %v2668, %v2670
  %v2696 = vsel %vm1109, %v2670, %v2672
  %2721 = vst [vmem:[#allocation4 + $0x240] sm:$0xff] %v2673
  %2722 = vst [vmem:[#allocation4 + $0x248] sm:$0xff] %v2674
  %2723 = vst [vmem:[#allocation4 + $0x250] sm:$0xff] %v2675
  %2724 = vst [vmem:[#allocation4 + $0x258] sm:$0xff] %v2676
  %2725 = vst [vmem:[#allocation4 + $0x260] sm:$0xff] %v2677
  %2726 = vst [vmem:[#allocation4 + $0x268] sm:$0xff] %v2678
  %2727 = vst [vmem:[#allocation4 + $0x270] sm:$0xff] %v2679
  %2728 = vst [vmem:[#allocation4 + $0x278] sm:$0xff] %v2680
  %2729 = vst [vmem:[#allocation4 + $0x280] sm:$0xff] %v2681
  %2730 = vst [vmem:[#allocation4 + $0x288] sm:$0xff] %v2682
  %2731 = vst [vmem:[#allocation4 + $0x290] sm:$0xff] %v2683
  %2732 = vst [vmem:[#allocation4 + $0x298] sm:$0xff] %v2684
  %2733 = vst [vmem:[#allocation4 + $0x2a0] sm:$0xff] %v2685
  %2734 = vst [vmem:[#allocation4 + $0x2a8] sm:$0xff] %v2686
  %2735 = vst [vmem:[#allocation4 + $0x2b0] sm:$0xff] %v2687
  %2736 = vst [vmem:[#allocation4 + $0x2b8] sm:$0xff] %v2688
  %2737 = vst [vmem:[#allocation4 + $0x2c0] sm:$0xff] %v2689
  %2738 = vst [vmem:[#allocation4 + $0x2c8] sm:$0xff] %v2690
  %2739 = vst [vmem:[#allocation4 + $0x2d0] sm:$0xff] %v2691
  %2740 = vst [vmem:[#allocation4 + $0x2d8] sm:$0xff] %v2692
  %2741 = vst [vmem:[#allocation4 + $0x2e0] sm:$0xff] %v2693
  %2742 = vst [vmem:[#allocation4 + $0x2e8] sm:$0xff] %v2694
  %2743 = vst [vmem:[#allocation4 + $0x2f0] sm:$0xff] %v2695
  %2744 = vst [vmem:[#allocation4 + $0x2f8] sm:$0xff] %v2696
  %v2745 = vld [vmem:[#allocation3 + $0x8] sm:$0xff]
  %v2746 = vld [vmem:[#allocation3 + $0x10] sm:$0xff]
  %v2747 = vld [vmem:[#allocation3 + $0x18] sm:$0xff]
  %v2748 = vld [vmem:[#allocation3 + $0x20] sm:$0xff]
  %v2749 = vld [vmem:[#allocation3 + $0x28] sm:$0xff]
  %v2750 = vld [vmem:[#allocation3 + $0x30] sm:$0xff]
  %v2751 = vld [vmem:[#allocation3 + $0x48] sm:$0xff]
  %v2752 = vld [vmem:[#allocation3 + $0x50] sm:$0xff]
  %v2753 = vld [vmem:[#allocation3 + $0x58] sm:$0xff]
  %v2754 = vld [vmem:[#allocation3 + $0x60] sm:$0xff]
  %v2755 = vld [vmem:[#allocation3 + $0x68] sm:$0xff]
  %v2756 = vld [vmem:[#allocation3 + $0x70] sm:$0xff]
  %v2757 = vld [vmem:[#allocation3 + $0x88] sm:$0xff]
  %v2758 = vld [vmem:[#allocation3 + $0x90] sm:$0xff]
  %v2759 = vld [vmem:[#allocation3 + $0x98] sm:$0xff]
  %v2760 = vld [vmem:[#allocation3 + $0xa0] sm:$0xff]
  %v2761 = vld [vmem:[#allocation3 + $0xa8] sm:$0xff]
  %v2762 = vld [vmem:[#allocation3 + $0xb0] sm:$0xff]
  %v2763 = vld [vmem:[#allocation3 + $0xc8] sm:$0xff]
  %v2764 = vld [vmem:[#allocation3 + $0xd0] sm:$0xff]
  %v2765 = vld [vmem:[#allocation3 + $0xd8] sm:$0xff]
  %v2766 = vld [vmem:[#allocation3 + $0xe0] sm:$0xff]
  %v2767 = vld [vmem:[#allocation3 + $0xe8] sm:$0xff]
  %v2768 = vld [vmem:[#allocation3 + $0xf0] sm:$0xff]
  %2769 = vst [vmem:[#allocation4 + $0x300] sm:$0xff] %v2745
  %2770 = vst [vmem:[#allocation4 + $0x308] sm:$0xff] %v2746
  %2771 = vst [vmem:[#allocation4 + $0x310] sm:$0xff] %v2747
  %2772 = vst [vmem:[#allocation4 + $0x318] sm:$0xff] %v2748
  %2773 = vst [vmem:[#allocation4 + $0x320] sm:$0xff] %v2749
  %2774 = vst [vmem:[#allocation4 + $0x328] sm:$0xff] %v2750
  %2775 = vst [vmem:[#allocation4 + $0x330] sm:$0xff] %v2751
  %2776 = vst [vmem:[#allocation4 + $0x338] sm:$0xff] %v2752
  %2777 = vst [vmem:[#allocation4 + $0x340] sm:$0xff] %v2753
  %2778 = vst [vmem:[#allocation4 + $0x348] sm:$0xff] %v2754
  %2779 = vst [vmem:[#allocation4 + $0x350] sm:$0xff] %v2755
  %2780 = vst [vmem:[#allocation4 + $0x358] sm:$0xff] %v2756
  %2781 = vst [vmem:[#allocation4 + $0x360] sm:$0xff] %v2757
  %2782 = vst [vmem:[#allocation4 + $0x368] sm:$0xff] %v2758
  %2783 = vst [vmem:[#allocation4 + $0x370] sm:$0xff] %v2759
  %2784 = vst [vmem:[#allocation4 + $0x378] sm:$0xff] %v2760
  %2785 = vst [vmem:[#allocation4 + $0x380] sm:$0xff] %v2761
  %2786 = vst [vmem:[#allocation4 + $0x388] sm:$0xff] %v2762
  %2787 = vst [vmem:[#allocation4 + $0x390] sm:$0xff] %v2763
  %2788 = vst [vmem:[#allocation4 + $0x398] sm:$0xff] %v2764
  %2789 = vst [vmem:[#allocation4 + $0x3a0] sm:$0xff] %v2765
  %2790 = vst [vmem:[#allocation4 + $0x3a8] sm:$0xff] %v2766
  %2791 = vst [vmem:[#allocation4 + $0x3b0] sm:$0xff] %v2767
  %2792 = vst [vmem:[#allocation4 + $0x3b8] sm:$0xff] %v2768
  %v2793 = vld [vmem:[#allocation3 + $0x8] sm:$0xff]
  %v2794 = vld [vmem:[#allocation3 + $0x10] sm:$0xff]
  %v2795 = vld [vmem:[#allocation3 + $0x18] sm:$0xff]
  %v2796 = vld [vmem:[#allocation3 + $0x20] sm:$0xff]
  %v2797 = vld [vmem:[#allocation3 + $0x28] sm:$0xff]
  %v2798 = vld [vmem:[#allocation3 + $0x30] sm:$0xff]
  %v2799 = vld [vmem:[#allocation3 + $0x38] sm:$0xff]
  %v2800 = vld [vmem:[#allocation3 + $0x48] sm:$0xff]
  %v2801 = vld [vmem:[#allocation3 + $0x50] sm:$0xff]
  %v2802 = vld [vmem:[#allocation3 + $0x58] sm:$0xff]
  %v2803 = vld [vmem:[#allocation3 + $0x60] sm:$0xff]
  %v2804 = vld [vmem:[#allocation3 + $0x68] sm:$0xff]
  %v2805 = vld [vmem:[#allocation3 + $0x70] sm:$0xff]
  %v2806 = vld [vmem:[#allocation3 + $0x78] sm:$0xff]
  %v2807 = vld [vmem:[#allocation3 + $0x88] sm:$0xff]
  %v2808 = vld [vmem:[#allocation3 + $0x90] sm:$0xff]
  %v2809 = vld [vmem:[#allocation3 + $0x98] sm:$0xff]
  %v2810 = vld [vmem:[#allocation3 + $0xa0] sm:$0xff]
  %v2811 = vld [vmem:[#allocation3 + $0xa8] sm:$0xff]
  %v2812 = vld [vmem:[#allocation3 + $0xb0] sm:$0xff]
  %v2813 = vld [vmem:[#allocation3 + $0xb8] sm:$0xff]
  %v2814 = vld [vmem:[#allocation3 + $0xc8] sm:$0xff]
  %v2815 = vld [vmem:[#allocation3 + $0xd0] sm:$0xff]
  %v2816 = vld [vmem:[#allocation3 + $0xd8] sm:$0xff]
  %v2817 = vld [vmem:[#allocation3 + $0xe0] sm:$0xff]
  %v2818 = vld [vmem:[#allocation3 + $0xe8] sm:$0xff]
  %v2819 = vld [vmem:[#allocation3 + $0xf0] sm:$0xff]
  %v2820 = vld [vmem:[#allocation3 + $0xf8] sm:$0xff]
  %2849 = vrot.lane.b32.xlu0 %v2793, 127
  %v2850 = vpop.permute.xlu0 %2849
  %2851 = vrot.lane.b32.xlu0 %v2794, 127
  %v2852 = vpop.permute.xlu0 %2851
  %2853 = vrot.lane.b32.xlu0 %v2795, 127
  %v2854 = vpop.permute.xlu0 %2853
  %2855 = vrot.lane.b32.xlu0 %v2796, 127
  %v2856 = vpop.permute.xlu0 %2855
  %2857 = vrot.lane.b32.xlu0 %v2797, 127
  %v2858 = vpop.permute.xlu0 %2857
  %2859 = vrot.lane.b32.xlu0 %v2798, 127
  %v2860 = vpop.permute.xlu0 %2859
  %2861 = vrot.lane.b32.xlu0 %v2799, 127
  %v2862 = vpop.permute.xlu0 %2861
  %2863 = vrot.lane.b32.xlu0 %v2800, 127
  %v2864 = vpop.permute.xlu0 %2863
  %2865 = vrot.lane.b32.xlu0 %v2801, 127
  %v2866 = vpop.permute.xlu0 %2865
  %2867 = vrot.lane.b32.xlu0 %v2802, 127
  %v2868 = vpop.permute.xlu0 %2867
  %2869 = vrot.lane.b32.xlu0 %v2803, 127
  %v2870 = vpop.permute.xlu0 %2869
  %2871 = vrot.lane.b32.xlu0 %v2804, 127
  %v2872 = vpop.permute.xlu0 %2871
  %2873 = vrot.lane.b32.xlu0 %v2805, 127
  %v2874 = vpop.permute.xlu0 %2873
  %2875 = vrot.lane.b32.xlu0 %v2806, 127
  %v2876 = vpop.permute.xlu0 %2875
  %2877 = vrot.lane.b32.xlu0 %v2807, 127
  %v2878 = vpop.permute.xlu0 %2877
  %2879 = vrot.lane.b32.xlu0 %v2808, 127
  %v2880 = vpop.permute.xlu0 %2879
  %2881 = vrot.lane.b32.xlu0 %v2809, 127
  %v2882 = vpop.permute.xlu0 %2881
  %2883 = vrot.lane.b32.xlu0 %v2810, 127
  %v2884 = vpop.permute.xlu0 %2883
  %2885 = vrot.lane.b32.xlu0 %v2811, 127
  %v2886 = vpop.permute.xlu0 %2885
  %2887 = vrot.lane.b32.xlu0 %v2812, 127
  %v2888 = vpop.permute.xlu0 %2887
  %2889 = vrot.lane.b32.xlu0 %v2813, 127
  %v2890 = vpop.permute.xlu0 %2889
  %2891 = vrot.lane.b32.xlu0 %v2814, 127
  %v2892 = vpop.permute.xlu0 %2891
  %2893 = vrot.lane.b32.xlu0 %v2815, 127
  %v2894 = vpop.permute.xlu0 %2893
  %2895 = vrot.lane.b32.xlu0 %v2816, 127
  %v2896 = vpop.permute.xlu0 %2895
  %2897 = vrot.lane.b32.xlu0 %v2817, 127
  %v2898 = vpop.permute.xlu0 %2897
  %2899 = vrot.lane.b32.xlu0 %v2818, 127
  %v2900 = vpop.permute.xlu0 %2899
  %2901 = vrot.lane.b32.xlu0 %v2819, 127
  %v2902 = vpop.permute.xlu0 %2901
  %2903 = vrot.lane.b32.xlu0 %v2820, 127
  %v2904 = vpop.permute.xlu0 %2903
  %v2905 = vsel %vm1226, %v2850, %v2852
  %v2906 = vsel %vm1226, %v2852, %v2854
  %v2907 = vsel %vm1226, %v2854, %v2856
  %v2908 = vsel %vm1226, %v2856, %v2858
  %v2909 = vsel %vm1226, %v2858, %v2860
  %v2910 = vsel %vm1226, %v2860, %v2862
  %v2911 = vsel %vm1226, %v2864, %v2866
  %v2912 = vsel %vm1226, %v2866, %v2868
  %v2913 = vsel %vm1226, %v2868, %v2870
  %v2914 = vsel %vm1226, %v2870, %v2872
  %v2915 = vsel %vm1226, %v2872, %v2874
  %v2916 = vsel %vm1226, %v2874, %v2876
  %v2917 = vsel %vm1226, %v2878, %v2880
  %v2918 = vsel %vm1226, %v2880, %v2882
  %v2919 = vsel %vm1226, %v2882, %v2884
  %v2920 = vsel %vm1226, %v2884, %v2886
  %v2921 = vsel %vm1226, %v2886, %v2888
  %v2922 = vsel %vm1226, %v2888, %v2890
  %v2923 = vsel %vm1226, %v2892, %v2894
  %v2924 = vsel %vm1226, %v2894, %v2896
  %v2925 = vsel %vm1226, %v2896, %v2898
  %v2926 = vsel %vm1226, %v2898, %v2900
  %v2927 = vsel %vm1226, %v2900, %v2902
  %v2928 = vsel %vm1226, %v2902, %v2904
  %2953 = vst [vmem:[#allocation4 + $0x3c0] sm:$0xff] %v2905
  %2954 = vst [vmem:[#allocation4 + $0x3c8] sm:$0xff] %v2906
  %2955 = vst [vmem:[#allocation4 + $0x3d0] sm:$0xff] %v2907
  %2956 = vst [vmem:[#allocation4 + $0x3d8] sm:$0xff] %v2908
  %2957 = vst [vmem:[#allocation4 + $0x3e0] sm:$0xff] %v2909
  %2958 = vst [vmem:[#allocation4 + $0x3e8] sm:$0xff] %v2910
  %2959 = vst [vmem:[#allocation4 + $0x3f0] sm:$0xff] %v2911
  %2960 = vst [vmem:[#allocation4 + $0x3f8] sm:$0xff] %v2912
  %2961 = vst [vmem:[#allocation4 + $0x400] sm:$0xff] %v2913
  %2962 = vst [vmem:[#allocation4 + $0x408] sm:$0xff] %v2914
  %2963 = vst [vmem:[#allocation4 + $0x410] sm:$0xff] %v2915
  %2964 = vst [vmem:[#allocation4 + $0x418] sm:$0xff] %v2916
  %2965 = vst [vmem:[#allocation4 + $0x420] sm:$0xff] %v2917
  %2966 = vst [vmem:[#allocation4 + $0x428] sm:$0xff] %v2918
  %2967 = vst [vmem:[#allocation4 + $0x430] sm:$0xff] %v2919
  %2968 = vst [vmem:[#allocation4 + $0x438] sm:$0xff] %v2920
  %2969 = vst [vmem:[#allocation4 + $0x440] sm:$0xff] %v2921
  %2970 = vst [vmem:[#allocation4 + $0x448] sm:$0xff] %v2922
  %2971 = vst [vmem:[#allocation4 + $0x450] sm:$0xff] %v2923
  %2972 = vst [vmem:[#allocation4 + $0x458] sm:$0xff] %v2924
  %2973 = vst [vmem:[#allocation4 + $0x460] sm:$0xff] %v2925
  %2974 = vst [vmem:[#allocation4 + $0x468] sm:$0xff] %v2926
  %2975 = vst [vmem:[#allocation4 + $0x470] sm:$0xff] %v2927
  %2976 = vst [vmem:[#allocation4 + $0x478] sm:$0xff] %v2928
  %v2977 = vld [vmem:[#allocation3 + $0x8] sm:$0xff]
  %v2978 = vld [vmem:[#allocation3 + $0x10] sm:$0xff]
  %v2979 = vld [vmem:[#allocation3 + $0x18] sm:$0xff]
  %v2980 = vld [vmem:[#allocation3 + $0x20] sm:$0xff]
  %v2981 = vld [vmem:[#allocation3 + $0x28] sm:$0xff]
  %v2982 = vld [vmem:[#allocation3 + $0x30] sm:$0xff]
  %v2983 = vld [vmem:[#allocation3 + $0x38] sm:$0xff]
  %v2984 = vld [vmem:[#allocation3 + $0x48] sm:$0xff]
  %v2985 = vld [vmem:[#allocation3 + $0x50] sm:$0xff]
  %v2986 = vld [vmem:[#allocation3 + $0x58] sm:$0xff]
  %v2987 = vld [vmem:[#allocation3 + $0x60] sm:$0xff]
  %v2988 = vld [vmem:[#allocation3 + $0x68] sm:$0xff]
  %v2989 = vld [vmem:[#allocation3 + $0x70] sm:$0xff]
  %v2990 = vld [vmem:[#allocation3 + $0x78] sm:$0xff]
  %v2991 = vld [vmem:[#allocation3 + $0x88] sm:$0xff]
  %v2992 = vld [vmem:[#allocation3 + $0x90] sm:$0xff]
  %v2993 = vld [vmem:[#allocation3 + $0x98] sm:$0xff]
  %v2994 = vld [vmem:[#allocation3 + $0xa0] sm:$0xff]
  %v2995 = vld [vmem:[#allocation3 + $0xa8] sm:$0xff]
  %v2996 = vld [vmem:[#allocation3 + $0xb0] sm:$0xff]
  %v2997 = vld [vmem:[#allocation3 + $0xb8] sm:$0xff]
  %v2998 = vld [vmem:[#allocation3 + $0xc8] sm:$0xff]
  %v2999 = vld [vmem:[#allocation3 + $0xd0] sm:$0xff]
  %v3000 = vld [vmem:[#allocation3 + $0xd8] sm:$0xff]
  %v3001 = vld [vmem:[#allocation3 + $0xe0] sm:$0xff]
  %v3002 = vld [vmem:[#allocation3 + $0xe8] sm:$0xff]
  %v3003 = vld [vmem:[#allocation3 + $0xf0] sm:$0xff]
  %v3004 = vld [vmem:[#allocation3 + $0xf8] sm:$0xff]
  %3033 = vrot.lane.b32.xlu0 %v2977, 111
  %v3034 = vpop.permute.xlu0 %3033
  %3035 = vrot.lane.b32.xlu0 %v2978, 111
  %v3036 = vpop.permute.xlu0 %3035
  %3037 = vrot.lane.b32.xlu0 %v2979, 111
  %v3038 = vpop.permute.xlu0 %3037
  %3039 = vrot.lane.b32.xlu0 %v2980, 111
  %v3040 = vpop.permute.xlu0 %3039
  %3041 = vrot.lane.b32.xlu0 %v2981, 111
  %v3042 = vpop.permute.xlu0 %3041
  %3043 = vrot.lane.b32.xlu0 %v2982, 111
  %v3044 = vpop.permute.xlu0 %3043
  %3045 = vrot.lane.b32.xlu0 %v2983, 111
  %v3046 = vpop.permute.xlu0 %3045
  %3047 = vrot.lane.b32.xlu0 %v2984, 111
  %v3048 = vpop.permute.xlu0 %3047
  %3049 = vrot.lane.b32.xlu0 %v2985, 111
  %v3050 = vpop.permute.xlu0 %3049
  %3051 = vrot.lane.b32.xlu0 %v2986, 111
  %v3052 = vpop.permute.xlu0 %3051
  %3053 = vrot.lane.b32.xlu0 %v2987, 111
  %v3054 = vpop.permute.xlu0 %3053
  %3055 = vrot.lane.b32.xlu0 %v2988, 111
  %v3056 = vpop.permute.xlu0 %3055
  %3057 = vrot.lane.b32.xlu0 %v2989, 111
  %v3058 = vpop.permute.xlu0 %3057
  %3059 = vrot.lane.b32.xlu0 %v2990, 111
  %v3060 = vpop.permute.xlu0 %3059
  %3061 = vrot.lane.b32.xlu0 %v2991, 111
  %v3062 = vpop.permute.xlu0 %3061
  %3063 = vrot.lane.b32.xlu0 %v2992, 111
  %v3064 = vpop.permute.xlu0 %3063
  %3065 = vrot.lane.b32.xlu0 %v2993, 111
  %v3066 = vpop.permute.xlu0 %3065
  %3067 = vrot.lane.b32.xlu0 %v2994, 111
  %v3068 = vpop.permute.xlu0 %3067
  %3069 = vrot.lane.b32.xlu0 %v2995, 111
  %v3070 = vpop.permute.xlu0 %3069
  %3071 = vrot.lane.b32.xlu0 %v2996, 111
  %v3072 = vpop.permute.xlu0 %3071
  %3073 = vrot.lane.b32.xlu0 %v2997, 111
  %v3074 = vpop.permute.xlu0 %3073
  %3075 = vrot.lane.b32.xlu0 %v2998, 111
  %v3076 = vpop.permute.xlu0 %3075
  %3077 = vrot.lane.b32.xlu0 %v2999, 111
  %v3078 = vpop.permute.xlu0 %3077
  %3079 = vrot.lane.b32.xlu0 %v3000, 111
  %v3080 = vpop.permute.xlu0 %3079
  %3081 = vrot.lane.b32.xlu0 %v3001, 111
  %v3082 = vpop.permute.xlu0 %3081
  %3083 = vrot.lane.b32.xlu0 %v3002, 111
  %v3084 = vpop.permute.xlu0 %3083
  %3085 = vrot.lane.b32.xlu0 %v3003, 111
  %v3086 = vpop.permute.xlu0 %3085
  %3087 = vrot.lane.b32.xlu0 %v3004, 111
  %v3088 = vpop.permute.xlu0 %3087
  %v3089 = vsel %vm1319, %v3034, %v3036
  %v3090 = vsel %vm1319, %v3036, %v3038
  %v3091 = vsel %vm1319, %v3038, %v3040
  %v3092 = vsel %vm1319, %v3040, %v3042
  %v3093 = vsel %vm1319, %v3042, %v3044
  %v3094 = vsel %vm1319, %v3044, %v3046
  %v3095 = vsel %vm1319, %v3048, %v3050
  %v3096 = vsel %vm1319, %v3050, %v3052
  %v3097 = vsel %vm1319, %v3052, %v3054
  %v3098 = vsel %vm1319, %v3054, %v3056
  %v3099 = vsel %vm1319, %v3056, %v3058
  %v3100 = vsel %vm1319, %v3058, %v3060
  %v3101 = vsel %vm1319, %v3062, %v3064
  %v3102 = vsel %vm1319, %v3064, %v3066
  %v3103 = vsel %vm1319, %v3066, %v3068
  %v3104 = vsel %vm1319, %v3068, %v3070
  %v3105 = vsel %vm1319, %v3070, %v3072
  %v3106 = vsel %vm1319, %v3072, %v3074
  %v3107 = vsel %vm1319, %v3076, %v3078
  %v3108 = vsel %vm1319, %v3078, %v3080
  %v3109 = vsel %vm1319, %v3080, %v3082
  %v3110 = vsel %vm1319, %v3082, %v3084
  %v3111 = vsel %vm1319, %v3084, %v3086
  %v3112 = vsel %vm1319, %v3086, %v3088
  %3137 = vst [vmem:[#allocation4 + $0x480] sm:$0xff] %v3089
  %3138 = vst [vmem:[#allocation4 + $0x488] sm:$0xff] %v3090
  %3139 = vst [vmem:[#allocation4 + $0x490] sm:$0xff] %v3091
  %3140 = vst [vmem:[#allocation4 + $0x498] sm:$0xff] %v3092
  %3141 = vst [vmem:[#allocation4 + $0x4a0] sm:$0xff] %v3093
  %3142 = vst [vmem:[#allocation4 + $0x4a8] sm:$0xff] %v3094
  %3143 = vst [vmem:[#allocation4 + $0x4b0] sm:$0xff] %v3095
  %3144 = vst [vmem:[#allocation4 + $0x4b8] sm:$0xff] %v3096
  %3145 = vst [vmem:[#allocation4 + $0x4c0] sm:$0xff] %v3097
  %3146 = vst [vmem:[#allocation4 + $0x4c8] sm:$0xff] %v3098
  %3147 = vst [vmem:[#allocation4 + $0x4d0] sm:$0xff] %v3099
  %3148 = vst [vmem:[#allocation4 + $0x4d8] sm:$0xff] %v3100
  %3149 = vst [vmem:[#allocation4 + $0x4e0] sm:$0xff] %v3101
  %3150 = vst [vmem:[#allocation4 + $0x4e8] sm:$0xff] %v3102
  %3151 = vst [vmem:[#allocation4 + $0x4f0] sm:$0xff] %v3103
  %3152 = vst [vmem:[#allocation4 + $0x4f8] sm:$0xff] %v3104
  %3153 = vst [vmem:[#allocation4 + $0x500] sm:$0xff] %v3105
  %3154 = vst [vmem:[#allocation4 + $0x508] sm:$0xff] %v3106
  %3155 = vst [vmem:[#allocation4 + $0x510] sm:$0xff] %v3107
  %3156 = vst [vmem:[#allocation4 + $0x518] sm:$0xff] %v3108
  %3157 = vst [vmem:[#allocation4 + $0x520] sm:$0xff] %v3109
  %3158 = vst [vmem:[#allocation4 + $0x528] sm:$0xff] %v3110
  %3159 = vst [vmem:[#allocation4 + $0x530] sm:$0xff] %v3111
  %3160 = vst [vmem:[#allocation4 + $0x538] sm:$0xff] %v3112
  %v3161 = vld [vmem:[#allocation3 + $0x8] sm:$0xff]
  %v3162 = vld [vmem:[#allocation3 + $0x10] sm:$0xff]
  %v3163 = vld [vmem:[#allocation3 + $0x18] sm:$0xff]
  %v3164 = vld [vmem:[#allocation3 + $0x20] sm:$0xff]
  %v3165 = vld [vmem:[#allocation3 + $0x28] sm:$0xff]
  %v3166 = vld [vmem:[#allocation3 + $0x30] sm:$0xff]
  %v3167 = vld [vmem:[#allocation3 + $0x38] sm:$0xff]
  %v3168 = vld [vmem:[#allocation3 + $0x48] sm:$0xff]
  %v3169 = vld [vmem:[#allocation3 + $0x50] sm:$0xff]
  %v3170 = vld [vmem:[#allocation3 + $0x58] sm:$0xff]
  %v3171 = vld [vmem:[#allocation3 + $0x60] sm:$0xff]
  %v3172 = vld [vmem:[#allocation3 + $0x68] sm:$0xff]
  %v3173 = vld [vmem:[#allocation3 + $0x70] sm:$0xff]
  %v3174 = vld [vmem:[#allocation3 + $0x78] sm:$0xff]
  %v3175 = vld [vmem:[#allocation3 + $0x88] sm:$0xff]
  %v3176 = vld [vmem:[#allocation3 + $0x90] sm:$0xff]
  %v3177 = vld [vmem:[#allocation3 + $0x98] sm:$0xff]
  %v3178 = vld [vmem:[#allocation3 + $0xa0] sm:$0xff]
  %v3179 = vld [vmem:[#allocation3 + $0xa8] sm:$0xff]
  %v3180 = vld [vmem:[#allocation3 + $0xb0] sm:$0xff]
  %v3181 = vld [vmem:[#allocation3 + $0xb8] sm:$0xff]
  %v3182 = vld [vmem:[#allocation3 + $0xc8] sm:$0xff]
  %v3183 = vld [vmem:[#allocation3 + $0xd0] sm:$0xff]
  %v3184 = vld [vmem:[#allocation3 + $0xd8] sm:$0xff]
  %v3185 = vld [vmem:[#allocation3 + $0xe0] sm:$0xff]
  %v3186 = vld [vmem:[#allocation3 + $0xe8] sm:$0xff]
  %v3187 = vld [vmem:[#allocation3 + $0xf0] sm:$0xff]
  %v3188 = vld [vmem:[#allocation3 + $0xf8] sm:$0xff]
  %3217 = vrot.lane.b32.xlu0 %v3161, 110
  %v3218 = vpop.permute.xlu0 %3217
  %3219 = vrot.lane.b32.xlu0 %v3162, 110
  %v3220 = vpop.permute.xlu0 %3219
  %3221 = vrot.lane.b32.xlu0 %v3163, 110
  %v3222 = vpop.permute.xlu0 %3221
  %3223 = vrot.lane.b32.xlu0 %v3164, 110
  %v3224 = vpop.permute.xlu0 %3223
  %3225 = vrot.lane.b32.xlu0 %v3165, 110
  %v3226 = vpop.permute.xlu0 %3225
  %3227 = vrot.lane.b32.xlu0 %v3166, 110
  %v3228 = vpop.permute.xlu0 %3227
  %3229 = vrot.lane.b32.xlu0 %v3167, 110
  %v3230 = vpop.permute.xlu0 %3229
  %3231 = vrot.lane.b32.xlu0 %v3168, 110
  %v3232 = vpop.permute.xlu0 %3231
  %3233 = vrot.lane.b32.xlu0 %v3169, 110
  %v3234 = vpop.permute.xlu0 %3233
  %3235 = vrot.lane.b32.xlu0 %v3170, 110
  %v3236 = vpop.permute.xlu0 %3235
  %3237 = vrot.lane.b32.xlu0 %v3171, 110
  %v3238 = vpop.permute.xlu0 %3237
  %3239 = vrot.lane.b32.xlu0 %v3172, 110
  %v3240 = vpop.permute.xlu0 %3239
  %3241 = vrot.lane.b32.xlu0 %v3173, 110
  %v3242 = vpop.permute.xlu0 %3241
  %3243 = vrot.lane.b32.xlu0 %v3174, 110
  %v3244 = vpop.permute.xlu0 %3243
  %3245 = vrot.lane.b32.xlu0 %v3175, 110
  %v3246 = vpop.permute.xlu0 %3245
  %3247 = vrot.lane.b32.xlu0 %v3176, 110
  %v3248 = vpop.permute.xlu0 %3247
  %3249 = vrot.lane.b32.xlu0 %v3177, 110
  %v3250 = vpop.permute.xlu0 %3249
  %3251 = vrot.lane.b32.xlu0 %v3178, 110
  %v3252 = vpop.permute.xlu0 %3251
  %3253 = vrot.lane.b32.xlu0 %v3179, 110
  %v3254 = vpop.permute.xlu0 %3253
  %3255 = vrot.lane.b32.xlu0 %v3180, 110
  %v3256 = vpop.permute.xlu0 %3255
  %3257 = vrot.lane.b32.xlu0 %v3181, 110
  %v3258 = vpop.permute.xlu0 %3257
  %3259 = vrot.lane.b32.xlu0 %v3182, 110
  %v3260 = vpop.permute.xlu0 %3259
  %3261 = vrot.lane.b32.xlu0 %v3183, 110
  %v3262 = vpop.permute.xlu0 %3261
  %3263 = vrot.lane.b32.xlu0 %v3184, 110
  %v3264 = vpop.permute.xlu0 %3263
  %3265 = vrot.lane.b32.xlu0 %v3185, 110
  %v3266 = vpop.permute.xlu0 %3265
  %3267 = vrot.lane.b32.xlu0 %v3186, 110
  %v3268 = vpop.permute.xlu0 %3267
  %3269 = vrot.lane.b32.xlu0 %v3187, 110
  %v3270 = vpop.permute.xlu0 %3269
  %3271 = vrot.lane.b32.xlu0 %v3188, 110
  %v3272 = vpop.permute.xlu0 %3271
  %v3273 = vsel %vm1412, %v3218, %v3220
  %v3274 = vsel %vm1412, %v3220, %v3222
  %v3275 = vsel %vm1412, %v3222, %v3224
  %v3276 = vsel %vm1412, %v3224, %v3226
  %v3277 = vsel %vm1412, %v3226, %v3228
  %v3278 = vsel %vm1412, %v3228, %v3230
  %v3279 = vsel %vm1412, %v3232, %v3234
  %v3280 = vsel %vm1412, %v3234, %v3236
  %v3281 = vsel %vm1412, %v3236, %v3238
  %v3282 = vsel %vm1412, %v3238, %v3240
  %v3283 = vsel %vm1412, %v3240, %v3242
  %v3284 = vsel %vm1412, %v3242, %v3244
  %v3285 = vsel %vm1412, %v3246, %v3248
  %v3286 = vsel %vm1412, %v3248, %v3250
  %v3287 = vsel %vm1412, %v3250, %v3252
  %v3288 = vsel %vm1412, %v3252, %v3254
  %v3289 = vsel %vm1412, %v3254, %v3256
  %v3290 = vsel %vm1412, %v3256, %v3258
  %v3291 = vsel %vm1412, %v3260, %v3262
  %v3292 = vsel %vm1412, %v3262, %v3264
  %v3293 = vsel %vm1412, %v3264, %v3266
  %v3294 = vsel %vm1412, %v3266, %v3268
  %v3295 = vsel %vm1412, %v3268, %v3270
  %v3296 = vsel %vm1412, %v3270, %v3272
  %3321 = vst [vmem:[#allocation4 + $0x540] sm:$0xff] %v3273
  %3322 = vst [vmem:[#allocation4 + $0x548] sm:$0xff] %v3274
  %3323 = vst [vmem:[#allocation4 + $0x550] sm:$0xff] %v3275
  %3324 = vst [vmem:[#allocation4 + $0x558] sm:$0xff] %v3276
  %3325 = vst [vmem:[#allocation4 + $0x560] sm:$0xff] %v3277
  %3326 = vst [vmem:[#allocation4 + $0x568] sm:$0xff] %v3278
  %3327 = vst [vmem:[#allocation4 + $0x570] sm:$0xff] %v3279
  %3328 = vst [vmem:[#allocation4 + $0x578] sm:$0xff] %v3280
  %3329 = vst [vmem:[#allocation4 + $0x580] sm:$0xff] %v3281
  %3330 = vst [vmem:[#allocation4 + $0x588] sm:$0xff] %v3282
  %3331 = vst [vmem:[#allocation4 + $0x590] sm:$0xff] %v3283
  %3332 = vst [vmem:[#allocation4 + $0x598] sm:$0xff] %v3284
  %3333 = vst [vmem:[#allocation4 + $0x5a0] sm:$0xff] %v3285
  %3334 = vst [vmem:[#allocation4 + $0x5a8] sm:$0xff] %v3286
  %3335 = vst [vmem:[#allocation4 + $0x5b0] sm:$0xff] %v3287
  %3336 = vst [vmem:[#allocation4 + $0x5b8] sm:$0xff] %v3288
  %3337 = vst [vmem:[#allocation4 + $0x5c0] sm:$0xff] %v3289
  %3338 = vst [vmem:[#allocation4 + $0x5c8] sm:$0xff] %v3290
  %3339 = vst [vmem:[#allocation4 + $0x5d0] sm:$0xff] %v3291
  %3340 = vst [vmem:[#allocation4 + $0x5d8] sm:$0xff] %v3292
  %3341 = vst [vmem:[#allocation4 + $0x5e0] sm:$0xff] %v3293
  %3342 = vst [vmem:[#allocation4 + $0x5e8] sm:$0xff] %v3294
  %3343 = vst [vmem:[#allocation4 + $0x5f0] sm:$0xff] %v3295
  %3344 = vst [vmem:[#allocation4 + $0x5f8] sm:$0xff] %v3296
  %v3345 = vld [vmem:[#allocation3 + $0x8] sm:$0xff]
  %v3346 = vld [vmem:[#allocation3 + $0x10] sm:$0xff]
  %v3347 = vld [vmem:[#allocation3 + $0x18] sm:$0xff]
  %v3348 = vld [vmem:[#allocation3 + $0x20] sm:$0xff]
  %v3349 = vld [vmem:[#allocation3 + $0x28] sm:$0xff]
  %v3350 = vld [vmem:[#allocation3 + $0x30] sm:$0xff]
  %v3351 = vld [vmem:[#allocation3 + $0x38] sm:$0xff]
  %v3352 = vld [vmem:[#allocation3 + $0x48] sm:$0xff]
  %v3353 = vld [vmem:[#allocation3 + $0x50] sm:$0xff]
  %v3354 = vld [vmem:[#allocation3 + $0x58] sm:$0xff]
  %v3355 = vld [vmem:[#allocation3 + $0x60] sm:$0xff]
  %v3356 = vld [vmem:[#allocation3 + $0x68] sm:$0xff]
  %v3357 = vld [vmem:[#allocation3 + $0x70] sm:$0xff]
  %v3358 = vld [vmem:[#allocation3 + $0x78] sm:$0xff]
  %v3359 = vld [vmem:[#allocation3 + $0x88] sm:$0xff]
  %v3360 = vld [vmem:[#allocation3 + $0x90] sm:$0xff]
  %v3361 = vld [vmem:[#allocation3 + $0x98] sm:$0xff]
  %v3362 = vld [vmem:[#allocation3 + $0xa0] sm:$0xff]
  %v3363 = vld [vmem:[#allocation3 + $0xa8] sm:$0xff]
  %v3364 = vld [vmem:[#allocation3 + $0xb0] sm:$0xff]
  %v3365 = vld [vmem:[#allocation3 + $0xb8] sm:$0xff]
  %v3366 = vld [vmem:[#allocation3 + $0xc8] sm:$0xff]
  %v3367 = vld [vmem:[#allocation3 + $0xd0] sm:$0xff]
  %v3368 = vld [vmem:[#allocation3 + $0xd8] sm:$0xff]
  %v3369 = vld [vmem:[#allocation3 + $0xe0] sm:$0xff]
  %v3370 = vld [vmem:[#allocation3 + $0xe8] sm:$0xff]
  %v3371 = vld [vmem:[#allocation3 + $0xf0] sm:$0xff]
  %v3372 = vld [vmem:[#allocation3 + $0xf8] sm:$0xff]
  %3401 = vrot.lane.b32.xlu0 %v3345, 109
  %v3402 = vpop.permute.xlu0 %3401
  %3403 = vrot.lane.b32.xlu0 %v3346, 109
  %v3404 = vpop.permute.xlu0 %3403
  %3405 = vrot.lane.b32.xlu0 %v3347, 109
  %v3406 = vpop.permute.xlu0 %3405
  %3407 = vrot.lane.b32.xlu0 %v3348, 109
  %v3408 = vpop.permute.xlu0 %3407
  %3409 = vrot.lane.b32.xlu0 %v3349, 109
  %v3410 = vpop.permute.xlu0 %3409
  %3411 = vrot.lane.b32.xlu0 %v3350, 109
  %v3412 = vpop.permute.xlu0 %3411
  %3413 = vrot.lane.b32.xlu0 %v3351, 109
  %v3414 = vpop.permute.xlu0 %3413
  %3415 = vrot.lane.b32.xlu0 %v3352, 109
  %v3416 = vpop.permute.xlu0 %3415
  %3417 = vrot.lane.b32.xlu0 %v3353, 109
  %v3418 = vpop.permute.xlu0 %3417
  %3419 = vrot.lane.b32.xlu0 %v3354, 109
  %v3420 = vpop.permute.xlu0 %3419
  %3421 = vrot.lane.b32.xlu0 %v3355, 109
  %v3422 = vpop.permute.xlu0 %3421
  %3423 = vrot.lane.b32.xlu0 %v3356, 109
  %v3424 = vpop.permute.xlu0 %3423
  %3425 = vrot.lane.b32.xlu0 %v3357, 109
  %v3426 = vpop.permute.xlu0 %3425
  %3427 = vrot.lane.b32.xlu0 %v3358, 109
  %v3428 = vpop.permute.xlu0 %3427
  %3429 = vrot.lane.b32.xlu0 %v3359, 109
  %v3430 = vpop.permute.xlu0 %3429
  %3431 = vrot.lane.b32.xlu0 %v3360, 109
  %v3432 = vpop.permute.xlu0 %3431
  %3433 = vrot.lane.b32.xlu0 %v3361, 109
  %v3434 = vpop.permute.xlu0 %3433
  %3435 = vrot.lane.b32.xlu0 %v3362, 109
  %v3436 = vpop.permute.xlu0 %3435
  %3437 = vrot.lane.b32.xlu0 %v3363, 109
  %v3438 = vpop.permute.xlu0 %3437
  %3439 = vrot.lane.b32.xlu0 %v3364, 109
  %v3440 = vpop.permute.xlu0 %3439
  %3441 = vrot.lane.b32.xlu0 %v3365, 109
  %v3442 = vpop.permute.xlu0 %3441
  %3443 = vrot.lane.b32.xlu0 %v3366, 109
  %v3444 = vpop.permute.xlu0 %3443
  %3445 = vrot.lane.b32.xlu0 %v3367, 109
  %v3446 = vpop.permute.xlu0 %3445
  %3447 = vrot.lane.b32.xlu0 %v3368, 109
  %v3448 = vpop.permute.xlu0 %3447
  %3449 = vrot.lane.b32.xlu0 %v3369, 109
  %v3450 = vpop.permute.xlu0 %3449
  %3451 = vrot.lane.b32.xlu0 %v3370, 109
  %v3452 = vpop.permute.xlu0 %3451
  %3453 = vrot.lane.b32.xlu0 %v3371, 109
  %v3454 = vpop.permute.xlu0 %3453
  %3455 = vrot.lane.b32.xlu0 %v3372, 109
  %v3456 = vpop.permute.xlu0 %3455
  %v3457 = vsel %vm1505, %v3402, %v3404
  %v3458 = vsel %vm1505, %v3404, %v3406
  %v3459 = vsel %vm1505, %v3406, %v3408
  %v3460 = vsel %vm1505, %v3408, %v3410
  %v3461 = vsel %vm1505, %v3410, %v3412
  %v3462 = vsel %vm1505, %v3412, %v3414
  %v3463 = vsel %vm1505, %v3416, %v3418
  %v3464 = vsel %vm1505, %v3418, %v3420
  %v3465 = vsel %vm1505, %v3420, %v3422
  %v3466 = vsel %vm1505, %v3422, %v3424
  %v3467 = vsel %vm1505, %v3424, %v3426
  %v3468 = vsel %vm1505, %v3426, %v3428
  %v3469 = vsel %vm1505, %v3430, %v3432
  %v3470 = vsel %vm1505, %v3432, %v3434
  %v3471 = vsel %vm1505, %v3434, %v3436
  %v3472 = vsel %vm1505, %v3436, %v3438
  %v3473 = vsel %vm1505, %v3438, %v3440
  %v3474 = vsel %vm1505, %v3440, %v3442
  %v3475 = vsel %vm1505, %v3444, %v3446
  %v3476 = vsel %vm1505, %v3446, %v3448
  %v3477 = vsel %vm1505, %v3448, %v3450
  %v3478 = vsel %vm1505, %v3450, %v3452
  %v3479 = vsel %vm1505, %v3452, %v3454
  %v3480 = vsel %vm1505, %v3454, %v3456
  %3505 = vst [vmem:[#allocation4 + $0x600] sm:$0xff] %v3457
  %3506 = vst [vmem:[#allocation4 + $0x608] sm:$0xff] %v3458
  %3507 = vst [vmem:[#allocation4 + $0x610] sm:$0xff] %v3459
  %3508 = vst [vmem:[#allocation4 + $0x618] sm:$0xff] %v3460
  %3509 = vst [vmem:[#allocation4 + $0x620] sm:$0xff] %v3461
  %3510 = vst [vmem:[#allocation4 + $0x628] sm:$0xff] %v3462
  %3511 = vst [vmem:[#allocation4 + $0x630] sm:$0xff] %v3463
  %3512 = vst [vmem:[#allocation4 + $0x638] sm:$0xff] %v3464
  %3513 = vst [vmem:[#allocation4 + $0x640] sm:$0xff] %v3465
  %3514 = vst [vmem:[#allocation4 + $0x648] sm:$0xff] %v3466
  %3515 = vst [vmem:[#allocation4 + $0x650] sm:$0xff] %v3467
  %3516 = vst [vmem:[#allocation4 + $0x658] sm:$0xff] %v3468
  %3517 = vst [vmem:[#allocation4 + $0x660] sm:$0xff] %v3469
  %3518 = vst [vmem:[#allocation4 + $0x668] sm:$0xff] %v3470
  %3519 = vst [vmem:[#allocation4 + $0x670] sm:$0xff] %v3471
  %3520 = vst [vmem:[#allocation4 + $0x678] sm:$0xff] %v3472
  %3521 = vst [vmem:[#allocation4 + $0x680] sm:$0xff] %v3473
  %3522 = vst [vmem:[#allocation4 + $0x688] sm:$0xff] %v3474
  %3523 = vst [vmem:[#allocation4 + $0x690] sm:$0xff] %v3475
  %3524 = vst [vmem:[#allocation4 + $0x698] sm:$0xff] %v3476
  %3525 = vst [vmem:[#allocation4 + $0x6a0] sm:$0xff] %v3477
  %3526 = vst [vmem:[#allocation4 + $0x6a8] sm:$0xff] %v3478
  %3527 = vst [vmem:[#allocation4 + $0x6b0] sm:$0xff] %v3479
  %3528 = vst [vmem:[#allocation4 + $0x6b8] sm:$0xff] %v3480
  %v3529 = vld [vmem:[%s7] sm:$0xff]
  %v3530 = vld [vmem:[%s7 + $0x8] sm:$0xff]
  %v3531 = vld [vmem:[%s7 + $0x10] sm:$0xff]
  %v3532 = vld [vmem:[%s7 + $0x18] sm:$0xff]
  %v3533 = vld [vmem:[%s7 + $0x20] sm:$0xff]
  %v3534 = vld [vmem:[%s7 + $0x28] sm:$0xff]
  %v3535 = vld [vmem:[%s7 + $0x30] sm:$0xff]
  %v3536 = vld [vmem:[%s7 + $0x38] sm:$0xff]
  %v3537 = vld [vmem:[%s7 + $0x40] sm:$0xff]
  %v3538 = vld [vmem:[%s7 + $0x48] sm:$0xff]
  %v3539 = vld [vmem:[%s7 + $0x50] sm:$0xff]
  %v3540 = vld [vmem:[%s7 + $0x58] sm:$0xff]
  %v3541 = vld [vmem:[#allocation4] sm:$0xff]
  %v3542 = vld [vmem:[#allocation4 + $0x8] sm:$0xff]
  %v3543 = vld [vmem:[#allocation4 + $0x10] sm:$0xff]
  %v3544 = vld [vmem:[#allocation4 + $0x18] sm:$0xff]
  %v3545 = vld [vmem:[#allocation4 + $0x20] sm:$0xff]
  %v3546 = vld [vmem:[#allocation4 + $0x28] sm:$0xff]
  %v3547 = vld [vmem:[#allocation4 + $0x30] sm:$0xff]
  %v3548 = vld [vmem:[#allocation4 + $0x38] sm:$0xff]
  %v3549 = vld [vmem:[#allocation4 + $0x40] sm:$0xff]
  %v3550 = vld [vmem:[#allocation4 + $0x48] sm:$0xff]
  %v3551 = vld [vmem:[#allocation4 + $0x50] sm:$0xff]
  %v3552 = vld [vmem:[#allocation4 + $0x58] sm:$0xff]
  %v3553 = vld [vmem:[#allocation4 + $0x60] sm:$0xff]
  %v3554 = vld [vmem:[#allocation4 + $0x68] sm:$0xff]
  %v3555 = vld [vmem:[#allocation4 + $0x70] sm:$0xff]
  %v3556 = vld [vmem:[#allocation4 + $0x78] sm:$0xff]
  %v3557 = vld [vmem:[#allocation4 + $0x80] sm:$0xff]
  %v3558 = vld [vmem:[#allocation4 + $0x88] sm:$0xff]
  %v3559 = vld [vmem:[#allocation4 + $0x90] sm:$0xff]
  %v3560 = vld [vmem:[#allocation4 + $0x98] sm:$0xff]
  %v3561 = vld [vmem:[#allocation4 + $0xa0] sm:$0xff]
  %v3562 = vld [vmem:[#allocation4 + $0xa8] sm:$0xff]
  %v3563 = vld [vmem:[#allocation4 + $0xb0] sm:$0xff]
  %v3564 = vld [vmem:[#allocation4 + $0xb8] sm:$0xff]
  %v3565 = vld [vmem:[#allocation4 + $0xc0] sm:$0xff]
  %v3566 = vld [vmem:[#allocation4 + $0xc8] sm:$0xff]
  %v3567 = vld [vmem:[#allocation4 + $0xd0] sm:$0xff]
  %v3568 = vld [vmem:[#allocation4 + $0xd8] sm:$0xff]
  %v3569 = vld [vmem:[#allocation4 + $0xe0] sm:$0xff]
  %v3570 = vld [vmem:[#allocation4 + $0xe8] sm:$0xff]
  %v3571 = vld [vmem:[#allocation4 + $0xf0] sm:$0xff]
  %v3572 = vld [vmem:[#allocation4 + $0xf8] sm:$0xff]
  %v3573 = vld [vmem:[#allocation4 + $0x100] sm:$0xff]
  %v3574 = vld [vmem:[#allocation4 + $0x108] sm:$0xff]
  %v3575 = vld [vmem:[#allocation4 + $0x110] sm:$0xff]
  %v3576 = vld [vmem:[#allocation4 + $0x118] sm:$0xff]
  %v3577 = vld [vmem:[#allocation4 + $0x120] sm:$0xff]
  %v3578 = vld [vmem:[#allocation4 + $0x128] sm:$0xff]
  %v3579 = vld [vmem:[#allocation4 + $0x130] sm:$0xff]
  %v3580 = vld [vmem:[#allocation4 + $0x138] sm:$0xff]
  %v3581 = vld [vmem:[#allocation4 + $0x140] sm:$0xff]
  %v3582 = vld [vmem:[#allocation4 + $0x148] sm:$0xff]
  %v3583 = vld [vmem:[#allocation4 + $0x150] sm:$0xff]
  %v3584 = vld [vmem:[#allocation4 + $0x158] sm:$0xff]
  %v3585 = vld [vmem:[#allocation4 + $0x160] sm:$0xff]
  %v3586 = vld [vmem:[#allocation4 + $0x168] sm:$0xff]
  %v3587 = vld [vmem:[#allocation4 + $0x170] sm:$0xff]
  %v3588 = vld [vmem:[#allocation4 + $0x178] sm:$0xff]
  %v3589 = vld [vmem:[#allocation4 + $0x180] sm:$0xff]
  %v3590 = vld [vmem:[#allocation4 + $0x188] sm:$0xff]
  %v3591 = vld [vmem:[#allocation4 + $0x190] sm:$0xff]
  %v3592 = vld [vmem:[#allocation4 + $0x198] sm:$0xff]
  %v3593 = vld [vmem:[#allocation4 + $0x1a0] sm:$0xff]
  %v3594 = vld [vmem:[#allocation4 + $0x1a8] sm:$0xff]
  %v3595 = vld [vmem:[#allocation4 + $0x1b0] sm:$0xff]
  %v3596 = vld [vmem:[#allocation4 + $0x1b8] sm:$0xff]
  %v3597 = vld [vmem:[#allocation4 + $0x1c0] sm:$0xff]
  %v3598 = vld [vmem:[#allocation4 + $0x1c8] sm:$0xff]
  %v3599 = vld [vmem:[#allocation4 + $0x1d0] sm:$0xff]
  %v3600 = vld [vmem:[#allocation4 + $0x1d8] sm:$0xff]
  %v3601 = vld [vmem:[#allocation4 + $0x1e0] sm:$0xff]
  %v3602 = vld [vmem:[#allocation4 + $0x1e8] sm:$0xff]
  %v3603 = vld [vmem:[#allocation4 + $0x1f0] sm:$0xff]
  %v3604 = vld [vmem:[#allocation4 + $0x1f8] sm:$0xff]
  %v3605 = vld [vmem:[#allocation4 + $0x200] sm:$0xff]
  %v3606 = vld [vmem:[#allocation4 + $0x208] sm:$0xff]
  %v3607 = vld [vmem:[#allocation4 + $0x210] sm:$0xff]
  %v3608 = vld [vmem:[#allocation4 + $0x218] sm:$0xff]
  %v3609 = vld [vmem:[#allocation4 + $0x220] sm:$0xff]
  %v3610 = vld [vmem:[#allocation4 + $0x228] sm:$0xff]
  %v3611 = vld [vmem:[#allocation4 + $0x230] sm:$0xff]
  %v3612 = vld [vmem:[#allocation4 + $0x238] sm:$0xff]
  %v3613 = vld [vmem:[#allocation4 + $0x240] sm:$0xff]
  %v3614 = vld [vmem:[#allocation4 + $0x248] sm:$0xff]
  %v3615 = vld [vmem:[#allocation4 + $0x250] sm:$0xff]
  %v3616 = vld [vmem:[#allocation4 + $0x258] sm:$0xff]
  %v3617 = vld [vmem:[#allocation4 + $0x260] sm:$0xff]
  %v3618 = vld [vmem:[#allocation4 + $0x268] sm:$0xff]
  %v3619 = vld [vmem:[#allocation4 + $0x270] sm:$0xff]
  %v3620 = vld [vmem:[#allocation4 + $0x278] sm:$0xff]
  %v3621 = vld [vmem:[#allocation4 + $0x280] sm:$0xff]
  %v3622 = vld [vmem:[#allocation4 + $0x288] sm:$0xff]
  %v3623 = vld [vmem:[#allocation4 + $0x290] sm:$0xff]
  %v3624 = vld [vmem:[#allocation4 + $0x298] sm:$0xff]
  %v3625 = vld [vmem:[#allocation4 + $0x2a0] sm:$0xff]
  %v3626 = vld [vmem:[#allocation4 + $0x2a8] sm:$0xff]
  %v3627 = vld [vmem:[#allocation4 + $0x2b0] sm:$0xff]
  %v3628 = vld [vmem:[#allocation4 + $0x2b8] sm:$0xff]
  %v3629 = vld [vmem:[#allocation4 + $0x2c0] sm:$0xff]
  %v3630 = vld [vmem:[#allocation4 + $0x2c8] sm:$0xff]
  %v3631 = vld [vmem:[#allocation4 + $0x2d0] sm:$0xff]
  %v3632 = vld [vmem:[#allocation4 + $0x2d8] sm:$0xff]
  %v3633 = vld [vmem:[#allocation4 + $0x2e0] sm:$0xff]
  %v3634 = vld [vmem:[#allocation4 + $0x2e8] sm:$0xff]
  %v3635 = vld [vmem:[#allocation4 + $0x2f0] sm:$0xff]
  %v3636 = vld [vmem:[#allocation4 + $0x2f8] sm:$0xff]
  %v3637 = vld [vmem:[#allocation4 + $0x300] sm:$0xff]
  %v3638 = vld [vmem:[#allocation4 + $0x308] sm:$0xff]
  %v3639 = vld [vmem:[#allocation4 + $0x310] sm:$0xff]
  %v3640 = vld [vmem:[#allocation4 + $0x318] sm:$0xff]
  %v3641 = vld [vmem:[#allocation4 + $0x320] sm:$0xff]
  %v3642 = vld [vmem:[#allocation4 + $0x328] sm:$0xff]
  %v3643 = vld [vmem:[#allocation4 + $0x330] sm:$0xff]
  %v3644 = vld [vmem:[#allocation4 + $0x338] sm:$0xff]
  %v3645 = vld [vmem:[#allocation4 + $0x340] sm:$0xff]
  %v3646 = vld [vmem:[#allocation4 + $0x348] sm:$0xff]
  %v3647 = vld [vmem:[#allocation4 + $0x350] sm:$0xff]
  %v3648 = vld [vmem:[#allocation4 + $0x358] sm:$0xff]
  %v3649 = vld [vmem:[#allocation4 + $0x360] sm:$0xff]
  %v3650 = vld [vmem:[#allocation4 + $0x368] sm:$0xff]
  %v3651 = vld [vmem:[#allocation4 + $0x370] sm:$0xff]
  %v3652 = vld [vmem:[#allocation4 + $0x378] sm:$0xff]
  %v3653 = vld [vmem:[#allocation4 + $0x380] sm:$0xff]
  %v3654 = vld [vmem:[#allocation4 + $0x388] sm:$0xff]
  %v3655 = vld [vmem:[#allocation4 + $0x390] sm:$0xff]
  %v3656 = vld [vmem:[#allocation4 + $0x398] sm:$0xff]
  %v3657 = vld [vmem:[#allocation4 + $0x3a0] sm:$0xff]
  %v3658 = vld [vmem:[#allocation4 + $0x3a8] sm:$0xff]
  %v3659 = vld [vmem:[#allocation4 + $0x3b0] sm:$0xff]
  %v3660 = vld [vmem:[#allocation4 + $0x3b8] sm:$0xff]
  %v3661 = vld [vmem:[#allocation4 + $0x3c0] sm:$0xff]
  %v3662 = vld [vmem:[#allocation4 + $0x3c8] sm:$0xff]
  %v3663 = vld [vmem:[#allocation4 + $0x3d0] sm:$0xff]
  %v3664 = vld [vmem:[#allocation4 + $0x3d8] sm:$0xff]
  %v3665 = vld [vmem:[#allocation4 + $0x3e0] sm:$0xff]
  %v3666 = vld [vmem:[#allocation4 + $0x3e8] sm:$0xff]
  %v3667 = vld [vmem:[#allocation4 + $0x3f0] sm:$0xff]
  %v3668 = vld [vmem:[#allocation4 + $0x3f8] sm:$0xff]
  %v3669 = vld [vmem:[#allocation4 + $0x400] sm:$0xff]
  %v3670 = vld [vmem:[#allocation4 + $0x408] sm:$0xff]
  %v3671 = vld [vmem:[#allocation4 + $0x410] sm:$0xff]
  %v3672 = vld [vmem:[#allocation4 + $0x418] sm:$0xff]
  %v3673 = vld [vmem:[#allocation4 + $0x420] sm:$0xff]
  %v3674 = vld [vmem:[#allocation4 + $0x428] sm:$0xff]
  %v3675 = vld [vmem:[#allocation4 + $0x430] sm:$0xff]
  %v3676 = vld [vmem:[#allocation4 + $0x438] sm:$0xff]
  %v3677 = vld [vmem:[#allocation4 + $0x440] sm:$0xff]
  %v3678 = vld [vmem:[#allocation4 + $0x448] sm:$0xff]
  %v3679 = vld [vmem:[#allocation4 + $0x450] sm:$0xff]
  %v3680 = vld [vmem:[#allocation4 + $0x458] sm:$0xff]
  %v3681 = vld [vmem:[#allocation4 + $0x460] sm:$0xff]
  %v3682 = vld [vmem:[#allocation4 + $0x468] sm:$0xff]
  %v3683 = vld [vmem:[#allocation4 + $0x470] sm:$0xff]
  %v3684 = vld [vmem:[#allocation4 + $0x478] sm:$0xff]
  %v3685 = vld [vmem:[#allocation4 + $0x480] sm:$0xff]
  %v3686 = vld [vmem:[#allocation4 + $0x488] sm:$0xff]
  %v3687 = vld [vmem:[#allocation4 + $0x490] sm:$0xff]
  %v3688 = vld [vmem:[#allocation4 + $0x498] sm:$0xff]
  %v3689 = vld [vmem:[#allocation4 + $0x4a0] sm:$0xff]
  %v3690 = vld [vmem:[#allocation4 + $0x4a8] sm:$0xff]
  %v3691 = vld [vmem:[#allocation4 + $0x4b0] sm:$0xff]
  %v3692 = vld [vmem:[#allocation4 + $0x4b8] sm:$0xff]
  %v3693 = vld [vmem:[#allocation4 + $0x4c0] sm:$0xff]
  %v3694 = vld [vmem:[#allocation4 + $0x4c8] sm:$0xff]
  %v3695 = vld [vmem:[#allocation4 + $0x4d0] sm:$0xff]
  %v3696 = vld [vmem:[#allocation4 + $0x4d8] sm:$0xff]
  %v3697 = vld [vmem:[#allocation4 + $0x4e0] sm:$0xff]
  %v3698 = vld [vmem:[#allocation4 + $0x4e8] sm:$0xff]
  %v3699 = vld [vmem:[#allocation4 + $0x4f0] sm:$0xff]
  %v3700 = vld [vmem:[#allocation4 + $0x4f8] sm:$0xff]
  %v3701 = vld [vmem:[#allocation4 + $0x500] sm:$0xff]
  %v3702 = vld [vmem:[#allocation4 + $0x508] sm:$0xff]
  %v3703 = vld [vmem:[#allocation4 + $0x510] sm:$0xff]
  %v3704 = vld [vmem:[#allocation4 + $0x518] sm:$0xff]
  %v3705 = vld [vmem:[#allocation4 + $0x520] sm:$0xff]
  %v3706 = vld [vmem:[#allocation4 + $0x528] sm:$0xff]
  %v3707 = vld [vmem:[#allocation4 + $0x530] sm:$0xff]
  %v3708 = vld [vmem:[#allocation4 + $0x538] sm:$0xff]
  %v3709 = vld [vmem:[#allocation4 + $0x540] sm:$0xff]
  %v3710 = vld [vmem:[#allocation4 + $0x548] sm:$0xff]
  %v3711 = vld [vmem:[#allocation4 + $0x550] sm:$0xff]
  %v3712 = vld [vmem:[#allocation4 + $0x558] sm:$0xff]
  %v3713 = vld [vmem:[#allocation4 + $0x560] sm:$0xff]
  %v3714 = vld [vmem:[#allocation4 + $0x568] sm:$0xff]
  %v3715 = vld [vmem:[#allocation4 + $0x570] sm:$0xff]
  %v3716 = vld [vmem:[#allocation4 + $0x578] sm:$0xff]
  %v3717 = vld [vmem:[#allocation4 + $0x580] sm:$0xff]
  %v3718 = vld [vmem:[#allocation4 + $0x588] sm:$0xff]
  %v3719 = vld [vmem:[#allocation4 + $0x590] sm:$0xff]
  %v3720 = vld [vmem:[#allocation4 + $0x598] sm:$0xff]
  %v3721 = vld [vmem:[#allocation4 + $0x5a0] sm:$0xff]
  %v3722 = vld [vmem:[#allocation4 + $0x5a8] sm:$0xff]
  %v3723 = vld [vmem:[#allocation4 + $0x5b0] sm:$0xff]
  %v3724 = vld [vmem:[#allocation4 + $0x5b8] sm:$0xff]
  %v3725 = vld [vmem:[#allocation4 + $0x5c0] sm:$0xff]
  %v3726 = vld [vmem:[#allocation4 + $0x5c8] sm:$0xff]
  %v3727 = vld [vmem:[#allocation4 + $0x5d0] sm:$0xff]
  %v3728 = vld [vmem:[#allocation4 + $0x5d8] sm:$0xff]
  %v3729 = vld [vmem:[#allocation4 + $0x5e0] sm:$0xff]
  %v3730 = vld [vmem:[#allocation4 + $0x5e8] sm:$0xff]
  %v3731 = vld [vmem:[#allocation4 + $0x5f0] sm:$0xff]
  %v3732 = vld [vmem:[#allocation4 + $0x5f8] sm:$0xff]
  %v3733 = vld [vmem:[#allocation4 + $0x600] sm:$0xff]
  %v3734 = vld [vmem:[#allocation4 + $0x608] sm:$0xff]
  %v3735 = vld [vmem:[#allocation4 + $0x610] sm:$0xff]
  %v3736 = vld [vmem:[#allocation4 + $0x618] sm:$0xff]
  %v3737 = vld [vmem:[#allocation4 + $0x620] sm:$0xff]
  %v3738 = vld [vmem:[#allocation4 + $0x628] sm:$0xff]
  %v3739 = vld [vmem:[#allocation4 + $0x630] sm:$0xff]
  %v3740 = vld [vmem:[#allocation4 + $0x638] sm:$0xff]
  %v3741 = vld [vmem:[#allocation4 + $0x640] sm:$0xff]
  %v3742 = vld [vmem:[#allocation4 + $0x648] sm:$0xff]
  %v3743 = vld [vmem:[#allocation4 + $0x650] sm:$0xff]
  %v3744 = vld [vmem:[#allocation4 + $0x658] sm:$0xff]
  %v3745 = vld [vmem:[#allocation4 + $0x660] sm:$0xff]
  %v3746 = vld [vmem:[#allocation4 + $0x668] sm:$0xff]
  %v3747 = vld [vmem:[#allocation4 + $0x670] sm:$0xff]
  %v3748 = vld [vmem:[#allocation4 + $0x678] sm:$0xff]
  %v3749 = vld [vmem:[#allocation4 + $0x680] sm:$0xff]
  %v3750 = vld [vmem:[#allocation4 + $0x688] sm:$0xff]
  %v3751 = vld [vmem:[#allocation4 + $0x690] sm:$0xff]
  %v3752 = vld [vmem:[#allocation4 + $0x698] sm:$0xff]
  %v3753 = vld [vmem:[#allocation4 + $0x6a0] sm:$0xff]
  %v3754 = vld [vmem:[#allocation4 + $0x6a8] sm:$0xff]
  %v3755 = vld [vmem:[#allocation4 + $0x6b0] sm:$0xff]
  %v3756 = vld [vmem:[#allocation4 + $0x6b8] sm:$0xff]
  %vm3757 = vcmask 261120
  %v3759 = vsel %vm3757, %v3531, 0
  %v3762 = vsel %vm3757, %v3534, 0
  %v3765 = vsel %vm3757, %v3537, 0
  %v3768 = vsel %vm3757, %v3540, 0
  %3770 = vmatprep.subr.mxu0 %v3542
  %3771 = vmatpush1.msra.mxu0 %v3541
  %3772 = vmatprep.subr.mxu0 %v3548
  %3773 = vmatpush1.msra.mxu0 %v3547
  %3774 = vmatprep.subr.mxu0 %v3554
  %3775 = vmatpush1.msra.mxu0 %v3553
  %3776 = vmatprep.subr.mxu0 %v3560
  %3777 = vmatpush1.msra.mxu0 %v3559
  %3778 = vmatprep.subr.mxu0 %v3566
  %3779 = vmatpush1.msra.mxu0 %v3565
  %3780 = vmatprep.subr.mxu0 %v3572
  %3781 = vmatpush1.msra.mxu0 %v3571
  %3782 = vmatprep.subr.mxu0 %v3578
  %3783 = vmatpush1.msra.mxu0 %v3577
  %3784 = vmatprep.subr.mxu0 %v3584
  %3785 = vmatpush1.msra.mxu0 %v3583
  %3786 = vmatprep.subr.mxu0 %v3590
  %3787 = vmatpush1.msra.mxu0 %v3589
  %3788 = vmatprep.subr.mxu0 %v3596
  %3789 = vmatpush1.msra.mxu0 %v3595
  %3790 = vmatprep.subr.mxu0 %v3602
  %3791 = vmatpush1.msra.mxu0 %v3601
  %3792 = vmatprep.subr.mxu0 %v3608
  %3793 = vmatpush1.msra.mxu0 %v3607
  %3794 = vmatprep.subr.mxu0 %v3614
  %3795 = vmatpush1.msra.mxu0 %v3613
  %3796 = vmatprep.subr.mxu0 %v3620
  %3797 = vmatpush1.msra.mxu0 %v3619
  %3798 = vmatprep.subr.mxu0 %v3626
  %3799 = vmatpush1.msra.mxu0 %v3625
  %3800 = vmatprep.subr.mxu0 %v3632
  %3801 = vmatpush1.msra.mxu0 %v3631
  %3802 = vmatprep.subr.mxu0 %v3638
  %3803 = vmatpush1.msra.mxu0 %v3637
  %3804 = vmatprep.subr.mxu0 %v3644
  %3805 = vmatpush1.msra.mxu0 %v3643
  %3806 = vmatprep.subr.mxu0 %v3650
  %3807 = vmatpush1.msra.mxu0 %v3649
  %3808 = vmatprep.subr.mxu0 %v3656
  %3809 = vmatpush1.msra.mxu0 %v3655
  %3810 = vmatprep.subr.mxu0 %v3662
  %3811 = vmatpush1.msra.mxu0 %v3661
  %3812 = vmatprep.subr.mxu0 %v3668
  %3813 = vmatpush1.msra.mxu0 %v3667
  %3814 = vmatprep.subr.mxu0 %v3674
  %3815 = vmatpush1.msra.mxu0 %v3673
  %3816 = vmatprep.subr.mxu0 %v3680
  %3817 = vmatpush1.msra.mxu0 %v3679
  %3818 = vmatprep.subr.mxu0 %v3686
  %3819 = vmatpush1.msra.mxu0 %v3685
  %3820 = vmatprep.subr.mxu0 %v3692
  %3821 = vmatpush1.msra.mxu0 %v3691
  %3822 = vmatprep.subr.mxu0 %v3698
  %3823 = vmatpush1.msra.mxu0 %v3697
  %3824 = vmatprep.subr.mxu0 %v3704
  %3825 = vmatpush1.msra.mxu0 %v3703
  %3826 = vmatprep.subr.mxu0 %v3710
  %3827 = vmatpush1.msra.mxu0 %v3709
  %3828 = vmatprep.subr.mxu0 %v3716
  %3829 = vmatpush1.msra.mxu0 %v3715
  %3830 = vmatprep.subr.mxu0 %v3722
  %3831 = vmatpush1.msra.mxu0 %v3721
  %3832 = vmatprep.subr.mxu0 %v3728
  %3833 = vmatpush1.msra.mxu0 %v3727
  %3834 = vmatprep.mubr.f32.mxu0 %v3530
  %3835 = vmatmul.mubr.f32.gmra.mrb[0].mxu0 %v3529
  %v3836 = vpop.f32.mrb[0].mxu0
  %v3837 = vadd.f32 0.0, %v3836
  %v3838 = vpop.f32.mrb[0].mxu0
  %v3839 = vadd.f32 0.0, %v3838
  %3840 = vmatprep.mubr.f32.mxu0 %v3533
  %3841 = vmatmul.mubr.f32.gmra.mrb[0].mxu0 %v3532
  %v3842 = vpop.f32.mrb[0].mxu0
  %v3843 = vadd.f32 0.0, %v3842
  %v3844 = vpop.f32.mrb[0].mxu0
  %v3845 = vadd.f32 0.0, %v3844
  %3846 = vmatprep.mubr.f32.mxu0 %v3536
  %3847 = vmatmul.mubr.f32.gmra.mrb[0].mxu0 %v3535
  %v3848 = vpop.f32.mrb[0].mxu0
  %v3849 = vadd.f32 0.0, %v3848
  %v3850 = vpop.f32.mrb[0].mxu0
  %v3851 = vadd.f32 0.0, %v3850
  %3852 = vmatprep.mubr.f32.mxu0 %v3539
  %3853 = vmatmul.mubr.f32.gmra.mrb[0].mxu0 %v3538
  %v3854 = vpop.f32.mrb[0].mxu0
  %v3855 = vadd.f32 0.0, %v3854
  %v3856 = vpop.f32.mrb[0].mxu0
  %v3857 = vadd.f32 0.0, %v3856
  %3858 = vdwg.mxu0
  %3859 = vmatprep.subr.mxu0 %v3734
  %3860 = vmatpush1.msra.mxu0 %v3733
  %3861 = vmatprep.subr.mxu0 %v3740
  %3862 = vmatpush1.msra.mxu0 %v3739
  %3863 = vmatprep.subr.mxu0 %v3746
  %3864 = vmatpush1.msra.mxu0 %v3745
  %3865 = vmatprep.subr.mxu0 %v3752
  %3866 = vmatpush1.msra.mxu0 %v3751
  %3867 = vmatprep.subr.mxu0 0.0
  %3868 = vmatpush1.msra.mxu0 0.0
  %3869 = vmatprep.subr.mxu0 0.0
  %3870 = vmatpush1.msra.mxu0 0.0
  %3871 = vmatprep.subr.mxu0 0.0
  %3872 = vmatpush1.msra.mxu0 0.0
  %3873 = vmatprep.subr.mxu0 0.0
  %3874 = vmatpush1.msra.mxu0 0.0
  %3875 = vmatprep.subr.mxu0 0.0
  %3876 = vmatpush1.msra.mxu0 0.0
  %3877 = vmatprep.subr.mxu0 0.0
  %3878 = vmatpush1.msra.mxu0 0.0
  %3879 = vmatprep.subr.mxu0 0.0
  %3880 = vmatpush1.msra.mxu0 0.0
  %3881 = vmatprep.subr.mxu0 0.0
  %3882 = vmatpush1.msra.mxu0 0.0
  %3883 = vmatprep.subr.mxu0 0.0
  %3884 = vmatpush1.msra.mxu0 0.0
  %3885 = vmatprep.subr.mxu0 0.0
  %3886 = vmatpush1.msra.mxu0 0.0
  %3887 = vmatprep.subr.mxu0 0.0
  %3888 = vmatpush1.msra.mxu0 0.0
  %3889 = vmatprep.subr.mxu0 0.0
  %3890 = vmatpush1.msra.mxu0 0.0
  %3891 = vmatprep.subr.mxu0 0.0
  %3892 = vmatpush1.msra.mxu0 0.0
  %3893 = vmatprep.subr.mxu0 0.0
  %3894 = vmatpush1.msra.mxu0 0.0
  %3895 = vmatprep.subr.mxu0 0.0
  %3896 = vmatpush1.msra.mxu0 0.0
  %3897 = vmatprep.subr.mxu0 0.0
  %3898 = vmatpush1.msra.mxu0 0.0
  %3899 = vmatprep.subr.mxu0 0.0
  %3900 = vmatpush1.msra.mxu0 0.0
  %3901 = vmatprep.subr.mxu0 0.0
  %3902 = vmatpush1.msra.mxu0 0.0
  %3903 = vmatprep.subr.mxu0 0.0
  %3904 = vmatpush1.msra.mxu0 0.0
  %3905 = vmatprep.subr.mxu0 0.0
  %3906 = vmatpush1.msra.mxu0 0.0
  %3907 = vmatprep.subr.mxu0 0.0
  %3908 = vmatpush1.msra.mxu0 0.0
  %3909 = vmatprep.subr.mxu0 0.0
  %3910 = vmatpush1.msra.mxu0 0.0
  %3911 = vmatprep.subr.mxu0 0.0
  %3912 = vmatpush1.msra.mxu0 0.0
  %3913 = vmatprep.subr.mxu0 0.0
  %3914 = vmatpush1.msra.mxu0 0.0
  %3915 = vmatprep.subr.mxu0 0.0
  %3916 = vmatpush1.msra.mxu0 0.0
  %3917 = vmatprep.subr.mxu0 0.0
  %3918 = vmatpush1.msra.mxu0 0.0
  %3919 = vmatprep.subr.mxu0 0.0
  %3920 = vmatpush1.msra.mxu0 0.0
  %3921 = vmatprep.subr.mxu0 0.0
  %3922 = vmatpush1.msra.mxu0 0.0
  %3923 = vmatprep.mubr.f32.mxu0 0.0
  %3924 = vmatmul.mubr.f32.gmra.mrb[0].mxu0 %v3759
  %v3925 = vpop.f32.mrb[0].mxu0
  %v3926 = vadd.f32 %v3837, %v3925
  %v3927 = vpop.f32.mrb[0].mxu0
  %v3928 = vadd.f32 %v3839, %v3927
  %3929 = vmatprep.mubr.f32.mxu0 0.0
  %3930 = vmatmul.mubr.f32.gmra.mrb[0].mxu0 %v3762
  %v3931 = vpop.f32.mrb[0].mxu0
  %v3932 = vadd.f32 %v3843, %v3931
  %v3933 = vpop.f32.mrb[0].mxu0
  %v3934 = vadd.f32 %v3845, %v3933
  %3935 = vmatprep.mubr.f32.mxu0 0.0
  %3936 = vmatmul.mubr.f32.gmra.mrb[0].mxu0 %v3765
  %v3937 = vpop.f32.mrb[0].mxu0
  %v3938 = vadd.f32 %v3849, %v3937
  %v3939 = vpop.f32.mrb[0].mxu0
  %v3940 = vadd.f32 %v3851, %v3939
  %3941 = vmatprep.mubr.f32.mxu0 0.0
  %3942 = vmatmul.mubr.f32.gmra.mrb[0].mxu0 %v3768
  %v3943 = vpop.f32.mrb[0].mxu0
  %v3944 = vadd.f32 %v3855, %v3943
  %v3945 = vpop.f32.mrb[0].mxu0
  %v3946 = vadd.f32 %v3857, %v3945
  %3947 = vdwg.mxu0
  %3948 = vmatprep.subr.mxu0 %v3544
  %3949 = vmatpush1.msra.mxu0 %v3543
  %3950 = vmatprep.subr.mxu0 %v3550
  %3951 = vmatpush1.msra.mxu0 %v3549
  %3952 = vmatprep.subr.mxu0 %v3556
  %3953 = vmatpush1.msra.mxu0 %v3555
  %3954 = vmatprep.subr.mxu0 %v3562
  %3955 = vmatpush1.msra.mxu0 %v3561
  %3956 = vmatprep.subr.mxu0 %v3568
  %3957 = vmatpush1.msra.mxu0 %v3567
  %3958 = vmatprep.subr.mxu0 %v3574
  %3959 = vmatpush1.msra.mxu0 %v3573
  %3960 = vmatprep.subr.mxu0 %v3580
  %3961 = vmatpush1.msra.mxu0 %v3579
  %3962 = vmatprep.subr.mxu0 %v3586
  %3963 = vmatpush1.msra.mxu0 %v3585
  %3964 = vmatprep.subr.mxu0 %v3592
  %3965 = vmatpush1.msra.mxu0 %v3591
  %3966 = vmatprep.subr.mxu0 %v3598
  %3967 = vmatpush1.msra.mxu0 %v3597
  %3968 = vmatprep.subr.mxu0 %v3604
  %3969 = vmatpush1.msra.mxu0 %v3603
  %3970 = vmatprep.subr.mxu0 %v3610
  %3971 = vmatpush1.msra.mxu0 %v3609
  %3972 = vmatprep.subr.mxu0 %v3616
  %3973 = vmatpush1.msra.mxu0 %v3615
  %3974 = vmatprep.subr.mxu0 %v3622
  %3975 = vmatpush1.msra.mxu0 %v3621
  %3976 = vmatprep.subr.mxu0 %v3628
  %3977 = vmatpush1.msra.mxu0 %v3627
  %3978 = vmatprep.subr.mxu0 %v3634
  %3979 = vmatpush1.msra.mxu0 %v3633
  %3980 = vmatprep.subr.mxu0 %v3640
  %3981 = vmatpush1.msra.mxu0 %v3639
  %3982 = vmatprep.subr.mxu0 %v3646
  %3983 = vmatpush1.msra.mxu0 %v3645
  %3984 = vmatprep.subr.mxu0 %v3652
  %3985 = vmatpush1.msra.mxu0 %v3651
  %3986 = vmatprep.subr.mxu0 %v3658
  %3987 = vmatpush1.msra.mxu0 %v3657
  %3988 = vmatprep.subr.mxu0 %v3664
  %3989 = vmatpush1.msra.mxu0 %v3663
  %3990 = vmatprep.subr.mxu0 %v3670
  %3991 = vmatpush1.msra.mxu0 %v3669
  %3992 = vmatprep.subr.mxu0 %v3676
  %3993 = vmatpush1.msra.mxu0 %v3675
  %3994 = vmatprep.subr.mxu0 %v3682
  %3995 = vmatpush1.msra.mxu0 %v3681
  %3996 = vmatprep.subr.mxu0 %v3688
  %3997 = vmatpush1.msra.mxu0 %v3687
  %3998 = vmatprep.subr.mxu0 %v3694
  %3999 = vmatpush1.msra.mxu0 %v3693
  %4000 = vmatprep.subr.mxu0 %v3700
  %4001 = vmatpush1.msra.mxu0 %v3699
  %4002 = vmatprep.subr.mxu0 %v3706
  %4003 = vmatpush1.msra.mxu0 %v3705
  %4004 = vmatprep.subr.mxu0 %v3712
  %4005 = vmatpush1.msra.mxu0 %v3711
  %4006 = vmatprep.subr.mxu0 %v3718
  %4007 = vmatpush1.msra.mxu0 %v3717
  %4008 = vmatprep.subr.mxu0 %v3724
  %4009 = vmatpush1.msra.mxu0 %v3723
  %4010 = vmatprep.subr.mxu0 %v3730
  %4011 = vmatpush1.msra.mxu0 %v3729
  %4012 = vmatprep.mubr.f32.mxu0 %v3530
  %4013 = vmatmul.mubr.f32.gmra.mrb[0].mxu0 %v3529
  %v4014 = vpop.f32.mrb[0].mxu0
  %v4015 = vadd.f32 0.0, %v4014
  %v4016 = vpop.f32.mrb[0].mxu0
  %v4017 = vadd.f32 0.0, %v4016
  %4018 = vmatprep.mubr.f32.mxu0 %v3533
  %4019 = vmatmul.mubr.f32.gmra.mrb[0].mxu0 %v3532
  %v4020 = vpop.f32.mrb[0].mxu0
  %v4021 = vadd.f32 0.0, %v4020
  %v4022 = vpop.f32.mrb[0].mxu0
  %v4023 = vadd.f32 0.0, %v4022
  %4024 = vmatprep.mubr.f32.mxu0 %v3536
  %4025 = vmatmul.mubr.f32.gmra.mrb[0].mxu0 %v3535
  %v4026 = vpop.f32.mrb[0].mxu0
  %v4027 = vadd.f32 0.0, %v4026
  %v4028 = vpop.f32.mrb[0].mxu0
  %v4029 = vadd.f32 0.0, %v4028
  %4030 = vmatprep.mubr.f32.mxu0 %v3539
  %4031 = vmatmul.mubr.f32.gmra.mrb[0].mxu0 %v3538
  %v4032 = vpop.f32.mrb[0].mxu0
  %v4033 = vadd.f32 0.0, %v4032
  %v4034 = vpop.f32.mrb[0].mxu0
  %v4035 = vadd.f32 0.0, %v4034
  %4036 = vdwg.mxu0
  %4037 = vmatprep.subr.mxu0 %v3736
  %4038 = vmatpush1.msra.mxu0 %v3735
  %4039 = vmatprep.subr.mxu0 %v3742
  %4040 = vmatpush1.msra.mxu0 %v3741
  %4041 = vmatprep.subr.mxu0 %v3748
  %4042 = vmatpush1.msra.mxu0 %v3747
  %4043 = vmatprep.subr.mxu0 %v3754
  %4044 = vmatpush1.msra.mxu0 %v3753
  %4045 = vmatprep.subr.mxu0 0.0
  %4046 = vmatpush1.msra.mxu0 0.0
  %4047 = vmatprep.subr.mxu0 0.0
  %4048 = vmatpush1.msra.mxu0 0.0
  %4049 = vmatprep.subr.mxu0 0.0
  %4050 = vmatpush1.msra.mxu0 0.0
  %4051 = vmatprep.subr.mxu0 0.0
  %4052 = vmatpush1.msra.mxu0 0.0
  %4053 = vmatprep.subr.mxu0 0.0
  %4054 = vmatpush1.msra.mxu0 0.0
  %4055 = vmatprep.subr.mxu0 0.0
  %4056 = vmatpush1.msra.mxu0 0.0
  %4057 = vmatprep.subr.mxu0 0.0
  %4058 = vmatpush1.msra.mxu0 0.0
  %4059 = vmatprep.subr.mxu0 0.0
  %4060 = vmatpush1.msra.mxu0 0.0
  %4061 = vmatprep.subr.mxu0 0.0
  %4062 = vmatpush1.msra.mxu0 0.0
  %4063 = vmatprep.subr.mxu0 0.0
  %4064 = vmatpush1.msra.mxu0 0.0
  %4065 = vmatprep.subr.mxu0 0.0
  %4066 = vmatpush1.msra.mxu0 0.0
  %4067 = vmatprep.subr.mxu0 0.0
  %4068 = vmatpush1.msra.mxu0 0.0
  %4069 = vmatprep.subr.mxu0 0.0
  %4070 = vmatpush1.msra.mxu0 0.0
  %4071 = vmatprep.subr.mxu0 0.0
  %4072 = vmatpush1.msra.mxu0 0.0
  %4073 = vmatprep.subr.mxu0 0.0
  %4074 = vmatpush1.msra.mxu0 0.0
  %4075 = vmatprep.subr.mxu0 0.0
  %4076 = vmatpush1.msra.mxu0 0.0
  %4077 = vmatprep.subr.mxu0 0.0
  %4078 = vmatpush1.msra.mxu0 0.0
  %4079 = vmatprep.subr.mxu0 0.0
  %4080 = vmatpush1.msra.mxu0 0.0
  %4081 = vmatprep.subr.mxu0 0.0
  %4082 = vmatpush1.msra.mxu0 0.0
  %4083 = vmatprep.subr.mxu0 0.0
  %4084 = vmatpush1.msra.mxu0 0.0
  %4085 = vmatprep.subr.mxu0 0.0
  %4086 = vmatpush1.msra.mxu0 0.0
  %4087 = vmatprep.subr.mxu0 0.0
  %4088 = vmatpush1.msra.mxu0 0.0
  %4089 = vmatprep.subr.mxu0 0.0
  %4090 = vmatpush1.msra.mxu0 0.0
  %4091 = vmatprep.subr.mxu0 0.0
  %4092 = vmatpush1.msra.mxu0 0.0
  %4093 = vmatprep.subr.mxu0 0.0
  %4094 = vmatpush1.msra.mxu0 0.0
  %4095 = vmatprep.subr.mxu0 0.0
  %4096 = vmatpush1.msra.mxu0 0.0
  %4097 = vmatprep.subr.mxu0 0.0
  %4098 = vmatpush1.msra.mxu0 0.0
  %4099 = vmatprep.subr.mxu0 0.0
  %4100 = vmatpush1.msra.mxu0 0.0
  %4101 = vmatprep.mubr.f32.mxu0 0.0
  %4102 = vmatmul.mubr.f32.gmra.mrb[0].mxu0 %v3759
  %v4103 = vpop.f32.mrb[0].mxu0
  %v4104 = vadd.f32 %v4015, %v4103
  %v4105 = vpop.f32.mrb[0].mxu0
  %v4106 = vadd.f32 %v4017, %v4105
  %4107 = vmatprep.mubr.f32.mxu0 0.0
  %4108 = vmatmul.mubr.f32.gmra.mrb[0].mxu0 %v3762
  %v4109 = vpop.f32.mrb[0].mxu0
  %v4110 = vadd.f32 %v4021, %v4109
  %v4111 = vpop.f32.mrb[0].mxu0
  %v4112 = vadd.f32 %v4023, %v4111
  %4113 = vmatprep.mubr.f32.mxu0 0.0
  %4114 = vmatmul.mubr.f32.gmra.mrb[0].mxu0 %v3765
  %v4115 = vpop.f32.mrb[0].mxu0
  %v4116 = vadd.f32 %v4027, %v4115
  %v4117 = vpop.f32.mrb[0].mxu0
  %v4118 = vadd.f32 %v4029, %v4117
  %4119 = vmatprep.mubr.f32.mxu0 0.0
  %4120 = vmatmul.mubr.f32.gmra.mrb[0].mxu0 %v3768
  %v4121 = vpop.f32.mrb[0].mxu0
  %v4122 = vadd.f32 %v4033, %v4121
  %v4123 = vpop.f32.mrb[0].mxu0
  %v4124 = vadd.f32 %v4035, %v4123
  %4125 = vdwg.mxu0
  %4126 = vmatprep.subr.mxu0 %v3546
  %4127 = vmatpush1.msra.mxu0 %v3545
  %4128 = vmatprep.subr.mxu0 %v3552
  %4129 = vmatpush1.msra.mxu0 %v3551
  %4130 = vmatprep.subr.mxu0 %v3558
  %4131 = vmatpush1.msra.mxu0 %v3557
  %4132 = vmatprep.subr.mxu0 %v3564
  %4133 = vmatpush1.msra.mxu0 %v3563
  %4134 = vmatprep.subr.mxu0 %v3570
  %4135 = vmatpush1.msra.mxu0 %v3569
  %4136 = vmatprep.subr.mxu0 %v3576
  %4137 = vmatpush1.msra.mxu0 %v3575
  %4138 = vmatprep.subr.mxu0 %v3582
  %4139 = vmatpush1.msra.mxu0 %v3581
  %4140 = vmatprep.subr.mxu0 %v3588
  %4141 = vmatpush1.msra.mxu0 %v3587
  %4142 = vmatprep.subr.mxu0 %v3594
  %4143 = vmatpush1.msra.mxu0 %v3593
  %4144 = vmatprep.subr.mxu0 %v3600
  %4145 = vmatpush1.msra.mxu0 %v3599
  %4146 = vmatprep.subr.mxu0 %v3606
  %4147 = vmatpush1.msra.mxu0 %v3605
  %4148 = vmatprep.subr.mxu0 %v3612
  %4149 = vmatpush1.msra.mxu0 %v3611
  %4150 = vmatprep.subr.mxu0 %v3618
  %4151 = vmatpush1.msra.mxu0 %v3617
  %4152 = vmatprep.subr.mxu0 %v3624
  %4153 = vmatpush1.msra.mxu0 %v3623
  %4154 = vmatprep.subr.mxu0 %v3630
  %4155 = vmatpush1.msra.mxu0 %v3629
  %4156 = vmatprep.subr.mxu0 %v3636
  %4157 = vmatpush1.msra.mxu0 %v3635
  %4158 = vmatprep.subr.mxu0 %v3642
  %4159 = vmatpush1.msra.mxu0 %v3641
  %4160 = vmatprep.subr.mxu0 %v3648
  %4161 = vmatpush1.msra.mxu0 %v3647
  %4162 = vmatprep.subr.mxu0 %v3654
  %4163 = vmatpush1.msra.mxu0 %v3653
  %4164 = vmatprep.subr.mxu0 %v3660
  %4165 = vmatpush1.msra.mxu0 %v3659
  %4166 = vmatprep.subr.mxu0 %v3666
  %4167 = vmatpush1.msra.mxu0 %v3665
  %4168 = vmatprep.subr.mxu0 %v3672
  %4169 = vmatpush1.msra.mxu0 %v3671
  %4170 = vmatprep.subr.mxu0 %v3678
  %4171 = vmatpush1.msra.mxu0 %v3677
  %4172 = vmatprep.subr.mxu0 %v3684
  %4173 = vmatpush1.msra.mxu0 %v3683
  %4174 = vmatprep.subr.mxu0 %v3690
  %4175 = vmatpush1.msra.mxu0 %v3689
  %4176 = vmatprep.subr.mxu0 %v3696
  %4177 = vmatpush1.msra.mxu0 %v3695
  %4178 = vmatprep.subr.mxu0 %v3702
  %4179 = vmatpush1.msra.mxu0 %v3701
  %4180 = vmatprep.subr.mxu0 %v3708
  %4181 = vmatpush1.msra.mxu0 %v3707
  %4182 = vmatprep.subr.mxu0 %v3714
  %4183 = vmatpush1.msra.mxu0 %v3713
  %4184 = vmatprep.subr.mxu0 %v3720
  %4185 = vmatpush1.msra.mxu0 %v3719
  %4186 = vmatprep.subr.mxu0 %v3726
  %4187 = vmatpush1.msra.mxu0 %v3725
  %4188 = vmatprep.subr.mxu0 %v3732
  %4189 = vmatpush1.msra.mxu0 %v3731
  %4190 = vmatprep.mubr.f32.mxu0 %v3530
  %4191 = vmatmul.mubr.f32.gmra.mrb[0].mxu0 %v3529
  %v4192 = vpop.f32.mrb[0].mxu0
  %v4193 = vadd.f32 0.0, %v4192
  %v4194 = vpop.f32.mrb[0].mxu0
  %v4195 = vadd.f32 0.0, %v4194
  %4196 = vmatprep.mubr.f32.mxu0 %v3533
  %4197 = vmatmul.mubr.f32.gmra.mrb[0].mxu0 %v3532
  %v4198 = vpop.f32.mrb[0].mxu0
  %v4199 = vadd.f32 0.0, %v4198
  %v4200 = vpop.f32.mrb[0].mxu0
  %v4201 = vadd.f32 0.0, %v4200
  %4202 = vmatprep.mubr.f32.mxu0 %v3536
  %4203 = vmatmul.mubr.f32.gmra.mrb[0].mxu0 %v3535
  %v4204 = vpop.f32.mrb[0].mxu0
  %v4205 = vadd.f32 0.0, %v4204
  %v4206 = vpop.f32.mrb[0].mxu0
  %v4207 = vadd.f32 0.0, %v4206
  %4208 = vmatprep.mubr.f32.mxu0 %v3539
  %4209 = vmatmul.mubr.f32.gmra.mrb[0].mxu0 %v3538
  %v4210 = vpop.f32.mrb[0].mxu0
  %v4211 = vadd.f32 0.0, %v4210
  %v4212 = vpop.f32.mrb[0].mxu0
  %v4213 = vadd.f32 0.0, %v4212
  %4214 = vdwg.mxu0
  %4215 = vmatprep.subr.mxu0 %v3738
  %4216 = vmatpush1.msra.mxu0 %v3737
  %4217 = vmatprep.subr.mxu0 %v3744
  %4218 = vmatpush1.msra.mxu0 %v3743
  %4219 = vmatprep.subr.mxu0 %v3750
  %4220 = vmatpush1.msra.mxu0 %v3749
  %4221 = vmatprep.subr.mxu0 %v3756
  %4222 = vmatpush1.msra.mxu0 %v3755
  %4223 = vmatprep.subr.mxu0 0.0
  %4224 = vmatpush1.msra.mxu0 0.0
  %4225 = vmatprep.subr.mxu0 0.0
  %4226 = vmatpush1.msra.mxu0 0.0
  %4227 = vmatprep.subr.mxu0 0.0
  %4228 = vmatpush1.msra.mxu0 0.0
  %4229 = vmatprep.subr.mxu0 0.0
  %4230 = vmatpush1.msra.mxu0 0.0
  %4231 = vmatprep.subr.mxu0 0.0
  %4232 = vmatpush1.msra.mxu0 0.0
  %4233 = vmatprep.subr.mxu0 0.0
  %4234 = vmatpush1.msra.mxu0 0.0
  %4235 = vmatprep.subr.mxu0 0.0
  %4236 = vmatpush1.msra.mxu0 0.0
  %4237 = vmatprep.subr.mxu0 0.0
  %4238 = vmatpush1.msra.mxu0 0.0
  %4239 = vmatprep.subr.mxu0 0.0
  %4240 = vmatpush1.msra.mxu0 0.0
  %4241 = vmatprep.subr.mxu0 0.0
  %4242 = vmatpush1.msra.mxu0 0.0
  %4243 = vmatprep.subr.mxu0 0.0
  %4244 = vmatpush1.msra.mxu0 0.0
  %4245 = vmatprep.subr.mxu0 0.0
  %4246 = vmatpush1.msra.mxu0 0.0
  %4247 = vmatprep.subr.mxu0 0.0
  %4248 = vmatpush1.msra.mxu0 0.0
  %4249 = vmatprep.subr.mxu0 0.0
  %4250 = vmatpush1.msra.mxu0 0.0
  %4251 = vmatprep.subr.mxu0 0.0
  %4252 = vmatpush1.msra.mxu0 0.0
  %4253 = vmatprep.subr.mxu0 0.0
  %4254 = vmatpush1.msra.mxu0 0.0
  %4255 = vmatprep.subr.mxu0 0.0
  %4256 = vmatpush1.msra.mxu0 0.0
  %4257 = vmatprep.subr.mxu0 0.0
  %4258 = vmatpush1.msra.mxu0 0.0
  %4259 = vmatprep.subr.mxu0 0.0
  %4260 = vmatpush1.msra.mxu0 0.0
  %4261 = vmatprep.subr.mxu0 0.0
  %4262 = vmatpush1.msra.mxu0 0.0
  %4263 = vmatprep.subr.mxu0 0.0
  %4264 = vmatpush1.msra.mxu0 0.0
  %4265 = vmatprep.subr.mxu0 0.0
  %4266 = vmatpush1.msra.mxu0 0.0
  %4267 = vmatprep.subr.mxu0 0.0
  %4268 = vmatpush1.msra.mxu0 0.0
  %4269 = vmatprep.subr.mxu0 0.0
  %4270 = vmatpush1.msra.mxu0 0.0
  %4271 = vmatprep.subr.mxu0 0.0
  %4272 = vmatpush1.msra.mxu0 0.0
  %4273 = vmatprep.subr.mxu0 0.0
  %4274 = vmatpush1.msra.mxu0 0.0
  %4275 = vmatprep.subr.mxu0 0.0
  %4276 = vmatpush1.msra.mxu0 0.0
  %4277 = vmatprep.subr.mxu0 0.0
  %4278 = vmatpush1.msra.mxu0 0.0
  %4279 = vmatprep.mubr.f32.mxu0 0.0
  %4280 = vmatmul.mubr.f32.gmra.mrb[0].mxu0 %v3759
  %v4281 = vpop.f32.mrb[0].mxu0
  %v4282 = vadd.f32 %v4193, %v4281
  %v4283 = vpop.f32.mrb[0].mxu0
  %v4284 = vadd.f32 %v4195, %v4283
  %4285 = vmatprep.mubr.f32.mxu0 0.0
  %4286 = vmatmul.mubr.f32.gmra.mrb[0].mxu0 %v3762
  %v4287 = vpop.f32.mrb[0].mxu0
  %v4288 = vadd.f32 %v4199, %v4287
  %v4289 = vpop.f32.mrb[0].mxu0
  %v4290 = vadd.f32 %v4201, %v4289
  %4291 = vmatprep.mubr.f32.mxu0 0.0
  %4292 = vmatmul.mubr.f32.gmra.mrb[0].mxu0 %v3765
  %v4293 = vpop.f32.mrb[0].mxu0
  %v4294 = vadd.f32 %v4205, %v4293
  %v4295 = vpop.f32.mrb[0].mxu0
  %v4296 = vadd.f32 %v4207, %v4295
  %4297 = vmatprep.mubr.f32.mxu0 0.0
  %4298 = vmatmul.mubr.f32.gmra.mrb[0].mxu0 %v3768
  %v4299 = vpop.f32.mrb[0].mxu0
  %v4300 = vadd.f32 %v4211, %v4299
  %v4301 = vpop.f32.mrb[0].mxu0
  %v4302 = vadd.f32 %v4213, %v4301
  %4303 = vdwg.mxu0
  %v4304 = vld [vmem:[%s8] sm:$0xff]
  %v4305 = vld [vmem:[%s8 + $0x8] sm:$0xff]
  %v4306 = vld [vmem:[%s8 + $0x10] sm:$0xff]
  %v4307 = vld [vmem:[%s8 + $0x18] sm:$0xff]
  %4309 = vset.pattern.permute.xlu0 0
  %4310 = vperm.xlu0 %4309, %v4304
  %v4311 = vpop.permute.xlu0 %4310
  %4314 = vset.pattern.permute.xlu0 0
  %4315 = vperm.xlu0 %4314, %v4305
  %v4316 = vpop.permute.xlu0 %4315
  %4319 = vset.pattern.permute.xlu0 0
  %4320 = vperm.xlu0 %4319, %v4306
  %v4321 = vpop.permute.xlu0 %4320
  %4324 = vset.pattern.permute.xlu0 0
  %4325 = vperm.xlu0 %4324, %v4307
  %v4326 = vpop.permute.xlu0 %4325
  %v4328 = vmul.f32 %v3926, %v4311
  %v4329 = vmul.f32 %v3928, %v4311
  %v4330 = vmul.f32 %v4104, %v4311
  %v4331 = vmul.f32 %v4106, %v4311
  %v4332 = vmul.f32 %v4282, %v4311
  %v4333 = vmul.f32 %v4284, %v4311
  %v4334 = vmul.f32 %v3932, %v4316
  %v4335 = vmul.f32 %v3934, %v4316
  %v4336 = vmul.f32 %v4110, %v4316
  %v4337 = vmul.f32 %v4112, %v4316
  %v4338 = vmul.f32 %v4288, %v4316
  %v4339 = vmul.f32 %v4290, %v4316
  %v4340 = vmul.f32 %v3938, %v4321
  %v4341 = vmul.f32 %v3940, %v4321
  %v4342 = vmul.f32 %v4116, %v4321
  %v4343 = vmul.f32 %v4118, %v4321
  %v4344 = vmul.f32 %v4294, %v4321
  %v4345 = vmul.f32 %v4296, %v4321
  %v4346 = vmul.f32 %v3944, %v4326
  %v4347 = vmul.f32 %v3946, %v4326
  %v4348 = vmul.f32 %v4122, %v4326
  %v4349 = vmul.f32 %v4124, %v4326
  %v4350 = vmul.f32 %v4300, %v4326
  %v4351 = vmul.f32 %v4302, %v4326
  %v4352 = vld [vmem:[%s9] sm:$0xff]
  %v4353 = vld [vmem:[%s9 + $0x8] sm:$0xff]
  %v4354 = vld [vmem:[%s9 + $0x10] sm:$0xff]
  %v4355 = vld [vmem:[%s9 + $0x18] sm:$0xff]
  %4357 = vset.pattern.permute.xlu0 0
  %4358 = vperm.xlu0 %4357, %v4352
  %v4359 = vpop.permute.xlu0 %4358
  %4362 = vset.pattern.permute.xlu0 0
  %4363 = vperm.xlu0 %4362, %v4353
  %v4364 = vpop.permute.xlu0 %4363
  %4367 = vset.pattern.permute.xlu0 0
  %4368 = vperm.xlu0 %4367, %v4354
  %v4369 = vpop.permute.xlu0 %4368
  %4372 = vset.pattern.permute.xlu0 0
  %4373 = vperm.xlu0 %4372, %v4355
  %v4374 = vpop.permute.xlu0 %4373
  %v4376 = vadd.f32 %v4328, %v4359
  %v4377 = vadd.f32 %v4329, %v4359
  %v4378 = vadd.f32 %v4330, %v4359
  %v4379 = vadd.f32 %v4331, %v4359
  %v4380 = vadd.f32 %v4332, %v4359
  %v4381 = vadd.f32 %v4333, %v4359
  %v4382 = vadd.f32 %v4334, %v4364
  %v4383 = vadd.f32 %v4335, %v4364
  %v4384 = vadd.f32 %v4336, %v4364
  %v4385 = vadd.f32 %v4337, %v4364
  %v4386 = vadd.f32 %v4338, %v4364
  %v4387 = vadd.f32 %v4339, %v4364
  %v4388 = vadd.f32 %v4340, %v4369
  %v4389 = vadd.f32 %v4341, %v4369
  %v4390 = vadd.f32 %v4342, %v4369
  %v4391 = vadd.f32 %v4343, %v4369
  %v4392 = vadd.f32 %v4344, %v4369
  %v4393 = vadd.f32 %v4345, %v4369
  %v4394 = vadd.f32 %v4346, %v4374
  %v4395 = vadd.f32 %v4347, %v4374
  %v4396 = vadd.f32 %v4348, %v4374
  %v4397 = vadd.f32 %v4349, %v4374
  %v4398 = vadd.f32 %v4350, %v4374
  %v4399 = vadd.f32 %v4351, %v4374
  %v4400 = vmax.f32 %v4376, 0.0
  %v4401 = vmax.f32 %v4377, 0.0
  %v4402 = vmax.f32 %v4378, 0.0
  %v4403 = vmax.f32 %v4379, 0.0
  %v4404 = vmax.f32 %v4380, 0.0
  %v4405 = vmax.f32 %v4381, 0.0
  %v4406 = vmax.f32 %v4382, 0.0
  %v4407 = vmax.f32 %v4383, 0.0
  %v4408 = vmax.f32 %v4384, 0.0
  %v4409 = vmax.f32 %v4385, 0.0
  %v4410 = vmax.f32 %v4386, 0.0
  %v4411 = vmax.f32 %v4387, 0.0
  %v4412 = vmax.f32 %v4388, 0.0
  %v4413 = vmax.f32 %v4389, 0.0
  %v4414 = vmax.f32 %v4390, 0.0
  %v4415 = vmax.f32 %v4391, 0.0
  %v4416 = vmax.f32 %v4392, 0.0
  %v4417 = vmax.f32 %v4393, 0.0
  %v4418 = vmax.f32 %v4394, 0.0
  %v4419 = vmax.f32 %v4395, 0.0
  %v4420 = vmax.f32 %v4396, 0.0
  %v4421 = vmax.f32 %v4397, 0.0
  %v4422 = vmax.f32 %v4398, 0.0
  %v4423 = vmax.f32 %v4399, 0.0
  %v4424 = vmul.f32 %v4400, %v423
  %v4425 = vmul.f32 %v4401, %v427
  %v4426 = vmul.f32 %v4402, %v431
  %v4427 = vmul.f32 %v4403, %v435
  %v4428 = vmul.f32 %v4404, %v439
  %v4429 = vmul.f32 %v4405, %v443
  %v4430 = vmul.f32 %v4406, %v423
  %v4431 = vmul.f32 %v4407, %v427
  %v4432 = vmul.f32 %v4408, %v431
  %v4433 = vmul.f32 %v4409, %v435
  %v4434 = vmul.f32 %v4410, %v439
  %v4435 = vmul.f32 %v4411, %v443
  %v4436 = vmul.f32 %v4412, %v423
  %v4437 = vmul.f32 %v4413, %v427
  %v4438 = vmul.f32 %v4414, %v431
  %v4439 = vmul.f32 %v4415, %v435
  %v4440 = vmul.f32 %v4416, %v439
  %v4441 = vmul.f32 %v4417, %v443
  %v4442 = vmul.f32 %v4418, %v423
  %v4443 = vmul.f32 %v4419, %v427
  %v4444 = vmul.f32 %v4420, %v431
  %v4445 = vmul.f32 %v4421, %v435
  %v4446 = vmul.f32 %v4422, %v439
  %v4447 = vmul.f32 %v4423, %v443
  %4448 = vst [vmem:[#allocation2 + $0x8] sm:$0xff] %v4424
  %4449 = vst [vmem:[#allocation2 + $0x10] sm:$0xff] %v4425
  %4450 = vst [vmem:[#allocation2 + $0x18] sm:$0xff] %v4426
  %4451 = vst [vmem:[#allocation2 + $0x20] sm:$0xff] %v4427
  %4452 = vst [vmem:[#allocation2 + $0x28] sm:$0xff] %v4428
  %4453 = vst [vmem:[#allocation2 + $0x30] sm:$0xff] %v4429
  %4454 = vst [vmem:[#allocation2 + $0x48] sm:$0xff] %v4430
  %4455 = vst [vmem:[#allocation2 + $0x50] sm:$0xff] %v4431
  %4456 = vst [vmem:[#allocation2 + $0x58] sm:$0xff] %v4432
  %4457 = vst [vmem:[#allocation2 + $0x60] sm:$0xff] %v4433
  %4458 = vst [vmem:[#allocation2 + $0x68] sm:$0xff] %v4434
  %4459 = vst [vmem:[#allocation2 + $0x70] sm:$0xff] %v4435
  %4460 = vst [vmem:[#allocation2 + $0x88] sm:$0xff] %v4436
  %4461 = vst [vmem:[#allocation2 + $0x90] sm:$0xff] %v4437
  %4462 = vst [vmem:[#allocation2 + $0x98] sm:$0xff] %v4438
  %4463 = vst [vmem:[#allocation2 + $0xa0] sm:$0xff] %v4439
  %4464 = vst [vmem:[#allocation2 + $0xa8] sm:$0xff] %v4440
  %4465 = vst [vmem:[#allocation2 + $0xb0] sm:$0xff] %v4441
  %4466 = vst [vmem:[#allocation2 + $0xc8] sm:$0xff] %v4442
  %4467 = vst [vmem:[#allocation2 + $0xd0] sm:$0xff] %v4443
  %4468 = vst [vmem:[#allocation2 + $0xd8] sm:$0xff] %v4444
  %4469 = vst [vmem:[#allocation2 + $0xe0] sm:$0xff] %v4445
  %4470 = vst [vmem:[#allocation2 + $0xe8] sm:$0xff] %v4446
  %4471 = vst [vmem:[#allocation2 + $0xf0] sm:$0xff] %v4447
  %v4472 = vld [vmem:[#allocation2] sm:$0xff]
  %v4473 = vld [vmem:[#allocation2 + $0x8] sm:$0xff]
  %v4474 = vld [vmem:[#allocation2 + $0x10] sm:$0xff]
  %v4475 = vld [vmem:[#allocation2 + $0x18] sm:$0xff]
  %v4476 = vld [vmem:[#allocation2 + $0x20] sm:$0xff]
  %v4477 = vld [vmem:[#allocation2 + $0x28] sm:$0xff]
  %v4478 = vld [vmem:[#allocation2 + $0x30] sm:$0xff]
  %v4479 = vld [vmem:[#allocation2 + $0x40] sm:$0xff]
  %v4480 = vld [vmem:[#allocation2 + $0x48] sm:$0xff]
  %v4481 = vld [vmem:[#allocation2 + $0x50] sm:$0xff]
  %v4482 = vld [vmem:[#allocation2 + $0x58] sm:$0xff]
  %v4483 = vld [vmem:[#allocation2 + $0x60] sm:$0xff]
  %v4484 = vld [vmem:[#allocation2 + $0x68] sm:$0xff]
  %v4485 = vld [vmem:[#allocation2 + $0x70] sm:$0xff]
  %v4486 = vld [vmem:[#allocation2 + $0x80] sm:$0xff]
  %v4487 = vld [vmem:[#allocation2 + $0x88] sm:$0xff]
  %v4488 = vld [vmem:[#allocation2 + $0x90] sm:$0xff]
  %v4489 = vld [vmem:[#allocation2 + $0x98] sm:$0xff]
  %v4490 = vld [vmem:[#allocation2 + $0xa0] sm:$0xff]
  %v4491 = vld [vmem:[#allocation2 + $0xa8] sm:$0xff]
  %v4492 = vld [vmem:[#allocation2 + $0xb0] sm:$0xff]
  %v4493 = vld [vmem:[#allocation2 + $0xc0] sm:$0xff]
  %v4494 = vld [vmem:[#allocation2 + $0xc8] sm:$0xff]
  %v4495 = vld [vmem:[#allocation2 + $0xd0] sm:$0xff]
  %v4496 = vld [vmem:[#allocation2 + $0xd8] sm:$0xff]
  %v4497 = vld [vmem:[#allocation2 + $0xe0] sm:$0xff]
  %v4498 = vld [vmem:[#allocation2 + $0xe8] sm:$0xff]
  %v4499 = vld [vmem:[#allocation2 + $0xf0] sm:$0xff]
  %4528 = vrot.lane.b32.xlu0 %v4472, 19
  %v4529 = vpop.permute.xlu0 %4528
  %4530 = vrot.lane.b32.xlu0 %v4473, 19
  %v4531 = vpop.permute.xlu0 %4530
  %4532 = vrot.lane.b32.xlu0 %v4474, 19
  %v4533 = vpop.permute.xlu0 %4532
  %4534 = vrot.lane.b32.xlu0 %v4475, 19
  %v4535 = vpop.permute.xlu0 %4534
  %4536 = vrot.lane.b32.xlu0 %v4476, 19
  %v4537 = vpop.permute.xlu0 %4536
  %4538 = vrot.lane.b32.xlu0 %v4477, 19
  %v4539 = vpop.permute.xlu0 %4538
  %4540 = vrot.lane.b32.xlu0 %v4478, 19
  %v4541 = vpop.permute.xlu0 %4540
  %4542 = vrot.lane.b32.xlu0 %v4479, 19
  %v4543 = vpop.permute.xlu0 %4542
  %4544 = vrot.lane.b32.xlu0 %v4480, 19
  %v4545 = vpop.permute.xlu0 %4544
  %4546 = vrot.lane.b32.xlu0 %v4481, 19
  %v4547 = vpop.permute.xlu0 %4546
  %4548 = vrot.lane.b32.xlu0 %v4482, 19
  %v4549 = vpop.permute.xlu0 %4548
  %4550 = vrot.lane.b32.xlu0 %v4483, 19
  %v4551 = vpop.permute.xlu0 %4550
  %4552 = vrot.lane.b32.xlu0 %v4484, 19
  %v4553 = vpop.permute.xlu0 %4552
  %4554 = vrot.lane.b32.xlu0 %v4485, 19
  %v4555 = vpop.permute.xlu0 %4554
  %4556 = vrot.lane.b32.xlu0 %v4486, 19
  %v4557 = vpop.permute.xlu0 %4556
  %4558 = vrot.lane.b32.xlu0 %v4487, 19
  %v4559 = vpop.permute.xlu0 %4558
  %4560 = vrot.lane.b32.xlu0 %v4488, 19
  %v4561 = vpop.permute.xlu0 %4560
  %4562 = vrot.lane.b32.xlu0 %v4489, 19
  %v4563 = vpop.permute.xlu0 %4562
  %4564 = vrot.lane.b32.xlu0 %v4490, 19
  %v4565 = vpop.permute.xlu0 %4564
  %4566 = vrot.lane.b32.xlu0 %v4491, 19
  %v4567 = vpop.permute.xlu0 %4566
  %4568 = vrot.lane.b32.xlu0 %v4492, 19
  %v4569 = vpop.permute.xlu0 %4568
  %4570 = vrot.lane.b32.xlu0 %v4493, 19
  %v4571 = vpop.permute.xlu0 %4570
  %4572 = vrot.lane.b32.xlu0 %v4494, 19
  %v4573 = vpop.permute.xlu0 %4572
  %4574 = vrot.lane.b32.xlu0 %v4495, 19
  %v4575 = vpop.permute.xlu0 %4574
  %4576 = vrot.lane.b32.xlu0 %v4496, 19
  %v4577 = vpop.permute.xlu0 %4576
  %4578 = vrot.lane.b32.xlu0 %v4497, 19
  %v4579 = vpop.permute.xlu0 %4578
  %4580 = vrot.lane.b32.xlu0 %v4498, 19
  %v4581 = vpop.permute.xlu0 %4580
  %4582 = vrot.lane.b32.xlu0 %v4499, 19
  %v4583 = vpop.permute.xlu0 %4582
  %v4584 = vsel %vm830, %v4529, %v4531
  %v4585 = vsel %vm830, %v4531, %v4533
  %v4586 = vsel %vm830, %v4533, %v4535
  %v4587 = vsel %vm830, %v4535, %v4537
  %v4588 = vsel %vm830, %v4537, %v4539
  %v4589 = vsel %vm830, %v4539, %v4541
  %v4590 = vsel %vm830, %v4543, %v4545
  %v4591 = vsel %vm830, %v4545, %v4547
  %v4592 = vsel %vm830, %v4547, %v4549
  %v4593 = vsel %vm830, %v4549, %v4551
  %v4594 = vsel %vm830, %v4551, %v4553
  %v4595 = vsel %vm830, %v4553, %v4555
  %v4596 = vsel %vm830, %v4557, %v4559
  %v4597 = vsel %vm830, %v4559, %v4561
  %v4598 = vsel %vm830, %v4561, %v4563
  %v4599 = vsel %vm830, %v4563, %v4565
  %v4600 = vsel %vm830, %v4565, %v4567
  %v4601 = vsel %vm830, %v4567, %v4569
  %v4602 = vsel %vm830, %v4571, %v4573
  %v4603 = vsel %vm830, %v4573, %v4575
  %v4604 = vsel %vm830, %v4575, %v4577
  %v4605 = vsel %vm830, %v4577, %v4579
  %v4606 = vsel %vm830, %v4579, %v4581
  %v4607 = vsel %vm830, %v4581, %v4583
  %4632 = vst [vmem:[#allocation4] sm:$0xff] %v4584
  %4633 = vst [vmem:[#allocation4 + $0x8] sm:$0xff] %v4585
  %4634 = vst [vmem:[#allocation4 + $0x10] sm:$0xff] %v4586
  %4635 = vst [vmem:[#allocation4 + $0x18] sm:$0xff] %v4587
  %4636 = vst [vmem:[#allocation4 + $0x20] sm:$0xff] %v4588
  %4637 = vst [vmem:[#allocation4 + $0x28] sm:$0xff] %v4589
  %4638 = vst [vmem:[#allocation4 + $0x30] sm:$0xff] %v4590
  %4639 = vst [vmem:[#allocation4 + $0x38] sm:$0xff] %v4591
  %4640 = vst [vmem:[#allocation4 + $0x40] sm:$0xff] %v4592
  %4641 = vst [vmem:[#allocation4 + $0x48] sm:$0xff] %v4593
  %4642 = vst [vmem:[#allocation4 + $0x50] sm:$0xff] %v4594
  %4643 = vst [vmem:[#allocation4 + $0x58] sm:$0xff] %v4595
  %4644 = vst [vmem:[#allocation4 + $0x60] sm:$0xff] %v4596
  %4645 = vst [vmem:[#allocation4 + $0x68] sm:$0xff] %v4597
  %4646 = vst [vmem:[#allocation4 + $0x70] sm:$0xff] %v4598
  %4647 = vst [vmem:[#allocation4 + $0x78] sm:$0xff] %v4599
  %4648 = vst [vmem:[#allocation4 + $0x80] sm:$0xff] %v4600
  %4649 = vst [vmem:[#allocation4 + $0x88] sm:$0xff] %v4601
  %4650 = vst [vmem:[#allocation4 + $0x90] sm:$0xff] %v4602
  %4651 = vst [vmem:[#allocation4 + $0x98] sm:$0xff] %v4603
  %4652 = vst [vmem:[#allocation4 + $0xa0] sm:$0xff] %v4604
  %4653 = vst [vmem:[#allocation4 + $0xa8] sm:$0xff] %v4605
  %4654 = vst [vmem:[#allocation4 + $0xb0] sm:$0xff] %v4606
  %4655 = vst [vmem:[#allocation4 + $0xb8] sm:$0xff] %v4607
  %v4656 = vld [vmem:[#allocation2] sm:$0xff]
  %v4657 = vld [vmem:[#allocation2 + $0x8] sm:$0xff]
  %v4658 = vld [vmem:[#allocation2 + $0x10] sm:$0xff]
  %v4659 = vld [vmem:[#allocation2 + $0x18] sm:$0xff]
  %v4660 = vld [vmem:[#allocation2 + $0x20] sm:$0xff]
  %v4661 = vld [vmem:[#allocation2 + $0x28] sm:$0xff]
  %v4662 = vld [vmem:[#allocation2 + $0x30] sm:$0xff]
  %v4663 = vld [vmem:[#allocation2 + $0x40] sm:$0xff]
  %v4664 = vld [vmem:[#allocation2 + $0x48] sm:$0xff]
  %v4665 = vld [vmem:[#allocation2 + $0x50] sm:$0xff]
  %v4666 = vld [vmem:[#allocation2 + $0x58] sm:$0xff]
  %v4667 = vld [vmem:[#allocation2 + $0x60] sm:$0xff]
  %v4668 = vld [vmem:[#allocation2 + $0x68] sm:$0xff]
  %v4669 = vld [vmem:[#allocation2 + $0x70] sm:$0xff]
  %v4670 = vld [vmem:[#allocation2 + $0x80] sm:$0xff]
  %v4671 = vld [vmem:[#allocation2 + $0x88] sm:$0xff]
  %v4672 = vld [vmem:[#allocation2 + $0x90] sm:$0xff]
  %v4673 = vld [vmem:[#allocation2 + $0x98] sm:$0xff]
  %v4674 = vld [vmem:[#allocation2 + $0xa0] sm:$0xff]
  %v4675 = vld [vmem:[#allocation2 + $0xa8] sm:$0xff]
  %v4676 = vld [vmem:[#allocation2 + $0xb0] sm:$0xff]
  %v4677 = vld [vmem:[#allocation2 + $0xc0] sm:$0xff]
  %v4678 = vld [vmem:[#allocation2 + $0xc8] sm:$0xff]
  %v4679 = vld [vmem:[#allocation2 + $0xd0] sm:$0xff]
  %v4680 = vld [vmem:[#allocation2 + $0xd8] sm:$0xff]
  %v4681 = vld [vmem:[#allocation2 + $0xe0] sm:$0xff]
  %v4682 = vld [vmem:[#allocation2 + $0xe8] sm:$0xff]
  %v4683 = vld [vmem:[#allocation2 + $0xf0] sm:$0xff]
  %4712 = vrot.lane.b32.xlu0 %v4656, 18
  %v4713 = vpop.permute.xlu0 %4712
  %4714 = vrot.lane.b32.xlu0 %v4657, 18
  %v4715 = vpop.permute.xlu0 %4714
  %4716 = vrot.lane.b32.xlu0 %v4658, 18
  %v4717 = vpop.permute.xlu0 %4716
  %4718 = vrot.lane.b32.xlu0 %v4659, 18
  %v4719 = vpop.permute.xlu0 %4718
  %4720 = vrot.lane.b32.xlu0 %v4660, 18
  %v4721 = vpop.permute.xlu0 %4720
  %4722 = vrot.lane.b32.xlu0 %v4661, 18
  %v4723 = vpop.permute.xlu0 %4722
  %4724 = vrot.lane.b32.xlu0 %v4662, 18
  %v4725 = vpop.permute.xlu0 %4724
  %4726 = vrot.lane.b32.xlu0 %v4663, 18
  %v4727 = vpop.permute.xlu0 %4726
  %4728 = vrot.lane.b32.xlu0 %v4664, 18
  %v4729 = vpop.permute.xlu0 %4728
  %4730 = vrot.lane.b32.xlu0 %v4665, 18
  %v4731 = vpop.permute.xlu0 %4730
  %4732 = vrot.lane.b32.xlu0 %v4666, 18
  %v4733 = vpop.permute.xlu0 %4732
  %4734 = vrot.lane.b32.xlu0 %v4667, 18
  %v4735 = vpop.permute.xlu0 %4734
  %4736 = vrot.lane.b32.xlu0 %v4668, 18
  %v4737 = vpop.permute.xlu0 %4736
  %4738 = vrot.lane.b32.xlu0 %v4669, 18
  %v4739 = vpop.permute.xlu0 %4738
  %4740 = vrot.lane.b32.xlu0 %v4670, 18
  %v4741 = vpop.permute.xlu0 %4740
  %4742 = vrot.lane.b32.xlu0 %v4671, 18
  %v4743 = vpop.permute.xlu0 %4742
  %4744 = vrot.lane.b32.xlu0 %v4672, 18
  %v4745 = vpop.permute.xlu0 %4744
  %4746 = vrot.lane.b32.xlu0 %v4673, 18
  %v4747 = vpop.permute.xlu0 %4746
  %4748 = vrot.lane.b32.xlu0 %v4674, 18
  %v4749 = vpop.permute.xlu0 %4748
  %4750 = vrot.lane.b32.xlu0 %v4675, 18
  %v4751 = vpop.permute.xlu0 %4750
  %4752 = vrot.lane.b32.xlu0 %v4676, 18
  %v4753 = vpop.permute.xlu0 %4752
  %4754 = vrot.lane.b32.xlu0 %v4677, 18
  %v4755 = vpop.permute.xlu0 %4754
  %4756 = vrot.lane.b32.xlu0 %v4678, 18
  %v4757 = vpop.permute.xlu0 %4756
  %4758 = vrot.lane.b32.xlu0 %v4679, 18
  %v4759 = vpop.permute.xlu0 %4758
  %4760 = vrot.lane.b32.xlu0 %v4680, 18
  %v4761 = vpop.permute.xlu0 %4760
  %4762 = vrot.lane.b32.xlu0 %v4681, 18
  %v4763 = vpop.permute.xlu0 %4762
  %4764 = vrot.lane.b32.xlu0 %v4682, 18
  %v4765 = vpop.permute.xlu0 %4764
  %4766 = vrot.lane.b32.xlu0 %v4683, 18
  %v4767 = vpop.permute.xlu0 %4766
  %v4768 = vsel %vm923, %v4713, %v4715
  %v4769 = vsel %vm923, %v4715, %v4717
  %v4770 = vsel %vm923, %v4717, %v4719
  %v4771 = vsel %vm923, %v4719, %v4721
  %v4772 = vsel %vm923, %v4721, %v4723
  %v4773 = vsel %vm923, %v4723, %v4725
  %v4774 = vsel %vm923, %v4727, %v4729
  %v4775 = vsel %vm923, %v4729, %v4731
  %v4776 = vsel %vm923, %v4731, %v4733
  %v4777 = vsel %vm923, %v4733, %v4735
  %v4778 = vsel %vm923, %v4735, %v4737
  %v4779 = vsel %vm923, %v4737, %v4739
  %v4780 = vsel %vm923, %v4741, %v4743
  %v4781 = vsel %vm923, %v4743, %v4745
  %v4782 = vsel %vm923, %v4745, %v4747
  %v4783 = vsel %vm923, %v4747, %v4749
  %v4784 = vsel %vm923, %v4749, %v4751
  %v4785 = vsel %vm923, %v4751, %v4753
  %v4786 = vsel %vm923, %v4755, %v4757
  %v4787 = vsel %vm923, %v4757, %v4759
  %v4788 = vsel %vm923, %v4759, %v4761
  %v4789 = vsel %vm923, %v4761, %v4763
  %v4790 = vsel %vm923, %v4763, %v4765
  %v4791 = vsel %vm923, %v4765, %v4767
  %4816 = vst [vmem:[#allocation4 + $0xc0] sm:$0xff] %v4768
  %4817 = vst [vmem:[#allocation4 + $0xc8] sm:$0xff] %v4769
  %4818 = vst [vmem:[#allocation4 + $0xd0] sm:$0xff] %v4770
  %4819 = vst [vmem:[#allocation4 + $0xd8] sm:$0xff] %v4771
  %4820 = vst [vmem:[#allocation4 + $0xe0] sm:$0xff] %v4772
  %4821 = vst [vmem:[#allocation4 + $0xe8] sm:$0xff] %v4773
  %4822 = vst [vmem:[#allocation4 + $0xf0] sm:$0xff] %v4774
  %4823 = vst [vmem:[#allocation4 + $0xf8] sm:$0xff] %v4775
  %4824 = vst [vmem:[#allocation4 + $0x100] sm:$0xff] %v4776
  %4825 = vst [vmem:[#allocation4 + $0x108] sm:$0xff] %v4777
  %4826 = vst [vmem:[#allocation4 + $0x110] sm:$0xff] %v4778
  %4827 = vst [vmem:[#allocation4 + $0x118] sm:$0xff] %v4779
  %4828 = vst [vmem:[#allocation4 + $0x120] sm:$0xff] %v4780
  %4829 = vst [vmem:[#allocation4 + $0x128] sm:$0xff] %v4781
  %4830 = vst [vmem:[#allocation4 + $0x130] sm:$0xff] %v4782
  %4831 = vst [vmem:[#allocation4 + $0x138] sm:$0xff] %v4783
  %4832 = vst [vmem:[#allocation4 + $0x140] sm:$0xff] %v4784
  %4833 = vst [vmem:[#allocation4 + $0x148] sm:$0xff] %v4785
  %4834 = vst [vmem:[#allocation4 + $0x150] sm:$0xff] %v4786
  %4835 = vst [vmem:[#allocation4 + $0x158] sm:$0xff] %v4787
  %4836 = vst [vmem:[#allocation4 + $0x160] sm:$0xff] %v4788
  %4837 = vst [vmem:[#allocation4 + $0x168] sm:$0xff] %v4789
  %4838 = vst [vmem:[#allocation4 + $0x170] sm:$0xff] %v4790
  %4839 = vst [vmem:[#allocation4 + $0x178] sm:$0xff] %v4791
  %v4840 = vld [vmem:[#allocation2] sm:$0xff]
  %v4841 = vld [vmem:[#allocation2 + $0x8] sm:$0xff]
  %v4842 = vld [vmem:[#allocation2 + $0x10] sm:$0xff]
  %v4843 = vld [vmem:[#allocation2 + $0x18] sm:$0xff]
  %v4844 = vld [vmem:[#allocation2 + $0x20] sm:$0xff]
  %v4845 = vld [vmem:[#allocation2 + $0x28] sm:$0xff]
  %v4846 = vld [vmem:[#allocation2 + $0x30] sm:$0xff]
  %v4847 = vld [vmem:[#allocation2 + $0x40] sm:$0xff]
  %v4848 = vld [vmem:[#allocation2 + $0x48] sm:$0xff]
  %v4849 = vld [vmem:[#allocation2 + $0x50] sm:$0xff]
  %v4850 = vld [vmem:[#allocation2 + $0x58] sm:$0xff]
  %v4851 = vld [vmem:[#allocation2 + $0x60] sm:$0xff]
  %v4852 = vld [vmem:[#allocation2 + $0x68] sm:$0xff]
  %v4853 = vld [vmem:[#allocation2 + $0x70] sm:$0xff]
  %v4854 = vld [vmem:[#allocation2 + $0x80] sm:$0xff]
  %v4855 = vld [vmem:[#allocation2 + $0x88] sm:$0xff]
  %v4856 = vld [vmem:[#allocation2 + $0x90] sm:$0xff]
  %v4857 = vld [vmem:[#allocation2 + $0x98] sm:$0xff]
  %v4858 = vld [vmem:[#allocation2 + $0xa0] sm:$0xff]
  %v4859 = vld [vmem:[#allocation2 + $0xa8] sm:$0xff]
  %v4860 = vld [vmem:[#allocation2 + $0xb0] sm:$0xff]
  %v4861 = vld [vmem:[#allocation2 + $0xc0] sm:$0xff]
  %v4862 = vld [vmem:[#allocation2 + $0xc8] sm:$0xff]
  %v4863 = vld [vmem:[#allocation2 + $0xd0] sm:$0xff]
  %v4864 = vld [vmem:[#allocation2 + $0xd8] sm:$0xff]
  %v4865 = vld [vmem:[#allocation2 + $0xe0] sm:$0xff]
  %v4866 = vld [vmem:[#allocation2 + $0xe8] sm:$0xff]
  %v4867 = vld [vmem:[#allocation2 + $0xf0] sm:$0xff]
  %4896 = vrot.lane.b32.xlu0 %v4840, 17
  %v4897 = vpop.permute.xlu0 %4896
  %4898 = vrot.lane.b32.xlu0 %v4841, 17
  %v4899 = vpop.permute.xlu0 %4898
  %4900 = vrot.lane.b32.xlu0 %v4842, 17
  %v4901 = vpop.permute.xlu0 %4900
  %4902 = vrot.lane.b32.xlu0 %v4843, 17
  %v4903 = vpop.permute.xlu0 %4902
  %4904 = vrot.lane.b32.xlu0 %v4844, 17
  %v4905 = vpop.permute.xlu0 %4904
  %4906 = vrot.lane.b32.xlu0 %v4845, 17
  %v4907 = vpop.permute.xlu0 %4906
  %4908 = vrot.lane.b32.xlu0 %v4846, 17
  %v4909 = vpop.permute.xlu0 %4908
  %4910 = vrot.lane.b32.xlu0 %v4847, 17
  %v4911 = vpop.permute.xlu0 %4910
  %4912 = vrot.lane.b32.xlu0 %v4848, 17
  %v4913 = vpop.permute.xlu0 %4912
  %4914 = vrot.lane.b32.xlu0 %v4849, 17
  %v4915 = vpop.permute.xlu0 %4914
  %4916 = vrot.lane.b32.xlu0 %v4850, 17
  %v4917 = vpop.permute.xlu0 %4916
  %4918 = vrot.lane.b32.xlu0 %v4851, 17
  %v4919 = vpop.permute.xlu0 %4918
  %4920 = vrot.lane.b32.xlu0 %v4852, 17
  %v4921 = vpop.permute.xlu0 %4920
  %4922 = vrot.lane.b32.xlu0 %v4853, 17
  %v4923 = vpop.permute.xlu0 %4922
  %4924 = vrot.lane.b32.xlu0 %v4854, 17
  %v4925 = vpop.permute.xlu0 %4924
  %4926 = vrot.lane.b32.xlu0 %v4855, 17
  %v4927 = vpop.permute.xlu0 %4926
  %4928 = vrot.lane.b32.xlu0 %v4856, 17
  %v4929 = vpop.permute.xlu0 %4928
  %4930 = vrot.lane.b32.xlu0 %v4857, 17
  %v4931 = vpop.permute.xlu0 %4930
  %4932 = vrot.lane.b32.xlu0 %v4858, 17
  %v4933 = vpop.permute.xlu0 %4932
  %4934 = vrot.lane.b32.xlu0 %v4859, 17
  %v4935 = vpop.permute.xlu0 %4934
  %4936 = vrot.lane.b32.xlu0 %v4860, 17
  %v4937 = vpop.permute.xlu0 %4936
  %4938 = vrot.lane.b32.xlu0 %v4861, 17
  %v4939 = vpop.permute.xlu0 %4938
  %4940 = vrot.lane.b32.xlu0 %v4862, 17
  %v4941 = vpop.permute.xlu0 %4940
  %4942 = vrot.lane.b32.xlu0 %v4863, 17
  %v4943 = vpop.permute.xlu0 %4942
  %4944 = vrot.lane.b32.xlu0 %v4864, 17
  %v4945 = vpop.permute.xlu0 %4944
  %4946 = vrot.lane.b32.xlu0 %v4865, 17
  %v4947 = vpop.permute.xlu0 %4946
  %4948 = vrot.lane.b32.xlu0 %v4866, 17
  %v4949 = vpop.permute.xlu0 %4948
  %4950 = vrot.lane.b32.xlu0 %v4867, 17
  %v4951 = vpop.permute.xlu0 %4950
  %v4952 = vsel %vm1016, %v4897, %v4899
  %v4953 = vsel %vm1016, %v4899, %v4901
  %v4954 = vsel %vm1016, %v4901, %v4903
  %v4955 = vsel %vm1016, %v4903, %v4905
  %v4956 = vsel %vm1016, %v4905, %v4907
  %v4957 = vsel %vm1016, %v4907, %v4909
  %v4958 = vsel %vm1016, %v4911, %v4913
  %v4959 = vsel %vm1016, %v4913, %v4915
  %v4960 = vsel %vm1016, %v4915, %v4917
  %v4961 = vsel %vm1016, %v4917, %v4919
  %v4962 = vsel %vm1016, %v4919, %v4921
  %v4963 = vsel %vm1016, %v4921, %v4923
  %v4964 = vsel %vm1016, %v4925, %v4927
  %v4965 = vsel %vm1016, %v4927, %v4929
  %v4966 = vsel %vm1016, %v4929, %v4931
  %v4967 = vsel %vm1016, %v4931, %v4933
  %v4968 = vsel %vm1016, %v4933, %v4935
  %v4969 = vsel %vm1016, %v4935, %v4937
  %v4970 = vsel %vm1016, %v4939, %v4941
  %v4971 = vsel %vm1016, %v4941, %v4943
  %v4972 = vsel %vm1016, %v4943, %v4945
  %v4973 = vsel %vm1016, %v4945, %v4947
  %v4974 = vsel %vm1016, %v4947, %v4949
  %v4975 = vsel %vm1016, %v4949, %v4951
  %5000 = vst [vmem:[#allocation4 + $0x180] sm:$0xff] %v4952
  %5001 = vst [vmem:[#allocation4 + $0x188] sm:$0xff] %v4953
  %5002 = vst [vmem:[#allocation4 + $0x190] sm:$0xff] %v4954
  %5003 = vst [vmem:[#allocation4 + $0x198] sm:$0xff] %v4955
  %5004 = vst [vmem:[#allocation4 + $0x1a0] sm:$0xff] %v4956
  %5005 = vst [vmem:[#allocation4 + $0x1a8] sm:$0xff] %v4957
  %5006 = vst [vmem:[#allocation4 + $0x1b0] sm:$0xff] %v4958
  %5007 = vst [vmem:[#allocation4 + $0x1b8] sm:$0xff] %v4959
  %5008 = vst [vmem:[#allocation4 + $0x1c0] sm:$0xff] %v4960
  %5009 = vst [vmem:[#allocation4 + $0x1c8] sm:$0xff] %v4961
  %5010 = vst [vmem:[#allocation4 + $0x1d0] sm:$0xff] %v4962
  %5011 = vst [vmem:[#allocation4 + $0x1d8] sm:$0xff] %v4963
  %5012 = vst [vmem:[#allocation4 + $0x1e0] sm:$0xff] %v4964
  %5013 = vst [vmem:[#allocation4 + $0x1e8] sm:$0xff] %v4965
  %5014 = vst [vmem:[#allocation4 + $0x1f0] sm:$0xff] %v4966
  %5015 = vst [vmem:[#allocation4 + $0x1f8] sm:$0xff] %v4967
  %5016 = vst [vmem:[#allocation4 + $0x200] sm:$0xff] %v4968
  %5017 = vst [vmem:[#allocation4 + $0x208] sm:$0xff] %v4969
  %5018 = vst [vmem:[#allocation4 + $0x210] sm:$0xff] %v4970
  %5019 = vst [vmem:[#allocation4 + $0x218] sm:$0xff] %v4971
  %5020 = vst [vmem:[#allocation4 + $0x220] sm:$0xff] %v4972
  %5021 = vst [vmem:[#allocation4 + $0x228] sm:$0xff] %v4973
  %5022 = vst [vmem:[#allocation4 + $0x230] sm:$0xff] %v4974
  %5023 = vst [vmem:[#allocation4 + $0x238] sm:$0xff] %v4975
  %v5024 = vld [vmem:[#allocation2] sm:$0xff]
  %v5025 = vld [vmem:[#allocation2 + $0x8] sm:$0xff]
  %v5026 = vld [vmem:[#allocation2 + $0x10] sm:$0xff]
  %v5027 = vld [vmem:[#allocation2 + $0x18] sm:$0xff]
  %v5028 = vld [vmem:[#allocation2 + $0x20] sm:$0xff]
  %v5029 = vld [vmem:[#allocation2 + $0x28] sm:$0xff]
  %v5030 = vld [vmem:[#allocation2 + $0x30] sm:$0xff]
  %v5031 = vld [vmem:[#allocation2 + $0x40] sm:$0xff]
  %v5032 = vld [vmem:[#allocation2 + $0x48] sm:$0xff]
  %v5033 = vld [vmem:[#allocation2 + $0x50] sm:$0xff]
  %v5034 = vld [vmem:[#allocation2 + $0x58] sm:$0xff]
  %v5035 = vld [vmem:[#allocation2 + $0x60] sm:$0xff]
  %v5036 = vld [vmem:[#allocation2 + $0x68] sm:$0xff]
  %v5037 = vld [vmem:[#allocation2 + $0x70] sm:$0xff]
  %v5038 = vld [vmem:[#allocation2 + $0x80] sm:$0xff]
  %v5039 = vld [vmem:[#allocation2 + $0x88] sm:$0xff]
  %v5040 = vld [vmem:[#allocation2 + $0x90] sm:$0xff]
  %v5041 = vld [vmem:[#allocation2 + $0x98] sm:$0xff]
  %v5042 = vld [vmem:[#allocation2 + $0xa0] sm:$0xff]
  %v5043 = vld [vmem:[#allocation2 + $0xa8] sm:$0xff]
  %v5044 = vld [vmem:[#allocation2 + $0xb0] sm:$0xff]
  %v5045 = vld [vmem:[#allocation2 + $0xc0] sm:$0xff]
  %v5046 = vld [vmem:[#allocation2 + $0xc8] sm:$0xff]
  %v5047 = vld [vmem:[#allocation2 + $0xd0] sm:$0xff]
  %v5048 = vld [vmem:[#allocation2 + $0xd8] sm:$0xff]
  %v5049 = vld [vmem:[#allocation2 + $0xe0] sm:$0xff]
  %v5050 = vld [vmem:[#allocation2 + $0xe8] sm:$0xff]
  %v5051 = vld [vmem:[#allocation2 + $0xf0] sm:$0xff]
  %5080 = vrot.lane.b32.xlu0 %v5024, 1
  %v5081 = vpop.permute.xlu0 %5080
  %5082 = vrot.lane.b32.xlu0 %v5025, 1
  %v5083 = vpop.permute.xlu0 %5082
  %5084 = vrot.lane.b32.xlu0 %v5026, 1
  %v5085 = vpop.permute.xlu0 %5084
  %5086 = vrot.lane.b32.xlu0 %v5027, 1
  %v5087 = vpop.permute.xlu0 %5086
  %5088 = vrot.lane.b32.xlu0 %v5028, 1
  %v5089 = vpop.permute.xlu0 %5088
  %5090 = vrot.lane.b32.xlu0 %v5029, 1
  %v5091 = vpop.permute.xlu0 %5090
  %5092 = vrot.lane.b32.xlu0 %v5030, 1
  %v5093 = vpop.permute.xlu0 %5092
  %5094 = vrot.lane.b32.xlu0 %v5031, 1
  %v5095 = vpop.permute.xlu0 %5094
  %5096 = vrot.lane.b32.xlu0 %v5032, 1
  %v5097 = vpop.permute.xlu0 %5096
  %5098 = vrot.lane.b32.xlu0 %v5033, 1
  %v5099 = vpop.permute.xlu0 %5098
  %5100 = vrot.lane.b32.xlu0 %v5034, 1
  %v5101 = vpop.permute.xlu0 %5100
  %5102 = vrot.lane.b32.xlu0 %v5035, 1
  %v5103 = vpop.permute.xlu0 %5102
  %5104 = vrot.lane.b32.xlu0 %v5036, 1
  %v5105 = vpop.permute.xlu0 %5104
  %5106 = vrot.lane.b32.xlu0 %v5037, 1
  %v5107 = vpop.permute.xlu0 %5106
  %5108 = vrot.lane.b32.xlu0 %v5038, 1
  %v5109 = vpop.permute.xlu0 %5108
  %5110 = vrot.lane.b32.xlu0 %v5039, 1
  %v5111 = vpop.permute.xlu0 %5110
  %5112 = vrot.lane.b32.xlu0 %v5040, 1
  %v5113 = vpop.permute.xlu0 %5112
  %5114 = vrot.lane.b32.xlu0 %v5041, 1
  %v5115 = vpop.permute.xlu0 %5114
  %5116 = vrot.lane.b32.xlu0 %v5042, 1
  %v5117 = vpop.permute.xlu0 %5116
  %5118 = vrot.lane.b32.xlu0 %v5043, 1
  %v5119 = vpop.permute.xlu0 %5118
  %5120 = vrot.lane.b32.xlu0 %v5044, 1
  %v5121 = vpop.permute.xlu0 %5120
  %5122 = vrot.lane.b32.xlu0 %v5045, 1
  %v5123 = vpop.permute.xlu0 %5122
  %5124 = vrot.lane.b32.xlu0 %v5046, 1
  %v5125 = vpop.permute.xlu0 %5124
  %5126 = vrot.lane.b32.xlu0 %v5047, 1
  %v5127 = vpop.permute.xlu0 %5126
  %5128 = vrot.lane.b32.xlu0 %v5048, 1
  %v5129 = vpop.permute.xlu0 %5128
  %5130 = vrot.lane.b32.xlu0 %v5049, 1
  %v5131 = vpop.permute.xlu0 %5130
  %5132 = vrot.lane.b32.xlu0 %v5050, 1
  %v5133 = vpop.permute.xlu0 %5132
  %5134 = vrot.lane.b32.xlu0 %v5051, 1
  %v5135 = vpop.permute.xlu0 %5134
  %v5136 = vsel %vm1109, %v5081, %v5083
  %v5137 = vsel %vm1109, %v5083, %v5085
  %v5138 = vsel %vm1109, %v5085, %v5087
  %v5139 = vsel %vm1109, %v5087, %v5089
  %v5140 = vsel %vm1109, %v5089, %v5091
  %v5141 = vsel %vm1109, %v5091, %v5093
  %v5142 = vsel %vm1109, %v5095, %v5097
  %v5143 = vsel %vm1109, %v5097, %v5099
  %v5144 = vsel %vm1109, %v5099, %v5101
  %v5145 = vsel %vm1109, %v5101, %v5103
  %v5146 = vsel %vm1109, %v5103, %v5105
  %v5147 = vsel %vm1109, %v5105, %v5107
  %v5148 = vsel %vm1109, %v5109, %v5111
  %v5149 = vsel %vm1109, %v5111, %v5113
  %v5150 = vsel %vm1109, %v5113, %v5115
  %v5151 = vsel %vm1109, %v5115, %v5117
  %v5152 = vsel %vm1109, %v5117, %v5119
  %v5153 = vsel %vm1109, %v5119, %v5121
  %v5154 = vsel %vm1109, %v5123, %v5125
  %v5155 = vsel %vm1109, %v5125, %v5127
  %v5156 = vsel %vm1109, %v5127, %v5129
  %v5157 = vsel %vm1109, %v5129, %v5131
  %v5158 = vsel %vm1109, %v5131, %v5133
  %v5159 = vsel %vm1109, %v5133, %v5135
  %5184 = vst [vmem:[#allocation4 + $0x240] sm:$0xff] %v5136
  %5185 = vst [vmem:[#allocation4 + $0x248] sm:$0xff] %v5137
  %5186 = vst [vmem:[#allocation4 + $0x250] sm:$0xff] %v5138
  %5187 = vst [vmem:[#allocation4 + $0x258] sm:$0xff] %v5139
  %5188 = vst [vmem:[#allocation4 + $0x260] sm:$0xff] %v5140
  %5189 = vst [vmem:[#allocation4 + $0x268] sm:$0xff] %v5141
  %5190 = vst [vmem:[#allocation4 + $0x270] sm:$0xff] %v5142
  %5191 = vst [vmem:[#allocation4 + $0x278] sm:$0xff] %v5143
  %5192 = vst [vmem:[#allocation4 + $0x280] sm:$0xff] %v5144
  %5193 = vst [vmem:[#allocation4 + $0x288] sm:$0xff] %v5145
  %5194 = vst [vmem:[#allocation4 + $0x290] sm:$0xff] %v5146
  %5195 = vst [vmem:[#allocation4 + $0x298] sm:$0xff] %v5147
  %5196 = vst [vmem:[#allocation4 + $0x2a0] sm:$0xff] %v5148
  %5197 = vst [vmem:[#allocation4 + $0x2a8] sm:$0xff] %v5149
  %5198 = vst [vmem:[#allocation4 + $0x2b0] sm:$0xff] %v5150
  %5199 = vst [vmem:[#allocation4 + $0x2b8] sm:$0xff] %v5151
  %5200 = vst [vmem:[#allocation4 + $0x2c0] sm:$0xff] %v5152
  %5201 = vst [vmem:[#allocation4 + $0x2c8] sm:$0xff] %v5153
  %5202 = vst [vmem:[#allocation4 + $0x2d0] sm:$0xff] %v5154
  %5203 = vst [vmem:[#allocation4 + $0x2d8] sm:$0xff] %v5155
  %5204 = vst [vmem:[#allocation4 + $0x2e0] sm:$0xff] %v5156
  %5205 = vst [vmem:[#allocation4 + $0x2e8] sm:$0xff] %v5157
  %5206 = vst [vmem:[#allocation4 + $0x2f0] sm:$0xff] %v5158
  %5207 = vst [vmem:[#allocation4 + $0x2f8] sm:$0xff] %v5159
  %v5208 = vld [vmem:[#allocation2 + $0x8] sm:$0xff]
  %v5209 = vld [vmem:[#allocation2 + $0x10] sm:$0xff]
  %v5210 = vld [vmem:[#allocation2 + $0x18] sm:$0xff]
  %v5211 = vld [vmem:[#allocation2 + $0x20] sm:$0xff]
  %v5212 = vld [vmem:[#allocation2 + $0x28] sm:$0xff]
  %v5213 = vld [vmem:[#allocation2 + $0x30] sm:$0xff]
  %v5214 = vld [vmem:[#allocation2 + $0x48] sm:$0xff]
  %v5215 = vld [vmem:[#allocation2 + $0x50] sm:$0xff]
  %v5216 = vld [vmem:[#allocation2 + $0x58] sm:$0xff]
  %v5217 = vld [vmem:[#allocation2 + $0x60] sm:$0xff]
  %v5218 = vld [vmem:[#allocation2 + $0x68] sm:$0xff]
  %v5219 = vld [vmem:[#allocation2 + $0x70] sm:$0xff]
  %v5220 = vld [vmem:[#allocation2 + $0x88] sm:$0xff]
  %v5221 = vld [vmem:[#allocation2 + $0x90] sm:$0xff]
  %v5222 = vld [vmem:[#allocation2 + $0x98] sm:$0xff]
  %v5223 = vld [vmem:[#allocation2 + $0xa0] sm:$0xff]
  %v5224 = vld [vmem:[#allocation2 + $0xa8] sm:$0xff]
  %v5225 = vld [vmem:[#allocation2 + $0xb0] sm:$0xff]
  %v5226 = vld [vmem:[#allocation2 + $0xc8] sm:$0xff]
  %v5227 = vld [vmem:[#allocation2 + $0xd0] sm:$0xff]
  %v5228 = vld [vmem:[#allocation2 + $0xd8] sm:$0xff]
  %v5229 = vld [vmem:[#allocation2 + $0xe0] sm:$0xff]
  %v5230 = vld [vmem:[#allocation2 + $0xe8] sm:$0xff]
  %v5231 = vld [vmem:[#allocation2 + $0xf0] sm:$0xff]
  %5232 = vst [vmem:[#allocation4 + $0x300] sm:$0xff] %v5208
  %5233 = vst [vmem:[#allocation4 + $0x308] sm:$0xff] %v5209
  %5234 = vst [vmem:[#allocation4 + $0x310] sm:$0xff] %v5210
  %5235 = vst [vmem:[#allocation4 + $0x318] sm:$0xff] %v5211
  %5236 = vst [vmem:[#allocation4 + $0x320] sm:$0xff] %v5212
  %5237 = vst [vmem:[#allocation4 + $0x328] sm:$0xff] %v5213
  %5238 = vst [vmem:[#allocation4 + $0x330] sm:$0xff] %v5214
  %5239 = vst [vmem:[#allocation4 + $0x338] sm:$0xff] %v5215
  %5240 = vst [vmem:[#allocation4 + $0x340] sm:$0xff] %v5216
  %5241 = vst [vmem:[#allocation4 + $0x348] sm:$0xff] %v5217
  %5242 = vst [vmem:[#allocation4 + $0x350] sm:$0xff] %v5218
  %5243 = vst [vmem:[#allocation4 + $0x358] sm:$0xff] %v5219
  %5244 = vst [vmem:[#allocation4 + $0x360] sm:$0xff] %v5220
  %5245 = vst [vmem:[#allocation4 + $0x368] sm:$0xff] %v5221
  %5246 = vst [vmem:[#allocation4 + $0x370] sm:$0xff] %v5222
  %5247 = vst [vmem:[#allocation4 + $0x378] sm:$0xff] %v5223
  %5248 = vst [vmem:[#allocation4 + $0x380] sm:$0xff] %v5224
  %5249 = vst [vmem:[#allocation4 + $0x388] sm:$0xff] %v5225
  %5250 = vst [vmem:[#allocation4 + $0x390] sm:$0xff] %v5226
  %5251 = vst [vmem:[#allocation4 + $0x398] sm:$0xff] %v5227
  %5252 = vst [vmem:[#allocation4 + $0x3a0] sm:$0xff] %v5228
  %5253 = vst [vmem:[#allocation4 + $0x3a8] sm:$0xff] %v5229
  %5254 = vst [vmem:[#allocation4 + $0x3b0] sm:$0xff] %v5230
  %5255 = vst [vmem:[#allocation4 + $0x3b8] sm:$0xff] %v5231
  %v5256 = vld [vmem:[#allocation2 + $0x8] sm:$0xff]
  %v5257 = vld [vmem:[#allocation2 + $0x10] sm:$0xff]
  %v5258 = vld [vmem:[#allocation2 + $0x18] sm:$0xff]
  %v5259 = vld [vmem:[#allocation2 + $0x20] sm:$0xff]
  %v5260 = vld [vmem:[#allocation2 + $0x28] sm:$0xff]
  %v5261 = vld [vmem:[#allocation2 + $0x30] sm:$0xff]
  %v5262 = vld [vmem:[#allocation2 + $0x38] sm:$0xff]
  %v5263 = vld [vmem:[#allocation2 + $0x48] sm:$0xff]
  %v5264 = vld [vmem:[#allocation2 + $0x50] sm:$0xff]
  %v5265 = vld [vmem:[#allocation2 + $0x58] sm:$0xff]
  %v5266 = vld [vmem:[#allocation2 + $0x60] sm:$0xff]
  %v5267 = vld [vmem:[#allocation2 + $0x68] sm:$0xff]
  %v5268 = vld [vmem:[#allocation2 + $0x70] sm:$0xff]
  %v5269 = vld [vmem:[#allocation2 + $0x78] sm:$0xff]
  %v5270 = vld [vmem:[#allocation2 + $0x88] sm:$0xff]
  %v5271 = vld [vmem:[#allocation2 + $0x90] sm:$0xff]
  %v5272 = vld [vmem:[#allocation2 + $0x98] sm:$0xff]
  %v5273 = vld [vmem:[#allocation2 + $0xa0] sm:$0xff]
  %v5274 = vld [vmem:[#allocation2 + $0xa8] sm:$0xff]
  %v5275 = vld [vmem:[#allocation2 + $0xb0] sm:$0xff]
  %v5276 = vld [vmem:[#allocation2 + $0xb8] sm:$0xff]
  %v5277 = vld [vmem:[#allocation2 + $0xc8] sm:$0xff]
  %v5278 = vld [vmem:[#allocation2 + $0xd0] sm:$0xff]
  %v5279 = vld [vmem:[#allocation2 + $0xd8] sm:$0xff]
  %v5280 = vld [vmem:[#allocation2 + $0xe0] sm:$0xff]
  %v5281 = vld [vmem:[#allocation2 + $0xe8] sm:$0xff]
  %v5282 = vld [vmem:[#allocation2 + $0xf0] sm:$0xff]
  %v5283 = vld [vmem:[#allocation2 + $0xf8] sm:$0xff]
  %5312 = vrot.lane.b32.xlu0 %v5256, 127
  %v5313 = vpop.permute.xlu0 %5312
  %5314 = vrot.lane.b32.xlu0 %v5257, 127
  %v5315 = vpop.permute.xlu0 %5314
  %5316 = vrot.lane.b32.xlu0 %v5258, 127
  %v5317 = vpop.permute.xlu0 %5316
  %5318 = vrot.lane.b32.xlu0 %v5259, 127
  %v5319 = vpop.permute.xlu0 %5318
  %5320 = vrot.lane.b32.xlu0 %v5260, 127
  %v5321 = vpop.permute.xlu0 %5320
  %5322 = vrot.lane.b32.xlu0 %v5261, 127
  %v5323 = vpop.permute.xlu0 %5322
  %5324 = vrot.lane.b32.xlu0 %v5262, 127
  %v5325 = vpop.permute.xlu0 %5324
  %5326 = vrot.lane.b32.xlu0 %v5263, 127
  %v5327 = vpop.permute.xlu0 %5326
  %5328 = vrot.lane.b32.xlu0 %v5264, 127
  %v5329 = vpop.permute.xlu0 %5328
  %5330 = vrot.lane.b32.xlu0 %v5265, 127
  %v5331 = vpop.permute.xlu0 %5330
  %5332 = vrot.lane.b32.xlu0 %v5266, 127
  %v5333 = vpop.permute.xlu0 %5332
  %5334 = vrot.lane.b32.xlu0 %v5267, 127
  %v5335 = vpop.permute.xlu0 %5334
  %5336 = vrot.lane.b32.xlu0 %v5268, 127
  %v5337 = vpop.permute.xlu0 %5336
  %5338 = vrot.lane.b32.xlu0 %v5269, 127
  %v5339 = vpop.permute.xlu0 %5338
  %5340 = vrot.lane.b32.xlu0 %v5270, 127
  %v5341 = vpop.permute.xlu0 %5340
  %5342 = vrot.lane.b32.xlu0 %v5271, 127
  %v5343 = vpop.permute.xlu0 %5342
  %5344 = vrot.lane.b32.xlu0 %v5272, 127
  %v5345 = vpop.permute.xlu0 %5344
  %5346 = vrot.lane.b32.xlu0 %v5273, 127
  %v5347 = vpop.permute.xlu0 %5346
  %5348 = vrot.lane.b32.xlu0 %v5274, 127
  %v5349 = vpop.permute.xlu0 %5348
  %5350 = vrot.lane.b32.xlu0 %v5275, 127
  %v5351 = vpop.permute.xlu0 %5350
  %5352 = vrot.lane.b32.xlu0 %v5276, 127
  %v5353 = vpop.permute.xlu0 %5352
  %5354 = vrot.lane.b32.xlu0 %v5277, 127
  %v5355 = vpop.permute.xlu0 %5354
  %5356 = vrot.lane.b32.xlu0 %v5278, 127
  %v5357 = vpop.permute.xlu0 %5356
  %5358 = vrot.lane.b32.xlu0 %v5279, 127
  %v5359 = vpop.permute.xlu0 %5358
  %5360 = vrot.lane.b32.xlu0 %v5280, 127
  %v5361 = vpop.permute.xlu0 %5360
  %5362 = vrot.lane.b32.xlu0 %v5281, 127
  %v5363 = vpop.permute.xlu0 %5362
  %5364 = vrot.lane.b32.xlu0 %v5282, 127
  %v5365 = vpop.permute.xlu0 %5364
  %5366 = vrot.lane.b32.xlu0 %v5283, 127
  %v5367 = vpop.permute.xlu0 %5366
  %v5368 = vsel %vm1226, %v5313, %v5315
  %v5369 = vsel %vm1226, %v5315, %v5317
  %v5370 = vsel %vm1226, %v5317, %v5319
  %v5371 = vsel %vm1226, %v5319, %v5321
  %v5372 = vsel %vm1226, %v5321, %v5323
  %v5373 = vsel %vm1226, %v5323, %v5325
  %v5374 = vsel %vm1226, %v5327, %v5329
  %v5375 = vsel %vm1226, %v5329, %v5331
  %v5376 = vsel %vm1226, %v5331, %v5333
  %v5377 = vsel %vm1226, %v5333, %v5335
  %v5378 = vsel %vm1226, %v5335, %v5337
  %v5379 = vsel %vm1226, %v5337, %v5339
  %v5380 = vsel %vm1226, %v5341, %v5343
  %v5381 = vsel %vm1226, %v5343, %v5345
  %v5382 = vsel %vm1226, %v5345, %v5347
  %v5383 = vsel %vm1226, %v5347, %v5349
  %v5384 = vsel %vm1226, %v5349, %v5351
  %v5385 = vsel %vm1226, %v5351, %v5353
  %v5386 = vsel %vm1226, %v5355, %v5357
  %v5387 = vsel %vm1226, %v5357, %v5359
  %v5388 = vsel %vm1226, %v5359, %v5361
  %v5389 = vsel %vm1226, %v5361, %v5363
  %v5390 = vsel %vm1226, %v5363, %v5365
  %v5391 = vsel %vm1226, %v5365, %v5367
  %5416 = vst [vmem:[#allocation4 + $0x3c0] sm:$0xff] %v5368
  %5417 = vst [vmem:[#allocation4 + $0x3c8] sm:$0xff] %v5369
  %5418 = vst [vmem:[#allocation4 + $0x3d0] sm:$0xff] %v5370
  %5419 = vst [vmem:[#allocation4 + $0x3d8] sm:$0xff] %v5371
  %5420 = vst [vmem:[#allocation4 + $0x3e0] sm:$0xff] %v5372
  %5421 = vst [vmem:[#allocation4 + $0x3e8] sm:$0xff] %v5373
  %5422 = vst [vmem:[#allocation4 + $0x3f0] sm:$0xff] %v5374
  %5423 = vst [vmem:[#allocation4 + $0x3f8] sm:$0xff] %v5375
  %5424 = vst [vmem:[#allocation4 + $0x400] sm:$0xff] %v5376
  %5425 = vst [vmem:[#allocation4 + $0x408] sm:$0xff] %v5377
  %5426 = vst [vmem:[#allocation4 + $0x410] sm:$0xff] %v5378
  %5427 = vst [vmem:[#allocation4 + $0x418] sm:$0xff] %v5379
  %5428 = vst [vmem:[#allocation4 + $0x420] sm:$0xff] %v5380
  %5429 = vst [vmem:[#allocation4 + $0x428] sm:$0xff] %v5381
  %5430 = vst [vmem:[#allocation4 + $0x430] sm:$0xff] %v5382
  %5431 = vst [vmem:[#allocation4 + $0x438] sm:$0xff] %v5383
  %5432 = vst [vmem:[#allocation4 + $0x440] sm:$0xff] %v5384
  %5433 = vst [vmem:[#allocation4 + $0x448] sm:$0xff] %v5385
  %5434 = vst [vmem:[#allocation4 + $0x450] sm:$0xff] %v5386
  %5435 = vst [vmem:[#allocation4 + $0x458] sm:$0xff] %v5387
  %5436 = vst [vmem:[#allocation4 + $0x460] sm:$0xff] %v5388
  %5437 = vst [vmem:[#allocation4 + $0x468] sm:$0xff] %v5389
  %5438 = vst [vmem:[#allocation4 + $0x470] sm:$0xff] %v5390
  %5439 = vst [vmem:[#allocation4 + $0x478] sm:$0xff] %v5391
  %v5440 = vld [vmem:[#allocation2 + $0x8] sm:$0xff]
  %v5441 = vld [vmem:[#allocation2 + $0x10] sm:$0xff]
  %v5442 = vld [vmem:[#allocation2 + $0x18] sm:$0xff]
  %v5443 = vld [vmem:[#allocation2 + $0x20] sm:$0xff]
  %v5444 = vld [vmem:[#allocation2 + $0x28] sm:$0xff]
  %v5445 = vld [vmem:[#allocation2 + $0x30] sm:$0xff]
  %v5446 = vld [vmem:[#allocation2 + $0x38] sm:$0xff]
  %v5447 = vld [vmem:[#allocation2 + $0x48] sm:$0xff]
  %v5448 = vld [vmem:[#allocation2 + $0x50] sm:$0xff]
  %v5449 = vld [vmem:[#allocation2 + $0x58] sm:$0xff]
  %v5450 = vld [vmem:[#allocation2 + $0x60] sm:$0xff]
  %v5451 = vld [vmem:[#allocation2 + $0x68] sm:$0xff]
  %v5452 = vld [vmem:[#allocation2 + $0x70] sm:$0xff]
  %v5453 = vld [vmem:[#allocation2 + $0x78] sm:$0xff]
  %v5454 = vld [vmem:[#allocation2 + $0x88] sm:$0xff]
  %v5455 = vld [vmem:[#allocation2 + $0x90] sm:$0xff]
  %v5456 = vld [vmem:[#allocation2 + $0x98] sm:$0xff]
  %v5457 = vld [vmem:[#allocation2 + $0xa0] sm:$0xff]
  %v5458 = vld [vmem:[#allocation2 + $0xa8] sm:$0xff]
  %v5459 = vld [vmem:[#allocation2 + $0xb0] sm:$0xff]
  %v5460 = vld [vmem:[#allocation2 + $0xb8] sm:$0xff]
  %v5461 = vld [vmem:[#allocation2 + $0xc8] sm:$0xff]
  %v5462 = vld [vmem:[#allocation2 + $0xd0] sm:$0xff]
  %v5463 = vld [vmem:[#allocation2 + $0xd8] sm:$0xff]
  %v5464 = vld [vmem:[#allocation2 + $0xe0] sm:$0xff]
  %v5465 = vld [vmem:[#allocation2 + $0xe8] sm:$0xff]
  %v5466 = vld [vmem:[#allocation2 + $0xf0] sm:$0xff]
  %v5467 = vld [vmem:[#allocation2 + $0xf8] sm:$0xff]
  %5496 = vrot.lane.b32.xlu0 %v5440, 111
  %v5497 = vpop.permute.xlu0 %5496
  %5498 = vrot.lane.b32.xlu0 %v5441, 111
  %v5499 = vpop.permute.xlu0 %5498
  %5500 = vrot.lane.b32.xlu0 %v5442, 111
  %v5501 = vpop.permute.xlu0 %5500
  %5502 = vrot.lane.b32.xlu0 %v5443, 111
  %v5503 = vpop.permute.xlu0 %5502
  %5504 = vrot.lane.b32.xlu0 %v5444, 111
  %v5505 = vpop.permute.xlu0 %5504
  %5506 = vrot.lane.b32.xlu0 %v5445, 111
  %v5507 = vpop.permute.xlu0 %5506
  %5508 = vrot.lane.b32.xlu0 %v5446, 111
  %v5509 = vpop.permute.xlu0 %5508
  %5510 = vrot.lane.b32.xlu0 %v5447, 111
  %v5511 = vpop.permute.xlu0 %5510
  %5512 = vrot.lane.b32.xlu0 %v5448, 111
  %v5513 = vpop.permute.xlu0 %5512
  %5514 = vrot.lane.b32.xlu0 %v5449, 111
  %v5515 = vpop.permute.xlu0 %5514
  %5516 = vrot.lane.b32.xlu0 %v5450, 111
  %v5517 = vpop.permute.xlu0 %5516
  %5518 = vrot.lane.b32.xlu0 %v5451, 111
  %v5519 = vpop.permute.xlu0 %5518
  %5520 = vrot.lane.b32.xlu0 %v5452, 111
  %v5521 = vpop.permute.xlu0 %5520
  %5522 = vrot.lane.b32.xlu0 %v5453, 111
  %v5523 = vpop.permute.xlu0 %5522
  %5524 = vrot.lane.b32.xlu0 %v5454, 111
  %v5525 = vpop.permute.xlu0 %5524
  %5526 = vrot.lane.b32.xlu0 %v5455, 111
  %v5527 = vpop.permute.xlu0 %5526
  %5528 = vrot.lane.b32.xlu0 %v5456, 111
  %v5529 = vpop.permute.xlu0 %5528
  %5530 = vrot.lane.b32.xlu0 %v5457, 111
  %v5531 = vpop.permute.xlu0 %5530
  %5532 = vrot.lane.b32.xlu0 %v5458, 111
  %v5533 = vpop.permute.xlu0 %5532
  %5534 = vrot.lane.b32.xlu0 %v5459, 111
  %v5535 = vpop.permute.xlu0 %5534
  %5536 = vrot.lane.b32.xlu0 %v5460, 111
  %v5537 = vpop.permute.xlu0 %5536
  %5538 = vrot.lane.b32.xlu0 %v5461, 111
  %v5539 = vpop.permute.xlu0 %5538
  %5540 = vrot.lane.b32.xlu0 %v5462, 111
  %v5541 = vpop.permute.xlu0 %5540
  %5542 = vrot.lane.b32.xlu0 %v5463, 111
  %v5543 = vpop.permute.xlu0 %5542
  %5544 = vrot.lane.b32.xlu0 %v5464, 111
  %v5545 = vpop.permute.xlu0 %5544
  %5546 = vrot.lane.b32.xlu0 %v5465, 111
  %v5547 = vpop.permute.xlu0 %5546
  %5548 = vrot.lane.b32.xlu0 %v5466, 111
  %v5549 = vpop.permute.xlu0 %5548
  %5550 = vrot.lane.b32.xlu0 %v5467, 111
  %v5551 = vpop.permute.xlu0 %5550
  %v5552 = vsel %vm1319, %v5497, %v5499
  %v5553 = vsel %vm1319, %v5499, %v5501
  %v5554 = vsel %vm1319, %v5501, %v5503
  %v5555 = vsel %vm1319, %v5503, %v5505
  %v5556 = vsel %vm1319, %v5505, %v5507
  %v5557 = vsel %vm1319, %v5507, %v5509
  %v5558 = vsel %vm1319, %v5511, %v5513
  %v5559 = vsel %vm1319, %v5513, %v5515
  %v5560 = vsel %vm1319, %v5515, %v5517
  %v5561 = vsel %vm1319, %v5517, %v5519
  %v5562 = vsel %vm1319, %v5519, %v5521
  %v5563 = vsel %vm1319, %v5521, %v5523
  %v5564 = vsel %vm1319, %v5525, %v5527
  %v5565 = vsel %vm1319, %v5527, %v5529
  %v5566 = vsel %vm1319, %v5529, %v5531
  %v5567 = vsel %vm1319, %v5531, %v5533
  %v5568 = vsel %vm1319, %v5533, %v5535
  %v5569 = vsel %vm1319, %v5535, %v5537
  %v5570 = vsel %vm1319, %v5539, %v5541
  %v5571 = vsel %vm1319, %v5541, %v5543
  %v5572 = vsel %vm1319, %v5543, %v5545
  %v5573 = vsel %vm1319, %v5545, %v5547
  %v5574 = vsel %vm1319, %v5547, %v5549
  %v5575 = vsel %vm1319, %v5549, %v5551
  %5600 = vst [vmem:[#allocation4 + $0x480] sm:$0xff] %v5552
  %5601 = vst [vmem:[#allocation4 + $0x488] sm:$0xff] %v5553
  %5602 = vst [vmem:[#allocation4 + $0x490] sm:$0xff] %v5554
  %5603 = vst [vmem:[#allocation4 + $0x498] sm:$0xff] %v5555
  %5604 = vst [vmem:[#allocation4 + $0x4a0] sm:$0xff] %v5556
  %5605 = vst [vmem:[#allocation4 + $0x4a8] sm:$0xff] %v5557
  %5606 = vst [vmem:[#allocation4 + $0x4b0] sm:$0xff] %v5558
  %5607 = vst [vmem:[#allocation4 + $0x4b8] sm:$0xff] %v5559
  %5608 = vst [vmem:[#allocation4 + $0x4c0] sm:$0xff] %v5560
  %5609 = vst [vmem:[#allocation4 + $0x4c8] sm:$0xff] %v5561
  %5610 = vst [vmem:[#allocation4 + $0x4d0] sm:$0xff] %v5562
  %5611 = vst [vmem:[#allocation4 + $0x4d8] sm:$0xff] %v5563
  %5612 = vst [vmem:[#allocation4 + $0x4e0] sm:$0xff] %v5564
  %5613 = vst [vmem:[#allocation4 + $0x4e8] sm:$0xff] %v5565
  %5614 = vst [vmem:[#allocation4 + $0x4f0] sm:$0xff] %v5566
  %5615 = vst [vmem:[#allocation4 + $0x4f8] sm:$0xff] %v5567
  %5616 = vst [vmem:[#allocation4 + $0x500] sm:$0xff] %v5568
  %5617 = vst [vmem:[#allocation4 + $0x508] sm:$0xff] %v5569
  %5618 = vst [vmem:[#allocation4 + $0x510] sm:$0xff] %v5570
  %5619 = vst [vmem:[#allocation4 + $0x518] sm:$0xff] %v5571
  %5620 = vst [vmem:[#allocation4 + $0x520] sm:$0xff] %v5572
  %5621 = vst [vmem:[#allocation4 + $0x528] sm:$0xff] %v5573
  %5622 = vst [vmem:[#allocation4 + $0x530] sm:$0xff] %v5574
  %5623 = vst [vmem:[#allocation4 + $0x538] sm:$0xff] %v5575
  %v5624 = vld [vmem:[#allocation2 + $0x8] sm:$0xff]
  %v5625 = vld [vmem:[#allocation2 + $0x10] sm:$0xff]
  %v5626 = vld [vmem:[#allocation2 + $0x18] sm:$0xff]
  %v5627 = vld [vmem:[#allocation2 + $0x20] sm:$0xff]
  %v5628 = vld [vmem:[#allocation2 + $0x28] sm:$0xff]
  %v5629 = vld [vmem:[#allocation2 + $0x30] sm:$0xff]
  %v5630 = vld [vmem:[#allocation2 + $0x38] sm:$0xff]
  %v5631 = vld [vmem:[#allocation2 + $0x48] sm:$0xff]
  %v5632 = vld [vmem:[#allocation2 + $0x50] sm:$0xff]
  %v5633 = vld [vmem:[#allocation2 + $0x58] sm:$0xff]
  %v5634 = vld [vmem:[#allocation2 + $0x60] sm:$0xff]
  %v5635 = vld [vmem:[#allocation2 + $0x68] sm:$0xff]
  %v5636 = vld [vmem:[#allocation2 + $0x70] sm:$0xff]
  %v5637 = vld [vmem:[#allocation2 + $0x78] sm:$0xff]
  %v5638 = vld [vmem:[#allocation2 + $0x88] sm:$0xff]
  %v5639 = vld [vmem:[#allocation2 + $0x90] sm:$0xff]
  %v5640 = vld [vmem:[#allocation2 + $0x98] sm:$0xff]
  %v5641 = vld [vmem:[#allocation2 + $0xa0] sm:$0xff]
  %v5642 = vld [vmem:[#allocation2 + $0xa8] sm:$0xff]
  %v5643 = vld [vmem:[#allocation2 + $0xb0] sm:$0xff]
  %v5644 = vld [vmem:[#allocation2 + $0xb8] sm:$0xff]
  %v5645 = vld [vmem:[#allocation2 + $0xc8] sm:$0xff]
  %v5646 = vld [vmem:[#allocation2 + $0xd0] sm:$0xff]
  %v5647 = vld [vmem:[#allocation2 + $0xd8] sm:$0xff]
  %v5648 = vld [vmem:[#allocation2 + $0xe0] sm:$0xff]
  %v5649 = vld [vmem:[#allocation2 + $0xe8] sm:$0xff]
  %v5650 = vld [vmem:[#allocation2 + $0xf0] sm:$0xff]
  %v5651 = vld [vmem:[#allocation2 + $0xf8] sm:$0xff]
  %5680 = vrot.lane.b32.xlu0 %v5624, 110
  %v5681 = vpop.permute.xlu0 %5680
  %5682 = vrot.lane.b32.xlu0 %v5625, 110
  %v5683 = vpop.permute.xlu0 %5682
  %5684 = vrot.lane.b32.xlu0 %v5626, 110
  %v5685 = vpop.permute.xlu0 %5684
  %5686 = vrot.lane.b32.xlu0 %v5627, 110
  %v5687 = vpop.permute.xlu0 %5686
  %5688 = vrot.lane.b32.xlu0 %v5628, 110
  %v5689 = vpop.permute.xlu0 %5688
  %5690 = vrot.lane.b32.xlu0 %v5629, 110
  %v5691 = vpop.permute.xlu0 %5690
  %5692 = vrot.lane.b32.xlu0 %v5630, 110
  %v5693 = vpop.permute.xlu0 %5692
  %5694 = vrot.lane.b32.xlu0 %v5631, 110
  %v5695 = vpop.permute.xlu0 %5694
  %5696 = vrot.lane.b32.xlu0 %v5632, 110
  %v5697 = vpop.permute.xlu0 %5696
  %5698 = vrot.lane.b32.xlu0 %v5633, 110
  %v5699 = vpop.permute.xlu0 %5698
  %5700 = vrot.lane.b32.xlu0 %v5634, 110
  %v5701 = vpop.permute.xlu0 %5700
  %5702 = vrot.lane.b32.xlu0 %v5635, 110
  %v5703 = vpop.permute.xlu0 %5702
  %5704 = vrot.lane.b32.xlu0 %v5636, 110
  %v5705 = vpop.permute.xlu0 %5704
  %5706 = vrot.lane.b32.xlu0 %v5637, 110
  %v5707 = vpop.permute.xlu0 %5706
  %5708 = vrot.lane.b32.xlu0 %v5638, 110
  %v5709 = vpop.permute.xlu0 %5708
  %5710 = vrot.lane.b32.xlu0 %v5639, 110
  %v5711 = vpop.permute.xlu0 %5710
  %5712 = vrot.lane.b32.xlu0 %v5640, 110
  %v5713 = vpop.permute.xlu0 %5712
  %5714 = vrot.lane.b32.xlu0 %v5641, 110
  %v5715 = vpop.permute.xlu0 %5714
  %5716 = vrot.lane.b32.xlu0 %v5642, 110
  %v5717 = vpop.permute.xlu0 %5716
  %5718 = vrot.lane.b32.xlu0 %v5643, 110
  %v5719 = vpop.permute.xlu0 %5718
  %5720 = vrot.lane.b32.xlu0 %v5644, 110
  %v5721 = vpop.permute.xlu0 %5720
  %5722 = vrot.lane.b32.xlu0 %v5645, 110
  %v5723 = vpop.permute.xlu0 %5722
  %5724 = vrot.lane.b32.xlu0 %v5646, 110
  %v5725 = vpop.permute.xlu0 %5724
  %5726 = vrot.lane.b32.xlu0 %v5647, 110
  %v5727 = vpop.permute.xlu0 %5726
  %5728 = vrot.lane.b32.xlu0 %v5648, 110
  %v5729 = vpop.permute.xlu0 %5728
  %5730 = vrot.lane.b32.xlu0 %v5649, 110
  %v5731 = vpop.permute.xlu0 %5730
  %5732 = vrot.lane.b32.xlu0 %v5650, 110
  %v5733 = vpop.permute.xlu0 %5732
  %5734 = vrot.lane.b32.xlu0 %v5651, 110
  %v5735 = vpop.permute.xlu0 %5734
  %v5736 = vsel %vm1412, %v5681, %v5683
  %v5737 = vsel %vm1412, %v5683, %v5685
  %v5738 = vsel %vm1412, %v5685, %v5687
  %v5739 = vsel %vm1412, %v5687, %v5689
  %v5740 = vsel %vm1412, %v5689, %v5691
  %v5741 = vsel %vm1412, %v5691, %v5693
  %v5742 = vsel %vm1412, %v5695, %v5697
  %v5743 = vsel %vm1412, %v5697, %v5699
  %v5744 = vsel %vm1412, %v5699, %v5701
  %v5745 = vsel %vm1412, %v5701, %v5703
  %v5746 = vsel %vm1412, %v5703, %v5705
  %v5747 = vsel %vm1412, %v5705, %v5707
  %v5748 = vsel %vm1412, %v5709, %v5711
  %v5749 = vsel %vm1412, %v5711, %v5713
  %v5750 = vsel %vm1412, %v5713, %v5715
  %v5751 = vsel %vm1412, %v5715, %v5717
  %v5752 = vsel %vm1412, %v5717, %v5719
  %v5753 = vsel %vm1412, %v5719, %v5721
  %v5754 = vsel %vm1412, %v5723, %v5725
  %v5755 = vsel %vm1412, %v5725, %v5727
  %v5756 = vsel %vm1412, %v5727, %v5729
  %v5757 = vsel %vm1412, %v5729, %v5731
  %v5758 = vsel %vm1412, %v5731, %v5733
  %v5759 = vsel %vm1412, %v5733, %v5735
  %5784 = vst [vmem:[#allocation4 + $0x540] sm:$0xff] %v5736
  %5785 = vst [vmem:[#allocation4 + $0x548] sm:$0xff] %v5737
  %5786 = vst [vmem:[#allocation4 + $0x550] sm:$0xff] %v5738
  %5787 = vst [vmem:[#allocation4 + $0x558] sm:$0xff] %v5739
  %5788 = vst [vmem:[#allocation4 + $0x560] sm:$0xff] %v5740
  %5789 = vst [vmem:[#allocation4 + $0x568] sm:$0xff] %v5741
  %5790 = vst [vmem:[#allocation4 + $0x570] sm:$0xff] %v5742
  %5791 = vst [vmem:[#allocation4 + $0x578] sm:$0xff] %v5743
  %5792 = vst [vmem:[#allocation4 + $0x580] sm:$0xff] %v5744
  %5793 = vst [vmem:[#allocation4 + $0x588] sm:$0xff] %v5745
  %5794 = vst [vmem:[#allocation4 + $0x590] sm:$0xff] %v5746
  %5795 = vst [vmem:[#allocation4 + $0x598] sm:$0xff] %v5747
  %5796 = vst [vmem:[#allocation4 + $0x5a0] sm:$0xff] %v5748
  %5797 = vst [vmem:[#allocation4 + $0x5a8] sm:$0xff] %v5749
  %5798 = vst [vmem:[#allocation4 + $0x5b0] sm:$0xff] %v5750
  %5799 = vst [vmem:[#allocation4 + $0x5b8] sm:$0xff] %v5751
  %5800 = vst [vmem:[#allocation4 + $0x5c0] sm:$0xff] %v5752
  %5801 = vst [vmem:[#allocation4 + $0x5c8] sm:$0xff] %v5753
  %5802 = vst [vmem:[#allocation4 + $0x5d0] sm:$0xff] %v5754
  %5803 = vst [vmem:[#allocation4 + $0x5d8] sm:$0xff] %v5755
  %5804 = vst [vmem:[#allocation4 + $0x5e0] sm:$0xff] %v5756
  %5805 = vst [vmem:[#allocation4 + $0x5e8] sm:$0xff] %v5757
  %5806 = vst [vmem:[#allocation4 + $0x5f0] sm:$0xff] %v5758
  %5807 = vst [vmem:[#allocation4 + $0x5f8] sm:$0xff] %v5759
  %v5808 = vld [vmem:[#allocation2 + $0x8] sm:$0xff]
  %v5809 = vld [vmem:[#allocation2 + $0x10] sm:$0xff]
  %v5810 = vld [vmem:[#allocation2 + $0x18] sm:$0xff]
  %v5811 = vld [vmem:[#allocation2 + $0x20] sm:$0xff]
  %v5812 = vld [vmem:[#allocation2 + $0x28] sm:$0xff]
  %v5813 = vld [vmem:[#allocation2 + $0x30] sm:$0xff]
  %v5814 = vld [vmem:[#allocation2 + $0x38] sm:$0xff]
  %v5815 = vld [vmem:[#allocation2 + $0x48] sm:$0xff]
  %v5816 = vld [vmem:[#allocation2 + $0x50] sm:$0xff]
  %v5817 = vld [vmem:[#allocation2 + $0x58] sm:$0xff]
  %v5818 = vld [vmem:[#allocation2 + $0x60] sm:$0xff]
  %v5819 = vld [vmem:[#allocation2 + $0x68] sm:$0xff]
  %v5820 = vld [vmem:[#allocation2 + $0x70] sm:$0xff]
  %v5821 = vld [vmem:[#allocation2 + $0x78] sm:$0xff]
  %v5822 = vld [vmem:[#allocation2 + $0x88] sm:$0xff]
  %v5823 = vld [vmem:[#allocation2 + $0x90] sm:$0xff]
  %v5824 = vld [vmem:[#allocation2 + $0x98] sm:$0xff]
  %v5825 = vld [vmem:[#allocation2 + $0xa0] sm:$0xff]
  %v5826 = vld [vmem:[#allocation2 + $0xa8] sm:$0xff]
  %v5827 = vld [vmem:[#allocation2 + $0xb0] sm:$0xff]
  %v5828 = vld [vmem:[#allocation2 + $0xb8] sm:$0xff]
  %v5829 = vld [vmem:[#allocation2 + $0xc8] sm:$0xff]
  %v5830 = vld [vmem:[#allocation2 + $0xd0] sm:$0xff]
  %v5831 = vld [vmem:[#allocation2 + $0xd8] sm:$0xff]
  %v5832 = vld [vmem:[#allocation2 + $0xe0] sm:$0xff]
  %v5833 = vld [vmem:[#allocation2 + $0xe8] sm:$0xff]
  %v5834 = vld [vmem:[#allocation2 + $0xf0] sm:$0xff]
  %v5835 = vld [vmem:[#allocation2 + $0xf8] sm:$0xff]
  %5864 = vrot.lane.b32.xlu0 %v5808, 109
  %v5865 = vpop.permute.xlu0 %5864
  %5866 = vrot.lane.b32.xlu0 %v5809, 109
  %v5867 = vpop.permute.xlu0 %5866
  %5868 = vrot.lane.b32.xlu0 %v5810, 109
  %v5869 = vpop.permute.xlu0 %5868
  %5870 = vrot.lane.b32.xlu0 %v5811, 109
  %v5871 = vpop.permute.xlu0 %5870
  %5872 = vrot.lane.b32.xlu0 %v5812, 109
  %v5873 = vpop.permute.xlu0 %5872
  %5874 = vrot.lane.b32.xlu0 %v5813, 109
  %v5875 = vpop.permute.xlu0 %5874
  %5876 = vrot.lane.b32.xlu0 %v5814, 109
  %v5877 = vpop.permute.xlu0 %5876
  %5878 = vrot.lane.b32.xlu0 %v5815, 109
  %v5879 = vpop.permute.xlu0 %5878
  %5880 = vrot.lane.b32.xlu0 %v5816, 109
  %v5881 = vpop.permute.xlu0 %5880
  %5882 = vrot.lane.b32.xlu0 %v5817, 109
  %v5883 = vpop.permute.xlu0 %5882
  %5884 = vrot.lane.b32.xlu0 %v5818, 109
  %v5885 = vpop.permute.xlu0 %5884
  %5886 = vrot.lane.b32.xlu0 %v5819, 109
  %v5887 = vpop.permute.xlu0 %5886
  %5888 = vrot.lane.b32.xlu0 %v5820, 109
  %v5889 = vpop.permute.xlu0 %5888
  %5890 = vrot.lane.b32.xlu0 %v5821, 109
  %v5891 = vpop.permute.xlu0 %5890
  %5892 = vrot.lane.b32.xlu0 %v5822, 109
  %v5893 = vpop.permute.xlu0 %5892
  %5894 = vrot.lane.b32.xlu0 %v5823, 109
  %v5895 = vpop.permute.xlu0 %5894
  %5896 = vrot.lane.b32.xlu0 %v5824, 109
  %v5897 = vpop.permute.xlu0 %5896
  %5898 = vrot.lane.b32.xlu0 %v5825, 109
  %v5899 = vpop.permute.xlu0 %5898
  %5900 = vrot.lane.b32.xlu0 %v5826, 109
  %v5901 = vpop.permute.xlu0 %5900
  %5902 = vrot.lane.b32.xlu0 %v5827, 109
  %v5903 = vpop.permute.xlu0 %5902
  %5904 = vrot.lane.b32.xlu0 %v5828, 109
  %v5905 = vpop.permute.xlu0 %5904
  %5906 = vrot.lane.b32.xlu0 %v5829, 109
  %v5907 = vpop.permute.xlu0 %5906
  %5908 = vrot.lane.b32.xlu0 %v5830, 109
  %v5909 = vpop.permute.xlu0 %5908
  %5910 = vrot.lane.b32.xlu0 %v5831, 109
  %v5911 = vpop.permute.xlu0 %5910
  %5912 = vrot.lane.b32.xlu0 %v5832, 109
  %v5913 = vpop.permute.xlu0 %5912
  %5914 = vrot.lane.b32.xlu0 %v5833, 109
  %v5915 = vpop.permute.xlu0 %5914
  %5916 = vrot.lane.b32.xlu0 %v5834, 109
  %v5917 = vpop.permute.xlu0 %5916
  %5918 = vrot.lane.b32.xlu0 %v5835, 109
  %v5919 = vpop.permute.xlu0 %5918
  %v5920 = vsel %vm1505, %v5865, %v5867
  %v5921 = vsel %vm1505, %v5867, %v5869
  %v5922 = vsel %vm1505, %v5869, %v5871
  %v5923 = vsel %vm1505, %v5871, %v5873
  %v5924 = vsel %vm1505, %v5873, %v5875
  %v5925 = vsel %vm1505, %v5875, %v5877
  %v5926 = vsel %vm1505, %v5879, %v5881
  %v5927 = vsel %vm1505, %v5881, %v5883
  %v5928 = vsel %vm1505, %v5883, %v5885
  %v5929 = vsel %vm1505, %v5885, %v5887
  %v5930 = vsel %vm1505, %v5887, %v5889
  %v5931 = vsel %vm1505, %v5889, %v5891
  %v5932 = vsel %vm1505, %v5893, %v5895
  %v5933 = vsel %vm1505, %v5895, %v5897
  %v5934 = vsel %vm1505, %v5897, %v5899
  %v5935 = vsel %vm1505, %v5899, %v5901
  %v5936 = vsel %vm1505, %v5901, %v5903
  %v5937 = vsel %vm1505, %v5903, %v5905
  %v5938 = vsel %vm1505, %v5907, %v5909
  %v5939 = vsel %vm1505, %v5909, %v5911
  %v5940 = vsel %vm1505, %v5911, %v5913
  %v5941 = vsel %vm1505, %v5913, %v5915
  %v5942 = vsel %vm1505, %v5915, %v5917
  %v5943 = vsel %vm1505, %v5917, %v5919
  %5968 = vst [vmem:[#allocation4 + $0x600] sm:$0xff] %v5920
  %5969 = vst [vmem:[#allocation4 + $0x608] sm:$0xff] %v5921
  %5970 = vst [vmem:[#allocation4 + $0x610] sm:$0xff] %v5922
  %5971 = vst [vmem:[#allocation4 + $0x618] sm:$0xff] %v5923
  %5972 = vst [vmem:[#allocation4 + $0x620] sm:$0xff] %v5924
  %5973 = vst [vmem:[#allocation4 + $0x628] sm:$0xff] %v5925
  %5974 = vst [vmem:[#allocation4 + $0x630] sm:$0xff] %v5926
  %5975 = vst [vmem:[#allocation4 + $0x638] sm:$0xff] %v5927
  %5976 = vst [vmem:[#allocation4 + $0x640] sm:$0xff] %v5928
  %5977 = vst [vmem:[#allocation4 + $0x648] sm:$0xff] %v5929
  %5978 = vst [vmem:[#allocation4 + $0x650] sm:$0xff] %v5930
  %5979 = vst [vmem:[#allocation4 + $0x658] sm:$0xff] %v5931
  %5980 = vst [vmem:[#allocation4 + $0x660] sm:$0xff] %v5932
  %5981 = vst [vmem:[#allocation4 + $0x668] sm:$0xff] %v5933
  %5982 = vst [vmem:[#allocation4 + $0x670] sm:$0xff] %v5934
  %5983 = vst [vmem:[#allocation4 + $0x678] sm:$0xff] %v5935
  %5984 = vst [vmem:[#allocation4 + $0x680] sm:$0xff] %v5936
  %5985 = vst [vmem:[#allocation4 + $0x688] sm:$0xff] %v5937
  %5986 = vst [vmem:[#allocation4 + $0x690] sm:$0xff] %v5938
  %5987 = vst [vmem:[#allocation4 + $0x698] sm:$0xff] %v5939
  %5988 = vst [vmem:[#allocation4 + $0x6a0] sm:$0xff] %v5940
  %5989 = vst [vmem:[#allocation4 + $0x6a8] sm:$0xff] %v5941
  %5990 = vst [vmem:[#allocation4 + $0x6b0] sm:$0xff] %v5942
  %5991 = vst [vmem:[#allocation4 + $0x6b8] sm:$0xff] %v5943
  %v5992 = vld [vmem:[%s10] sm:$0xff]
  %v5993 = vld [vmem:[%s10 + $0x8] sm:$0xff]
  %v5994 = vld [vmem:[%s10 + $0x10] sm:$0xff]
  %v5995 = vld [vmem:[%s10 + $0x18] sm:$0xff]
  %v5996 = vld [vmem:[%s10 + $0x20] sm:$0xff]
  %v5997 = vld [vmem:[%s10 + $0x28] sm:$0xff]
  %v5998 = vld [vmem:[%s10 + $0x30] sm:$0xff]
  %v5999 = vld [vmem:[%s10 + $0x38] sm:$0xff]
  %v6000 = vld [vmem:[%s10 + $0x40] sm:$0xff]
  %v6001 = vld [vmem:[%s10 + $0x48] sm:$0xff]
  %v6002 = vld [vmem:[%s10 + $0x50] sm:$0xff]
  %v6003 = vld [vmem:[%s10 + $0x58] sm:$0xff]
  %v6004 = vld [vmem:[#allocation4] sm:$0xff]
  %v6005 = vld [vmem:[#allocation4 + $0x8] sm:$0xff]
  %v6006 = vld [vmem:[#allocation4 + $0x10] sm:$0xff]
  %v6007 = vld [vmem:[#allocation4 + $0x18] sm:$0xff]
  %v6008 = vld [vmem:[#allocation4 + $0x20] sm:$0xff]
  %v6009 = vld [vmem:[#allocation4 + $0x28] sm:$0xff]
  %v6010 = vld [vmem:[#allocation4 + $0x30] sm:$0xff]
  %v6011 = vld [vmem:[#allocation4 + $0x38] sm:$0xff]
  %v6012 = vld [vmem:[#allocation4 + $0x40] sm:$0xff]
  %v6013 = vld [vmem:[#allocation4 + $0x48] sm:$0xff]
  %v6014 = vld [vmem:[#allocation4 + $0x50] sm:$0xff]
  %v6015 = vld [vmem:[#allocation4 + $0x58] sm:$0xff]
  %v6016 = vld [vmem:[#allocation4 + $0x60] sm:$0xff]
  %v6017 = vld [vmem:[#allocation4 + $0x68] sm:$0xff]
  %v6018 = vld [vmem:[#allocation4 + $0x70] sm:$0xff]
  %v6019 = vld [vmem:[#allocation4 + $0x78] sm:$0xff]
  %v6020 = vld [vmem:[#allocation4 + $0x80] sm:$0xff]
  %v6021 = vld [vmem:[#allocation4 + $0x88] sm:$0xff]
  %v6022 = vld [vmem:[#allocation4 + $0x90] sm:$0xff]
  %v6023 = vld [vmem:[#allocation4 + $0x98] sm:$0xff]
  %v6024 = vld [vmem:[#allocation4 + $0xa0] sm:$0xff]
  %v6025 = vld [vmem:[#allocation4 + $0xa8] sm:$0xff]
  %v6026 = vld [vmem:[#allocation4 + $0xb0] sm:$0xff]
  %v6027 = vld [vmem:[#allocation4 + $0xb8] sm:$0xff]
  %v6028 = vld [vmem:[#allocation4 + $0xc0] sm:$0xff]
  %v6029 = vld [vmem:[#allocation4 + $0xc8] sm:$0xff]
  %v6030 = vld [vmem:[#allocation4 + $0xd0] sm:$0xff]
  %v6031 = vld [vmem:[#allocation4 + $0xd8] sm:$0xff]
  %v6032 = vld [vmem:[#allocation4 + $0xe0] sm:$0xff]
  %v6033 = vld [vmem:[#allocation4 + $0xe8] sm:$0xff]
  %v6034 = vld [vmem:[#allocation4 + $0xf0] sm:$0xff]
  %v6035 = vld [vmem:[#allocation4 + $0xf8] sm:$0xff]
  %v6036 = vld [vmem:[#allocation4 + $0x100] sm:$0xff]
  %v6037 = vld [vmem:[#allocation4 + $0x108] sm:$0xff]
  %v6038 = vld [vmem:[#allocation4 + $0x110] sm:$0xff]
  %v6039 = vld [vmem:[#allocation4 + $0x118] sm:$0xff]
  %v6040 = vld [vmem:[#allocation4 + $0x120] sm:$0xff]
  %v6041 = vld [vmem:[#allocation4 + $0x128] sm:$0xff]
  %v6042 = vld [vmem:[#allocation4 + $0x130] sm:$0xff]
  %v6043 = vld [vmem:[#allocation4 + $0x138] sm:$0xff]
  %v6044 = vld [vmem:[#allocation4 + $0x140] sm:$0xff]
  %v6045 = vld [vmem:[#allocation4 + $0x148] sm:$0xff]
  %v6046 = vld [vmem:[#allocation4 + $0x150] sm:$0xff]
  %v6047 = vld [vmem:[#allocation4 + $0x158] sm:$0xff]
  %v6048 = vld [vmem:[#allocation4 + $0x160] sm:$0xff]
  %v6049 = vld [vmem:[#allocation4 + $0x168] sm:$0xff]
  %v6050 = vld [vmem:[#allocation4 + $0x170] sm:$0xff]
  %v6051 = vld [vmem:[#allocation4 + $0x178] sm:$0xff]
  %v6052 = vld [vmem:[#allocation4 + $0x180] sm:$0xff]
  %v6053 = vld [vmem:[#allocation4 + $0x188] sm:$0xff]
  %v6054 = vld [vmem:[#allocation4 + $0x190] sm:$0xff]
  %v6055 = vld [vmem:[#allocation4 + $0x198] sm:$0xff]
  %v6056 = vld [vmem:[#allocation4 + $0x1a0] sm:$0xff]
  %v6057 = vld [vmem:[#allocation4 + $0x1a8] sm:$0xff]
  %v6058 = vld [vmem:[#allocation4 + $0x1b0] sm:$0xff]
  %v6059 = vld [vmem:[#allocation4 + $0x1b8] sm:$0xff]
  %v6060 = vld [vmem:[#allocation4 + $0x1c0] sm:$0xff]
  %v6061 = vld [vmem:[#allocation4 + $0x1c8] sm:$0xff]
  %v6062 = vld [vmem:[#allocation4 + $0x1d0] sm:$0xff]
  %v6063 = vld [vmem:[#allocation4 + $0x1d8] sm:$0xff]
  %v6064 = vld [vmem:[#allocation4 + $0x1e0] sm:$0xff]
  %v6065 = vld [vmem:[#allocation4 + $0x1e8] sm:$0xff]
  %v6066 = vld [vmem:[#allocation4 + $0x1f0] sm:$0xff]
  %v6067 = vld [vmem:[#allocation4 + $0x1f8] sm:$0xff]
  %v6068 = vld [vmem:[#allocation4 + $0x200] sm:$0xff]
  %v6069 = vld [vmem:[#allocation4 + $0x208] sm:$0xff]
  %v6070 = vld [vmem:[#allocation4 + $0x210] sm:$0xff]
  %v6071 = vld [vmem:[#allocation4 + $0x218] sm:$0xff]
  %v6072 = vld [vmem:[#allocation4 + $0x220] sm:$0xff]
  %v6073 = vld [vmem:[#allocation4 + $0x228] sm:$0xff]
  %v6074 = vld [vmem:[#allocation4 + $0x230] sm:$0xff]
  %v6075 = vld [vmem:[#allocation4 + $0x238] sm:$0xff]
  %v6076 = vld [vmem:[#allocation4 + $0x240] sm:$0xff]
  %v6077 = vld [vmem:[#allocation4 + $0x248] sm:$0xff]
  %v6078 = vld [vmem:[#allocation4 + $0x250] sm:$0xff]
  %v6079 = vld [vmem:[#allocation4 + $0x258] sm:$0xff]
  %v6080 = vld [vmem:[#allocation4 + $0x260] sm:$0xff]
  %v6081 = vld [vmem:[#allocation4 + $0x268] sm:$0xff]
  %v6082 = vld [vmem:[#allocation4 + $0x270] sm:$0xff]
  %v6083 = vld [vmem:[#allocation4 + $0x278] sm:$0xff]
  %v6084 = vld [vmem:[#allocation4 + $0x280] sm:$0xff]
  %v6085 = vld [vmem:[#allocation4 + $0x288] sm:$0xff]
  %v6086 = vld [vmem:[#allocation4 + $0x290] sm:$0xff]
  %v6087 = vld [vmem:[#allocation4 + $0x298] sm:$0xff]
  %v6088 = vld [vmem:[#allocation4 + $0x2a0] sm:$0xff]
  %v6089 = vld [vmem:[#allocation4 + $0x2a8] sm:$0xff]
  %v6090 = vld [vmem:[#allocation4 + $0x2b0] sm:$0xff]
  %v6091 = vld [vmem:[#allocation4 + $0x2b8] sm:$0xff]
  %v6092 = vld [vmem:[#allocation4 + $0x2c0] sm:$0xff]
  %v6093 = vld [vmem:[#allocation4 + $0x2c8] sm:$0xff]
  %v6094 = vld [vmem:[#allocation4 + $0x2d0] sm:$0xff]
  %v6095 = vld [vmem:[#allocation4 + $0x2d8] sm:$0xff]
  %v6096 = vld [vmem:[#allocation4 + $0x2e0] sm:$0xff]
  %v6097 = vld [vmem:[#allocation4 + $0x2e8] sm:$0xff]
  %v6098 = vld [vmem:[#allocation4 + $0x2f0] sm:$0xff]
  %v6099 = vld [vmem:[#allocation4 + $0x2f8] sm:$0xff]
  %v6100 = vld [vmem:[#allocation4 + $0x300] sm:$0xff]
  %v6101 = vld [vmem:[#allocation4 + $0x308] sm:$0xff]
  %v6102 = vld [vmem:[#allocation4 + $0x310] sm:$0xff]
  %v6103 = vld [vmem:[#allocation4 + $0x318] sm:$0xff]
  %v6104 = vld [vmem:[#allocation4 + $0x320] sm:$0xff]
  %v6105 = vld [vmem:[#allocation4 + $0x328] sm:$0xff]
  %v6106 = vld [vmem:[#allocation4 + $0x330] sm:$0xff]
  %v6107 = vld [vmem:[#allocation4 + $0x338] sm:$0xff]
  %v6108 = vld [vmem:[#allocation4 + $0x340] sm:$0xff]
  %v6109 = vld [vmem:[#allocation4 + $0x348] sm:$0xff]
  %v6110 = vld [vmem:[#allocation4 + $0x350] sm:$0xff]
  %v6111 = vld [vmem:[#allocation4 + $0x358] sm:$0xff]
  %v6112 = vld [vmem:[#allocation4 + $0x360] sm:$0xff]
  %v6113 = vld [vmem:[#allocation4 + $0x368] sm:$0xff]
  %v6114 = vld [vmem:[#allocation4 + $0x370] sm:$0xff]
  %v6115 = vld [vmem:[#allocation4 + $0x378] sm:$0xff]
  %v6116 = vld [vmem:[#allocation4 + $0x380] sm:$0xff]
  %v6117 = vld [vmem:[#allocation4 + $0x388] sm:$0xff]
  %v6118 = vld [vmem:[#allocation4 + $0x390] sm:$0xff]
  %v6119 = vld [vmem:[#allocation4 + $0x398] sm:$0xff]
  %v6120 = vld [vmem:[#allocation4 + $0x3a0] sm:$0xff]
  %v6121 = vld [vmem:[#allocation4 + $0x3a8] sm:$0xff]
  %v6122 = vld [vmem:[#allocation4 + $0x3b0] sm:$0xff]
  %v6123 = vld [vmem:[#allocation4 + $0x3b8] sm:$0xff]
  %v6124 = vld [vmem:[#allocation4 + $0x3c0] sm:$0xff]
  %v6125 = vld [vmem:[#allocation4 + $0x3c8] sm:$0xff]
  %v6126 = vld [vmem:[#allocation4 + $0x3d0] sm:$0xff]
  %v6127 = vld [vmem:[#allocation4 + $0x3d8] sm:$0xff]
  %v6128 = vld [vmem:[#allocation4 + $0x3e0] sm:$0xff]
  %v6129 = vld [vmem:[#allocation4 + $0x3e8] sm:$0xff]
  %v6130 = vld [vmem:[#allocation4 + $0x3f0] sm:$0xff]
  %v6131 = vld [vmem:[#allocation4 + $0x3f8] sm:$0xff]
  %v6132 = vld [vmem:[#allocation4 + $0x400] sm:$0xff]
  %v6133 = vld [vmem:[#allocation4 + $0x408] sm:$0xff]
  %v6134 = vld [vmem:[#allocation4 + $0x410] sm:$0xff]
  %v6135 = vld [vmem:[#allocation4 + $0x418] sm:$0xff]
  %v6136 = vld [vmem:[#allocation4 + $0x420] sm:$0xff]
  %v6137 = vld [vmem:[#allocation4 + $0x428] sm:$0xff]
  %v6138 = vld [vmem:[#allocation4 + $0x430] sm:$0xff]
  %v6139 = vld [vmem:[#allocation4 + $0x438] sm:$0xff]
  %v6140 = vld [vmem:[#allocation4 + $0x440] sm:$0xff]
  %v6141 = vld [vmem:[#allocation4 + $0x448] sm:$0xff]
  %v6142 = vld [vmem:[#allocation4 + $0x450] sm:$0xff]
  %v6143 = vld [vmem:[#allocation4 + $0x458] sm:$0xff]
  %v6144 = vld [vmem:[#allocation4 + $0x460] sm:$0xff]
  %v6145 = vld [vmem:[#allocation4 + $0x468] sm:$0xff]
  %v6146 = vld [vmem:[#allocation4 + $0x470] sm:$0xff]
  %v6147 = vld [vmem:[#allocation4 + $0x478] sm:$0xff]
  %v6148 = vld [vmem:[#allocation4 + $0x480] sm:$0xff]
  %v6149 = vld [vmem:[#allocation4 + $0x488] sm:$0xff]
  %v6150 = vld [vmem:[#allocation4 + $0x490] sm:$0xff]
  %v6151 = vld [vmem:[#allocation4 + $0x498] sm:$0xff]
  %v6152 = vld [vmem:[#allocation4 + $0x4a0] sm:$0xff]
  %v6153 = vld [vmem:[#allocation4 + $0x4a8] sm:$0xff]
  %v6154 = vld [vmem:[#allocation4 + $0x4b0] sm:$0xff]
  %v6155 = vld [vmem:[#allocation4 + $0x4b8] sm:$0xff]
  %v6156 = vld [vmem:[#allocation4 + $0x4c0] sm:$0xff]
  %v6157 = vld [vmem:[#allocation4 + $0x4c8] sm:$0xff]
  %v6158 = vld [vmem:[#allocation4 + $0x4d0] sm:$0xff]
  %v6159 = vld [vmem:[#allocation4 + $0x4d8] sm:$0xff]
  %v6160 = vld [vmem:[#allocation4 + $0x4e0] sm:$0xff]
  %v6161 = vld [vmem:[#allocation4 + $0x4e8] sm:$0xff]
  %v6162 = vld [vmem:[#allocation4 + $0x4f0] sm:$0xff]
  %v6163 = vld [vmem:[#allocation4 + $0x4f8] sm:$0xff]
  %v6164 = vld [vmem:[#allocation4 + $0x500] sm:$0xff]
  %v6165 = vld [vmem:[#allocation4 + $0x508] sm:$0xff]
  %v6166 = vld [vmem:[#allocation4 + $0x510] sm:$0xff]
  %v6167 = vld [vmem:[#allocation4 + $0x518] sm:$0xff]
  %v6168 = vld [vmem:[#allocation4 + $0x520] sm:$0xff]
  %v6169 = vld [vmem:[#allocation4 + $0x528] sm:$0xff]
  %v6170 = vld [vmem:[#allocation4 + $0x530] sm:$0xff]
  %v6171 = vld [vmem:[#allocation4 + $0x538] sm:$0xff]
  %v6172 = vld [vmem:[#allocation4 + $0x540] sm:$0xff]
  %v6173 = vld [vmem:[#allocation4 + $0x548] sm:$0xff]
  %v6174 = vld [vmem:[#allocation4 + $0x550] sm:$0xff]
  %v6175 = vld [vmem:[#allocation4 + $0x558] sm:$0xff]
  %v6176 = vld [vmem:[#allocation4 + $0x560] sm:$0xff]
  %v6177 = vld [vmem:[#allocation4 + $0x568] sm:$0xff]
  %v6178 = vld [vmem:[#allocation4 + $0x570] sm:$0xff]
  %v6179 = vld [vmem:[#allocation4 + $0x578] sm:$0xff]
  %v6180 = vld [vmem:[#allocation4 + $0x580] sm:$0xff]
  %v6181 = vld [vmem:[#allocation4 + $0x588] sm:$0xff]
  %v6182 = vld [vmem:[#allocation4 + $0x590] sm:$0xff]
  %v6183 = vld [vmem:[#allocation4 + $0x598] sm:$0xff]
  %v6184 = vld [vmem:[#allocation4 + $0x5a0] sm:$0xff]
  %v6185 = vld [vmem:[#allocation4 + $0x5a8] sm:$0xff]
  %v6186 = vld [vmem:[#allocation4 + $0x5b0] sm:$0xff]
  %v6187 = vld [vmem:[#allocation4 + $0x5b8] sm:$0xff]
  %v6188 = vld [vmem:[#allocation4 + $0x5c0] sm:$0xff]
  %v6189 = vld [vmem:[#allocation4 + $0x5c8] sm:$0xff]
  %v6190 = vld [vmem:[#allocation4 + $0x5d0] sm:$0xff]
  %v6191 = vld [vmem:[#allocation4 + $0x5d8] sm:$0xff]
  %v6192 = vld [vmem:[#allocation4 + $0x5e0] sm:$0xff]
  %v6193 = vld [vmem:[#allocation4 + $0x5e8] sm:$0xff]
  %v6194 = vld [vmem:[#allocation4 + $0x5f0] sm:$0xff]
  %v6195 = vld [vmem:[#allocation4 + $0x5f8] sm:$0xff]
  %v6196 = vld [vmem:[#allocation4 + $0x600] sm:$0xff]
  %v6197 = vld [vmem:[#allocation4 + $0x608] sm:$0xff]
  %v6198 = vld [vmem:[#allocation4 + $0x610] sm:$0xff]
  %v6199 = vld [vmem:[#allocation4 + $0x618] sm:$0xff]
  %v6200 = vld [vmem:[#allocation4 + $0x620] sm:$0xff]
  %v6201 = vld [vmem:[#allocation4 + $0x628] sm:$0xff]
  %v6202 = vld [vmem:[#allocation4 + $0x630] sm:$0xff]
  %v6203 = vld [vmem:[#allocation4 + $0x638] sm:$0xff]
  %v6204 = vld [vmem:[#allocation4 + $0x640] sm:$0xff]
  %v6205 = vld [vmem:[#allocation4 + $0x648] sm:$0xff]
  %v6206 = vld [vmem:[#allocation4 + $0x650] sm:$0xff]
  %v6207 = vld [vmem:[#allocation4 + $0x658] sm:$0xff]
  %v6208 = vld [vmem:[#allocation4 + $0x660] sm:$0xff]
  %v6209 = vld [vmem:[#allocation4 + $0x668] sm:$0xff]
  %v6210 = vld [vmem:[#allocation4 + $0x670] sm:$0xff]
  %v6211 = vld [vmem:[#allocation4 + $0x678] sm:$0xff]
  %v6212 = vld [vmem:[#allocation4 + $0x680] sm:$0xff]
  %v6213 = vld [vmem:[#allocation4 + $0x688] sm:$0xff]
  %v6214 = vld [vmem:[#allocation4 + $0x690] sm:$0xff]
  %v6215 = vld [vmem:[#allocation4 + $0x698] sm:$0xff]
  %v6216 = vld [vmem:[#allocation4 + $0x6a0] sm:$0xff]
  %v6217 = vld [vmem:[#allocation4 + $0x6a8] sm:$0xff]
  %v6218 = vld [vmem:[#allocation4 + $0x6b0] sm:$0xff]
  %v6219 = vld [vmem:[#allocation4 + $0x6b8] sm:$0xff]
  %v6221 = vsel %vm3757, %v5994, 0
  %v6224 = vsel %vm3757, %v5997, 0
  %v6227 = vsel %vm3757, %v6000, 0
  %v6230 = vsel %vm3757, %v6003, 0
  %6232 = vmatprep.subr.mxu0 %v6005
  %6233 = vmatpush1.msra.mxu0 %v6004
  %6234 = vmatprep.subr.mxu0 %v6011
  %6235 = vmatpush1.msra.mxu0 %v6010
  %6236 = vmatprep.subr.mxu0 %v6017
  %6237 = vmatpush1.msra.mxu0 %v6016
  %6238 = vmatprep.subr.mxu0 %v6023
  %6239 = vmatpush1.msra.mxu0 %v6022
  %6240 = vmatprep.subr.mxu0 %v6029
  %6241 = vmatpush1.msra.mxu0 %v6028
  %6242 = vmatprep.subr.mxu0 %v6035
  %6243 = vmatpush1.msra.mxu0 %v6034
  %6244 = vmatprep.subr.mxu0 %v6041
  %6245 = vmatpush1.msra.mxu0 %v6040
  %6246 = vmatprep.subr.mxu0 %v6047
  %6247 = vmatpush1.msra.mxu0 %v6046
  %6248 = vmatprep.subr.mxu0 %v6053
  %6249 = vmatpush1.msra.mxu0 %v6052
  %6250 = vmatprep.subr.mxu0 %v6059
  %6251 = vmatpush1.msra.mxu0 %v6058
  %6252 = vmatprep.subr.mxu0 %v6065
  %6253 = vmatpush1.msra.mxu0 %v6064
  %6254 = vmatprep.subr.mxu0 %v6071
  %6255 = vmatpush1.msra.mxu0 %v6070
  %6256 = vmatprep.subr.mxu0 %v6077
  %6257 = vmatpush1.msra.mxu0 %v6076
  %6258 = vmatprep.subr.mxu0 %v6083
  %6259 = vmatpush1.msra.mxu0 %v6082
  %6260 = vmatprep.subr.mxu0 %v6089
  %6261 = vmatpush1.msra.mxu0 %v6088
  %6262 = vmatprep.subr.mxu0 %v6095
  %6263 = vmatpush1.msra.mxu0 %v6094
  %6264 = vmatprep.subr.mxu0 %v6101
  %6265 = vmatpush1.msra.mxu0 %v6100
  %6266 = vmatprep.subr.mxu0 %v6107
  %6267 = vmatpush1.msra.mxu0 %v6106
  %6268 = vmatprep.subr.mxu0 %v6113
  %6269 = vmatpush1.msra.mxu0 %v6112
  %6270 = vmatprep.subr.mxu0 %v6119
  %6271 = vmatpush1.msra.mxu0 %v6118
  %6272 = vmatprep.subr.mxu0 %v6125
  %6273 = vmatpush1.msra.mxu0 %v6124
  %6274 = vmatprep.subr.mxu0 %v6131
  %6275 = vmatpush1.msra.mxu0 %v6130
  %6276 = vmatprep.subr.mxu0 %v6137
  %6277 = vmatpush1.msra.mxu0 %v6136
  %6278 = vmatprep.subr.mxu0 %v6143
  %6279 = vmatpush1.msra.mxu0 %v6142
  %6280 = vmatprep.subr.mxu0 %v6149
  %6281 = vmatpush1.msra.mxu0 %v6148
  %6282 = vmatprep.subr.mxu0 %v6155
  %6283 = vmatpush1.msra.mxu0 %v6154
  %6284 = vmatprep.subr.mxu0 %v6161
  %6285 = vmatpush1.msra.mxu0 %v6160
  %6286 = vmatprep.subr.mxu0 %v6167
  %6287 = vmatpush1.msra.mxu0 %v6166
  %6288 = vmatprep.subr.mxu0 %v6173
  %6289 = vmatpush1.msra.mxu0 %v6172
  %6290 = vmatprep.subr.mxu0 %v6179
  %6291 = vmatpush1.msra.mxu0 %v6178
  %6292 = vmatprep.subr.mxu0 %v6185
  %6293 = vmatpush1.msra.mxu0 %v6184
  %6294 = vmatprep.subr.mxu0 %v6191
  %6295 = vmatpush1.msra.mxu0 %v6190
  %6296 = vmatprep.mubr.f32.mxu0 %v5993
  %6297 = vmatmul.mubr.f32.gmra.mrb[0].mxu0 %v5992
  %v6298 = vpop.f32.mrb[0].mxu0
  %v6299 = vadd.f32 0.0, %v6298
  %v6300 = vpop.f32.mrb[0].mxu0
  %v6301 = vadd.f32 0.0, %v6300
  %6302 = vmatprep.mubr.f32.mxu0 %v5996
  %6303 = vmatmul.mubr.f32.gmra.mrb[0].mxu0 %v5995
  %v6304 = vpop.f32.mrb[0].mxu0
  %v6305 = vadd.f32 0.0, %v6304
  %v6306 = vpop.f32.mrb[0].mxu0
  %v6307 = vadd.f32 0.0, %v6306
  %6308 = vmatprep.mubr.f32.mxu0 %v5999
  %6309 = vmatmul.mubr.f32.gmra.mrb[0].mxu0 %v5998
  %v6310 = vpop.f32.mrb[0].mxu0
  %v6311 = vadd.f32 0.0, %v6310
  %v6312 = vpop.f32.mrb[0].mxu0
  %v6313 = vadd.f32 0.0, %v6312
  %6314 = vmatprep.mubr.f32.mxu0 %v6002
  %6315 = vmatmul.mubr.f32.gmra.mrb[0].mxu0 %v6001
  %v6316 = vpop.f32.mrb[0].mxu0
  %v6317 = vadd.f32 0.0, %v6316
  %v6318 = vpop.f32.mrb[0].mxu0
  %v6319 = vadd.f32 0.0, %v6318
  %6320 = vdwg.mxu0
  %6321 = vmatprep.subr.mxu0 %v6197
  %6322 = vmatpush1.msra.mxu0 %v6196
  %6323 = vmatprep.subr.mxu0 %v6203
  %6324 = vmatpush1.msra.mxu0 %v6202
  %6325 = vmatprep.subr.mxu0 %v6209
  %6326 = vmatpush1.msra.mxu0 %v6208
  %6327 = vmatprep.subr.mxu0 %v6215
  %6328 = vmatpush1.msra.mxu0 %v6214
  %6329 = vmatprep.subr.mxu0 0.0
  %6330 = vmatpush1.msra.mxu0 0.0
  %6331 = vmatprep.subr.mxu0 0.0
  %6332 = vmatpush1.msra.mxu0 0.0
  %6333 = vmatprep.subr.mxu0 0.0
  %6334 = vmatpush1.msra.mxu0 0.0
  %6335 = vmatprep.subr.mxu0 0.0
  %6336 = vmatpush1.msra.mxu0 0.0
  %6337 = vmatprep.subr.mxu0 0.0
  %6338 = vmatpush1.msra.mxu0 0.0
  %6339 = vmatprep.subr.mxu0 0.0
  %6340 = vmatpush1.msra.mxu0 0.0
  %6341 = vmatprep.subr.mxu0 0.0
  %6342 = vmatpush1.msra.mxu0 0.0
  %6343 = vmatprep.subr.mxu0 0.0
  %6344 = vmatpush1.msra.mxu0 0.0
  %6345 = vmatprep.subr.mxu0 0.0
  %6346 = vmatpush1.msra.mxu0 0.0
  %6347 = vmatprep.subr.mxu0 0.0
  %6348 = vmatpush1.msra.mxu0 0.0
  %6349 = vmatprep.subr.mxu0 0.0
  %6350 = vmatpush1.msra.mxu0 0.0
  %6351 = vmatprep.subr.mxu0 0.0
  %6352 = vmatpush1.msra.mxu0 0.0
  %6353 = vmatprep.subr.mxu0 0.0
  %6354 = vmatpush1.msra.mxu0 0.0
  %6355 = vmatprep.subr.mxu0 0.0
  %6356 = vmatpush1.msra.mxu0 0.0
  %6357 = vmatprep.subr.mxu0 0.0
  %6358 = vmatpush1.msra.mxu0 0.0
  %6359 = vmatprep.subr.mxu0 0.0
  %6360 = vmatpush1.msra.mxu0 0.0
  %6361 = vmatprep.subr.mxu0 0.0
  %6362 = vmatpush1.msra.mxu0 0.0
  %6363 = vmatprep.subr.mxu0 0.0
  %6364 = vmatpush1.msra.mxu0 0.0
  %6365 = vmatprep.subr.mxu0 0.0
  %6366 = vmatpush1.msra.mxu0 0.0
  %6367 = vmatprep.subr.mxu0 0.0
  %6368 = vmatpush1.msra.mxu0 0.0
  %6369 = vmatprep.subr.mxu0 0.0
  %6370 = vmatpush1.msra.mxu0 0.0
  %6371 = vmatprep.subr.mxu0 0.0
  %6372 = vmatpush1.msra.mxu0 0.0
  %6373 = vmatprep.subr.mxu0 0.0
  %6374 = vmatpush1.msra.mxu0 0.0
  %6375 = vmatprep.subr.mxu0 0.0
  %6376 = vmatpush1.msra.mxu0 0.0
  %6377 = vmatprep.subr.mxu0 0.0
  %6378 = vmatpush1.msra.mxu0 0.0
  %6379 = vmatprep.subr.mxu0 0.0
  %6380 = vmatpush1.msra.mxu0 0.0
  %6381 = vmatprep.subr.mxu0 0.0
  %6382 = vmatpush1.msra.mxu0 0.0
  %6383 = vmatprep.subr.mxu0 0.0
  %6384 = vmatpush1.msra.mxu0 0.0
  %6385 = vmatprep.mubr.f32.mxu0 0.0
  %6386 = vmatmul.mubr.f32.gmra.mrb[0].mxu0 %v6221
  %v6387 = vpop.f32.mrb[0].mxu0
  %v6388 = vadd.f32 %v6299, %v6387
  %v6389 = vpop.f32.mrb[0].mxu0
  %v6390 = vadd.f32 %v6301, %v6389
  %6391 = vmatprep.mubr.f32.mxu0 0.0
  %6392 = vmatmul.mubr.f32.gmra.mrb[0].mxu0 %v6224
  %v6393 = vpop.f32.mrb[0].mxu0
  %v6394 = vadd.f32 %v6305, %v6393
  %v6395 = vpop.f32.mrb[0].mxu0
  %v6396 = vadd.f32 %v6307, %v6395
  %6397 = vmatprep.mubr.f32.mxu0 0.0
  %6398 = vmatmul.mubr.f32.gmra.mrb[0].mxu0 %v6227
  %v6399 = vpop.f32.mrb[0].mxu0
  %v6400 = vadd.f32 %v6311, %v6399
  %v6401 = vpop.f32.mrb[0].mxu0
  %v6402 = vadd.f32 %v6313, %v6401
  %6403 = vmatprep.mubr.f32.mxu0 0.0
  %6404 = vmatmul.mubr.f32.gmra.mrb[0].mxu0 %v6230
  %v6405 = vpop.f32.mrb[0].mxu0
  %v6406 = vadd.f32 %v6317, %v6405
  %v6407 = vpop.f32.mrb[0].mxu0
  %v6408 = vadd.f32 %v6319, %v6407
  %6409 = vdwg.mxu0
  %6410 = vmatprep.subr.mxu0 %v6007
  %6411 = vmatpush1.msra.mxu0 %v6006
  %6412 = vmatprep.subr.mxu0 %v6013
  %6413 = vmatpush1.msra.mxu0 %v6012
  %6414 = vmatprep.subr.mxu0 %v6019
  %6415 = vmatpush1.msra.mxu0 %v6018
  %6416 = vmatprep.subr.mxu0 %v6025
  %6417 = vmatpush1.msra.mxu0 %v6024
  %6418 = vmatprep.subr.mxu0 %v6031
  %6419 = vmatpush1.msra.mxu0 %v6030
  %6420 = vmatprep.subr.mxu0 %v6037
  %6421 = vmatpush1.msra.mxu0 %v6036
  %6422 = vmatprep.subr.mxu0 %v6043
  %6423 = vmatpush1.msra.mxu0 %v6042
  %6424 = vmatprep.subr.mxu0 %v6049
  %6425 = vmatpush1.msra.mxu0 %v6048
  %6426 = vmatprep.subr.mxu0 %v6055
  %6427 = vmatpush1.msra.mxu0 %v6054
  %6428 = vmatprep.subr.mxu0 %v6061
  %6429 = vmatpush1.msra.mxu0 %v6060
  %6430 = vmatprep.subr.mxu0 %v6067
  %6431 = vmatpush1.msra.mxu0 %v6066
  %6432 = vmatprep.subr.mxu0 %v6073
  %6433 = vmatpush1.msra.mxu0 %v6072
  %6434 = vmatprep.subr.mxu0 %v6079
  %6435 = vmatpush1.msra.mxu0 %v6078
  %6436 = vmatprep.subr.mxu0 %v6085
  %6437 = vmatpush1.msra.mxu0 %v6084
  %6438 = vmatprep.subr.mxu0 %v6091
  %6439 = vmatpush1.msra.mxu0 %v6090
  %6440 = vmatprep.subr.mxu0 %v6097
  %6441 = vmatpush1.msra.mxu0 %v6096
  %6442 = vmatprep.subr.mxu0 %v6103
  %6443 = vmatpush1.msra.mxu0 %v6102
  %6444 = vmatprep.subr.mxu0 %v6109
  %6445 = vmatpush1.msra.mxu0 %v6108
  %6446 = vmatprep.subr.mxu0 %v6115
  %6447 = vmatpush1.msra.mxu0 %v6114
  %6448 = vmatprep.subr.mxu0 %v6121
  %6449 = vmatpush1.msra.mxu0 %v6120
  %6450 = vmatprep.subr.mxu0 %v6127
  %6451 = vmatpush1.msra.mxu0 %v6126
  %6452 = vmatprep.subr.mxu0 %v6133
  %6453 = vmatpush1.msra.mxu0 %v6132
  %6454 = vmatprep.subr.mxu0 %v6139
  %6455 = vmatpush1.msra.mxu0 %v6138
  %6456 = vmatprep.subr.mxu0 %v6145
  %6457 = vmatpush1.msra.mxu0 %v6144
  %6458 = vmatprep.subr.mxu0 %v6151
  %6459 = vmatpush1.msra.mxu0 %v6150
  %6460 = vmatprep.subr.mxu0 %v6157
  %6461 = vmatpush1.msra.mxu0 %v6156
  %6462 = vmatprep.subr.mxu0 %v6163
  %6463 = vmatpush1.msra.mxu0 %v6162
  %6464 = vmatprep.subr.mxu0 %v6169
  %6465 = vmatpush1.msra.mxu0 %v6168
  %6466 = vmatprep.subr.mxu0 %v6175
  %6467 = vmatpush1.msra.mxu0 %v6174
  %6468 = vmatprep.subr.mxu0 %v6181
  %6469 = vmatpush1.msra.mxu0 %v6180
  %6470 = vmatprep.subr.mxu0 %v6187
  %6471 = vmatpush1.msra.mxu0 %v6186
  %6472 = vmatprep.subr.mxu0 %v6193
  %6473 = vmatpush1.msra.mxu0 %v6192
  %6474 = vmatprep.mubr.f32.mxu0 %v5993
  %6475 = vmatmul.mubr.f32.gmra.mrb[0].mxu0 %v5992
  %v6476 = vpop.f32.mrb[0].mxu0
  %v6477 = vadd.f32 0.0, %v6476
  %v6478 = vpop.f32.mrb[0].mxu0
  %v6479 = vadd.f32 0.0, %v6478
  %6480 = vmatprep.mubr.f32.mxu0 %v5996
  %6481 = vmatmul.mubr.f32.gmra.mrb[0].mxu0 %v5995
  %v6482 = vpop.f32.mrb[0].mxu0
  %v6483 = vadd.f32 0.0, %v6482
  %v6484 = vpop.f32.mrb[0].mxu0
  %v6485 = vadd.f32 0.0, %v6484
  %6486 = vmatprep.mubr.f32.mxu0 %v5999
  %6487 = vmatmul.mubr.f32.gmra.mrb[0].mxu0 %v5998
  %v6488 = vpop.f32.mrb[0].mxu0
  %v6489 = vadd.f32 0.0, %v6488
  %v6490 = vpop.f32.mrb[0].mxu0
  %v6491 = vadd.f32 0.0, %v6490
  %6492 = vmatprep.mubr.f32.mxu0 %v6002
  %6493 = vmatmul.mubr.f32.gmra.mrb[0].mxu0 %v6001
  %v6494 = vpop.f32.mrb[0].mxu0
  %v6495 = vadd.f32 0.0, %v6494
  %v6496 = vpop.f32.mrb[0].mxu0
  %v6497 = vadd.f32 0.0, %v6496
  %6498 = vdwg.mxu0
  %6499 = vmatprep.subr.mxu0 %v6199
  %6500 = vmatpush1.msra.mxu0 %v6198
  %6501 = vmatprep.subr.mxu0 %v6205
  %6502 = vmatpush1.msra.mxu0 %v6204
  %6503 = vmatprep.subr.mxu0 %v6211
  %6504 = vmatpush1.msra.mxu0 %v6210
  %6505 = vmatprep.subr.mxu0 %v6217
  %6506 = vmatpush1.msra.mxu0 %v6216
  %6507 = vmatprep.subr.mxu0 0.0
  %6508 = vmatpush1.msra.mxu0 0.0
  %6509 = vmatprep.subr.mxu0 0.0
  %6510 = vmatpush1.msra.mxu0 0.0
  %6511 = vmatprep.subr.mxu0 0.0
  %6512 = vmatpush1.msra.mxu0 0.0
  %6513 = vmatprep.subr.mxu0 0.0
  %6514 = vmatpush1.msra.mxu0 0.0
  %6515 = vmatprep.subr.mxu0 0.0
  %6516 = vmatpush1.msra.mxu0 0.0
  %6517 = vmatprep.subr.mxu0 0.0
  %6518 = vmatpush1.msra.mxu0 0.0
  %6519 = vmatprep.subr.mxu0 0.0
  %6520 = vmatpush1.msra.mxu0 0.0
  %6521 = vmatprep.subr.mxu0 0.0
  %6522 = vmatpush1.msra.mxu0 0.0
  %6523 = vmatprep.subr.mxu0 0.0
  %6524 = vmatpush1.msra.mxu0 0.0
  %6525 = vmatprep.subr.mxu0 0.0
  %6526 = vmatpush1.msra.mxu0 0.0
  %6527 = vmatprep.subr.mxu0 0.0
  %6528 = vmatpush1.msra.mxu0 0.0
  %6529 = vmatprep.subr.mxu0 0.0
  %6530 = vmatpush1.msra.mxu0 0.0
  %6531 = vmatprep.subr.mxu0 0.0
  %6532 = vmatpush1.msra.mxu0 0.0
  %6533 = vmatprep.subr.mxu0 0.0
  %6534 = vmatpush1.msra.mxu0 0.0
  %6535 = vmatprep.subr.mxu0 0.0
  %6536 = vmatpush1.msra.mxu0 0.0
  %6537 = vmatprep.subr.mxu0 0.0
  %6538 = vmatpush1.msra.mxu0 0.0
  %6539 = vmatprep.subr.mxu0 0.0
  %6540 = vmatpush1.msra.mxu0 0.0
  %6541 = vmatprep.subr.mxu0 0.0
  %6542 = vmatpush1.msra.mxu0 0.0
  %6543 = vmatprep.subr.mxu0 0.0
  %6544 = vmatpush1.msra.mxu0 0.0
  %6545 = vmatprep.subr.mxu0 0.0
  %6546 = vmatpush1.msra.mxu0 0.0
  %6547 = vmatprep.subr.mxu0 0.0
  %6548 = vmatpush1.msra.mxu0 0.0
  %6549 = vmatprep.subr.mxu0 0.0
  %6550 = vmatpush1.msra.mxu0 0.0
  %6551 = vmatprep.subr.mxu0 0.0
  %6552 = vmatpush1.msra.mxu0 0.0
  %6553 = vmatprep.subr.mxu0 0.0
  %6554 = vmatpush1.msra.mxu0 0.0
  %6555 = vmatprep.subr.mxu0 0.0
  %6556 = vmatpush1.msra.mxu0 0.0
  %6557 = vmatprep.subr.mxu0 0.0
  %6558 = vmatpush1.msra.mxu0 0.0
  %6559 = vmatprep.subr.mxu0 0.0
  %6560 = vmatpush1.msra.mxu0 0.0
  %6561 = vmatprep.subr.mxu0 0.0
  %6562 = vmatpush1.msra.mxu0 0.0
  %6563 = vmatprep.mubr.f32.mxu0 0.0
  %6564 = vmatmul.mubr.f32.gmra.mrb[0].mxu0 %v6221
  %v6565 = vpop.f32.mrb[0].mxu0
  %v6566 = vadd.f32 %v6477, %v6565
  %v6567 = vpop.f32.mrb[0].mxu0
  %v6568 = vadd.f32 %v6479, %v6567
  %6569 = vmatprep.mubr.f32.mxu0 0.0
  %6570 = vmatmul.mubr.f32.gmra.mrb[0].mxu0 %v6224
  %v6571 = vpop.f32.mrb[0].mxu0
  %v6572 = vadd.f32 %v6483, %v6571
  %v6573 = vpop.f32.mrb[0].mxu0
  %v6574 = vadd.f32 %v6485, %v6573
  %6575 = vmatprep.mubr.f32.mxu0 0.0
  %6576 = vmatmul.mubr.f32.gmra.mrb[0].mxu0 %v6227
  %v6577 = vpop.f32.mrb[0].mxu0
  %v6578 = vadd.f32 %v6489, %v6577
  %v6579 = vpop.f32.mrb[0].mxu0
  %v6580 = vadd.f32 %v6491, %v6579
  %6581 = vmatprep.mubr.f32.mxu0 0.0
  %6582 = vmatmul.mubr.f32.gmra.mrb[0].mxu0 %v6230
  %v6583 = vpop.f32.mrb[0].mxu0
  %v6584 = vadd.f32 %v6495, %v6583
  %v6585 = vpop.f32.mrb[0].mxu0
  %v6586 = vadd.f32 %v6497, %v6585
  %6587 = vdwg.mxu0
  %6588 = vmatprep.subr.mxu0 %v6009
  %6589 = vmatpush1.msra.mxu0 %v6008
  %6590 = vmatprep.subr.mxu0 %v6015
  %6591 = vmatpush1.msra.mxu0 %v6014
  %6592 = vmatprep.subr.mxu0 %v6021
  %6593 = vmatpush1.msra.mxu0 %v6020
  %6594 = vmatprep.subr.mxu0 %v6027
  %6595 = vmatpush1.msra.mxu0 %v6026
  %6596 = vmatprep.subr.mxu0 %v6033
  %6597 = vmatpush1.msra.mxu0 %v6032
  %6598 = vmatprep.subr.mxu0 %v6039
  %6599 = vmatpush1.msra.mxu0 %v6038
  %6600 = vmatprep.subr.mxu0 %v6045
  %6601 = vmatpush1.msra.mxu0 %v6044
  %6602 = vmatprep.subr.mxu0 %v6051
  %6603 = vmatpush1.msra.mxu0 %v6050
  %6604 = vmatprep.subr.mxu0 %v6057
  %6605 = vmatpush1.msra.mxu0 %v6056
  %6606 = vmatprep.subr.mxu0 %v6063
  %6607 = vmatpush1.msra.mxu0 %v6062
  %6608 = vmatprep.subr.mxu0 %v6069
  %6609 = vmatpush1.msra.mxu0 %v6068
  %6610 = vmatprep.subr.mxu0 %v6075
  %6611 = vmatpush1.msra.mxu0 %v6074
  %6612 = vmatprep.subr.mxu0 %v6081
  %6613 = vmatpush1.msra.mxu0 %v6080
  %6614 = vmatprep.subr.mxu0 %v6087
  %6615 = vmatpush1.msra.mxu0 %v6086
  %6616 = vmatprep.subr.mxu0 %v6093
  %6617 = vmatpush1.msra.mxu0 %v6092
  %6618 = vmatprep.subr.mxu0 %v6099
  %6619 = vmatpush1.msra.mxu0 %v6098
  %6620 = vmatprep.subr.mxu0 %v6105
  %6621 = vmatpush1.msra.mxu0 %v6104
  %6622 = vmatprep.subr.mxu0 %v6111
  %6623 = vmatpush1.msra.mxu0 %v6110
  %6624 = vmatprep.subr.mxu0 %v6117
  %6625 = vmatpush1.msra.mxu0 %v6116
  %6626 = vmatprep.subr.mxu0 %v6123
  %6627 = vmatpush1.msra.mxu0 %v6122
  %6628 = vmatprep.subr.mxu0 %v6129
  %6629 = vmatpush1.msra.mxu0 %v6128
  %6630 = vmatprep.subr.mxu0 %v6135
  %6631 = vmatpush1.msra.mxu0 %v6134
  %6632 = vmatprep.subr.mxu0 %v6141
  %6633 = vmatpush1.msra.mxu0 %v6140
  %6634 = vmatprep.subr.mxu0 %v6147
  %6635 = vmatpush1.msra.mxu0 %v6146
  %6636 = vmatprep.subr.mxu0 %v6153
  %6637 = vmatpush1.msra.mxu0 %v6152
  %6638 = vmatprep.subr.mxu0 %v6159
  %6639 = vmatpush1.msra.mxu0 %v6158
  %6640 = vmatprep.subr.mxu0 %v6165
  %6641 = vmatpush1.msra.mxu0 %v6164
  %6642 = vmatprep.subr.mxu0 %v6171
  %6643 = vmatpush1.msra.mxu0 %v6170
  %6644 = vmatprep.subr.mxu0 %v6177
  %6645 = vmatpush1.msra.mxu0 %v6176
  %6646 = vmatprep.subr.mxu0 %v6183
  %6647 = vmatpush1.msra.mxu0 %v6182
  %6648 = vmatprep.subr.mxu0 %v6189
  %6649 = vmatpush1.msra.mxu0 %v6188
  %6650 = vmatprep.subr.mxu0 %v6195
  %6651 = vmatpush1.msra.mxu0 %v6194
  %6652 = vmatprep.mubr.f32.mxu0 %v5993
  %6653 = vmatmul.mubr.f32.gmra.mrb[0].mxu0 %v5992
  %v6654 = vpop.f32.mrb[0].mxu0
  %v6655 = vadd.f32 0.0, %v6654
  %v6656 = vpop.f32.mrb[0].mxu0
  %v6657 = vadd.f32 0.0, %v6656
  %6658 = vmatprep.mubr.f32.mxu0 %v5996
  %6659 = vmatmul.mubr.f32.gmra.mrb[0].mxu0 %v5995
  %v6660 = vpop.f32.mrb[0].mxu0
  %v6661 = vadd.f32 0.0, %v6660
  %v6662 = vpop.f32.mrb[0].mxu0
  %v6663 = vadd.f32 0.0, %v6662
  %6664 = vmatprep.mubr.f32.mxu0 %v5999
  %6665 = vmatmul.mubr.f32.gmra.mrb[0].mxu0 %v5998
  %v6666 = vpop.f32.mrb[0].mxu0
  %v6667 = vadd.f32 0.0, %v6666
  %v6668 = vpop.f32.mrb[0].mxu0
  %v6669 = vadd.f32 0.0, %v6668
  %6670 = vmatprep.mubr.f32.mxu0 %v6002
  %6671 = vmatmul.mubr.f32.gmra.mrb[0].mxu0 %v6001
  %v6672 = vpop.f32.mrb[0].mxu0
  %v6673 = vadd.f32 0.0, %v6672
  %v6674 = vpop.f32.mrb[0].mxu0
  %v6675 = vadd.f32 0.0, %v6674
  %6676 = vdwg.mxu0
  %6677 = vmatprep.subr.mxu0 %v6201
  %6678 = vmatpush1.msra.mxu0 %v6200
  %6679 = vmatprep.subr.mxu0 %v6207
  %6680 = vmatpush1.msra.mxu0 %v6206
  %6681 = vmatprep.subr.mxu0 %v6213
  %6682 = vmatpush1.msra.mxu0 %v6212
  %6683 = vmatprep.subr.mxu0 %v6219
  %6684 = vmatpush1.msra.mxu0 %v6218
  %6685 = vmatprep.subr.mxu0 0.0
  %6686 = vmatpush1.msra.mxu0 0.0
  %6687 = vmatprep.subr.mxu0 0.0
  %6688 = vmatpush1.msra.mxu0 0.0
  %6689 = vmatprep.subr.mxu0 0.0
  %6690 = vmatpush1.msra.mxu0 0.0
  %6691 = vmatprep.subr.mxu0 0.0
  %6692 = vmatpush1.msra.mxu0 0.0
  %6693 = vmatprep.subr.mxu0 0.0
  %6694 = vmatpush1.msra.mxu0 0.0
  %6695 = vmatprep.subr.mxu0 0.0
  %6696 = vmatpush1.msra.mxu0 0.0
  %6697 = vmatprep.subr.mxu0 0.0
  %6698 = vmatpush1.msra.mxu0 0.0
  %6699 = vmatprep.subr.mxu0 0.0
  %6700 = vmatpush1.msra.mxu0 0.0
  %6701 = vmatprep.subr.mxu0 0.0
  %6702 = vmatpush1.msra.mxu0 0.0
  %6703 = vmatprep.subr.mxu0 0.0
  %6704 = vmatpush1.msra.mxu0 0.0
  %6705 = vmatprep.subr.mxu0 0.0
  %6706 = vmatpush1.msra.mxu0 0.0
  %6707 = vmatprep.subr.mxu0 0.0
  %6708 = vmatpush1.msra.mxu0 0.0
  %6709 = vmatprep.subr.mxu0 0.0
  %6710 = vmatpush1.msra.mxu0 0.0
  %6711 = vmatprep.subr.mxu0 0.0
  %6712 = vmatpush1.msra.mxu0 0.0
  %6713 = vmatprep.subr.mxu0 0.0
  %6714 = vmatpush1.msra.mxu0 0.0
  %6715 = vmatprep.subr.mxu0 0.0
  %6716 = vmatpush1.msra.mxu0 0.0
  %6717 = vmatprep.subr.mxu0 0.0
  %6718 = vmatpush1.msra.mxu0 0.0
  %6719 = vmatprep.subr.mxu0 0.0
  %6720 = vmatpush1.msra.mxu0 0.0
  %6721 = vmatprep.subr.mxu0 0.0
  %6722 = vmatpush1.msra.mxu0 0.0
  %6723 = vmatprep.subr.mxu0 0.0
  %6724 = vmatpush1.msra.mxu0 0.0
  %6725 = vmatprep.subr.mxu0 0.0
  %6726 = vmatpush1.msra.mxu0 0.0
  %6727 = vmatprep.subr.mxu0 0.0
  %6728 = vmatpush1.msra.mxu0 0.0
  %6729 = vmatprep.subr.mxu0 0.0
  %6730 = vmatpush1.msra.mxu0 0.0
  %6731 = vmatprep.subr.mxu0 0.0
  %6732 = vmatpush1.msra.mxu0 0.0
  %6733 = vmatprep.subr.mxu0 0.0
  %6734 = vmatpush1.msra.mxu0 0.0
  %6735 = vmatprep.subr.mxu0 0.0
  %6736 = vmatpush1.msra.mxu0 0.0
  %6737 = vmatprep.subr.mxu0 0.0
  %6738 = vmatpush1.msra.mxu0 0.0
  %6739 = vmatprep.subr.mxu0 0.0
  %6740 = vmatpush1.msra.mxu0 0.0
  %6741 = vmatprep.mubr.f32.mxu0 0.0
  %6742 = vmatmul.mubr.f32.gmra.mrb[0].mxu0 %v6221
  %v6743 = vpop.f32.mrb[0].mxu0
  %v6744 = vadd.f32 %v6655, %v6743
  %v6745 = vpop.f32.mrb[0].mxu0
  %v6746 = vadd.f32 %v6657, %v6745
  %6747 = vmatprep.mubr.f32.mxu0 0.0
  %6748 = vmatmul.mubr.f32.gmra.mrb[0].mxu0 %v6224
  %v6749 = vpop.f32.mrb[0].mxu0
  %v6750 = vadd.f32 %v6661, %v6749
  %v6751 = vpop.f32.mrb[0].mxu0
  %v6752 = vadd.f32 %v6663, %v6751
  %6753 = vmatprep.mubr.f32.mxu0 0.0
  %6754 = vmatmul.mubr.f32.gmra.mrb[0].mxu0 %v6227
  %v6755 = vpop.f32.mrb[0].mxu0
  %v6756 = vadd.f32 %v6667, %v6755
  %v6757 = vpop.f32.mrb[0].mxu0
  %v6758 = vadd.f32 %v6669, %v6757
  %6759 = vmatprep.mubr.f32.mxu0 0.0
  %6760 = vmatmul.mubr.f32.gmra.mrb[0].mxu0 %v6230
  %v6761 = vpop.f32.mrb[0].mxu0
  %v6762 = vadd.f32 %v6673, %v6761
  %v6763 = vpop.f32.mrb[0].mxu0
  %v6764 = vadd.f32 %v6675, %v6763
  %6765 = vdwg.mxu0
  %v6766 = vld [vmem:[%s11] sm:$0xff]
  %v6767 = vld [vmem:[%s11 + $0x8] sm:$0xff]
  %v6768 = vld [vmem:[%s11 + $0x10] sm:$0xff]
  %v6769 = vld [vmem:[%s11 + $0x18] sm:$0xff]
  %6771 = vset.pattern.permute.xlu0 0
  %6772 = vperm.xlu0 %6771, %v6766
  %v6773 = vpop.permute.xlu0 %6772
  %6776 = vset.pattern.permute.xlu0 0
  %6777 = vperm.xlu0 %6776, %v6767
  %v6778 = vpop.permute.xlu0 %6777
  %6781 = vset.pattern.permute.xlu0 0
  %6782 = vperm.xlu0 %6781, %v6768
  %v6783 = vpop.permute.xlu0 %6782
  %6786 = vset.pattern.permute.xlu0 0
  %6787 = vperm.xlu0 %6786, %v6769
  %v6788 = vpop.permute.xlu0 %6787
  %v6790 = vmul.f32 %v6388, %v6773
  %v6791 = vmul.f32 %v6390, %v6773
  %v6792 = vmul.f32 %v6566, %v6773
  %v6793 = vmul.f32 %v6568, %v6773
  %v6794 = vmul.f32 %v6744, %v6773
  %v6795 = vmul.f32 %v6746, %v6773
  %v6796 = vmul.f32 %v6394, %v6778
  %v6797 = vmul.f32 %v6396, %v6778
  %v6798 = vmul.f32 %v6572, %v6778
  %v6799 = vmul.f32 %v6574, %v6778
  %v6800 = vmul.f32 %v6750, %v6778
  %v6801 = vmul.f32 %v6752, %v6778
  %v6802 = vmul.f32 %v6400, %v6783
  %v6803 = vmul.f32 %v6402, %v6783
  %v6804 = vmul.f32 %v6578, %v6783
  %v6805 = vmul.f32 %v6580, %v6783
  %v6806 = vmul.f32 %v6756, %v6783
  %v6807 = vmul.f32 %v6758, %v6783
  %v6808 = vmul.f32 %v6406, %v6788
  %v6809 = vmul.f32 %v6408, %v6788
  %v6810 = vmul.f32 %v6584, %v6788
  %v6811 = vmul.f32 %v6586, %v6788
  %v6812 = vmul.f32 %v6762, %v6788
  %v6813 = vmul.f32 %v6764, %v6788
  %v6814 = vld [vmem:[%s12] sm:$0xff]
  %v6815 = vld [vmem:[%s12 + $0x8] sm:$0xff]
  %v6816 = vld [vmem:[%s12 + $0x10] sm:$0xff]
  %v6817 = vld [vmem:[%s12 + $0x18] sm:$0xff]
  %6819 = vset.pattern.permute.xlu0 0
  %6820 = vperm.xlu0 %6819, %v6814
  %v6821 = vpop.permute.xlu0 %6820
  %6824 = vset.pattern.permute.xlu0 0
  %6825 = vperm.xlu0 %6824, %v6815
  %v6826 = vpop.permute.xlu0 %6825
  %6829 = vset.pattern.permute.xlu0 0
  %6830 = vperm.xlu0 %6829, %v6816
  %v6831 = vpop.permute.xlu0 %6830
  %6834 = vset.pattern.permute.xlu0 0
  %6835 = vperm.xlu0 %6834, %v6817
  %v6836 = vpop.permute.xlu0 %6835
  %v6838 = vadd.f32 %v6790, %v6821
  %v6839 = vadd.f32 %v6791, %v6821
  %v6840 = vadd.f32 %v6792, %v6821
  %v6841 = vadd.f32 %v6793, %v6821
  %v6842 = vadd.f32 %v6794, %v6821
  %v6843 = vadd.f32 %v6795, %v6821
  %v6844 = vadd.f32 %v6796, %v6826
  %v6845 = vadd.f32 %v6797, %v6826
  %v6846 = vadd.f32 %v6798, %v6826
  %v6847 = vadd.f32 %v6799, %v6826
  %v6848 = vadd.f32 %v6800, %v6826
  %v6849 = vadd.f32 %v6801, %v6826
  %v6850 = vadd.f32 %v6802, %v6831
  %v6851 = vadd.f32 %v6803, %v6831
  %v6852 = vadd.f32 %v6804, %v6831
  %v6853 = vadd.f32 %v6805, %v6831
  %v6854 = vadd.f32 %v6806, %v6831
  %v6855 = vadd.f32 %v6807, %v6831
  %v6856 = vadd.f32 %v6808, %v6836
  %v6857 = vadd.f32 %v6809, %v6836
  %v6858 = vadd.f32 %v6810, %v6836
  %v6859 = vadd.f32 %v6811, %v6836
  %v6860 = vadd.f32 %v6812, %v6836
  %v6861 = vadd.f32 %v6813, %v6836
  %v6862 = vmax.f32 %v6838, 0.0
  %v6863 = vmax.f32 %v6839, 0.0
  %v6864 = vmax.f32 %v6840, 0.0
  %v6865 = vmax.f32 %v6841, 0.0
  %v6866 = vmax.f32 %v6842, 0.0
  %v6867 = vmax.f32 %v6843, 0.0
  %v6868 = vmax.f32 %v6844, 0.0
  %v6869 = vmax.f32 %v6845, 0.0
  %v6870 = vmax.f32 %v6846, 0.0
  %v6871 = vmax.f32 %v6847, 0.0
  %v6872 = vmax.f32 %v6848, 0.0
  %v6873 = vmax.f32 %v6849, 0.0
  %v6874 = vmax.f32 %v6850, 0.0
  %v6875 = vmax.f32 %v6851, 0.0
  %v6876 = vmax.f32 %v6852, 0.0
  %v6877 = vmax.f32 %v6853, 0.0
  %v6878 = vmax.f32 %v6854, 0.0
  %v6879 = vmax.f32 %v6855, 0.0
  %v6880 = vmax.f32 %v6856, 0.0
  %v6881 = vmax.f32 %v6857, 0.0
  %v6882 = vmax.f32 %v6858, 0.0
  %v6883 = vmax.f32 %v6859, 0.0
  %v6884 = vmax.f32 %v6860, 0.0
  %v6885 = vmax.f32 %v6861, 0.0
  %v6886 = vmul.f32 %v6862, %v423
  %v6887 = vmul.f32 %v6863, %v427
  %v6888 = vmul.f32 %v6864, %v431
  %v6889 = vmul.f32 %v6865, %v435
  %v6890 = vmul.f32 %v6866, %v439
  %v6891 = vmul.f32 %v6867, %v443
  %v6892 = vmul.f32 %v6868, %v423
  %v6893 = vmul.f32 %v6869, %v427
  %v6894 = vmul.f32 %v6870, %v431
  %v6895 = vmul.f32 %v6871, %v435
  %v6896 = vmul.f32 %v6872, %v439
  %v6897 = vmul.f32 %v6873, %v443
  %v6898 = vmul.f32 %v6874, %v423
  %v6899 = vmul.f32 %v6875, %v427
  %v6900 = vmul.f32 %v6876, %v431
  %v6901 = vmul.f32 %v6877, %v435
  %v6902 = vmul.f32 %v6878, %v439
  %v6903 = vmul.f32 %v6879, %v443
  %v6904 = vmul.f32 %v6880, %v423
  %v6905 = vmul.f32 %v6881, %v427
  %v6906 = vmul.f32 %v6882, %v431
  %v6907 = vmul.f32 %v6883, %v435
  %v6908 = vmul.f32 %v6884, %v439
  %v6909 = vmul.f32 %v6885, %v443
  %6910 = vst [vmem:[#allocation3 + $0x8] sm:$0xff] %v6886
  %6911 = vst [vmem:[#allocation3 + $0x10] sm:$0xff] %v6887
  %6912 = vst [vmem:[#allocation3 + $0x18] sm:$0xff] %v6888
  %6913 = vst [vmem:[#allocation3 + $0x20] sm:$0xff] %v6889
  %6914 = vst [vmem:[#allocation3 + $0x28] sm:$0xff] %v6890
  %6915 = vst [vmem:[#allocation3 + $0x30] sm:$0xff] %v6891
  %6916 = vst [vmem:[#allocation3 + $0x48] sm:$0xff] %v6892
  %6917 = vst [vmem:[#allocation3 + $0x50] sm:$0xff] %v6893
  %6918 = vst [vmem:[#allocation3 + $0x58] sm:$0xff] %v6894
  %6919 = vst [vmem:[#allocation3 + $0x60] sm:$0xff] %v6895
  %6920 = vst [vmem:[#allocation3 + $0x68] sm:$0xff] %v6896
  %6921 = vst [vmem:[#allocation3 + $0x70] sm:$0xff] %v6897
  %6922 = vst [vmem:[#allocation3 + $0x88] sm:$0xff] %v6898
  %6923 = vst [vmem:[#allocation3 + $0x90] sm:$0xff] %v6899
  %6924 = vst [vmem:[#allocation3 + $0x98] sm:$0xff] %v6900
  %6925 = vst [vmem:[#allocation3 + $0xa0] sm:$0xff] %v6901
  %6926 = vst [vmem:[#allocation3 + $0xa8] sm:$0xff] %v6902
  %6927 = vst [vmem:[#allocation3 + $0xb0] sm:$0xff] %v6903
  %6928 = vst [vmem:[#allocation3 + $0xc8] sm:$0xff] %v6904
  %6929 = vst [vmem:[#allocation3 + $0xd0] sm:$0xff] %v6905
  %6930 = vst [vmem:[#allocation3 + $0xd8] sm:$0xff] %v6906
  %6931 = vst [vmem:[#allocation3 + $0xe0] sm:$0xff] %v6907
  %6932 = vst [vmem:[#allocation3 + $0xe8] sm:$0xff] %v6908
  %6933 = vst [vmem:[#allocation3 + $0xf0] sm:$0xff] %v6909
  %v6934 = vld [vmem:[#allocation3] sm:$0xff]
  %v6935 = vld [vmem:[#allocation3 + $0x8] sm:$0xff]
  %v6936 = vld [vmem:[#allocation3 + $0x10] sm:$0xff]
  %v6937 = vld [vmem:[#allocation3 + $0x18] sm:$0xff]
  %v6938 = vld [vmem:[#allocation3 + $0x20] sm:$0xff]
  %v6939 = vld [vmem:[#allocation3 + $0x28] sm:$0xff]
  %v6940 = vld [vmem:[#allocation3 + $0x30] sm:$0xff]
  %v6941 = vld [vmem:[#allocation3 + $0x40] sm:$0xff]
  %v6942 = vld [vmem:[#allocation3 + $0x48] sm:$0xff]
  %v6943 = vld [vmem:[#allocation3 + $0x50] sm:$0xff]
  %v6944 = vld [vmem:[#allocation3 + $0x58] sm:$0xff]
  %v6945 = vld [vmem:[#allocation3 + $0x60] sm:$0xff]
  %v6946 = vld [vmem:[#allocation3 + $0x68] sm:$0xff]
  %v6947 = vld [vmem:[#allocation3 + $0x70] sm:$0xff]
  %v6948 = vld [vmem:[#allocation3 + $0x80] sm:$0xff]
  %v6949 = vld [vmem:[#allocation3 + $0x88] sm:$0xff]
  %v6950 = vld [vmem:[#allocation3 + $0x90] sm:$0xff]
  %v6951 = vld [vmem:[#allocation3 + $0x98] sm:$0xff]
  %v6952 = vld [vmem:[#allocation3 + $0xa0] sm:$0xff]
  %v6953 = vld [vmem:[#allocation3 + $0xa8] sm:$0xff]
  %v6954 = vld [vmem:[#allocation3 + $0xb0] sm:$0xff]
  %v6955 = vld [vmem:[#allocation3 + $0xc0] sm:$0xff]
  %v6956 = vld [vmem:[#allocation3 + $0xc8] sm:$0xff]
  %v6957 = vld [vmem:[#allocation3 + $0xd0] sm:$0xff]
  %v6958 = vld [vmem:[#allocation3 + $0xd8] sm:$0xff]
  %v6959 = vld [vmem:[#allocation3 + $0xe0] sm:$0xff]
  %v6960 = vld [vmem:[#allocation3 + $0xe8] sm:$0xff]
  %v6961 = vld [vmem:[#allocation3 + $0xf0] sm:$0xff]
  %6990 = vrot.lane.b32.xlu0 %v6934, 19
  %v6991 = vpop.permute.xlu0 %6990
  %6992 = vrot.lane.b32.xlu0 %v6935, 19
  %v6993 = vpop.permute.xlu0 %6992
  %6994 = vrot.lane.b32.xlu0 %v6936, 19
  %v6995 = vpop.permute.xlu0 %6994
  %6996 = vrot.lane.b32.xlu0 %v6937, 19
  %v6997 = vpop.permute.xlu0 %6996
  %6998 = vrot.lane.b32.xlu0 %v6938, 19
  %v6999 = vpop.permute.xlu0 %6998
  %7000 = vrot.lane.b32.xlu0 %v6939, 19
  %v7001 = vpop.permute.xlu0 %7000
  %7002 = vrot.lane.b32.xlu0 %v6940, 19
  %v7003 = vpop.permute.xlu0 %7002
  %7004 = vrot.lane.b32.xlu0 %v6941, 19
  %v7005 = vpop.permute.xlu0 %7004
  %7006 = vrot.lane.b32.xlu0 %v6942, 19
  %v7007 = vpop.permute.xlu0 %7006
  %7008 = vrot.lane.b32.xlu0 %v6943, 19
  %v7009 = vpop.permute.xlu0 %7008
  %7010 = vrot.lane.b32.xlu0 %v6944, 19
  %v7011 = vpop.permute.xlu0 %7010
  %7012 = vrot.lane.b32.xlu0 %v6945, 19
  %v7013 = vpop.permute.xlu0 %7012
  %7014 = vrot.lane.b32.xlu0 %v6946, 19
  %v7015 = vpop.permute.xlu0 %7014
  %7016 = vrot.lane.b32.xlu0 %v6947, 19
  %v7017 = vpop.permute.xlu0 %7016
  %7018 = vrot.lane.b32.xlu0 %v6948, 19
  %v7019 = vpop.permute.xlu0 %7018
  %7020 = vrot.lane.b32.xlu0 %v6949, 19
  %v7021 = vpop.permute.xlu0 %7020
  %7022 = vrot.lane.b32.xlu0 %v6950, 19
  %v7023 = vpop.permute.xlu0 %7022
  %7024 = vrot.lane.b32.xlu0 %v6951, 19
  %v7025 = vpop.permute.xlu0 %7024
  %7026 = vrot.lane.b32.xlu0 %v6952, 19
  %v7027 = vpop.permute.xlu0 %7026
  %7028 = vrot.lane.b32.xlu0 %v6953, 19
  %v7029 = vpop.permute.xlu0 %7028
  %7030 = vrot.lane.b32.xlu0 %v6954, 19
  %v7031 = vpop.permute.xlu0 %7030
  %7032 = vrot.lane.b32.xlu0 %v6955, 19
  %v7033 = vpop.permute.xlu0 %7032
  %7034 = vrot.lane.b32.xlu0 %v6956, 19
  %v7035 = vpop.permute.xlu0 %7034
  %7036 = vrot.lane.b32.xlu0 %v6957, 19
  %v7037 = vpop.permute.xlu0 %7036
  %7038 = vrot.lane.b32.xlu0 %v6958, 19
  %v7039 = vpop.permute.xlu0 %7038
  %7040 = vrot.lane.b32.xlu0 %v6959, 19
  %v7041 = vpop.permute.xlu0 %7040
  %7042 = vrot.lane.b32.xlu0 %v6960, 19
  %v7043 = vpop.permute.xlu0 %7042
  %7044 = vrot.lane.b32.xlu0 %v6961, 19
  %v7045 = vpop.permute.xlu0 %7044
  %v7046 = vsel %vm830, %v6991, %v6993
  %v7047 = vsel %vm830, %v6993, %v6995
  %v7048 = vsel %vm830, %v6995, %v6997
  %v7049 = vsel %vm830, %v6997, %v6999
  %v7050 = vsel %vm830, %v6999, %v7001
  %v7051 = vsel %vm830, %v7001, %v7003
  %v7052 = vsel %vm830, %v7005, %v7007
  %v7053 = vsel %vm830, %v7007, %v7009
  %v7054 = vsel %vm830, %v7009, %v7011
  %v7055 = vsel %vm830, %v7011, %v7013
  %v7056 = vsel %vm830, %v7013, %v7015
  %v7057 = vsel %vm830, %v7015, %v7017
  %v7058 = vsel %vm830, %v7019, %v7021
  %v7059 = vsel %vm830, %v7021, %v7023
  %v7060 = vsel %vm830, %v7023, %v7025
  %v7061 = vsel %vm830, %v7025, %v7027
  %v7062 = vsel %vm830, %v7027, %v7029
  %v7063 = vsel %vm830, %v7029, %v7031
  %v7064 = vsel %vm830, %v7033, %v7035
  %v7065 = vsel %vm830, %v7035, %v7037
  %v7066 = vsel %vm830, %v7037, %v7039
  %v7067 = vsel %vm830, %v7039, %v7041
  %v7068 = vsel %vm830, %v7041, %v7043
  %v7069 = vsel %vm830, %v7043, %v7045
  %7094 = vst [vmem:[#allocation4] sm:$0xff] %v7046
  %7095 = vst [vmem:[#allocation4 + $0x8] sm:$0xff] %v7047
  %7096 = vst [vmem:[#allocation4 + $0x10] sm:$0xff] %v7048
  %7097 = vst [vmem:[#allocation4 + $0x18] sm:$0xff] %v7049
  %7098 = vst [vmem:[#allocation4 + $0x20] sm:$0xff] %v7050
  %7099 = vst [vmem:[#allocation4 + $0x28] sm:$0xff] %v7051
  %7100 = vst [vmem:[#allocation4 + $0x30] sm:$0xff] %v7052
  %7101 = vst [vmem:[#allocation4 + $0x38] sm:$0xff] %v7053
  %7102 = vst [vmem:[#allocation4 + $0x40] sm:$0xff] %v7054
  %7103 = vst [vmem:[#allocation4 + $0x48] sm:$0xff] %v7055
  %7104 = vst [vmem:[#allocation4 + $0x50] sm:$0xff] %v7056
  %7105 = vst [vmem:[#allocation4 + $0x58] sm:$0xff] %v7057
  %7106 = vst [vmem:[#allocation4 + $0x60] sm:$0xff] %v7058
  %7107 = vst [vmem:[#allocation4 + $0x68] sm:$0xff] %v7059
  %7108 = vst [vmem:[#allocation4 + $0x70] sm:$0xff] %v7060
  %7109 = vst [vmem:[#allocation4 + $0x78] sm:$0xff] %v7061
  %7110 = vst [vmem:[#allocation4 + $0x80] sm:$0xff] %v7062
  %7111 = vst [vmem:[#allocation4 + $0x88] sm:$0xff] %v7063
  %7112 = vst [vmem:[#allocation4 + $0x90] sm:$0xff] %v7064
  %7113 = vst [vmem:[#allocation4 + $0x98] sm:$0xff] %v7065
  %7114 = vst [vmem:[#allocation4 + $0xa0] sm:$0xff] %v7066
  %7115 = vst [vmem:[#allocation4 + $0xa8] sm:$0xff] %v7067
  %7116 = vst [vmem:[#allocation4 + $0xb0] sm:$0xff] %v7068
  %7117 = vst [vmem:[#allocation4 + $0xb8] sm:$0xff] %v7069
  %v7118 = vld [vmem:[#allocation3] sm:$0xff]
  %v7119 = vld [vmem:[#allocation3 + $0x8] sm:$0xff]
  %v7120 = vld [vmem:[#allocation3 + $0x10] sm:$0xff]
  %v7121 = vld [vmem:[#allocation3 + $0x18] sm:$0xff]
  %v7122 = vld [vmem:[#allocation3 + $0x20] sm:$0xff]
  %v7123 = vld [vmem:[#allocation3 + $0x28] sm:$0xff]
  %v7124 = vld [vmem:[#allocation3 + $0x30] sm:$0xff]
  %v7125 = vld [vmem:[#allocation3 + $0x40] sm:$0xff]
  %v7126 = vld [vmem:[#allocation3 + $0x48] sm:$0xff]
  %v7127 = vld [vmem:[#allocation3 + $0x50] sm:$0xff]
  %v7128 = vld [vmem:[#allocation3 + $0x58] sm:$0xff]
  %v7129 = vld [vmem:[#allocation3 + $0x60] sm:$0xff]
  %v7130 = vld [vmem:[#allocation3 + $0x68] sm:$0xff]
  %v7131 = vld [vmem:[#allocation3 + $0x70] sm:$0xff]
  %v7132 = vld [vmem:[#allocation3 + $0x80] sm:$0xff]
  %v7133 = vld [vmem:[#allocation3 + $0x88] sm:$0xff]
  %v7134 = vld [vmem:[#allocation3 + $0x90] sm:$0xff]
  %v7135 = vld [vmem:[#allocation3 + $0x98] sm:$0xff]
  %v7136 = vld [vmem:[#allocation3 + $0xa0] sm:$0xff]
  %v7137 = vld [vmem:[#allocation3 + $0xa8] sm:$0xff]
  %v7138 = vld [vmem:[#allocation3 + $0xb0] sm:$0xff]
  %v7139 = vld [vmem:[#allocation3 + $0xc0] sm:$0xff]
  %v7140 = vld [vmem:[#allocation3 + $0xc8] sm:$0xff]
  %v7141 = vld [vmem:[#allocation3 + $0xd0] sm:$0xff]
  %v7142 = vld [vmem:[#allocation3 + $0xd8] sm:$0xff]
  %v7143 = vld [vmem:[#allocation3 + $0xe0] sm:$0xff]
  %v7144 = vld [vmem:[#allocation3 + $0xe8] sm:$0xff]
  %v7145 = vld [vmem:[#allocation3 + $0xf0] sm:$0xff]
  %7174 = vrot.lane.b32.xlu0 %v7118, 18
  %v7175 = vpop.permute.xlu0 %7174
  %7176 = vrot.lane.b32.xlu0 %v7119, 18
  %v7177 = vpop.permute.xlu0 %7176
  %7178 = vrot.lane.b32.xlu0 %v7120, 18
  %v7179 = vpop.permute.xlu0 %7178
  %7180 = vrot.lane.b32.xlu0 %v7121, 18
  %v7181 = vpop.permute.xlu0 %7180
  %7182 = vrot.lane.b32.xlu0 %v7122, 18
  %v7183 = vpop.permute.xlu0 %7182
  %7184 = vrot.lane.b32.xlu0 %v7123, 18
  %v7185 = vpop.permute.xlu0 %7184
  %7186 = vrot.lane.b32.xlu0 %v7124, 18
  %v7187 = vpop.permute.xlu0 %7186
  %7188 = vrot.lane.b32.xlu0 %v7125, 18
  %v7189 = vpop.permute.xlu0 %7188
  %7190 = vrot.lane.b32.xlu0 %v7126, 18
  %v7191 = vpop.permute.xlu0 %7190
  %7192 = vrot.lane.b32.xlu0 %v7127, 18
  %v7193 = vpop.permute.xlu0 %7192
  %7194 = vrot.lane.b32.xlu0 %v7128, 18
  %v7195 = vpop.permute.xlu0 %7194
  %7196 = vrot.lane.b32.xlu0 %v7129, 18
  %v7197 = vpop.permute.xlu0 %7196
  %7198 = vrot.lane.b32.xlu0 %v7130, 18
  %v7199 = vpop.permute.xlu0 %7198
  %7200 = vrot.lane.b32.xlu0 %v7131, 18
  %v7201 = vpop.permute.xlu0 %7200
  %7202 = vrot.lane.b32.xlu0 %v7132, 18
  %v7203 = vpop.permute.xlu0 %7202
  %7204 = vrot.lane.b32.xlu0 %v7133, 18
  %v7205 = vpop.permute.xlu0 %7204
  %7206 = vrot.lane.b32.xlu0 %v7134, 18
  %v7207 = vpop.permute.xlu0 %7206
  %7208 = vrot.lane.b32.xlu0 %v7135, 18
  %v7209 = vpop.permute.xlu0 %7208
  %7210 = vrot.lane.b32.xlu0 %v7136, 18
  %v7211 = vpop.permute.xlu0 %7210
  %7212 = vrot.lane.b32.xlu0 %v7137, 18
  %v7213 = vpop.permute.xlu0 %7212
  %7214 = vrot.lane.b32.xlu0 %v7138, 18
  %v7215 = vpop.permute.xlu0 %7214
  %7216 = vrot.lane.b32.xlu0 %v7139, 18
  %v7217 = vpop.permute.xlu0 %7216
  %7218 = vrot.lane.b32.xlu0 %v7140, 18
  %v7219 = vpop.permute.xlu0 %7218
  %7220 = vrot.lane.b32.xlu0 %v7141, 18
  %v7221 = vpop.permute.xlu0 %7220
  %7222 = vrot.lane.b32.xlu0 %v7142, 18
  %v7223 = vpop.permute.xlu0 %7222
  %7224 = vrot.lane.b32.xlu0 %v7143, 18
  %v7225 = vpop.permute.xlu0 %7224
  %7226 = vrot.lane.b32.xlu0 %v7144, 18
  %v7227 = vpop.permute.xlu0 %7226
  %7228 = vrot.lane.b32.xlu0 %v7145, 18
  %v7229 = vpop.permute.xlu0 %7228
  %v7230 = vsel %vm923, %v7175, %v7177
  %v7231 = vsel %vm923, %v7177, %v7179
  %v7232 = vsel %vm923, %v7179, %v7181
  %v7233 = vsel %vm923, %v7181, %v7183
  %v7234 = vsel %vm923, %v7183, %v7185
  %v7235 = vsel %vm923, %v7185, %v7187
  %v7236 = vsel %vm923, %v7189, %v7191
  %v7237 = vsel %vm923, %v7191, %v7193
  %v7238 = vsel %vm923, %v7193, %v7195
  %v7239 = vsel %vm923, %v7195, %v7197
  %v7240 = vsel %vm923, %v7197, %v7199
  %v7241 = vsel %vm923, %v7199, %v7201
  %v7242 = vsel %vm923, %v7203, %v7205
  %v7243 = vsel %vm923, %v7205, %v7207
  %v7244 = vsel %vm923, %v7207, %v7209
  %v7245 = vsel %vm923, %v7209, %v7211
  %v7246 = vsel %vm923, %v7211, %v7213
  %v7247 = vsel %vm923, %v7213, %v7215
  %v7248 = vsel %vm923, %v7217, %v7219
  %v7249 = vsel %vm923, %v7219, %v7221
  %v7250 = vsel %vm923, %v7221, %v7223
  %v7251 = vsel %vm923, %v7223, %v7225
  %v7252 = vsel %vm923, %v7225, %v7227
  %v7253 = vsel %vm923, %v7227, %v7229
  %7278 = vst [vmem:[#allocation4 + $0xc0] sm:$0xff] %v7230
  %7279 = vst [vmem:[#allocation4 + $0xc8] sm:$0xff] %v7231
  %7280 = vst [vmem:[#allocation4 + $0xd0] sm:$0xff] %v7232
  %7281 = vst [vmem:[#allocation4 + $0xd8] sm:$0xff] %v7233
  %7282 = vst [vmem:[#allocation4 + $0xe0] sm:$0xff] %v7234
  %7283 = vst [vmem:[#allocation4 + $0xe8] sm:$0xff] %v7235
  %7284 = vst [vmem:[#allocation4 + $0xf0] sm:$0xff] %v7236
  %7285 = vst [vmem:[#allocation4 + $0xf8] sm:$0xff] %v7237
  %7286 = vst [vmem:[#allocation4 + $0x100] sm:$0xff] %v7238
  %7287 = vst [vmem:[#allocation4 + $0x108] sm:$0xff] %v7239
  %7288 = vst [vmem:[#allocation4 + $0x110] sm:$0xff] %v7240
  %7289 = vst [vmem:[#allocation4 + $0x118] sm:$0xff] %v7241
  %7290 = vst [vmem:[#allocation4 + $0x120] sm:$0xff] %v7242
  %7291 = vst [vmem:[#allocation4 + $0x128] sm:$0xff] %v7243
  %7292 = vst [vmem:[#allocation4 + $0x130] sm:$0xff] %v7244
  %7293 = vst [vmem:[#allocation4 + $0x138] sm:$0xff] %v7245
  %7294 = vst [vmem:[#allocation4 + $0x140] sm:$0xff] %v7246
  %7295 = vst [vmem:[#allocation4 + $0x148] sm:$0xff] %v7247
  %7296 = vst [vmem:[#allocation4 + $0x150] sm:$0xff] %v7248
  %7297 = vst [vmem:[#allocation4 + $0x158] sm:$0xff] %v7249
  %7298 = vst [vmem:[#allocation4 + $0x160] sm:$0xff] %v7250
  %7299 = vst [vmem:[#allocation4 + $0x168] sm:$0xff] %v7251
  %7300 = vst [vmem:[#allocation4 + $0x170] sm:$0xff] %v7252
  %7301 = vst [vmem:[#allocation4 + $0x178] sm:$0xff] %v7253
  %v7302 = vld [vmem:[#allocation3] sm:$0xff]
  %v7303 = vld [vmem:[#allocation3 + $0x8] sm:$0xff]
  %v7304 = vld [vmem:[#allocation3 + $0x10] sm:$0xff]
  %v7305 = vld [vmem:[#allocation3 + $0x18] sm:$0xff]
  %v7306 = vld [vmem:[#allocation3 + $0x20] sm:$0xff]
  %v7307 = vld [vmem:[#allocation3 + $0x28] sm:$0xff]
  %v7308 = vld [vmem:[#allocation3 + $0x30] sm:$0xff]
  %v7309 = vld [vmem:[#allocation3 + $0x40] sm:$0xff]
  %v7310 = vld [vmem:[#allocation3 + $0x48] sm:$0xff]
  %v7311 = vld [vmem:[#allocation3 + $0x50] sm:$0xff]
  %v7312 = vld [vmem:[#allocation3 + $0x58] sm:$0xff]
  %v7313 = vld [vmem:[#allocation3 + $0x60] sm:$0xff]
  %v7314 = vld [vmem:[#allocation3 + $0x68] sm:$0xff]
  %v7315 = vld [vmem:[#allocation3 + $0x70] sm:$0xff]
  %v7316 = vld [vmem:[#allocation3 + $0x80] sm:$0xff]
  %v7317 = vld [vmem:[#allocation3 + $0x88] sm:$0xff]
  %v7318 = vld [vmem:[#allocation3 + $0x90] sm:$0xff]
  %v7319 = vld [vmem:[#allocation3 + $0x98] sm:$0xff]
  %v7320 = vld [vmem:[#allocation3 + $0xa0] sm:$0xff]
  %v7321 = vld [vmem:[#allocation3 + $0xa8] sm:$0xff]
  %v7322 = vld [vmem:[#allocation3 + $0xb0] sm:$0xff]
  %v7323 = vld [vmem:[#allocation3 + $0xc0] sm:$0xff]
  %v7324 = vld [vmem:[#allocation3 + $0xc8] sm:$0xff]
  %v7325 = vld [vmem:[#allocation3 + $0xd0] sm:$0xff]
  %v7326 = vld [vmem:[#allocation3 + $0xd8] sm:$0xff]
  %v7327 = vld [vmem:[#allocation3 + $0xe0] sm:$0xff]
  %v7328 = vld [vmem:[#allocation3 + $0xe8] sm:$0xff]
  %v7329 = vld [vmem:[#allocation3 + $0xf0] sm:$0xff]
  %7358 = vrot.lane.b32.xlu0 %v7302, 17
  %v7359 = vpop.permute.xlu0 %7358
  %7360 = vrot.lane.b32.xlu0 %v7303, 17
  %v7361 = vpop.permute.xlu0 %7360
  %7362 = vrot.lane.b32.xlu0 %v7304, 17
  %v7363 = vpop.permute.xlu0 %7362
  %7364 = vrot.lane.b32.xlu0 %v7305, 17
  %v7365 = vpop.permute.xlu0 %7364
  %7366 = vrot.lane.b32.xlu0 %v7306, 17
  %v7367 = vpop.permute.xlu0 %7366
  %7368 = vrot.lane.b32.xlu0 %v7307, 17
  %v7369 = vpop.permute.xlu0 %7368
  %7370 = vrot.lane.b32.xlu0 %v7308, 17
  %v7371 = vpop.permute.xlu0 %7370
  %7372 = vrot.lane.b32.xlu0 %v7309, 17
  %v7373 = vpop.permute.xlu0 %7372
  %7374 = vrot.lane.b32.xlu0 %v7310, 17
  %v7375 = vpop.permute.xlu0 %7374
  %7376 = vrot.lane.b32.xlu0 %v7311, 17
  %v7377 = vpop.permute.xlu0 %7376
  %7378 = vrot.lane.b32.xlu0 %v7312, 17
  %v7379 = vpop.permute.xlu0 %7378
  %7380 = vrot.lane.b32.xlu0 %v7313, 17
  %v7381 = vpop.permute.xlu0 %7380
  %7382 = vrot.lane.b32.xlu0 %v7314, 17
  %v7383 = vpop.permute.xlu0 %7382
  %7384 = vrot.lane.b32.xlu0 %v7315, 17
  %v7385 = vpop.permute.xlu0 %7384
  %7386 = vrot.lane.b32.xlu0 %v7316, 17
  %v7387 = vpop.permute.xlu0 %7386
  %7388 = vrot.lane.b32.xlu0 %v7317, 17
  %v7389 = vpop.permute.xlu0 %7388
  %7390 = vrot.lane.b32.xlu0 %v7318, 17
  %v7391 = vpop.permute.xlu0 %7390
  %7392 = vrot.lane.b32.xlu0 %v7319, 17
  %v7393 = vpop.permute.xlu0 %7392
  %7394 = vrot.lane.b32.xlu0 %v7320, 17
  %v7395 = vpop.permute.xlu0 %7394
  %7396 = vrot.lane.b32.xlu0 %v7321, 17
  %v7397 = vpop.permute.xlu0 %7396
  %7398 = vrot.lane.b32.xlu0 %v7322, 17
  %v7399 = vpop.permute.xlu0 %7398
  %7400 = vrot.lane.b32.xlu0 %v7323, 17
  %v7401 = vpop.permute.xlu0 %7400
  %7402 = vrot.lane.b32.xlu0 %v7324, 17
  %v7403 = vpop.permute.xlu0 %7402
  %7404 = vrot.lane.b32.xlu0 %v7325, 17
  %v7405 = vpop.permute.xlu0 %7404
  %7406 = vrot.lane.b32.xlu0 %v7326, 17
  %v7407 = vpop.permute.xlu0 %7406
  %7408 = vrot.lane.b32.xlu0 %v7327, 17
  %v7409 = vpop.permute.xlu0 %7408
  %7410 = vrot.lane.b32.xlu0 %v7328, 17
  %v7411 = vpop.permute.xlu0 %7410
  %7412 = vrot.lane.b32.xlu0 %v7329, 17
  %v7413 = vpop.permute.xlu0 %7412
  %v7414 = vsel %vm1016, %v7359, %v7361
  %v7415 = vsel %vm1016, %v7361, %v7363
  %v7416 = vsel %vm1016, %v7363, %v7365
  %v7417 = vsel %vm1016, %v7365, %v7367
  %v7418 = vsel %vm1016, %v7367, %v7369
  %v7419 = vsel %vm1016, %v7369, %v7371
  %v7420 = vsel %vm1016, %v7373, %v7375
  %v7421 = vsel %vm1016, %v7375, %v7377
  %v7422 = vsel %vm1016, %v7377, %v7379
  %v7423 = vsel %vm1016, %v7379, %v7381
  %v7424 = vsel %vm1016, %v7381, %v7383
  %v7425 = vsel %vm1016, %v7383, %v7385
  %v7426 = vsel %vm1016, %v7387, %v7389
  %v7427 = vsel %vm1016, %v7389, %v7391
  %v7428 = vsel %vm1016, %v7391, %v7393
  %v7429 = vsel %vm1016, %v7393, %v7395
  %v7430 = vsel %vm1016, %v7395, %v7397
  %v7431 = vsel %vm1016, %v7397, %v7399
  %v7432 = vsel %vm1016, %v7401, %v7403
  %v7433 = vsel %vm1016, %v7403, %v7405
  %v7434 = vsel %vm1016, %v7405, %v7407
  %v7435 = vsel %vm1016, %v7407, %v7409
  %v7436 = vsel %vm1016, %v7409, %v7411
  %v7437 = vsel %vm1016, %v7411, %v7413
  %7462 = vst [vmem:[#allocation4 + $0x180] sm:$0xff] %v7414
  %7463 = vst [vmem:[#allocation4 + $0x188] sm:$0xff] %v7415
  %7464 = vst [vmem:[#allocation4 + $0x190] sm:$0xff] %v7416
  %7465 = vst [vmem:[#allocation4 + $0x198] sm:$0xff] %v7417
  %7466 = vst [vmem:[#allocation4 + $0x1a0] sm:$0xff] %v7418
  %7467 = vst [vmem:[#allocation4 + $0x1a8] sm:$0xff] %v7419
  %7468 = vst [vmem:[#allocation4 + $0x1b0] sm:$0xff] %v7420
  %7469 = vst [vmem:[#allocation4 + $0x1b8] sm:$0xff] %v7421
  %7470 = vst [vmem:[#allocation4 + $0x1c0] sm:$0xff] %v7422
  %7471 = vst [vmem:[#allocation4 + $0x1c8] sm:$0xff] %v7423
  %7472 = vst [vmem:[#allocation4 + $0x1d0] sm:$0xff] %v7424
  %7473 = vst [vmem:[#allocation4 + $0x1d8] sm:$0xff] %v7425
  %7474 = vst [vmem:[#allocation4 + $0x1e0] sm:$0xff] %v7426
  %7475 = vst [vmem:[#allocation4 + $0x1e8] sm:$0xff] %v7427
  %7476 = vst [vmem:[#allocation4 + $0x1f0] sm:$0xff] %v7428
  %7477 = vst [vmem:[#allocation4 + $0x1f8] sm:$0xff] %v7429
  %7478 = vst [vmem:[#allocation4 + $0x200] sm:$0xff] %v7430
  %7479 = vst [vmem:[#allocation4 + $0x208] sm:$0xff] %v7431
  %7480 = vst [vmem:[#allocation4 + $0x210] sm:$0xff] %v7432
  %7481 = vst [vmem:[#allocation4 + $0x218] sm:$0xff] %v7433
  %7482 = vst [vmem:[#allocation4 + $0x220] sm:$0xff] %v7434
  %7483 = vst [vmem:[#allocation4 + $0x228] sm:$0xff] %v7435
  %7484 = vst [vmem:[#allocation4 + $0x230] sm:$0xff] %v7436
  %7485 = vst [vmem:[#allocation4 + $0x238] sm:$0xff] %v7437
  %v7486 = vld [vmem:[#allocation3] sm:$0xff]
  %v7487 = vld [vmem:[#allocation3 + $0x8] sm:$0xff]
  %v7488 = vld [vmem:[#allocation3 + $0x10] sm:$0xff]
  %v7489 = vld [vmem:[#allocation3 + $0x18] sm:$0xff]
  %v7490 = vld [vmem:[#allocation3 + $0x20] sm:$0xff]
  %v7491 = vld [vmem:[#allocation3 + $0x28] sm:$0xff]
  %v7492 = vld [vmem:[#allocation3 + $0x30] sm:$0xff]
  %v7493 = vld [vmem:[#allocation3 + $0x40] sm:$0xff]
  %v7494 = vld [vmem:[#allocation3 + $0x48] sm:$0xff]
  %v7495 = vld [vmem:[#allocation3 + $0x50] sm:$0xff]
  %v7496 = vld [vmem:[#allocation3 + $0x58] sm:$0xff]
  %v7497 = vld [vmem:[#allocation3 + $0x60] sm:$0xff]
  %v7498 = vld [vmem:[#allocation3 + $0x68] sm:$0xff]
  %v7499 = vld [vmem:[#allocation3 + $0x70] sm:$0xff]
  %v7500 = vld [vmem:[#allocation3 + $0x80] sm:$0xff]
  %v7501 = vld [vmem:[#allocation3 + $0x88] sm:$0xff]
  %v7502 = vld [vmem:[#allocation3 + $0x90] sm:$0xff]
  %v7503 = vld [vmem:[#allocation3 + $0x98] sm:$0xff]
  %v7504 = vld [vmem:[#allocation3 + $0xa0] sm:$0xff]
  %v7505 = vld [vmem:[#allocation3 + $0xa8] sm:$0xff]
  %v7506 = vld [vmem:[#allocation3 + $0xb0] sm:$0xff]
  %v7507 = vld [vmem:[#allocation3 + $0xc0] sm:$0xff]
  %v7508 = vld [vmem:[#allocation3 + $0xc8] sm:$0xff]
  %v7509 = vld [vmem:[#allocation3 + $0xd0] sm:$0xff]
  %v7510 = vld [vmem:[#allocation3 + $0xd8] sm:$0xff]
  %v7511 = vld [vmem:[#allocation3 + $0xe0] sm:$0xff]
  %v7512 = vld [vmem:[#allocation3 + $0xe8] sm:$0xff]
  %v7513 = vld [vmem:[#allocation3 + $0xf0] sm:$0xff]
  %7542 = vrot.lane.b32.xlu0 %v7486, 1
  %v7543 = vpop.permute.xlu0 %7542
  %7544 = vrot.lane.b32.xlu0 %v7487, 1
  %v7545 = vpop.permute.xlu0 %7544
  %7546 = vrot.lane.b32.xlu0 %v7488, 1
  %v7547 = vpop.permute.xlu0 %7546
  %7548 = vrot.lane.b32.xlu0 %v7489, 1
  %v7549 = vpop.permute.xlu0 %7548
  %7550 = vrot.lane.b32.xlu0 %v7490, 1
  %v7551 = vpop.permute.xlu0 %7550
  %7552 = vrot.lane.b32.xlu0 %v7491, 1
  %v7553 = vpop.permute.xlu0 %7552
  %7554 = vrot.lane.b32.xlu0 %v7492, 1
  %v7555 = vpop.permute.xlu0 %7554
  %7556 = vrot.lane.b32.xlu0 %v7493, 1
  %v7557 = vpop.permute.xlu0 %7556
  %7558 = vrot.lane.b32.xlu0 %v7494, 1
  %v7559 = vpop.permute.xlu0 %7558
  %7560 = vrot.lane.b32.xlu0 %v7495, 1
  %v7561 = vpop.permute.xlu0 %7560
  %7562 = vrot.lane.b32.xlu0 %v7496, 1
  %v7563 = vpop.permute.xlu0 %7562
  %7564 = vrot.lane.b32.xlu0 %v7497, 1
  %v7565 = vpop.permute.xlu0 %7564
  %7566 = vrot.lane.b32.xlu0 %v7498, 1
  %v7567 = vpop.permute.xlu0 %7566
  %7568 = vrot.lane.b32.xlu0 %v7499, 1
  %v7569 = vpop.permute.xlu0 %7568
  %7570 = vrot.lane.b32.xlu0 %v7500, 1
  %v7571 = vpop.permute.xlu0 %7570
  %7572 = vrot.lane.b32.xlu0 %v7501, 1
  %v7573 = vpop.permute.xlu0 %7572
  %7574 = vrot.lane.b32.xlu0 %v7502, 1
  %v7575 = vpop.permute.xlu0 %7574
  %7576 = vrot.lane.b32.xlu0 %v7503, 1
  %v7577 = vpop.permute.xlu0 %7576
  %7578 = vrot.lane.b32.xlu0 %v7504, 1
  %v7579 = vpop.permute.xlu0 %7578
  %7580 = vrot.lane.b32.xlu0 %v7505, 1
  %v7581 = vpop.permute.xlu0 %7580
  %7582 = vrot.lane.b32.xlu0 %v7506, 1
  %v7583 = vpop.permute.xlu0 %7582
  %7584 = vrot.lane.b32.xlu0 %v7507, 1
  %v7585 = vpop.permute.xlu0 %7584
  %7586 = vrot.lane.b32.xlu0 %v7508, 1
  %v7587 = vpop.permute.xlu0 %7586
  %7588 = vrot.lane.b32.xlu0 %v7509, 1
  %v7589 = vpop.permute.xlu0 %7588
  %7590 = vrot.lane.b32.xlu0 %v7510, 1
  %v7591 = vpop.permute.xlu0 %7590
  %7592 = vrot.lane.b32.xlu0 %v7511, 1
  %v7593 = vpop.permute.xlu0 %7592
  %7594 = vrot.lane.b32.xlu0 %v7512, 1
  %v7595 = vpop.permute.xlu0 %7594
  %7596 = vrot.lane.b32.xlu0 %v7513, 1
  %v7597 = vpop.permute.xlu0 %7596
  %v7598 = vsel %vm1109, %v7543, %v7545
  %v7599 = vsel %vm1109, %v7545, %v7547
  %v7600 = vsel %vm1109, %v7547, %v7549
  %v7601 = vsel %vm1109, %v7549, %v7551
  %v7602 = vsel %vm1109, %v7551, %v7553
  %v7603 = vsel %vm1109, %v7553, %v7555
  %v7604 = vsel %vm1109, %v7557, %v7559
  %v7605 = vsel %vm1109, %v7559, %v7561
  %v7606 = vsel %vm1109, %v7561, %v7563
  %v7607 = vsel %vm1109, %v7563, %v7565
  %v7608 = vsel %vm1109, %v7565, %v7567
  %v7609 = vsel %vm1109, %v7567, %v7569
  %v7610 = vsel %vm1109, %v7571, %v7573
  %v7611 = vsel %vm1109, %v7573, %v7575
  %v7612 = vsel %vm1109, %v7575, %v7577
  %v7613 = vsel %vm1109, %v7577, %v7579
  %v7614 = vsel %vm1109, %v7579, %v7581
  %v7615 = vsel %vm1109, %v7581, %v7583
  %v7616 = vsel %vm1109, %v7585, %v7587
  %v7617 = vsel %vm1109, %v7587, %v7589
  %v7618 = vsel %vm1109, %v7589, %v7591
  %v7619 = vsel %vm1109, %v7591, %v7593
  %v7620 = vsel %vm1109, %v7593, %v7595
  %v7621 = vsel %vm1109, %v7595, %v7597
  %7646 = vst [vmem:[#allocation4 + $0x240] sm:$0xff] %v7598
  %7647 = vst [vmem:[#allocation4 + $0x248] sm:$0xff] %v7599
  %7648 = vst [vmem:[#allocation4 + $0x250] sm:$0xff] %v7600
  %7649 = vst [vmem:[#allocation4 + $0x258] sm:$0xff] %v7601
  %7650 = vst [vmem:[#allocation4 + $0x260] sm:$0xff] %v7602
  %7651 = vst [vmem:[#allocation4 + $0x268] sm:$0xff] %v7603
  %7652 = vst [vmem:[#allocation4 + $0x270] sm:$0xff] %v7604
  %7653 = vst [vmem:[#allocation4 + $0x278] sm:$0xff] %v7605
  %7654 = vst [vmem:[#allocation4 + $0x280] sm:$0xff] %v7606
  %7655 = vst [vmem:[#allocation4 + $0x288] sm:$0xff] %v7607
  %7656 = vst [vmem:[#allocation4 + $0x290] sm:$0xff] %v7608
  %7657 = vst [vmem:[#allocation4 + $0x298] sm:$0xff] %v7609
  %7658 = vst [vmem:[#allocation4 + $0x2a0] sm:$0xff] %v7610
  %7659 = vst [vmem:[#allocation4 + $0x2a8] sm:$0xff] %v7611
  %7660 = vst [vmem:[#allocation4 + $0x2b0] sm:$0xff] %v7612
  %7661 = vst [vmem:[#allocation4 + $0x2b8] sm:$0xff] %v7613
  %7662 = vst [vmem:[#allocation4 + $0x2c0] sm:$0xff] %v7614
  %7663 = vst [vmem:[#allocation4 + $0x2c8] sm:$0xff] %v7615
  %7664 = vst [vmem:[#allocation4 + $0x2d0] sm:$0xff] %v7616
  %7665 = vst [vmem:[#allocation4 + $0x2d8] sm:$0xff] %v7617
  %7666 = vst [vmem:[#allocation4 + $0x2e0] sm:$0xff] %v7618
  %7667 = vst [vmem:[#allocation4 + $0x2e8] sm:$0xff] %v7619
  %7668 = vst [vmem:[#allocation4 + $0x2f0] sm:$0xff] %v7620
  %7669 = vst [vmem:[#allocation4 + $0x2f8] sm:$0xff] %v7621
  %v7670 = vld [vmem:[#allocation3 + $0x8] sm:$0xff]
  %v7671 = vld [vmem:[#allocation3 + $0x10] sm:$0xff]
  %v7672 = vld [vmem:[#allocation3 + $0x18] sm:$0xff]
  %v7673 = vld [vmem:[#allocation3 + $0x20] sm:$0xff]
  %v7674 = vld [vmem:[#allocation3 + $0x28] sm:$0xff]
  %v7675 = vld [vmem:[#allocation3 + $0x30] sm:$0xff]
  %v7676 = vld [vmem:[#allocation3 + $0x48] sm:$0xff]
  %v7677 = vld [vmem:[#allocation3 + $0x50] sm:$0xff]
  %v7678 = vld [vmem:[#allocation3 + $0x58] sm:$0xff]
  %v7679 = vld [vmem:[#allocation3 + $0x60] sm:$0xff]
  %v7680 = vld [vmem:[#allocation3 + $0x68] sm:$0xff]
  %v7681 = vld [vmem:[#allocation3 + $0x70] sm:$0xff]
  %v7682 = vld [vmem:[#allocation3 + $0x88] sm:$0xff]
  %v7683 = vld [vmem:[#allocation3 + $0x90] sm:$0xff]
  %v7684 = vld [vmem:[#allocation3 + $0x98] sm:$0xff]
  %v7685 = vld [vmem:[#allocation3 + $0xa0] sm:$0xff]
  %v7686 = vld [vmem:[#allocation3 + $0xa8] sm:$0xff]
  %v7687 = vld [vmem:[#allocation3 + $0xb0] sm:$0xff]
  %v7688 = vld [vmem:[#allocation3 + $0xc8] sm:$0xff]
  %v7689 = vld [vmem:[#allocation3 + $0xd0] sm:$0xff]
  %v7690 = vld [vmem:[#allocation3 + $0xd8] sm:$0xff]
  %v7691 = vld [vmem:[#allocation3 + $0xe0] sm:$0xff]
  %v7692 = vld [vmem:[#allocation3 + $0xe8] sm:$0xff]
  %v7693 = vld [vmem:[#allocation3 + $0xf0] sm:$0xff]
  %7694 = vst [vmem:[#allocation4 + $0x300] sm:$0xff] %v7670
  %7695 = vst [vmem:[#allocation4 + $0x308] sm:$0xff] %v7671
  %7696 = vst [vmem:[#allocation4 + $0x310] sm:$0xff] %v7672
  %7697 = vst [vmem:[#allocation4 + $0x318] sm:$0xff] %v7673
  %7698 = vst [vmem:[#allocation4 + $0x320] sm:$0xff] %v7674
  %7699 = vst [vmem:[#allocation4 + $0x328] sm:$0xff] %v7675
  %7700 = vst [vmem:[#allocation4 + $0x330] sm:$0xff] %v7676
  %7701 = vst [vmem:[#allocation4 + $0x338] sm:$0xff] %v7677
  %7702 = vst [vmem:[#allocation4 + $0x340] sm:$0xff] %v7678
  %7703 = vst [vmem:[#allocation4 + $0x348] sm:$0xff] %v7679
  %7704 = vst [vmem:[#allocation4 + $0x350] sm:$0xff] %v7680
  %7705 = vst [vmem:[#allocation4 + $0x358] sm:$0xff] %v7681
  %7706 = vst [vmem:[#allocation4 + $0x360] sm:$0xff] %v7682
  %7707 = vst [vmem:[#allocation4 + $0x368] sm:$0xff] %v7683
  %7708 = vst [vmem:[#allocation4 + $0x370] sm:$0xff] %v7684
  %7709 = vst [vmem:[#allocation4 + $0x378] sm:$0xff] %v7685
  %7710 = vst [vmem:[#allocation4 + $0x380] sm:$0xff] %v7686
  %7711 = vst [vmem:[#allocation4 + $0x388] sm:$0xff] %v7687
  %7712 = vst [vmem:[#allocation4 + $0x390] sm:$0xff] %v7688
  %7713 = vst [vmem:[#allocation4 + $0x398] sm:$0xff] %v7689
  %7714 = vst [vmem:[#allocation4 + $0x3a0] sm:$0xff] %v7690
  %7715 = vst [vmem:[#allocation4 + $0x3a8] sm:$0xff] %v7691
  %7716 = vst [vmem:[#allocation4 + $0x3b0] sm:$0xff] %v7692
  %7717 = vst [vmem:[#allocation4 + $0x3b8] sm:$0xff] %v7693
  %v7718 = vld [vmem:[#allocation3 + $0x8] sm:$0xff]
  %v7719 = vld [vmem:[#allocation3 + $0x10] sm:$0xff]
  %v7720 = vld [vmem:[#allocation3 + $0x18] sm:$0xff]
  %v7721 = vld [vmem:[#allocation3 + $0x20] sm:$0xff]
  %v7722 = vld [vmem:[#allocation3 + $0x28] sm:$0xff]
  %v7723 = vld [vmem:[#allocation3 + $0x30] sm:$0xff]
  %v7724 = vld [vmem:[#allocation3 + $0x38] sm:$0xff]
  %v7725 = vld [vmem:[#allocation3 + $0x48] sm:$0xff]
  %v7726 = vld [vmem:[#allocation3 + $0x50] sm:$0xff]
  %v7727 = vld [vmem:[#allocation3 + $0x58] sm:$0xff]
  %v7728 = vld [vmem:[#allocation3 + $0x60] sm:$0xff]
  %v7729 = vld [vmem:[#allocation3 + $0x68] sm:$0xff]
  %v7730 = vld [vmem:[#allocation3 + $0x70] sm:$0xff]
  %v7731 = vld [vmem:[#allocation3 + $0x78] sm:$0xff]
  %v7732 = vld [vmem:[#allocation3 + $0x88] sm:$0xff]
  %v7733 = vld [vmem:[#allocation3 + $0x90] sm:$0xff]
  %v7734 = vld [vmem:[#allocation3 + $0x98] sm:$0xff]
  %v7735 = vld [vmem:[#allocation3 + $0xa0] sm:$0xff]
  %v7736 = vld [vmem:[#allocation3 + $0xa8] sm:$0xff]
  %v7737 = vld [vmem:[#allocation3 + $0xb0] sm:$0xff]
  %v7738 = vld [vmem:[#allocation3 + $0xb8] sm:$0xff]
  %v7739 = vld [vmem:[#allocation3 + $0xc8] sm:$0xff]
  %v7740 = vld [vmem:[#allocation3 + $0xd0] sm:$0xff]
  %v7741 = vld [vmem:[#allocation3 + $0xd8] sm:$0xff]
  %v7742 = vld [vmem:[#allocation3 + $0xe0] sm:$0xff]
  %v7743 = vld [vmem:[#allocation3 + $0xe8] sm:$0xff]
  %v7744 = vld [vmem:[#allocation3 + $0xf0] sm:$0xff]
  %v7745 = vld [vmem:[#allocation3 + $0xf8] sm:$0xff]
  %7774 = vrot.lane.b32.xlu0 %v7718, 127
  %v7775 = vpop.permute.xlu0 %7774
  %7776 = vrot.lane.b32.xlu0 %v7719, 127
  %v7777 = vpop.permute.xlu0 %7776
  %7778 = vrot.lane.b32.xlu0 %v7720, 127
  %v7779 = vpop.permute.xlu0 %7778
  %7780 = vrot.lane.b32.xlu0 %v7721, 127
  %v7781 = vpop.permute.xlu0 %7780
  %7782 = vrot.lane.b32.xlu0 %v7722, 127
  %v7783 = vpop.permute.xlu0 %7782
  %7784 = vrot.lane.b32.xlu0 %v7723, 127
  %v7785 = vpop.permute.xlu0 %7784
  %7786 = vrot.lane.b32.xlu0 %v7724, 127
  %v7787 = vpop.permute.xlu0 %7786
  %7788 = vrot.lane.b32.xlu0 %v7725, 127
  %v7789 = vpop.permute.xlu0 %7788
  %7790 = vrot.lane.b32.xlu0 %v7726, 127
  %v7791 = vpop.permute.xlu0 %7790
  %7792 = vrot.lane.b32.xlu0 %v7727, 127
  %v7793 = vpop.permute.xlu0 %7792
  %7794 = vrot.lane.b32.xlu0 %v7728, 127
  %v7795 = vpop.permute.xlu0 %7794
  %7796 = vrot.lane.b32.xlu0 %v7729, 127
  %v7797 = vpop.permute.xlu0 %7796
  %7798 = vrot.lane.b32.xlu0 %v7730, 127
  %v7799 = vpop.permute.xlu0 %7798
  %7800 = vrot.lane.b32.xlu0 %v7731, 127
  %v7801 = vpop.permute.xlu0 %7800
  %7802 = vrot.lane.b32.xlu0 %v7732, 127
  %v7803 = vpop.permute.xlu0 %7802
  %7804 = vrot.lane.b32.xlu0 %v7733, 127
  %v7805 = vpop.permute.xlu0 %7804
  %7806 = vrot.lane.b32.xlu0 %v7734, 127
  %v7807 = vpop.permute.xlu0 %7806
  %7808 = vrot.lane.b32.xlu0 %v7735, 127
  %v7809 = vpop.permute.xlu0 %7808
  %7810 = vrot.lane.b32.xlu0 %v7736, 127
  %v7811 = vpop.permute.xlu0 %7810
  %7812 = vrot.lane.b32.xlu0 %v7737, 127
  %v7813 = vpop.permute.xlu0 %7812
  %7814 = vrot.lane.b32.xlu0 %v7738, 127
  %v7815 = vpop.permute.xlu0 %7814
  %7816 = vrot.lane.b32.xlu0 %v7739, 127
  %v7817 = vpop.permute.xlu0 %7816
  %7818 = vrot.lane.b32.xlu0 %v7740, 127
  %v7819 = vpop.permute.xlu0 %7818
  %7820 = vrot.lane.b32.xlu0 %v7741, 127
  %v7821 = vpop.permute.xlu0 %7820
  %7822 = vrot.lane.b32.xlu0 %v7742, 127
  %v7823 = vpop.permute.xlu0 %7822
  %7824 = vrot.lane.b32.xlu0 %v7743, 127
  %v7825 = vpop.permute.xlu0 %7824
  %7826 = vrot.lane.b32.xlu0 %v7744, 127
  %v7827 = vpop.permute.xlu0 %7826
  %7828 = vrot.lane.b32.xlu0 %v7745, 127
  %v7829 = vpop.permute.xlu0 %7828
  %v7830 = vsel %vm1226, %v7775, %v7777
  %v7831 = vsel %vm1226, %v7777, %v7779
  %v7832 = vsel %vm1226, %v7779, %v7781
  %v7833 = vsel %vm1226, %v7781, %v7783
  %v7834 = vsel %vm1226, %v7783, %v7785
  %v7835 = vsel %vm1226, %v7785, %v7787
  %v7836 = vsel %vm1226, %v7789, %v7791
  %v7837 = vsel %vm1226, %v7791, %v7793
  %v7838 = vsel %vm1226, %v7793, %v7795
  %v7839 = vsel %vm1226, %v7795, %v7797
  %v7840 = vsel %vm1226, %v7797, %v7799
  %v7841 = vsel %vm1226, %v7799, %v7801
  %v7842 = vsel %vm1226, %v7803, %v7805
  %v7843 = vsel %vm1226, %v7805, %v7807
  %v7844 = vsel %vm1226, %v7807, %v7809
  %v7845 = vsel %vm1226, %v7809, %v7811
  %v7846 = vsel %vm1226, %v7811, %v7813
  %v7847 = vsel %vm1226, %v7813, %v7815
  %v7848 = vsel %vm1226, %v7817, %v7819
  %v7849 = vsel %vm1226, %v7819, %v7821
  %v7850 = vsel %vm1226, %v7821, %v7823
  %v7851 = vsel %vm1226, %v7823, %v7825
  %v7852 = vsel %vm1226, %v7825, %v7827
  %v7853 = vsel %vm1226, %v7827, %v7829
  %7878 = vst [vmem:[#allocation4 + $0x3c0] sm:$0xff] %v7830
  %7879 = vst [vmem:[#allocation4 + $0x3c8] sm:$0xff] %v7831
  %7880 = vst [vmem:[#allocation4 + $0x3d0] sm:$0xff] %v7832
  %7881 = vst [vmem:[#allocation4 + $0x3d8] sm:$0xff] %v7833
  %7882 = vst [vmem:[#allocation4 + $0x3e0] sm:$0xff] %v7834
  %7883 = vst [vmem:[#allocation4 + $0x3e8] sm:$0xff] %v7835
  %7884 = vst [vmem:[#allocation4 + $0x3f0] sm:$0xff] %v7836
  %7885 = vst [vmem:[#allocation4 + $0x3f8] sm:$0xff] %v7837
  %7886 = vst [vmem:[#allocation4 + $0x400] sm:$0xff] %v7838
  %7887 = vst [vmem:[#allocation4 + $0x408] sm:$0xff] %v7839
  %7888 = vst [vmem:[#allocation4 + $0x410] sm:$0xff] %v7840
  %7889 = vst [vmem:[#allocation4 + $0x418] sm:$0xff] %v7841
  %7890 = vst [vmem:[#allocation4 + $0x420] sm:$0xff] %v7842
  %7891 = vst [vmem:[#allocation4 + $0x428] sm:$0xff] %v7843
  %7892 = vst [vmem:[#allocation4 + $0x430] sm:$0xff] %v7844
  %7893 = vst [vmem:[#allocation4 + $0x438] sm:$0xff] %v7845
  %7894 = vst [vmem:[#allocation4 + $0x440] sm:$0xff] %v7846
  %7895 = vst [vmem:[#allocation4 + $0x448] sm:$0xff] %v7847
  %7896 = vst [vmem:[#allocation4 + $0x450] sm:$0xff] %v7848
  %7897 = vst [vmem:[#allocation4 + $0x458] sm:$0xff] %v7849
  %7898 = vst [vmem:[#allocation4 + $0x460] sm:$0xff] %v7850
  %7899 = vst [vmem:[#allocation4 + $0x468] sm:$0xff] %v7851
  %7900 = vst [vmem:[#allocation4 + $0x470] sm:$0xff] %v7852
  %7901 = vst [vmem:[#allocation4 + $0x478] sm:$0xff] %v7853
  %v7902 = vld [vmem:[#allocation3 + $0x8] sm:$0xff]
  %v7903 = vld [vmem:[#allocation3 + $0x10] sm:$0xff]
  %v7904 = vld [vmem:[#allocation3 + $0x18] sm:$0xff]
  %v7905 = vld [vmem:[#allocation3 + $0x20] sm:$0xff]
  %v7906 = vld [vmem:[#allocation3 + $0x28] sm:$0xff]
  %v7907 = vld [vmem:[#allocation3 + $0x30] sm:$0xff]
  %v7908 = vld [vmem:[#allocation3 + $0x38] sm:$0xff]
  %v7909 = vld [vmem:[#allocation3 + $0x48] sm:$0xff]
  %v7910 = vld [vmem:[#allocation3 + $0x50] sm:$0xff]
  %v7911 = vld [vmem:[#allocation3 + $0x58] sm:$0xff]
  %v7912 = vld [vmem:[#allocation3 + $0x60] sm:$0xff]
  %v7913 = vld [vmem:[#allocation3 + $0x68] sm:$0xff]
  %v7914 = vld [vmem:[#allocation3 + $0x70] sm:$0xff]
  %v7915 = vld [vmem:[#allocation3 + $0x78] sm:$0xff]
  %v7916 = vld [vmem:[#allocation3 + $0x88] sm:$0xff]
  %v7917 = vld [vmem:[#allocation3 + $0x90] sm:$0xff]
  %v7918 = vld [vmem:[#allocation3 + $0x98] sm:$0xff]
  %v7919 = vld [vmem:[#allocation3 + $0xa0] sm:$0xff]
  %v7920 = vld [vmem:[#allocation3 + $0xa8] sm:$0xff]
  %v7921 = vld [vmem:[#allocation3 + $0xb0] sm:$0xff]
  %v7922 = vld [vmem:[#allocation3 + $0xb8] sm:$0xff]
  %v7923 = vld [vmem:[#allocation3 + $0xc8] sm:$0xff]
  %v7924 = vld [vmem:[#allocation3 + $0xd0] sm:$0xff]
  %v7925 = vld [vmem:[#allocation3 + $0xd8] sm:$0xff]
  %v7926 = vld [vmem:[#allocation3 + $0xe0] sm:$0xff]
  %v7927 = vld [vmem:[#allocation3 + $0xe8] sm:$0xff]
  %v7928 = vld [vmem:[#allocation3 + $0xf0] sm:$0xff]
  %v7929 = vld [vmem:[#allocation3 + $0xf8] sm:$0xff]
  %7958 = vrot.lane.b32.xlu0 %v7902, 111
  %v7959 = vpop.permute.xlu0 %7958
  %7960 = vrot.lane.b32.xlu0 %v7903, 111
  %v7961 = vpop.permute.xlu0 %7960
  %7962 = vrot.lane.b32.xlu0 %v7904, 111
  %v7963 = vpop.permute.xlu0 %7962
  %7964 = vrot.lane.b32.xlu0 %v7905, 111
  %v7965 = vpop.permute.xlu0 %7964
  %7966 = vrot.lane.b32.xlu0 %v7906, 111
  %v7967 = vpop.permute.xlu0 %7966
  %7968 = vrot.lane.b32.xlu0 %v7907, 111
  %v7969 = vpop.permute.xlu0 %7968
  %7970 = vrot.lane.b32.xlu0 %v7908, 111
  %v7971 = vpop.permute.xlu0 %7970
  %7972 = vrot.lane.b32.xlu0 %v7909, 111
  %v7973 = vpop.permute.xlu0 %7972
  %7974 = vrot.lane.b32.xlu0 %v7910, 111
  %v7975 = vpop.permute.xlu0 %7974
  %7976 = vrot.lane.b32.xlu0 %v7911, 111
  %v7977 = vpop.permute.xlu0 %7976
  %7978 = vrot.lane.b32.xlu0 %v7912, 111
  %v7979 = vpop.permute.xlu0 %7978
  %7980 = vrot.lane.b32.xlu0 %v7913, 111
  %v7981 = vpop.permute.xlu0 %7980
  %7982 = vrot.lane.b32.xlu0 %v7914, 111
  %v7983 = vpop.permute.xlu0 %7982
  %7984 = vrot.lane.b32.xlu0 %v7915, 111
  %v7985 = vpop.permute.xlu0 %7984
  %7986 = vrot.lane.b32.xlu0 %v7916, 111
  %v7987 = vpop.permute.xlu0 %7986
  %7988 = vrot.lane.b32.xlu0 %v7917, 111
  %v7989 = vpop.permute.xlu0 %7988
  %7990 = vrot.lane.b32.xlu0 %v7918, 111
  %v7991 = vpop.permute.xlu0 %7990
  %7992 = vrot.lane.b32.xlu0 %v7919, 111
  %v7993 = vpop.permute.xlu0 %7992
  %7994 = vrot.lane.b32.xlu0 %v7920, 111
  %v7995 = vpop.permute.xlu0 %7994
  %7996 = vrot.lane.b32.xlu0 %v7921, 111
  %v7997 = vpop.permute.xlu0 %7996
  %7998 = vrot.lane.b32.xlu0 %v7922, 111
  %v7999 = vpop.permute.xlu0 %7998
  %8000 = vrot.lane.b32.xlu0 %v7923, 111
  %v8001 = vpop.permute.xlu0 %8000
  %8002 = vrot.lane.b32.xlu0 %v7924, 111
  %v8003 = vpop.permute.xlu0 %8002
  %8004 = vrot.lane.b32.xlu0 %v7925, 111
  %v8005 = vpop.permute.xlu0 %8004
  %8006 = vrot.lane.b32.xlu0 %v7926, 111
  %v8007 = vpop.permute.xlu0 %8006
  %8008 = vrot.lane.b32.xlu0 %v7927, 111
  %v8009 = vpop.permute.xlu0 %8008
  %8010 = vrot.lane.b32.xlu0 %v7928, 111
  %v8011 = vpop.permute.xlu0 %8010
  %8012 = vrot.lane.b32.xlu0 %v7929, 111
  %v8013 = vpop.permute.xlu0 %8012
  %v8014 = vsel %vm1319, %v7959, %v7961
  %v8015 = vsel %vm1319, %v7961, %v7963
  %v8016 = vsel %vm1319, %v7963, %v7965
  %v8017 = vsel %vm1319, %v7965, %v7967
  %v8018 = vsel %vm1319, %v7967, %v7969
  %v8019 = vsel %vm1319, %v7969, %v7971
  %v8020 = vsel %vm1319, %v7973, %v7975
  %v8021 = vsel %vm1319, %v7975, %v7977
  %v8022 = vsel %vm1319, %v7977, %v7979
  %v8023 = vsel %vm1319, %v7979, %v7981
  %v8024 = vsel %vm1319, %v7981, %v7983
  %v8025 = vsel %vm1319, %v7983, %v7985
  %v8026 = vsel %vm1319, %v7987, %v7989
  %v8027 = vsel %vm1319, %v7989, %v7991
  %v8028 = vsel %vm1319, %v7991, %v7993
  %v8029 = vsel %vm1319, %v7993, %v7995
  %v8030 = vsel %vm1319, %v7995, %v7997
  %v8031 = vsel %vm1319, %v7997, %v7999
  %v8032 = vsel %vm1319, %v8001, %v8003
  %v8033 = vsel %vm1319, %v8003, %v8005
  %v8034 = vsel %vm1319, %v8005, %v8007
  %v8035 = vsel %vm1319, %v8007, %v8009
  %v8036 = vsel %vm1319, %v8009, %v8011
  %v8037 = vsel %vm1319, %v8011, %v8013
  %8062 = vst [vmem:[#allocation4 + $0x480] sm:$0xff] %v8014
  %8063 = vst [vmem:[#allocation4 + $0x488] sm:$0xff] %v8015
  %8064 = vst [vmem:[#allocation4 + $0x490] sm:$0xff] %v8016
  %8065 = vst [vmem:[#allocation4 + $0x498] sm:$0xff] %v8017
  %8066 = vst [vmem:[#allocation4 + $0x4a0] sm:$0xff] %v8018
  %8067 = vst [vmem:[#allocation4 + $0x4a8] sm:$0xff] %v8019
  %8068 = vst [vmem:[#allocation4 + $0x4b0] sm:$0xff] %v8020
  %8069 = vst [vmem:[#allocation4 + $0x4b8] sm:$0xff] %v8021
  %8070 = vst [vmem:[#allocation4 + $0x4c0] sm:$0xff] %v8022
  %8071 = vst [vmem:[#allocation4 + $0x4c8] sm:$0xff] %v8023
  %8072 = vst [vmem:[#allocation4 + $0x4d0] sm:$0xff] %v8024
  %8073 = vst [vmem:[#allocation4 + $0x4d8] sm:$0xff] %v8025
  %8074 = vst [vmem:[#allocation4 + $0x4e0] sm:$0xff] %v8026
  %8075 = vst [vmem:[#allocation4 + $0x4e8] sm:$0xff] %v8027
  %8076 = vst [vmem:[#allocation4 + $0x4f0] sm:$0xff] %v8028
  %8077 = vst [vmem:[#allocation4 + $0x4f8] sm:$0xff] %v8029
  %8078 = vst [vmem:[#allocation4 + $0x500] sm:$0xff] %v8030
  %8079 = vst [vmem:[#allocation4 + $0x508] sm:$0xff] %v8031
  %8080 = vst [vmem:[#allocation4 + $0x510] sm:$0xff] %v8032
  %8081 = vst [vmem:[#allocation4 + $0x518] sm:$0xff] %v8033
  %8082 = vst [vmem:[#allocation4 + $0x520] sm:$0xff] %v8034
  %8083 = vst [vmem:[#allocation4 + $0x528] sm:$0xff] %v8035
  %8084 = vst [vmem:[#allocation4 + $0x530] sm:$0xff] %v8036
  %8085 = vst [vmem:[#allocation4 + $0x538] sm:$0xff] %v8037
  %v8086 = vld [vmem:[#allocation3 + $0x8] sm:$0xff]
  %v8087 = vld [vmem:[#allocation3 + $0x10] sm:$0xff]
  %v8088 = vld [vmem:[#allocation3 + $0x18] sm:$0xff]
  %v8089 = vld [vmem:[#allocation3 + $0x20] sm:$0xff]
  %v8090 = vld [vmem:[#allocation3 + $0x28] sm:$0xff]
  %v8091 = vld [vmem:[#allocation3 + $0x30] sm:$0xff]
  %v8092 = vld [vmem:[#allocation3 + $0x38] sm:$0xff]
  %v8093 = vld [vmem:[#allocation3 + $0x48] sm:$0xff]
  %v8094 = vld [vmem:[#allocation3 + $0x50] sm:$0xff]
  %v8095 = vld [vmem:[#allocation3 + $0x58] sm:$0xff]
  %v8096 = vld [vmem:[#allocation3 + $0x60] sm:$0xff]
  %v8097 = vld [vmem:[#allocation3 + $0x68] sm:$0xff]
  %v8098 = vld [vmem:[#allocation3 + $0x70] sm:$0xff]
  %v8099 = vld [vmem:[#allocation3 + $0x78] sm:$0xff]
  %v8100 = vld [vmem:[#allocation3 + $0x88] sm:$0xff]
  %v8101 = vld [vmem:[#allocation3 + $0x90] sm:$0xff]
  %v8102 = vld [vmem:[#allocation3 + $0x98] sm:$0xff]
  %v8103 = vld [vmem:[#allocation3 + $0xa0] sm:$0xff]
  %v8104 = vld [vmem:[#allocation3 + $0xa8] sm:$0xff]
  %v8105 = vld [vmem:[#allocation3 + $0xb0] sm:$0xff]
  %v8106 = vld [vmem:[#allocation3 + $0xb8] sm:$0xff]
  %v8107 = vld [vmem:[#allocation3 + $0xc8] sm:$0xff]
  %v8108 = vld [vmem:[#allocation3 + $0xd0] sm:$0xff]
  %v8109 = vld [vmem:[#allocation3 + $0xd8] sm:$0xff]
  %v8110 = vld [vmem:[#allocation3 + $0xe0] sm:$0xff]
  %v8111 = vld [vmem:[#allocation3 + $0xe8] sm:$0xff]
  %v8112 = vld [vmem:[#allocation3 + $0xf0] sm:$0xff]
  %v8113 = vld [vmem:[#allocation3 + $0xf8] sm:$0xff]
  %8142 = vrot.lane.b32.xlu0 %v8086, 110
  %v8143 = vpop.permute.xlu0 %8142
  %8144 = vrot.lane.b32.xlu0 %v8087, 110
  %v8145 = vpop.permute.xlu0 %8144
  %8146 = vrot.lane.b32.xlu0 %v8088, 110
  %v8147 = vpop.permute.xlu0 %8146
  %8148 = vrot.lane.b32.xlu0 %v8089, 110
  %v8149 = vpop.permute.xlu0 %8148
  %8150 = vrot.lane.b32.xlu0 %v8090, 110
  %v8151 = vpop.permute.xlu0 %8150
  %8152 = vrot.lane.b32.xlu0 %v8091, 110
  %v8153 = vpop.permute.xlu0 %8152
  %8154 = vrot.lane.b32.xlu0 %v8092, 110
  %v8155 = vpop.permute.xlu0 %8154
  %8156 = vrot.lane.b32.xlu0 %v8093, 110
  %v8157 = vpop.permute.xlu0 %8156
  %8158 = vrot.lane.b32.xlu0 %v8094, 110
  %v8159 = vpop.permute.xlu0 %8158
  %8160 = vrot.lane.b32.xlu0 %v8095, 110
  %v8161 = vpop.permute.xlu0 %8160
  %8162 = vrot.lane.b32.xlu0 %v8096, 110
  %v8163 = vpop.permute.xlu0 %8162
  %8164 = vrot.lane.b32.xlu0 %v8097, 110
  %v8165 = vpop.permute.xlu0 %8164
  %8166 = vrot.lane.b32.xlu0 %v8098, 110
  %v8167 = vpop.permute.xlu0 %8166
  %8168 = vrot.lane.b32.xlu0 %v8099, 110
  %v8169 = vpop.permute.xlu0 %8168
  %8170 = vrot.lane.b32.xlu0 %v8100, 110
  %v8171 = vpop.permute.xlu0 %8170
  %8172 = vrot.lane.b32.xlu0 %v8101, 110
  %v8173 = vpop.permute.xlu0 %8172
  %8174 = vrot.lane.b32.xlu0 %v8102, 110
  %v8175 = vpop.permute.xlu0 %8174
  %8176 = vrot.lane.b32.xlu0 %v8103, 110
  %v8177 = vpop.permute.xlu0 %8176
  %8178 = vrot.lane.b32.xlu0 %v8104, 110
  %v8179 = vpop.permute.xlu0 %8178
  %8180 = vrot.lane.b32.xlu0 %v8105, 110
  %v8181 = vpop.permute.xlu0 %8180
  %8182 = vrot.lane.b32.xlu0 %v8106, 110
  %v8183 = vpop.permute.xlu0 %8182
  %8184 = vrot.lane.b32.xlu0 %v8107, 110
  %v8185 = vpop.permute.xlu0 %8184
  %8186 = vrot.lane.b32.xlu0 %v8108, 110
  %v8187 = vpop.permute.xlu0 %8186
  %8188 = vrot.lane.b32.xlu0 %v8109, 110
  %v8189 = vpop.permute.xlu0 %8188
  %8190 = vrot.lane.b32.xlu0 %v8110, 110
  %v8191 = vpop.permute.xlu0 %8190
  %8192 = vrot.lane.b32.xlu0 %v8111, 110
  %v8193 = vpop.permute.xlu0 %8192
  %8194 = vrot.lane.b32.xlu0 %v8112, 110
  %v8195 = vpop.permute.xlu0 %8194
  %8196 = vrot.lane.b32.xlu0 %v8113, 110
  %v8197 = vpop.permute.xlu0 %8196
  %v8198 = vsel %vm1412, %v8143, %v8145
  %v8199 = vsel %vm1412, %v8145, %v8147
  %v8200 = vsel %vm1412, %v8147, %v8149
  %v8201 = vsel %vm1412, %v8149, %v8151
  %v8202 = vsel %vm1412, %v8151, %v8153
  %v8203 = vsel %vm1412, %v8153, %v8155
  %v8204 = vsel %vm1412, %v8157, %v8159
  %v8205 = vsel %vm1412, %v8159, %v8161
  %v8206 = vsel %vm1412, %v8161, %v8163
  %v8207 = vsel %vm1412, %v8163, %v8165
  %v8208 = vsel %vm1412, %v8165, %v8167
  %v8209 = vsel %vm1412, %v8167, %v8169
  %v8210 = vsel %vm1412, %v8171, %v8173
  %v8211 = vsel %vm1412, %v8173, %v8175
  %v8212 = vsel %vm1412, %v8175, %v8177
  %v8213 = vsel %vm1412, %v8177, %v8179
  %v8214 = vsel %vm1412, %v8179, %v8181
  %v8215 = vsel %vm1412, %v8181, %v8183
  %v8216 = vsel %vm1412, %v8185, %v8187
  %v8217 = vsel %vm1412, %v8187, %v8189
  %v8218 = vsel %vm1412, %v8189, %v8191
  %v8219 = vsel %vm1412, %v8191, %v8193
  %v8220 = vsel %vm1412, %v8193, %v8195
  %v8221 = vsel %vm1412, %v8195, %v8197
  %8246 = vst [vmem:[#allocation4 + $0x540] sm:$0xff] %v8198
  %8247 = vst [vmem:[#allocation4 + $0x548] sm:$0xff] %v8199
  %8248 = vst [vmem:[#allocation4 + $0x550] sm:$0xff] %v8200
  %8249 = vst [vmem:[#allocation4 + $0x558] sm:$0xff] %v8201
  %8250 = vst [vmem:[#allocation4 + $0x560] sm:$0xff] %v8202
  %8251 = vst [vmem:[#allocation4 + $0x568] sm:$0xff] %v8203
  %8252 = vst [vmem:[#allocation4 + $0x570] sm:$0xff] %v8204
  %8253 = vst [vmem:[#allocation4 + $0x578] sm:$0xff] %v8205
  %8254 = vst [vmem:[#allocation4 + $0x580] sm:$0xff] %v8206
  %8255 = vst [vmem:[#allocation4 + $0x588] sm:$0xff] %v8207
  %8256 = vst [vmem:[#allocation4 + $0x590] sm:$0xff] %v8208
  %8257 = vst [vmem:[#allocation4 + $0x598] sm:$0xff] %v8209
  %8258 = vst [vmem:[#allocation4 + $0x5a0] sm:$0xff] %v8210
  %8259 = vst [vmem:[#allocation4 + $0x5a8] sm:$0xff] %v8211
  %8260 = vst [vmem:[#allocation4 + $0x5b0] sm:$0xff] %v8212
  %8261 = vst [vmem:[#allocation4 + $0x5b8] sm:$0xff] %v8213
  %8262 = vst [vmem:[#allocation4 + $0x5c0] sm:$0xff] %v8214
  %8263 = vst [vmem:[#allocation4 + $0x5c8] sm:$0xff] %v8215
  %8264 = vst [vmem:[#allocation4 + $0x5d0] sm:$0xff] %v8216
  %8265 = vst [vmem:[#allocation4 + $0x5d8] sm:$0xff] %v8217
  %8266 = vst [vmem:[#allocation4 + $0x5e0] sm:$0xff] %v8218
  %8267 = vst [vmem:[#allocation4 + $0x5e8] sm:$0xff] %v8219
  %8268 = vst [vmem:[#allocation4 + $0x5f0] sm:$0xff] %v8220
  %8269 = vst [vmem:[#allocation4 + $0x5f8] sm:$0xff] %v8221
  %v8270 = vld [vmem:[#allocation3 + $0x8] sm:$0xff]
  %v8271 = vld [vmem:[#allocation3 + $0x10] sm:$0xff]
  %v8272 = vld [vmem:[#allocation3 + $0x18] sm:$0xff]
  %v8273 = vld [vmem:[#allocation3 + $0x20] sm:$0xff]
  %v8274 = vld [vmem:[#allocation3 + $0x28] sm:$0xff]
  %v8275 = vld [vmem:[#allocation3 + $0x30] sm:$0xff]
  %v8276 = vld [vmem:[#allocation3 + $0x38] sm:$0xff]
  %v8277 = vld [vmem:[#allocation3 + $0x48] sm:$0xff]
  %v8278 = vld [vmem:[#allocation3 + $0x50] sm:$0xff]
  %v8279 = vld [vmem:[#allocation3 + $0x58] sm:$0xff]
  %v8280 = vld [vmem:[#allocation3 + $0x60] sm:$0xff]
  %v8281 = vld [vmem:[#allocation3 + $0x68] sm:$0xff]
  %v8282 = vld [vmem:[#allocation3 + $0x70] sm:$0xff]
  %v8283 = vld [vmem:[#allocation3 + $0x78] sm:$0xff]
  %v8284 = vld [vmem:[#allocation3 + $0x88] sm:$0xff]
  %v8285 = vld [vmem:[#allocation3 + $0x90] sm:$0xff]
  %v8286 = vld [vmem:[#allocation3 + $0x98] sm:$0xff]
  %v8287 = vld [vmem:[#allocation3 + $0xa0] sm:$0xff]
  %v8288 = vld [vmem:[#allocation3 + $0xa8] sm:$0xff]
  %v8289 = vld [vmem:[#allocation3 + $0xb0] sm:$0xff]
  %v8290 = vld [vmem:[#allocation3 + $0xb8] sm:$0xff]
  %v8291 = vld [vmem:[#allocation3 + $0xc8] sm:$0xff]
  %v8292 = vld [vmem:[#allocation3 + $0xd0] sm:$0xff]
  %v8293 = vld [vmem:[#allocation3 + $0xd8] sm:$0xff]
  %v8294 = vld [vmem:[#allocation3 + $0xe0] sm:$0xff]
  %v8295 = vld [vmem:[#allocation3 + $0xe8] sm:$0xff]
  %v8296 = vld [vmem:[#allocation3 + $0xf0] sm:$0xff]
  %v8297 = vld [vmem:[#allocation3 + $0xf8] sm:$0xff]
  %8326 = vrot.lane.b32.xlu0 %v8270, 109
  %v8327 = vpop.permute.xlu0 %8326
  %8328 = vrot.lane.b32.xlu0 %v8271, 109
  %v8329 = vpop.permute.xlu0 %8328
  %8330 = vrot.lane.b32.xlu0 %v8272, 109
  %v8331 = vpop.permute.xlu0 %8330
  %8332 = vrot.lane.b32.xlu0 %v8273, 109
  %v8333 = vpop.permute.xlu0 %8332
  %8334 = vrot.lane.b32.xlu0 %v8274, 109
  %v8335 = vpop.permute.xlu0 %8334
  %8336 = vrot.lane.b32.xlu0 %v8275, 109
  %v8337 = vpop.permute.xlu0 %8336
  %8338 = vrot.lane.b32.xlu0 %v8276, 109
  %v8339 = vpop.permute.xlu0 %8338
  %8340 = vrot.lane.b32.xlu0 %v8277, 109
  %v8341 = vpop.permute.xlu0 %8340
  %8342 = vrot.lane.b32.xlu0 %v8278, 109
  %v8343 = vpop.permute.xlu0 %8342
  %8344 = vrot.lane.b32.xlu0 %v8279, 109
  %v8345 = vpop.permute.xlu0 %8344
  %8346 = vrot.lane.b32.xlu0 %v8280, 109
  %v8347 = vpop.permute.xlu0 %8346
  %8348 = vrot.lane.b32.xlu0 %v8281, 109
  %v8349 = vpop.permute.xlu0 %8348
  %8350 = vrot.lane.b32.xlu0 %v8282, 109
  %v8351 = vpop.permute.xlu0 %8350
  %8352 = vrot.lane.b32.xlu0 %v8283, 109
  %v8353 = vpop.permute.xlu0 %8352
  %8354 = vrot.lane.b32.xlu0 %v8284, 109
  %v8355 = vpop.permute.xlu0 %8354
  %8356 = vrot.lane.b32.xlu0 %v8285, 109
  %v8357 = vpop.permute.xlu0 %8356
  %8358 = vrot.lane.b32.xlu0 %v8286, 109
  %v8359 = vpop.permute.xlu0 %8358
  %8360 = vrot.lane.b32.xlu0 %v8287, 109
  %v8361 = vpop.permute.xlu0 %8360
  %8362 = vrot.lane.b32.xlu0 %v8288, 109
  %v8363 = vpop.permute.xlu0 %8362
  %8364 = vrot.lane.b32.xlu0 %v8289, 109
  %v8365 = vpop.permute.xlu0 %8364
  %8366 = vrot.lane.b32.xlu0 %v8290, 109
  %v8367 = vpop.permute.xlu0 %8366
  %8368 = vrot.lane.b32.xlu0 %v8291, 109
  %v8369 = vpop.permute.xlu0 %8368
  %8370 = vrot.lane.b32.xlu0 %v8292, 109
  %v8371 = vpop.permute.xlu0 %8370
  %8372 = vrot.lane.b32.xlu0 %v8293, 109
  %v8373 = vpop.permute.xlu0 %8372
  %8374 = vrot.lane.b32.xlu0 %v8294, 109
  %v8375 = vpop.permute.xlu0 %8374
  %8376 = vrot.lane.b32.xlu0 %v8295, 109
  %v8377 = vpop.permute.xlu0 %8376
  %8378 = vrot.lane.b32.xlu0 %v8296, 109
  %v8379 = vpop.permute.xlu0 %8378
  %8380 = vrot.lane.b32.xlu0 %v8297, 109
  %v8381 = vpop.permute.xlu0 %8380
  %v8382 = vsel %vm1505, %v8327, %v8329
  %v8383 = vsel %vm1505, %v8329, %v8331
  %v8384 = vsel %vm1505, %v8331, %v8333
  %v8385 = vsel %vm1505, %v8333, %v8335
  %v8386 = vsel %vm1505, %v8335, %v8337
  %v8387 = vsel %vm1505, %v8337, %v8339
  %v8388 = vsel %vm1505, %v8341, %v8343
  %v8389 = vsel %vm1505, %v8343, %v8345
  %v8390 = vsel %vm1505, %v8345, %v8347
  %v8391 = vsel %vm1505, %v8347, %v8349
  %v8392 = vsel %vm1505, %v8349, %v8351
  %v8393 = vsel %vm1505, %v8351, %v8353
  %v8394 = vsel %vm1505, %v8355, %v8357
  %v8395 = vsel %vm1505, %v8357, %v8359
  %v8396 = vsel %vm1505, %v8359, %v8361
  %v8397 = vsel %vm1505, %v8361, %v8363
  %v8398 = vsel %vm1505, %v8363, %v8365
  %v8399 = vsel %vm1505, %v8365, %v8367
  %v8400 = vsel %vm1505, %v8369, %v8371
  %v8401 = vsel %vm1505, %v8371, %v8373
  %v8402 = vsel %vm1505, %v8373, %v8375
  %v8403 = vsel %vm1505, %v8375, %v8377
  %v8404 = vsel %vm1505, %v8377, %v8379
  %v8405 = vsel %vm1505, %v8379, %v8381
  %8430 = vst [vmem:[#allocation4 + $0x600] sm:$0xff] %v8382
  %8431 = vst [vmem:[#allocation4 + $0x608] sm:$0xff] %v8383
  %8432 = vst [vmem:[#allocation4 + $0x610] sm:$0xff] %v8384
  %8433 = vst [vmem:[#allocation4 + $0x618] sm:$0xff] %v8385
  %8434 = vst [vmem:[#allocation4 + $0x620] sm:$0xff] %v8386
  %8435 = vst [vmem:[#allocation4 + $0x628] sm:$0xff] %v8387
  %8436 = vst [vmem:[#allocation4 + $0x630] sm:$0xff] %v8388
  %8437 = vst [vmem:[#allocation4 + $0x638] sm:$0xff] %v8389
  %8438 = vst [vmem:[#allocation4 + $0x640] sm:$0xff] %v8390
  %8439 = vst [vmem:[#allocation4 + $0x648] sm:$0xff] %v8391
  %8440 = vst [vmem:[#allocation4 + $0x650] sm:$0xff] %v8392
  %8441 = vst [vmem:[#allocation4 + $0x658] sm:$0xff] %v8393
  %8442 = vst [vmem:[#allocation4 + $0x660] sm:$0xff] %v8394
  %8443 = vst [vmem:[#allocation4 + $0x668] sm:$0xff] %v8395
  %8444 = vst [vmem:[#allocation4 + $0x670] sm:$0xff] %v8396
  %8445 = vst [vmem:[#allocation4 + $0x678] sm:$0xff] %v8397
  %8446 = vst [vmem:[#allocation4 + $0x680] sm:$0xff] %v8398
  %8447 = vst [vmem:[#allocation4 + $0x688] sm:$0xff] %v8399
  %8448 = vst [vmem:[#allocation4 + $0x690] sm:$0xff] %v8400
  %8449 = vst [vmem:[#allocation4 + $0x698] sm:$0xff] %v8401
  %8450 = vst [vmem:[#allocation4 + $0x6a0] sm:$0xff] %v8402
  %8451 = vst [vmem:[#allocation4 + $0x6a8] sm:$0xff] %v8403
  %8452 = vst [vmem:[#allocation4 + $0x6b0] sm:$0xff] %v8404
  %8453 = vst [vmem:[#allocation4 + $0x6b8] sm:$0xff] %v8405
  %v8454 = vld [vmem:[%s13] sm:$0xff]
  %v8455 = vld [vmem:[%s13 + $0x8] sm:$0xf]
  %v8456 = vld [vmem:[#allocation4] sm:$0xff]
  %v8457 = vld [vmem:[#allocation4 + $0x8] sm:$0xff]
  %v8458 = vld [vmem:[#allocation4 + $0x10] sm:$0xff]
  %v8459 = vld [vmem:[#allocation4 + $0x18] sm:$0xff]
  %v8460 = vld [vmem:[#allocation4 + $0x20] sm:$0xff]
  %v8461 = vld [vmem:[#allocation4 + $0x28] sm:$0xff]
  %v8462 = vld [vmem:[#allocation4 + $0x30] sm:$0xff]
  %v8463 = vld [vmem:[#allocation4 + $0x38] sm:$0xff]
  %v8464 = vld [vmem:[#allocation4 + $0x40] sm:$0xff]
  %v8465 = vld [vmem:[#allocation4 + $0x48] sm:$0xff]
  %v8466 = vld [vmem:[#allocation4 + $0x50] sm:$0xff]
  %v8467 = vld [vmem:[#allocation4 + $0x58] sm:$0xff]
  %v8468 = vld [vmem:[#allocation4 + $0x60] sm:$0xff]
  %v8469 = vld [vmem:[#allocation4 + $0x68] sm:$0xff]
  %v8470 = vld [vmem:[#allocation4 + $0x70] sm:$0xff]
  %v8471 = vld [vmem:[#allocation4 + $0x78] sm:$0xff]
  %v8472 = vld [vmem:[#allocation4 + $0x80] sm:$0xff]
  %v8473 = vld [vmem:[#allocation4 + $0x88] sm:$0xff]
  %v8474 = vld [vmem:[#allocation4 + $0x90] sm:$0xff]
  %v8475 = vld [vmem:[#allocation4 + $0x98] sm:$0xff]
  %v8476 = vld [vmem:[#allocation4 + $0xa0] sm:$0xff]
  %v8477 = vld [vmem:[#allocation4 + $0xa8] sm:$0xff]
  %v8478 = vld [vmem:[#allocation4 + $0xb0] sm:$0xff]
  %v8479 = vld [vmem:[#allocation4 + $0xb8] sm:$0xff]
  %v8480 = vld [vmem:[#allocation4 + $0xc0] sm:$0xff]
  %v8481 = vld [vmem:[#allocation4 + $0xc8] sm:$0xff]
  %v8482 = vld [vmem:[#allocation4 + $0xd0] sm:$0xff]
  %v8483 = vld [vmem:[#allocation4 + $0xd8] sm:$0xff]
  %v8484 = vld [vmem:[#allocation4 + $0xe0] sm:$0xff]
  %v8485 = vld [vmem:[#allocation4 + $0xe8] sm:$0xff]
  %v8486 = vld [vmem:[#allocation4 + $0xf0] sm:$0xff]
  %v8487 = vld [vmem:[#allocation4 + $0xf8] sm:$0xff]
  %v8488 = vld [vmem:[#allocation4 + $0x100] sm:$0xff]
  %v8489 = vld [vmem:[#allocation4 + $0x108] sm:$0xff]
  %v8490 = vld [vmem:[#allocation4 + $0x110] sm:$0xff]
  %v8491 = vld [vmem:[#allocation4 + $0x118] sm:$0xff]
  %v8492 = vld [vmem:[#allocation4 + $0x120] sm:$0xff]
  %v8493 = vld [vmem:[#allocation4 + $0x128] sm:$0xff]
  %v8494 = vld [vmem:[#allocation4 + $0x130] sm:$0xff]
  %v8495 = vld [vmem:[#allocation4 + $0x138] sm:$0xff]
  %v8496 = vld [vmem:[#allocation4 + $0x140] sm:$0xff]
  %v8497 = vld [vmem:[#allocation4 + $0x148] sm:$0xff]
  %v8498 = vld [vmem:[#allocation4 + $0x150] sm:$0xff]
  %v8499 = vld [vmem:[#allocation4 + $0x158] sm:$0xff]
  %v8500 = vld [vmem:[#allocation4 + $0x160] sm:$0xff]
  %v8501 = vld [vmem:[#allocation4 + $0x168] sm:$0xff]
  %v8502 = vld [vmem:[#allocation4 + $0x170] sm:$0xff]
  %v8503 = vld [vmem:[#allocation4 + $0x178] sm:$0xff]
  %v8504 = vld [vmem:[#allocation4 + $0x180] sm:$0xff]
  %v8505 = vld [vmem:[#allocation4 + $0x188] sm:$0xff]
  %v8506 = vld [vmem:[#allocation4 + $0x190] sm:$0xff]
  %v8507 = vld [vmem:[#allocation4 + $0x198] sm:$0xff]
  %v8508 = vld [vmem:[#allocation4 + $0x1a0] sm:$0xff]
  %v8509 = vld [vmem:[#allocation4 + $0x1a8] sm:$0xff]
  %v8510 = vld [vmem:[#allocation4 + $0x1b0] sm:$0xff]
  %v8511 = vld [vmem:[#allocation4 + $0x1b8] sm:$0xff]
  %v8512 = vld [vmem:[#allocation4 + $0x1c0] sm:$0xff]
  %v8513 = vld [vmem:[#allocation4 + $0x1c8] sm:$0xff]
  %v8514 = vld [vmem:[#allocation4 + $0x1d0] sm:$0xff]
  %v8515 = vld [vmem:[#allocation4 + $0x1d8] sm:$0xff]
  %v8516 = vld [vmem:[#allocation4 + $0x1e0] sm:$0xff]
  %v8517 = vld [vmem:[#allocation4 + $0x1e8] sm:$0xff]
  %v8518 = vld [vmem:[#allocation4 + $0x1f0] sm:$0xff]
  %v8519 = vld [vmem:[#allocation4 + $0x1f8] sm:$0xff]
  %v8520 = vld [vmem:[#allocation4 + $0x200] sm:$0xff]
  %v8521 = vld [vmem:[#allocation4 + $0x208] sm:$0xff]
  %v8522 = vld [vmem:[#allocation4 + $0x210] sm:$0xff]
  %v8523 = vld [vmem:[#allocation4 + $0x218] sm:$0xff]
  %v8524 = vld [vmem:[#allocation4 + $0x220] sm:$0xff]
  %v8525 = vld [vmem:[#allocation4 + $0x228] sm:$0xff]
  %v8526 = vld [vmem:[#allocation4 + $0x230] sm:$0xff]
  %v8527 = vld [vmem:[#allocation4 + $0x238] sm:$0xff]
  %v8528 = vld [vmem:[#allocation4 + $0x240] sm:$0xff]
  %v8529 = vld [vmem:[#allocation4 + $0x248] sm:$0xff]
  %v8530 = vld [vmem:[#allocation4 + $0x250] sm:$0xff]
  %v8531 = vld [vmem:[#allocation4 + $0x258] sm:$0xff]
  %v8532 = vld [vmem:[#allocation4 + $0x260] sm:$0xff]
  %v8533 = vld [vmem:[#allocation4 + $0x268] sm:$0xff]
  %v8534 = vld [vmem:[#allocation4 + $0x270] sm:$0xff]
  %v8535 = vld [vmem:[#allocation4 + $0x278] sm:$0xff]
  %v8536 = vld [vmem:[#allocation4 + $0x280] sm:$0xff]
  %v8537 = vld [vmem:[#allocation4 + $0x288] sm:$0xff]
  %v8538 = vld [vmem:[#allocation4 + $0x290] sm:$0xff]
  %v8539 = vld [vmem:[#allocation4 + $0x298] sm:$0xff]
  %v8540 = vld [vmem:[#allocation4 + $0x2a0] sm:$0xff]
  %v8541 = vld [vmem:[#allocation4 + $0x2a8] sm:$0xff]
  %v8542 = vld [vmem:[#allocation4 + $0x2b0] sm:$0xff]
  %v8543 = vld [vmem:[#allocation4 + $0x2b8] sm:$0xff]
  %v8544 = vld [vmem:[#allocation4 + $0x2c0] sm:$0xff]
  %v8545 = vld [vmem:[#allocation4 + $0x2c8] sm:$0xff]
  %v8546 = vld [vmem:[#allocation4 + $0x2d0] sm:$0xff]
  %v8547 = vld [vmem:[#allocation4 + $0x2d8] sm:$0xff]
  %v8548 = vld [vmem:[#allocation4 + $0x2e0] sm:$0xff]
  %v8549 = vld [vmem:[#allocation4 + $0x2e8] sm:$0xff]
  %v8550 = vld [vmem:[#allocation4 + $0x2f0] sm:$0xff]
  %v8551 = vld [vmem:[#allocation4 + $0x2f8] sm:$0xff]
  %v8552 = vld [vmem:[#allocation4 + $0x300] sm:$0xff]
  %v8553 = vld [vmem:[#allocation4 + $0x308] sm:$0xff]
  %v8554 = vld [vmem:[#allocation4 + $0x310] sm:$0xff]
  %v8555 = vld [vmem:[#allocation4 + $0x318] sm:$0xff]
  %v8556 = vld [vmem:[#allocation4 + $0x320] sm:$0xff]
  %v8557 = vld [vmem:[#allocation4 + $0x328] sm:$0xff]
  %v8558 = vld [vmem:[#allocation4 + $0x330] sm:$0xff]
  %v8559 = vld [vmem:[#allocation4 + $0x338] sm:$0xff]
  %v8560 = vld [vmem:[#allocation4 + $0x340] sm:$0xff]
  %v8561 = vld [vmem:[#allocation4 + $0x348] sm:$0xff]
  %v8562 = vld [vmem:[#allocation4 + $0x350] sm:$0xff]
  %v8563 = vld [vmem:[#allocation4 + $0x358] sm:$0xff]
  %v8564 = vld [vmem:[#allocation4 + $0x360] sm:$0xff]
  %v8565 = vld [vmem:[#allocation4 + $0x368] sm:$0xff]
  %v8566 = vld [vmem:[#allocation4 + $0x370] sm:$0xff]
  %v8567 = vld [vmem:[#allocation4 + $0x378] sm:$0xff]
  %v8568 = vld [vmem:[#allocation4 + $0x380] sm:$0xff]
  %v8569 = vld [vmem:[#allocation4 + $0x388] sm:$0xff]
  %v8570 = vld [vmem:[#allocation4 + $0x390] sm:$0xff]
  %v8571 = vld [vmem:[#allocation4 + $0x398] sm:$0xff]
  %v8572 = vld [vmem:[#allocation4 + $0x3a0] sm:$0xff]
  %v8573 = vld [vmem:[#allocation4 + $0x3a8] sm:$0xff]
  %v8574 = vld [vmem:[#allocation4 + $0x3b0] sm:$0xff]
  %v8575 = vld [vmem:[#allocation4 + $0x3b8] sm:$0xff]
  %v8576 = vld [vmem:[#allocation4 + $0x3c0] sm:$0xff]
  %v8577 = vld [vmem:[#allocation4 + $0x3c8] sm:$0xff]
  %v8578 = vld [vmem:[#allocation4 + $0x3d0] sm:$0xff]
  %v8579 = vld [vmem:[#allocation4 + $0x3d8] sm:$0xff]
  %v8580 = vld [vmem:[#allocation4 + $0x3e0] sm:$0xff]
  %v8581 = vld [vmem:[#allocation4 + $0x3e8] sm:$0xff]
  %v8582 = vld [vmem:[#allocation4 + $0x3f0] sm:$0xff]
  %v8583 = vld [vmem:[#allocation4 + $0x3f8] sm:$0xff]
  %v8584 = vld [vmem:[#allocation4 + $0x400] sm:$0xff]
  %v8585 = vld [vmem:[#allocation4 + $0x408] sm:$0xff]
  %v8586 = vld [vmem:[#allocation4 + $0x410] sm:$0xff]
  %v8587 = vld [vmem:[#allocation4 + $0x418] sm:$0xff]
  %v8588 = vld [vmem:[#allocation4 + $0x420] sm:$0xff]
  %v8589 = vld [vmem:[#allocation4 + $0x428] sm:$0xff]
  %v8590 = vld [vmem:[#allocation4 + $0x430] sm:$0xff]
  %v8591 = vld [vmem:[#allocation4 + $0x438] sm:$0xff]
  %v8592 = vld [vmem:[#allocation4 + $0x440] sm:$0xff]
  %v8593 = vld [vmem:[#allocation4 + $0x448] sm:$0xff]
  %v8594 = vld [vmem:[#allocation4 + $0x450] sm:$0xff]
  %v8595 = vld [vmem:[#allocation4 + $0x458] sm:$0xff]
  %v8596 = vld [vmem:[#allocation4 + $0x460] sm:$0xff]
  %v8597 = vld [vmem:[#allocation4 + $0x468] sm:$0xff]
  %v8598 = vld [vmem:[#allocation4 + $0x470] sm:$0xff]
  %v8599 = vld [vmem:[#allocation4 + $0x478] sm:$0xff]
  %v8600 = vld [vmem:[#allocation4 + $0x480] sm:$0xff]
  %v8601 = vld [vmem:[#allocation4 + $0x488] sm:$0xff]
  %v8602 = vld [vmem:[#allocation4 + $0x490] sm:$0xff]
  %v8603 = vld [vmem:[#allocation4 + $0x498] sm:$0xff]
  %v8604 = vld [vmem:[#allocation4 + $0x4a0] sm:$0xff]
  %v8605 = vld [vmem:[#allocation4 + $0x4a8] sm:$0xff]
  %v8606 = vld [vmem:[#allocation4 + $0x4b0] sm:$0xff]
  %v8607 = vld [vmem:[#allocation4 + $0x4b8] sm:$0xff]
  %v8608 = vld [vmem:[#allocation4 + $0x4c0] sm:$0xff]
  %v8609 = vld [vmem:[#allocation4 + $0x4c8] sm:$0xff]
  %v8610 = vld [vmem:[#allocation4 + $0x4d0] sm:$0xff]
  %v8611 = vld [vmem:[#allocation4 + $0x4d8] sm:$0xff]
  %v8612 = vld [vmem:[#allocation4 + $0x4e0] sm:$0xff]
  %v8613 = vld [vmem:[#allocation4 + $0x4e8] sm:$0xff]
  %v8614 = vld [vmem:[#allocation4 + $0x4f0] sm:$0xff]
  %v8615 = vld [vmem:[#allocation4 + $0x4f8] sm:$0xff]
  %v8616 = vld [vmem:[#allocation4 + $0x500] sm:$0xff]
  %v8617 = vld [vmem:[#allocation4 + $0x508] sm:$0xff]
  %v8618 = vld [vmem:[#allocation4 + $0x510] sm:$0xff]
  %v8619 = vld [vmem:[#allocation4 + $0x518] sm:$0xff]
  %v8620 = vld [vmem:[#allocation4 + $0x520] sm:$0xff]
  %v8621 = vld [vmem:[#allocation4 + $0x528] sm:$0xff]
  %v8622 = vld [vmem:[#allocation4 + $0x530] sm:$0xff]
  %v8623 = vld [vmem:[#allocation4 + $0x538] sm:$0xff]
  %v8624 = vld [vmem:[#allocation4 + $0x540] sm:$0xff]
  %v8625 = vld [vmem:[#allocation4 + $0x548] sm:$0xff]
  %v8626 = vld [vmem:[#allocation4 + $0x550] sm:$0xff]
  %v8627 = vld [vmem:[#allocation4 + $0x558] sm:$0xff]
  %v8628 = vld [vmem:[#allocation4 + $0x560] sm:$0xff]
  %v8629 = vld [vmem:[#allocation4 + $0x568] sm:$0xff]
  %v8630 = vld [vmem:[#allocation4 + $0x570] sm:$0xff]
  %v8631 = vld [vmem:[#allocation4 + $0x578] sm:$0xff]
  %v8632 = vld [vmem:[#allocation4 + $0x580] sm:$0xff]
  %v8633 = vld [vmem:[#allocation4 + $0x588] sm:$0xff]
  %v8634 = vld [vmem:[#allocation4 + $0x590] sm:$0xff]
  %v8635 = vld [vmem:[#allocation4 + $0x598] sm:$0xff]
  %v8636 = vld [vmem:[#allocation4 + $0x5a0] sm:$0xff]
  %v8637 = vld [vmem:[#allocation4 + $0x5a8] sm:$0xff]
  %v8638 = vld [vmem:[#allocation4 + $0x5b0] sm:$0xff]
  %v8639 = vld [vmem:[#allocation4 + $0x5b8] sm:$0xff]
  %v8640 = vld [vmem:[#allocation4 + $0x5c0] sm:$0xff]
  %v8641 = vld [vmem:[#allocation4 + $0x5c8] sm:$0xff]
  %v8642 = vld [vmem:[#allocation4 + $0x5d0] sm:$0xff]
  %v8643 = vld [vmem:[#allocation4 + $0x5d8] sm:$0xff]
  %v8644 = vld [vmem:[#allocation4 + $0x5e0] sm:$0xff]
  %v8645 = vld [vmem:[#allocation4 + $0x5e8] sm:$0xff]
  %v8646 = vld [vmem:[#allocation4 + $0x5f0] sm:$0xff]
  %v8647 = vld [vmem:[#allocation4 + $0x5f8] sm:$0xff]
  %v8648 = vld [vmem:[#allocation4 + $0x600] sm:$0xff]
  %v8649 = vld [vmem:[#allocation4 + $0x608] sm:$0xff]
  %v8650 = vld [vmem:[#allocation4 + $0x610] sm:$0xff]
  %v8651 = vld [vmem:[#allocation4 + $0x618] sm:$0xff]
  %v8652 = vld [vmem:[#allocation4 + $0x620] sm:$0xff]
  %v8653 = vld [vmem:[#allocation4 + $0x628] sm:$0xff]
  %v8654 = vld [vmem:[#allocation4 + $0x630] sm:$0xff]
  %v8655 = vld [vmem:[#allocation4 + $0x638] sm:$0xff]
  %v8656 = vld [vmem:[#allocation4 + $0x640] sm:$0xff]
  %v8657 = vld [vmem:[#allocation4 + $0x648] sm:$0xff]
  %v8658 = vld [vmem:[#allocation4 + $0x650] sm:$0xff]
  %v8659 = vld [vmem:[#allocation4 + $0x658] sm:$0xff]
  %v8660 = vld [vmem:[#allocation4 + $0x660] sm:$0xff]
  %v8661 = vld [vmem:[#allocation4 + $0x668] sm:$0xff]
  %v8662 = vld [vmem:[#allocation4 + $0x670] sm:$0xff]
  %v8663 = vld [vmem:[#allocation4 + $0x678] sm:$0xff]
  %v8664 = vld [vmem:[#allocation4 + $0x680] sm:$0xff]
  %v8665 = vld [vmem:[#allocation4 + $0x688] sm:$0xff]
  %v8666 = vld [vmem:[#allocation4 + $0x690] sm:$0xff]
  %v8667 = vld [vmem:[#allocation4 + $0x698] sm:$0xff]
  %v8668 = vld [vmem:[#allocation4 + $0x6a0] sm:$0xff]
  %v8669 = vld [vmem:[#allocation4 + $0x6a8] sm:$0xff]
  %v8670 = vld [vmem:[#allocation4 + $0x6b0] sm:$0xff]
  %v8671 = vld [vmem:[#allocation4 + $0x6b8] sm:$0xff]
  %v8674 = vcombine.high %v8454, %v8454
  %v8676 = vsel %vm3757, %v8455, 0
  %8678 = vmatprep.subr.mxu0 %v8457
  %8679 = vmatpush1.msra.mxu0 %v8456
  %8680 = vmatprep.subr.mxu0 %v8463
  %8681 = vmatpush1.msra.mxu0 %v8462
  %8682 = vmatprep.subr.mxu0 %v8469
  %8683 = vmatpush1.msra.mxu0 %v8468
  %8684 = vmatprep.subr.mxu0 %v8475
  %8685 = vmatpush1.msra.mxu0 %v8474
  %8686 = vmatprep.subr.mxu0 %v8481
  %8687 = vmatpush1.msra.mxu0 %v8480
  %8688 = vmatprep.subr.mxu0 %v8487
  %8689 = vmatpush1.msra.mxu0 %v8486
  %8690 = vmatprep.subr.mxu0 %v8493
  %8691 = vmatpush1.msra.mxu0 %v8492
  %8692 = vmatprep.subr.mxu0 %v8499
  %8693 = vmatpush1.msra.mxu0 %v8498
  %8694 = vmatprep.subr.mxu0 %v8505
  %8695 = vmatpush1.msra.mxu0 %v8504
  %8696 = vmatprep.subr.mxu0 %v8511
  %8697 = vmatpush1.msra.mxu0 %v8510
  %8698 = vmatprep.subr.mxu0 %v8517
  %8699 = vmatpush1.msra.mxu0 %v8516
  %8700 = vmatprep.subr.mxu0 %v8523
  %8701 = vmatpush1.msra.mxu0 %v8522
  %8702 = vmatprep.subr.mxu0 %v8529
  %8703 = vmatpush1.msra.mxu0 %v8528
  %8704 = vmatprep.subr.mxu0 %v8535
  %8705 = vmatpush1.msra.mxu0 %v8534
  %8706 = vmatprep.subr.mxu0 %v8541
  %8707 = vmatpush1.msra.mxu0 %v8540
  %8708 = vmatprep.subr.mxu0 %v8547
  %8709 = vmatpush1.msra.mxu0 %v8546
  %8710 = vmatprep.subr.mxu0 %v8553
  %8711 = vmatpush1.msra.mxu0 %v8552
  %8712 = vmatprep.subr.mxu0 %v8559
  %8713 = vmatpush1.msra.mxu0 %v8558
  %8714 = vmatprep.subr.mxu0 %v8565
  %8715 = vmatpush1.msra.mxu0 %v8564
  %8716 = vmatprep.subr.mxu0 %v8571
  %8717 = vmatpush1.msra.mxu0 %v8570
  %8718 = vmatprep.subr.mxu0 %v8577
  %8719 = vmatpush1.msra.mxu0 %v8576
  %8720 = vmatprep.subr.mxu0 %v8583
  %8721 = vmatpush1.msra.mxu0 %v8582
  %8722 = vmatprep.subr.mxu0 %v8589
  %8723 = vmatpush1.msra.mxu0 %v8588
  %8724 = vmatprep.subr.mxu0 %v8595
  %8725 = vmatpush1.msra.mxu0 %v8594
  %8726 = vmatprep.subr.mxu0 %v8601
  %8727 = vmatpush1.msra.mxu0 %v8600
  %8728 = vmatprep.subr.mxu0 %v8607
  %8729 = vmatpush1.msra.mxu0 %v8606
  %8730 = vmatprep.subr.mxu0 %v8613
  %8731 = vmatpush1.msra.mxu0 %v8612
  %8732 = vmatprep.subr.mxu0 %v8619
  %8733 = vmatpush1.msra.mxu0 %v8618
  %8734 = vmatprep.subr.mxu0 %v8625
  %8735 = vmatpush1.msra.mxu0 %v8624
  %8736 = vmatprep.subr.mxu0 %v8631
  %8737 = vmatpush1.msra.mxu0 %v8630
  %8738 = vmatprep.subr.mxu0 %v8637
  %8739 = vmatpush1.msra.mxu0 %v8636
  %8740 = vmatprep.subr.mxu0 %v8643
  %8741 = vmatpush1.msra.mxu0 %v8642
  %8742 = vmatprep.mubr.f32.mxu0 %v8674
  %8743 = vmatmul.mubr.f32.gmra.mrb[0].mxu0 %v8454
  %v8744 = vpop.f32.mrb[0].mxu0
  %v8745 = vadd.f32 0.0, %v8744
  %v8746 = vpop.f32.mrb[0].mxu0
  %v8747 = vadd.f32 0.0, %v8746
  %8748 = vdwg.mxu0
  %8749 = vmatprep.subr.mxu0 %v8649
  %8750 = vmatpush1.msra.mxu0 %v8648
  %8751 = vmatprep.subr.mxu0 %v8655
  %8752 = vmatpush1.msra.mxu0 %v8654
  %8753 = vmatprep.subr.mxu0 %v8661
  %8754 = vmatpush1.msra.mxu0 %v8660
  %8755 = vmatprep.subr.mxu0 %v8667
  %8756 = vmatpush1.msra.mxu0 %v8666
  %8757 = vmatprep.subr.mxu0 0.0
  %8758 = vmatpush1.msra.mxu0 0.0
  %8759 = vmatprep.subr.mxu0 0.0
  %8760 = vmatpush1.msra.mxu0 0.0
  %8761 = vmatprep.subr.mxu0 0.0
  %8762 = vmatpush1.msra.mxu0 0.0
  %8763 = vmatprep.subr.mxu0 0.0
  %8764 = vmatpush1.msra.mxu0 0.0
  %8765 = vmatprep.subr.mxu0 0.0
  %8766 = vmatpush1.msra.mxu0 0.0
  %8767 = vmatprep.subr.mxu0 0.0
  %8768 = vmatpush1.msra.mxu0 0.0
  %8769 = vmatprep.subr.mxu0 0.0
  %8770 = vmatpush1.msra.mxu0 0.0
  %8771 = vmatprep.subr.mxu0 0.0
  %8772 = vmatpush1.msra.mxu0 0.0
  %8773 = vmatprep.subr.mxu0 0.0
  %8774 = vmatpush1.msra.mxu0 0.0
  %8775 = vmatprep.subr.mxu0 0.0
  %8776 = vmatpush1.msra.mxu0 0.0
  %8777 = vmatprep.subr.mxu0 0.0
  %8778 = vmatpush1.msra.mxu0 0.0
  %8779 = vmatprep.subr.mxu0 0.0
  %8780 = vmatpush1.msra.mxu0 0.0
  %8781 = vmatprep.subr.mxu0 0.0
  %8782 = vmatpush1.msra.mxu0 0.0
  %8783 = vmatprep.subr.mxu0 0.0
  %8784 = vmatpush1.msra.mxu0 0.0
  %8785 = vmatprep.subr.mxu0 0.0
  %8786 = vmatpush1.msra.mxu0 0.0
  %8787 = vmatprep.subr.mxu0 0.0
  %8788 = vmatpush1.msra.mxu0 0.0
  %8789 = vmatprep.subr.mxu0 0.0
  %8790 = vmatpush1.msra.mxu0 0.0
  %8791 = vmatprep.subr.mxu0 0.0
  %8792 = vmatpush1.msra.mxu0 0.0
  %8793 = vmatprep.subr.mxu0 0.0
  %8794 = vmatpush1.msra.mxu0 0.0
  %8795 = vmatprep.subr.mxu0 0.0
  %8796 = vmatpush1.msra.mxu0 0.0
  %8797 = vmatprep.subr.mxu0 0.0
  %8798 = vmatpush1.msra.mxu0 0.0
  %8799 = vmatprep.subr.mxu0 0.0
  %8800 = vmatpush1.msra.mxu0 0.0
  %8801 = vmatprep.subr.mxu0 0.0
  %8802 = vmatpush1.msra.mxu0 0.0
  %8803 = vmatprep.subr.mxu0 0.0
  %8804 = vmatpush1.msra.mxu0 0.0
  %8805 = vmatprep.subr.mxu0 0.0
  %8806 = vmatpush1.msra.mxu0 0.0
  %8807 = vmatprep.subr.mxu0 0.0
  %8808 = vmatpush1.msra.mxu0 0.0
  %8809 = vmatprep.subr.mxu0 0.0
  %8810 = vmatpush1.msra.mxu0 0.0
  %8811 = vmatprep.subr.mxu0 0.0
  %8812 = vmatpush1.msra.mxu0 0.0
  %8813 = vmatprep.mubr.f32.mxu0 0.0
  %8814 = vmatmul.mubr.f32.gmra.mrb[0].mxu0 %v8676
  %v8815 = vpop.f32.mrb[0].mxu0
  %v8816 = vadd.f32 %v8745, %v8815
  %v8817 = vpop.f32.mrb[0].mxu0
  %v8818 = vadd.f32 %v8747, %v8817
  %8819 = vdwg.mxu0
  %8820 = vmatprep.subr.mxu0 %v8459
  %8821 = vmatpush1.msra.mxu0 %v8458
  %8822 = vmatprep.subr.mxu0 %v8465
  %8823 = vmatpush1.msra.mxu0 %v8464
  %8824 = vmatprep.subr.mxu0 %v8471
  %8825 = vmatpush1.msra.mxu0 %v8470
  %8826 = vmatprep.subr.mxu0 %v8477
  %8827 = vmatpush1.msra.mxu0 %v8476
  %8828 = vmatprep.subr.mxu0 %v8483
  %8829 = vmatpush1.msra.mxu0 %v8482
  %8830 = vmatprep.subr.mxu0 %v8489
  %8831 = vmatpush1.msra.mxu0 %v8488
  %8832 = vmatprep.subr.mxu0 %v8495
  %8833 = vmatpush1.msra.mxu0 %v8494
  %8834 = vmatprep.subr.mxu0 %v8501
  %8835 = vmatpush1.msra.mxu0 %v8500
  %8836 = vmatprep.subr.mxu0 %v8507
  %8837 = vmatpush1.msra.mxu0 %v8506
  %8838 = vmatprep.subr.mxu0 %v8513
  %8839 = vmatpush1.msra.mxu0 %v8512
  %8840 = vmatprep.subr.mxu0 %v8519
  %8841 = vmatpush1.msra.mxu0 %v8518
  %8842 = vmatprep.subr.mxu0 %v8525
  %8843 = vmatpush1.msra.mxu0 %v8524
  %8844 = vmatprep.subr.mxu0 %v8531
  %8845 = vmatpush1.msra.mxu0 %v8530
  %8846 = vmatprep.subr.mxu0 %v8537
  %8847 = vmatpush1.msra.mxu0 %v8536
  %8848 = vmatprep.subr.mxu0 %v8543
  %8849 = vmatpush1.msra.mxu0 %v8542
  %8850 = vmatprep.subr.mxu0 %v8549
  %8851 = vmatpush1.msra.mxu0 %v8548
  %8852 = vmatprep.subr.mxu0 %v8555
  %8853 = vmatpush1.msra.mxu0 %v8554
  %8854 = vmatprep.subr.mxu0 %v8561
  %8855 = vmatpush1.msra.mxu0 %v8560
  %8856 = vmatprep.subr.mxu0 %v8567
  %8857 = vmatpush1.msra.mxu0 %v8566
  %8858 = vmatprep.subr.mxu0 %v8573
  %8859 = vmatpush1.msra.mxu0 %v8572
  %8860 = vmatprep.subr.mxu0 %v8579
  %8861 = vmatpush1.msra.mxu0 %v8578
  %8862 = vmatprep.subr.mxu0 %v8585
  %8863 = vmatpush1.msra.mxu0 %v8584
  %8864 = vmatprep.subr.mxu0 %v8591
  %8865 = vmatpush1.msra.mxu0 %v8590
  %8866 = vmatprep.subr.mxu0 %v8597
  %8867 = vmatpush1.msra.mxu0 %v8596
  %8868 = vmatprep.subr.mxu0 %v8603
  %8869 = vmatpush1.msra.mxu0 %v8602
  %8870 = vmatprep.subr.mxu0 %v8609
  %8871 = vmatpush1.msra.mxu0 %v8608
  %8872 = vmatprep.subr.mxu0 %v8615
  %8873 = vmatpush1.msra.mxu0 %v8614
  %8874 = vmatprep.subr.mxu0 %v8621
  %8875 = vmatpush1.msra.mxu0 %v8620
  %8876 = vmatprep.subr.mxu0 %v8627
  %8877 = vmatpush1.msra.mxu0 %v8626
  %8878 = vmatprep.subr.mxu0 %v8633
  %8879 = vmatpush1.msra.mxu0 %v8632
  %8880 = vmatprep.subr.mxu0 %v8639
  %8881 = vmatpush1.msra.mxu0 %v8638
  %8882 = vmatprep.subr.mxu0 %v8645
  %8883 = vmatpush1.msra.mxu0 %v8644
  %8884 = vmatprep.mubr.f32.mxu0 %v8674
  %8885 = vmatmul.mubr.f32.gmra.mrb[0].mxu0 %v8454
  %v8886 = vpop.f32.mrb[0].mxu0
  %v8887 = vadd.f32 0.0, %v8886
  %v8888 = vpop.f32.mrb[0].mxu0
  %v8889 = vadd.f32 0.0, %v8888
  %8890 = vdwg.mxu0
  %8891 = vmatprep.subr.mxu0 %v8651
  %8892 = vmatpush1.msra.mxu0 %v8650
  %8893 = vmatprep.subr.mxu0 %v8657
  %8894 = vmatpush1.msra.mxu0 %v8656
  %8895 = vmatprep.subr.mxu0 %v8663
  %8896 = vmatpush1.msra.mxu0 %v8662
  %8897 = vmatprep.subr.mxu0 %v8669
  %8898 = vmatpush1.msra.mxu0 %v8668
  %8899 = vmatprep.subr.mxu0 0.0
  %8900 = vmatpush1.msra.mxu0 0.0
  %8901 = vmatprep.subr.mxu0 0.0
  %8902 = vmatpush1.msra.mxu0 0.0
  %8903 = vmatprep.subr.mxu0 0.0
  %8904 = vmatpush1.msra.mxu0 0.0
  %8905 = vmatprep.subr.mxu0 0.0
  %8906 = vmatpush1.msra.mxu0 0.0
  %8907 = vmatprep.subr.mxu0 0.0
  %8908 = vmatpush1.msra.mxu0 0.0
  %8909 = vmatprep.subr.mxu0 0.0
  %8910 = vmatpush1.msra.mxu0 0.0
  %8911 = vmatprep.subr.mxu0 0.0
  %8912 = vmatpush1.msra.mxu0 0.0
  %8913 = vmatprep.subr.mxu0 0.0
  %8914 = vmatpush1.msra.mxu0 0.0
  %8915 = vmatprep.subr.mxu0 0.0
  %8916 = vmatpush1.msra.mxu0 0.0
  %8917 = vmatprep.subr.mxu0 0.0
  %8918 = vmatpush1.msra.mxu0 0.0
  %8919 = vmatprep.subr.mxu0 0.0
  %8920 = vmatpush1.msra.mxu0 0.0
  %8921 = vmatprep.subr.mxu0 0.0
  %8922 = vmatpush1.msra.mxu0 0.0
  %8923 = vmatprep.subr.mxu0 0.0
  %8924 = vmatpush1.msra.mxu0 0.0
  %8925 = vmatprep.subr.mxu0 0.0
  %8926 = vmatpush1.msra.mxu0 0.0
  %8927 = vmatprep.subr.mxu0 0.0
  %8928 = vmatpush1.msra.mxu0 0.0
  %8929 = vmatprep.subr.mxu0 0.0
  %8930 = vmatpush1.msra.mxu0 0.0
  %8931 = vmatprep.subr.mxu0 0.0
  %8932 = vmatpush1.msra.mxu0 0.0
  %8933 = vmatprep.subr.mxu0 0.0
  %8934 = vmatpush1.msra.mxu0 0.0
  %8935 = vmatprep.subr.mxu0 0.0
  %8936 = vmatpush1.msra.mxu0 0.0
  %8937 = vmatprep.subr.mxu0 0.0
  %8938 = vmatpush1.msra.mxu0 0.0
  %8939 = vmatprep.subr.mxu0 0.0
  %8940 = vmatpush1.msra.mxu0 0.0
  %8941 = vmatprep.subr.mxu0 0.0
  %8942 = vmatpush1.msra.mxu0 0.0
  %8943 = vmatprep.subr.mxu0 0.0
  %8944 = vmatpush1.msra.mxu0 0.0
  %8945 = vmatprep.subr.mxu0 0.0
  %8946 = vmatpush1.msra.mxu0 0.0
  %8947 = vmatprep.subr.mxu0 0.0
  %8948 = vmatpush1.msra.mxu0 0.0
  %8949 = vmatprep.subr.mxu0 0.0
  %8950 = vmatpush1.msra.mxu0 0.0
  %8951 = vmatprep.subr.mxu0 0.0
  %8952 = vmatpush1.msra.mxu0 0.0
  %8953 = vmatprep.subr.mxu0 0.0
  %8954 = vmatpush1.msra.mxu0 0.0
  %8955 = vmatprep.mubr.f32.mxu0 0.0
  %8956 = vmatmul.mubr.f32.gmra.mrb[0].mxu0 %v8676
  %v8957 = vpop.f32.mrb[0].mxu0
  %v8958 = vadd.f32 %v8887, %v8957
  %v8959 = vpop.f32.mrb[0].mxu0
  %v8960 = vadd.f32 %v8889, %v8959
  %8961 = vdwg.mxu0
  %8962 = vmatprep.subr.mxu0 %v8461
  %8963 = vmatpush1.msra.mxu0 %v8460
  %8964 = vmatprep.subr.mxu0 %v8467
  %8965 = vmatpush1.msra.mxu0 %v8466
  %8966 = vmatprep.subr.mxu0 %v8473
  %8967 = vmatpush1.msra.mxu0 %v8472
  %8968 = vmatprep.subr.mxu0 %v8479
  %8969 = vmatpush1.msra.mxu0 %v8478
  %8970 = vmatprep.subr.mxu0 %v8485
  %8971 = vmatpush1.msra.mxu0 %v8484
  %8972 = vmatprep.subr.mxu0 %v8491
  %8973 = vmatpush1.msra.mxu0 %v8490
  %8974 = vmatprep.subr.mxu0 %v8497
  %8975 = vmatpush1.msra.mxu0 %v8496
  %8976 = vmatprep.subr.mxu0 %v8503
  %8977 = vmatpush1.msra.mxu0 %v8502
  %8978 = vmatprep.subr.mxu0 %v8509
  %8979 = vmatpush1.msra.mxu0 %v8508
  %8980 = vmatprep.subr.mxu0 %v8515
  %8981 = vmatpush1.msra.mxu0 %v8514
  %8982 = vmatprep.subr.mxu0 %v8521
  %8983 = vmatpush1.msra.mxu0 %v8520
  %8984 = vmatprep.subr.mxu0 %v8527
  %8985 = vmatpush1.msra.mxu0 %v8526
  %8986 = vmatprep.subr.mxu0 %v8533
  %8987 = vmatpush1.msra.mxu0 %v8532
  %8988 = vmatprep.subr.mxu0 %v8539
  %8989 = vmatpush1.msra.mxu0 %v8538
  %8990 = vmatprep.subr.mxu0 %v8545
  %8991 = vmatpush1.msra.mxu0 %v8544
  %8992 = vmatprep.subr.mxu0 %v8551
  %8993 = vmatpush1.msra.mxu0 %v8550
  %8994 = vmatprep.subr.mxu0 %v8557
  %8995 = vmatpush1.msra.mxu0 %v8556
  %8996 = vmatprep.subr.mxu0 %v8563
  %8997 = vmatpush1.msra.mxu0 %v8562
  %8998 = vmatprep.subr.mxu0 %v8569
  %8999 = vmatpush1.msra.mxu0 %v8568
  %9000 = vmatprep.subr.mxu0 %v8575
  %9001 = vmatpush1.msra.mxu0 %v8574
  %9002 = vmatprep.subr.mxu0 %v8581
  %9003 = vmatpush1.msra.mxu0 %v8580
  %9004 = vmatprep.subr.mxu0 %v8587
  %9005 = vmatpush1.msra.mxu0 %v8586
  %9006 = vmatprep.subr.mxu0 %v8593
  %9007 = vmatpush1.msra.mxu0 %v8592
  %9008 = vmatprep.subr.mxu0 %v8599
  %9009 = vmatpush1.msra.mxu0 %v8598
  %9010 = vmatprep.subr.mxu0 %v8605
  %9011 = vmatpush1.msra.mxu0 %v8604
  %9012 = vmatprep.subr.mxu0 %v8611
  %9013 = vmatpush1.msra.mxu0 %v8610
  %9014 = vmatprep.subr.mxu0 %v8617
  %9015 = vmatpush1.msra.mxu0 %v8616
  %9016 = vmatprep.subr.mxu0 %v8623
  %9017 = vmatpush1.msra.mxu0 %v8622
  %9018 = vmatprep.subr.mxu0 %v8629
  %9019 = vmatpush1.msra.mxu0 %v8628
  %9020 = vmatprep.subr.mxu0 %v8635
  %9021 = vmatpush1.msra.mxu0 %v8634
  %9022 = vmatprep.subr.mxu0 %v8641
  %9023 = vmatpush1.msra.mxu0 %v8640
  %9024 = vmatprep.subr.mxu0 %v8647
  %9025 = vmatpush1.msra.mxu0 %v8646
  %9026 = vmatprep.mubr.f32.mxu0 %v8674
  %9027 = vmatmul.mubr.f32.gmra.mrb[0].mxu0 %v8454
  %v9028 = vpop.f32.mrb[0].mxu0
  %v9029 = vadd.f32 0.0, %v9028
  %v9030 = vpop.f32.mrb[0].mxu0
  %v9031 = vadd.f32 0.0, %v9030
  %9032 = vdwg.mxu0
  %9033 = vmatprep.subr.mxu0 %v8653
  %9034 = vmatpush1.msra.mxu0 %v8652
  %9035 = vmatprep.subr.mxu0 %v8659
  %9036 = vmatpush1.msra.mxu0 %v8658
  %9037 = vmatprep.subr.mxu0 %v8665
  %9038 = vmatpush1.msra.mxu0 %v8664
  %9039 = vmatprep.subr.mxu0 %v8671
  %9040 = vmatpush1.msra.mxu0 %v8670
  %9041 = vmatprep.subr.mxu0 0.0
  %9042 = vmatpush1.msra.mxu0 0.0
  %9043 = vmatprep.subr.mxu0 0.0
  %9044 = vmatpush1.msra.mxu0 0.0
  %9045 = vmatprep.subr.mxu0 0.0
  %9046 = vmatpush1.msra.mxu0 0.0
  %9047 = vmatprep.subr.mxu0 0.0
  %9048 = vmatpush1.msra.mxu0 0.0
  %9049 = vmatprep.subr.mxu0 0.0
  %9050 = vmatpush1.msra.mxu0 0.0
  %9051 = vmatprep.subr.mxu0 0.0
  %9052 = vmatpush1.msra.mxu0 0.0
  %9053 = vmatprep.subr.mxu0 0.0
  %9054 = vmatpush1.msra.mxu0 0.0
  %9055 = vmatprep.subr.mxu0 0.0
  %9056 = vmatpush1.msra.mxu0 0.0
  %9057 = vmatprep.subr.mxu0 0.0
  %9058 = vmatpush1.msra.mxu0 0.0
  %9059 = vmatprep.subr.mxu0 0.0
  %9060 = vmatpush1.msra.mxu0 0.0
  %9061 = vmatprep.subr.mxu0 0.0
  %9062 = vmatpush1.msra.mxu0 0.0
  %9063 = vmatprep.subr.mxu0 0.0
  %9064 = vmatpush1.msra.mxu0 0.0
  %9065 = vmatprep.subr.mxu0 0.0
  %9066 = vmatpush1.msra.mxu0 0.0
  %9067 = vmatprep.subr.mxu0 0.0
  %9068 = vmatpush1.msra.mxu0 0.0
  %9069 = vmatprep.subr.mxu0 0.0
  %9070 = vmatpush1.msra.mxu0 0.0
  %9071 = vmatprep.subr.mxu0 0.0
  %9072 = vmatpush1.msra.mxu0 0.0
  %9073 = vmatprep.subr.mxu0 0.0
  %9074 = vmatpush1.msra.mxu0 0.0
  %9075 = vmatprep.subr.mxu0 0.0
  %9076 = vmatpush1.msra.mxu0 0.0
  %9077 = vmatprep.subr.mxu0 0.0
  %9078 = vmatpush1.msra.mxu0 0.0
  %9079 = vmatprep.subr.mxu0 0.0
  %9080 = vmatpush1.msra.mxu0 0.0
  %9081 = vmatprep.subr.mxu0 0.0
  %9082 = vmatpush1.msra.mxu0 0.0
  %9083 = vmatprep.subr.mxu0 0.0
  %9084 = vmatpush1.msra.mxu0 0.0
  %9085 = vmatprep.subr.mxu0 0.0
  %9086 = vmatpush1.msra.mxu0 0.0
  %9087 = vmatprep.subr.mxu0 0.0
  %9088 = vmatpush1.msra.mxu0 0.0
  %9089 = vmatprep.subr.mxu0 0.0
  %9090 = vmatpush1.msra.mxu0 0.0
  %9091 = vmatprep.subr.mxu0 0.0
  %9092 = vmatpush1.msra.mxu0 0.0
  %9093 = vmatprep.subr.mxu0 0.0
  %9094 = vmatpush1.msra.mxu0 0.0
  %9095 = vmatprep.subr.mxu0 0.0
  %9096 = vmatpush1.msra.mxu0 0.0
  %9097 = vmatprep.mubr.f32.mxu0 0.0
  %9098 = vmatmul.mubr.f32.gmra.mrb[0].mxu0 %v8676
  %v9099 = vpop.f32.mrb[0].mxu0
  %v9100 = vadd.f32 %v9029, %v9099
  %v9101 = vpop.f32.mrb[0].mxu0
  %v9102 = vadd.f32 %v9031, %v9101
  %9103 = vdwg.mxu0
  %v9104 = vmul.f32 %v8816, %v423
  %v9105 = vmul.f32 %v8818, %v427
  %v9106 = vmul.f32 %v8958, %v431
  %v9107 = vmul.f32 %v8960, %v435
  %v9108 = vmul.f32 %v9100, %v439
  %v9109 = vmul.f32 %v9102, %v443
  %v9116 = vcombine.low %v9104, %v9105
  %v9117 = vcombine.low %v9106, %v9107
  %v9118 = vcombine.low %v9108, %v9109
  %9122 = vst [vmem:[%s14] sm:$0xff] %v9116
  %9123 = vst [vmem:[%s14 + $0x8] sm:$0xff] %v9117
  %9124 = vst [vmem:[%s14 + $0x10] sm:$0xff] %v9118
  // Predicated region
  $region58: #{modified_dncnn_forward.1} parent=0 // pred_check
    _
  $region59: #{modified_dncnn_forward.1} parent=0 // pred_check_branch
    %9126 = sbr.rel (0) target = $region61
  $region60: #{modified_dncnn_forward.1} parent=0 // pred_region
    _
  $region61: #{modified_dncnn_forward.1} parent=0 // pred_fallthru
    _
  // Predicated region
  $region62: #{modified_dncnn_forward.1} parent=0 // pred_check
    _
  $region63: #{modified_dncnn_forward.1} parent=0 // pred_check_branch
    %9128 = sbr.rel (0) target = $region65
  $region64: #{modified_dncnn_forward.1} parent=0 // pred_region
    _
  $region65: #{modified_dncnn_forward.1} parent=0 // pred_fallthru
    _

</llo_original>
